<compile_context>
chip_gen: v7x
topology: tpu7x:2x2x1
jax: 0.10.0
libtpu: 0.0.40
codegen_flags: <defaults>
</compile_context>

<pallas_src>
import functools

import jax
import jax.numpy as jnp
from jax.experimental import pallas as pl
from jax.experimental.pallas import tpu as pltpu

EXPANSION = 4                  # ResBlock.expansion
TM, TK, TN = 256, 512, 256     # max tile sizes: MXU/lane aligned, VMEM-safe on v7x


def _round_up(x, m):
    return (x + m - 1) // m * m


def _m_tiles(M):
    tm = min(TM, _round_up(M, 8))
    return tm, _round_up(M, tm)


def _k_tiles(K):
    Kp = _round_up(K, 128)
    if Kp <= TK:
        return Kp, Kp
    Kp = _round_up(K, TK)
    return TK, Kp


def _n_tiles(Nc):
    Np = _round_up(Nc, 128)
    tn = 256 if Np % 256 == 0 else 128
    return tn, Np


# ----------------------------- Pallas kernels ------------------------------

def _conv_kernel(x_ref, w_ref, b_ref, o_ref, acc_ref, *, slope):
    """acc += x @ w (bf16 in, f32 acc); last K step: out = LeakyReLU(acc + b)."""
    @pl.when(pl.program_id(2) == 0)
    def _init():
        acc_ref[...] = jnp.zeros_like(acc_ref)

    acc_ref[...] += jnp.dot(x_ref[...], w_ref[...],
                            preferred_element_type=jnp.float32)

    @pl.when(pl.program_id(2) == pl.num_programs(2) - 1)
    def _finish():
        y = acc_ref[...] + b_ref[...]
        if slope != 1.0:                      # static specialization
            y = jnp.where(y >= 0.0, y, slope * y)
        o_ref[...] = y


def _conv_res_kernel(x_ref, w_ref, b_ref, r_ref, o_ref, acc_ref, *, slope):
    """Same as _conv_kernel plus a fused residual add before the activation."""
    @pl.when(pl.program_id(2) == 0)
    def _init():
        acc_ref[...] = jnp.zeros_like(acc_ref)

    acc_ref[...] += jnp.dot(x_ref[...], w_ref[...],
                            preferred_element_type=jnp.float32)

    @pl.when(pl.program_id(2) == pl.num_programs(2) - 1)
    def _finish():
        y = acc_ref[...] + b_ref[...] + r_ref[...]
        if slope != 1.0:
            y = jnp.where(y >= 0.0, y, slope * y)
        o_ref[...] = y


def _vae_head_kernel(h_ref, wmu_ref, bmu_ref, wlv_ref, blv_ref, eps_ref,
                     wp_ref, bp_ref, z_ref, mu_ref, lv_ref):
    """quant_conv -> chunk -> reparameterize -> post_quant_conv, fused."""
    h = h_ref[...]
    mu = jnp.dot(h, wmu_ref[...], preferred_element_type=jnp.float32) + bmu_ref[...]
    lv = jnp.dot(h, wlv_ref[...], preferred_element_type=jnp.float32) + blv_ref[...]
    mu_ref[...] = mu
    lv_ref[...] = lv
    # eps is uniform [0,1) to match torch.rand_like in the reference module.
    z_lat = mu + eps_ref[...] * jnp.exp(0.5 * lv)
    z_ref[...] = jnp.dot(z_lat.astype(jnp.bfloat16), wp_ref[...],
                         preferred_element_type=jnp.float32) + bp_ref[...]


# ------------------------------ conv wrapper -------------------------------

def _conv_gemm(xm, wm, bm, res, cout, slope):
    """out[:M, :cout] = LeakyReLU_slope(xm @ wm + bias (+ res)); tiled GEMM."""
    M, K = xm.shape
    Kp, Np = wm.shape                    # weights pre-padded at init
    tm, Mp = _m_tiles(M)
    tk = min(TK, Kp)                     # Kp is either <=TK or a multiple of TK
    tn = 256 if Np % 256 == 0 else 128
    grid = (Mp // tm, Np // tn, Kp // tk)

    xp = xm if (M, K) == (Mp, Kp) else jnp.pad(xm, ((0, Mp - M), (0, Kp - K)))
    xp = xp.astype(jnp.bfloat16)         # bf16 MXU inputs, f32 accumulate

    in_specs = [
        pl.BlockSpec((tm, tk), lambda i, j, k: (i, k)),
        pl.BlockSpec((tk, tn), lambda i, j, k: (k, j)),
        pl.BlockSpec((1, tn), lambda i, j, k: (0, j)),
    ]
    args = [xp, wm, bm]
    if res is None:
        kernel = functools.partial(_conv_kernel, slope=slope)
    else:
        kernel = functools.partial(_conv_res_kernel, slope=slope)
        rp = res if (M, cout) == (Mp, Np) else jnp.pad(
            res, ((0, Mp - M), (0, Np - cout)))
        in_specs.append(pl.BlockSpec((tm, tn), lambda i, j, k: (i, j)))
        args.append(rp.astype(jnp.float32))

    out = pl.pallas_call(
        kernel,
        out_shape=jax.ShapeDtypeStruct((Mp, Np), jnp.float32),
        grid=grid,
        in_specs=in_specs,
        out_specs=pl.BlockSpec((tm, tn), lambda i, j, k: (i, j)),
        scratch_shapes=[pltpu.VMEM((tm, tn), jnp.float32)],
        compiler_params=pltpu.CompilerParams(
            dimension_semantics=("parallel", "parallel", "arbitrary"),
            vmem_limit_bytes=32 * 1024 * 1024),
    )(*args)
    if (M, cout) != (Mp, Np):
        out = out[:M, :cout]
    return out


def _extract_patches(x, kh, kw, stride, padding):
    """im2col for NHWC input.  Patch channel order = (ki, kj, cin), ki slowest."""
    if padding > 0:
        x = jnp.pad(x, ((0, 0), (padding, padding), (padding, padding), (0, 0)))
    N, H, W, C = x.shape
    oh = (H - kh) // stride + 1
    ow = (W - kw) // stride + 1
    if kh == 1 and kw == 1:
        cols = [x[:, ::stride, ::stride, :]]
    else:
        cols = []
        for i in range(kh):
            for j in range(kw):
                cols.append(x[:, i:i + stride * (oh - 1) + 1:stride,
                              j:j + stride * (ow - 1) + 1:stride, :])
    return jnp.concatenate(cols, axis=-1), oh, ow


def conv2d(x, p, *, stride=1, padding=0, residual=None, slope=1.0):
    """x: (N,H,W,Cin) NHWC; p: prepped conv params; returns (N,oh,ow,Cout)."""
    kh, kw, cin, cout = p['kh'], p['kw'], p['cin'], p['cout']
    patches, oh, ow = _extract_patches(x, kh, kw, stride, padding)
    N = x.shape[0]
    M = N * oh * ow
    xm = patches.reshape(M, kh * kw * cin)
    res = None if residual is None else residual.reshape(M, cout)
    out = _conv_gemm(xm, p['w'], p['b'], res, cout, slope)
    return out.reshape(N, oh, ow, cout)


# ---------------------------- parameter helpers -----------------------------

class KeyGen:
    def __init__(self, seed):
        self._key = jax.random.PRNGKey(seed)

    def __call__(self):
        self._key, sub = jax.random.split(self._key)
        return sub


def _prep_conv(w_hwio, b, scale=None, shift=None):
    """Fold BN affine into conv, reshape to GEMM layout, pre-pad, cast bf16."""
    kh, kw, cin, cout = w_hwio.shape
    if scale is not None:
        w_hwio = w_hwio * scale                  # per-output-channel scale
        b = b * scale + shift
    K = kh * kw * cin
    _, Kp = _k_tiles(K)
    _, Np = _n_tiles(cout)
    wm = jnp.pad(w_hwio.reshape(K, cout), ((0, Kp - K), (0, Np - cout)))
    bm = jnp.pad(b, (0, Np - cout)).reshape(1, Np)
    return {'w': wm.astype(jnp.bfloat16), 'b': bm.astype(jnp.float32),
            'kh': kh, 'kw': kw, 'cin': cin, 'cout': cout}


def init_bn(kg, c, eps=1e-5):
    gamma = 1.0 + 0.1 * jax.random.normal(kg(), (c,), jnp.float32)
    beta = 0.1 * jax.random.normal(kg(), (c,), jnp.float32)
    running_mean = 0.1 * jax.random.normal(kg(), (c,), jnp.float32)
    running_var = 1.0 + 0.1 * jax.random.uniform(kg(), (c,), jnp.float32)
    scale = gamma / jnp.sqrt(running_var + eps)
    shift = beta - running_mean * scale
    return scale, shift


def init_conv(kg, cin, cout, k):
    w = 0.05 * jax.random.normal(kg(), (k, k, cin, cout), jnp.float32)
    b = 0.05 * jax.random.normal(kg(), (cout,), jnp.float32)
    return _prep_conv(w, b)


def init_cnnblock(kg, cin, cout, k):
    w = 0.05 * jax.random.normal(kg(), (k, k, cin, cout), jnp.float32)
    b = 0.05 * jax.random.normal(kg(), (cout,), jnp.float32)
    scale, shift = init_bn(kg, cout)
    return _prep_conv(w, b, scale, shift)   # Conv + BN folded; LeakyReLU in kernel


def init_resblock(kg, cin, planes, *, stride, downsample):
    return {
        'conv1': init_cnnblock(kg, cin, planes, 1),
        'conv2': init_cnnblock(kg, planes, planes, 3),
        'conv3': init_cnnblock(kg, planes, planes * EXPANSION, 1),  # conv3+norm3
        'down': init_cnnblock(kg, cin, planes * EXPANSION, 1) if downsample else None,
        'stride': stride,
    }


def apply_resblock(p, x):
    identity = x
    if p['down'] is not None:
        identity = conv2d(x, p['down'], stride=p['stride'], padding=0, slope=1.0)
    h = conv2d(x, p['conv1'], stride=1, padding=0, slope=0.2)
    h = conv2d(h, p['conv2'], stride=p['stride'], padding=1, slope=0.2)
    # conv3 + norm3 + residual add + LeakyReLU(0.01) fused in one Pallas call.
    return conv2d(h, p['conv3'], stride=1, padding=0, residual=identity, slope=0.01)


# --------------------------------- encoder ----------------------------------

def init_encoder(kg, num_chans, in_chans, z_dim, channel_multipliers, blocks):
    p = {'conv1': init_cnnblock(kg, num_chans, in_chans, 3)}
    dim = in_chans
    layers = []
    for factor in channel_multipliers:
        planes = factor * in_chans
        rbs = [init_resblock(kg, dim, planes, stride=2, downsample=True)]
        dim = planes * EXPANSION
        for _ in range(blocks - 1):
            rbs.append(init_resblock(kg, dim, planes, stride=1, downsample=False))
        layers.append(rbs)
    p['layers'] = layers
    p['conv2'] = init_conv(kg, dim, z_dim * 2, 1)
    return p


def apply_encoder(p, x):
    h = conv2d(x, p['conv1'], stride=1, padding=1, slope=0.2)
    for layer in p['layers']:
        for rb in layer:
            h = apply_resblock(rb, h)
    return conv2d(h, p['conv2'], stride=1, padding=0, slope=1.0)


# --------------------------------- decoder ----------------------------------

def init_decoder(kg, in_chans, embed_dim, channel_multipliers, blocks, out_channels):
    p = {'conv1': init_cnnblock(kg, embed_dim, in_chans, 1)}
    dim = in_chans
    layers = []
    for _ in reversed(channel_multipliers):
        planes = in_chans
        upsample = dim != planes * EXPANSION
        rbs = [init_resblock(kg, dim, planes, stride=1, downsample=upsample)]
        dim = planes * EXPANSION
        for _ in range(blocks - 1):
            rbs.append(init_resblock(kg, dim, planes, stride=1, downsample=False))
        layers.append({'resblocks': rbs, 'conv': init_conv(kg, dim, dim * 4, 3)})
    p['layers'] = layers
    p['conv2'] = init_cnnblock(kg, dim, out_channels, 3)
    return p


def pixel_shuffle_nhwc(x, r):
    # out[n, h*r+i, w*r+j, c] = in[n, h, w, c*r*r + i*r + j]  (torch semantics)
    N, H, W, C = x.shape
    c = C // (r * r)
    x = x.reshape(N, H, W, c, r, r)
    x = jnp.transpose(x, (0, 1, 4, 2, 5, 3))
    return x.reshape(N, H * r, W * r, c)


def apply_decoder(p, x):
    h = conv2d(x, p['conv1'], stride=1, padding=0, slope=0.2)
    for layer in p['layers']:
        for rb in layer['resblocks']:
            h = apply_resblock(rb, h)
        h = conv2d(h, layer['conv'], stride=1, padding=1, slope=1.0)
        h = pixel_shuffle_nhwc(h, 2)
    return conv2d(h, p['conv2'], stride=1, padding=1, slope=0.2)


# --------------------------- fused VAE latent head ---------------------------

def init_head(kg, z_dim, embed_dim):
    kq = 2 * z_dim
    wq = 0.05 * jax.random.normal(kg(), (kq, 2 * embed_dim), jnp.float32)
    bq = 0.05 * jax.random.normal(kg(), (2 * embed_dim,), jnp.float32)
    wp = 0.05 * jax.random.normal(kg(), (embed_dim, z_dim), jnp.float32)
    bp = 0.05 * jax.random.normal(kg(), (z_dim,), jnp.float32)
    kq_p = _round_up(kq, 128)
    ed_p = _round_up(embed_dim, 128)
    zd_p = _round_up(z_dim, 128)

    def padw(w, r, c):
        return jnp.pad(w, ((0, r - w.shape[0]), (0, c - w.shape[1]))).astype(jnp.bfloat16)

    def padb(b, c):
        return jnp.pad(b, (0, c - b.shape[0])).reshape(1, c).astype(jnp.float32)

    return {
        'w_mu': padw(wq[:, :embed_dim], kq_p, ed_p),
        'b_mu': padb(bq[:embed_dim], ed_p),
        'w_lv': padw(wq[:, embed_dim:], kq_p, ed_p),
        'b_lv': padb(bq[embed_dim:], ed_p),
        'w_p': padw(wp, ed_p, zd_p),
        'b_p': padb(bp, zd_p),
        'embed_dim': embed_dim, 'z_dim': z_dim, 'kq': kq,
    }


def apply_vae_head(p, h, eps):
    """Fused quant_conv -> chunk -> reparameterize -> post_quant_conv."""
    N, H, W, C = h.shape
    ed, zd = p['embed_dim'], p['z_dim']
    kq_p, ed_p = p['w_mu'].shape
    zd_p = p['w_p'].shape[1]
    M = N * H * W
    tm, Mp = _m_tiles(M)

    hm = jnp.pad(h.reshape(M, C), ((0, Mp - M), (0, kq_p - C))).astype(jnp.bfloat16)
    em = jnp.pad(eps.reshape(M, ed), ((0, Mp - M), (0, ed_p - ed))).astype(jnp.float32)

    z, mu, lv = pl.pallas_call(
        _vae_head_kernel,
        out_shape=(jax.ShapeDtypeStruct((Mp, zd_p), jnp.float32),
                   jax.ShapeDtypeStruct((Mp, ed_p), jnp.float32),
                   jax.ShapeDtypeStruct((Mp, ed_p), jnp.float32)),
        grid=(Mp // tm,),
        in_specs=[
            pl.BlockSpec((tm, kq_p), lambda i: (i, 0)),
            pl.BlockSpec((kq_p, ed_p), lambda i: (0, 0)),
            pl.BlockSpec((1, ed_p), lambda i: (0, 0)),
            pl.BlockSpec((kq_p, ed_p), lambda i: (0, 0)),
            pl.BlockSpec((1, ed_p), lambda i: (0, 0)),
            pl.BlockSpec((tm, ed_p), lambda i: (i, 0)),
            pl.BlockSpec((ed_p, zd_p), lambda i: (0, 0)),
            pl.BlockSpec((1, zd_p), lambda i: (0, 0)),
        ],
        out_specs=(pl.BlockSpec((tm, zd_p), lambda i: (i, 0)),
                   pl.BlockSpec((tm, ed_p), lambda i: (i, 0)),
                   pl.BlockSpec((tm, ed_p), lambda i: (i, 0))),
        compiler_params=pltpu.CompilerParams(
            dimension_semantics=("parallel",),
            vmem_limit_bytes=32 * 1024 * 1024),
    )(hm, p['w_mu'], p['b_mu'], p['w_lv'], p['b_lv'], em, p['w_p'], p['b_p'])

    z = z[:M, :zd].reshape(N, H, W, zd)
    mu = mu[:M, :ed].reshape(N, H, W, ed)
    lv = lv[:M, :ed].reshape(N, H, W, ed)
    return z, mu, lv


# ---------------------------------- model -----------------------------------

def init_model(seed, *, in_chans, num_chans, out_chans, z_dim, embed_dim,
               blocks, channel_multipliers):
    kg = KeyGen(seed)
    return {
        'encode': init_encoder(kg, num_chans, in_chans, z_dim,
                               channel_multipliers, blocks),
        'decode': init_decoder(kg, in_chans, embed_dim, channel_multipliers,
                               blocks, out_chans),
        'head': init_head(kg, z_dim, embed_dim),
        'embed_dim': embed_dim,
        'z_dim': z_dim,
    }


def forward(params, x_nchw, eps_key):
    x = jnp.transpose(x_nchw, (0, 2, 3, 1)).astype(jnp.float32)  # NCHW -> NHWC
    h = apply_encoder(params['encode'], x)
    N, hh, ww, _ = h.shape
    ed = params['embed_dim']
    eps = jax.random.uniform(eps_key, (N, hh, ww, ed), jnp.float32)  # torch.rand_like
    z, mu, logvar = apply_vae_head(params['head'], h, eps)
    img = apply_decoder(params['decode'], z)
    to_nchw = lambda t: jnp.transpose(t, (0, 3, 1, 2))
    return to_nchw(img), to_nchw(mu), to_nchw(logvar)


# ----------------------------------- main ------------------------------------

if __name__ == "__main__":
    key = jax.random.PRNGKey(0)
    xkey, ekey = jax.random.split(key)

    # Small but structurally faithful config: 2 down/up stages, 2 resblocks each.
    params = init_model(0, in_chans=8, num_chans=3, out_chans=3, z_dim=4,
                        embed_dim=4, blocks=2, channel_multipliers=[1, 2])

    x = jax.random.normal(xkey, (2, 3, 16, 16), jnp.float32)  # NCHW like torch

    fwd = jax.jit(lambda xx, kk: forward(params, xx, kk))
    img, mu, logvar = fwd(x, ekey)
    jax.block_until_ready((img, mu, logvar))

    assert img.shape == (2, 3, 16, 16), img.shape
    assert mu.shape == (2, 4, 4, 4), mu.shape
    assert logvar.shape == (2, 4, 4, 4), logvar.shape
    assert jnp.all(jnp.isfinite(img)) and jnp.all(jnp.isfinite(mu))
    assert jnp.all(jnp.isfinite(logvar))

    print("KERNEL_OK")
</pallas_src>

<mosaic_0001>
module attributes {stable_mosaic.version = 11 : i64} {
  func.func @_conv_kernel(%arg0: i32, %arg1: i32, %arg2: i32, %arg3: memref<256x128xbf16, #tpu.memory_space<vmem>>, %arg4: memref<128x128xbf16, #tpu.memory_space<vmem>>, %arg5: memref<1x128xf32, #tpu.memory_space<vmem>>, %arg6: memref<256x128xf32, #tpu.memory_space<vmem>>, %arg7: memref<256x128xf32, #tpu.memory_space<vmem>>) attributes {dimension_semantics = [#tpu.dimension_semantics<parallel>, #tpu.dimension_semantics<parallel>, #tpu.dimension_semantics<arbitrary>], iteration_bounds = array<i64: 2, 1, 1>, scalar_prefetch = 0 : i64, scratch_operands = 1 : i64, tpu.core_type = #tpu.core_type<tc>, window_params = [{transform_indices = @transform_0, window_bounds = array<i64: 256, 128>}, {transform_indices = @transform_1, window_bounds = array<i64: 128, 128>}, {transform_indices = @transform_2, window_bounds = array<i64: 1, 128>}, {transform_indices = @transform_3, window_bounds = array<i64: 256, 128>}]} {
    %c0_i32 = arith.constant 0 : i32
    %0 = arith.cmpi eq, %arg2, %c0_i32 : i32
    %1 = arith.extui %0 : i1 to i32
    %c0_i32_0 = arith.constant 0 : i32
    %2 = arith.cmpi ne, %1, %c0_i32_0 : i32
    scf.if %2 {
      %cst_10 = arith.constant 0.000000e+00 : f32
      %12 = vector.broadcast %cst_10 : f32 to vector<256x128xf32>
      %c0_11 = arith.constant 0 : index
      %c0_12 = arith.constant 0 : index
      %13 = vector.load %arg7[%c0_11, %c0_12] : memref<256x128xf32, #tpu.memory_space<vmem>>, vector<256x128xf32>
      tpu.vector_store %arg7[%c0_11, %c0_12], %12 {strides = array<i32>} : memref<256x128xf32, #tpu.memory_space<vmem>>, vector<256x128xf32>,
    } else {
    }
    %c0 = arith.constant 0 : index
    %c0_1 = arith.constant 0 : index
    %3 = vector.load %arg7[%c0, %c0_1] : memref<256x128xf32, #tpu.memory_space<vmem>>, vector<256x128xf32>
    %c0_2 = arith.constant 0 : index
    %c0_3 = arith.constant 0 : index
    %4 = vector.load %arg3[%c0_2, %c0_3] : memref<256x128xbf16, #tpu.memory_space<vmem>>, vector<256x128xbf16>
    %c0_4 = arith.constant 0 : index
    %c0_5 = arith.constant 0 : index
    %5 = vector.load %arg4[%c0_4, %c0_5] : memref<128x128xbf16, #tpu.memory_space<vmem>>, vector<128x128xbf16>
    %cst = arith.constant dense<0.000000e+00> : vector<256x128xf32>
    %6 = tpu.matmul %4, %5, %cst {dimension_numbers = #tpu.dot_dimension_numbers<[1], [0], [0], [1], [0, 0, 1, 1], [], []>} : vector<256x128xbf16>, vector<128x128xbf16>, vector<256x128xf32> -> vector<256x128xf32>
    %7 = arith.addf %3, %6 : vector<256x128xf32>
    %c0_6 = arith.constant 0 : index
    %c0_7 = arith.constant 0 : index
    %8 = vector.load %arg7[%c0_6, %c0_7] : memref<256x128xf32, #tpu.memory_space<vmem>>, vector<256x128xf32>
    tpu.vector_store %arg7[%c0_6, %c0_7], %7 {strides = array<i32>} : memref<256x128xf32, #tpu.memory_space<vmem>>, vector<256x128xf32>,
    %c0_i32_8 = arith.constant 0 : i32
    %9 = arith.cmpi eq, %arg2, %c0_i32_8 : i32
    %10 = arith.extui %9 : i1 to i32
    %c0_i32_9 = arith.constant 0 : i32
    %11 = arith.cmpi ne, %10, %c0_i32_9 : i32
    scf.if %11 {
      %c0_10 = arith.constant 0 : index
      %c0_11 = arith.constant 0 : index
      %12 = vector.load %arg7[%c0_10, %c0_11] : memref<256x128xf32, #tpu.memory_space<vmem>>, vector<256x128xf32>
      %c0_12 = arith.constant 0 : index
      %c0_13 = arith.constant 0 : index
      %13 = vector.load %arg5[%c0_12, %c0_13] : memref<1x128xf32, #tpu.memory_space<vmem>>, vector<1x128xf32>
      %14 = vector.broadcast %13 : vector<1x128xf32> to vector<256x128xf32>
      %15 = arith.addf %12, %14 : vector<256x128xf32>
      %cst_14 = arith.constant 0.000000e+00 : f32
      %16 = vector.broadcast %cst_14 : f32 to vector<256x128xf32>
      %17 = arith.cmpf oge, %15, %16 : vector<256x128xf32>
      %cst_15 = arith.constant 2.000000e-01 : f32
      %18 = vector.broadcast %cst_15 : f32 to vector<256x128xf32>
      %19 = arith.mulf %18, %15 : vector<256x128xf32>
      %20 = arith.select %17, %15, %19 : vector<256x128xi1>, vector<256x128xf32>
      %c0_16 = arith.constant 0 : index
      %c0_17 = arith.constant 0 : index
      %21 = vector.load %arg6[%c0_16, %c0_17] : memref<256x128xf32, #tpu.memory_space<vmem>>, vector<256x128xf32>
      tpu.vector_store %arg6[%c0_16, %c0_17], %20 {strides = array<i32>} : memref<256x128xf32, #tpu.memory_space<vmem>>, vector<256x128xf32>,
    } else {
    }
    return
  }
  func.func @transform_0(%arg0: i32, %arg1: i32, %arg2: i32) -> (i32, i32) {
    %c0_i32 = arith.constant 0 : i32
    return %arg0, %arg2 : i32, i32
  }
  func.func @transform_1(%arg0: i32, %arg1: i32, %arg2: i32) -> (i32, i32) {
    %c0_i32 = arith.constant 0 : i32
    return %arg2, %arg1 : i32, i32
  }
  func.func @transform_2(%arg0: i32, %arg1: i32, %arg2: i32) -> (i32, i32) {
    %c0_i32 = arith.constant 0 : i32
    %c0_i32_0 = arith.constant 0 : i32
    return %c0_i32, %arg1 : i32, i32
  }
  func.func @transform_3(%arg0: i32, %arg1: i32, %arg2: i32) -> (i32, i32) {
    %c0_i32 = arith.constant 0 : i32
    return %arg0, %arg1 : i32, i32
  }
}

module attributes {stable_mosaic.version = 11 : i64} {
  func.func @_conv_kernel(%arg0: i32, %arg1: i32, %arg2: i32, %arg3: memref<128x128xbf16, #tpu.memory_space<vmem>>, %arg4: memref<128x128xbf16, #tpu.memory_space<vmem>>, %arg5: memref<1x128xf32, #tpu.memory_space<vmem>>, %arg6: memref<128x128xf32, #tpu.memory_space<vmem>>, %arg7: memref<128x128xf32, #tpu.memory_space<vmem>>) attributes {dimension_semantics = [#tpu.dimension_semantics<parallel>, #tpu.dimension_semantics<parallel>, #tpu.dimension_semantics<arbitrary>], iteration_bounds = array<i64: 1, 1, 1>, scalar_prefetch = 0 : i64, scratch_operands = 1 : i64, tpu.core_type = #tpu.core_type<tc>, window_params = [{transform_indices = @transform_0, window_bounds = array<i64: 128, 128>}, {transform_indices = @transform_1, window_bounds = array<i64: 128, 128>}, {transform_indices = @transform_2, window_bounds = array<i64: 1, 128>}, {transform_indices = @transform_3, window_bounds = array<i64: 128, 128>}]} {
    %c0_i32 = arith.constant 0 : i32
    %0 = arith.cmpi eq, %arg2, %c0_i32 : i32
    %1 = arith.extui %0 : i1 to i32
    %c0_i32_0 = arith.constant 0 : i32
    %2 = arith.cmpi ne, %1, %c0_i32_0 : i32
    scf.if %2 {
      %cst_10 = arith.constant 0.000000e+00 : f32
      %12 = vector.broadcast %cst_10 : f32 to vector<128x128xf32>
      %c0_11 = arith.constant 0 : index
      %c0_12 = arith.constant 0 : index
      %13 = vector.load %arg7[%c0_11, %c0_12] : memref<128x128xf32, #tpu.memory_space<vmem>>, vector<128x128xf32>
      tpu.vector_store %arg7[%c0_11, %c0_12], %12 {strides = array<i32>} : memref<128x128xf32, #tpu.memory_space<vmem>>, vector<128x128xf32>,
    } else {
    }
    %c0 = arith.constant 0 : index
    %c0_1 = arith.constant 0 : index
    %3 = vector.load %arg7[%c0, %c0_1] : memref<128x128xf32, #tpu.memory_space<vmem>>, vector<128x128xf32>
    %c0_2 = arith.constant 0 : index
    %c0_3 = arith.constant 0 : index
    %4 = vector.load %arg3[%c0_2, %c0_3] : memref<128x128xbf16, #tpu.memory_space<vmem>>, vector<128x128xbf16>
    %c0_4 = arith.constant 0 : index
    %c0_5 = arith.constant 0 : index
    %5 = vector.load %arg4[%c0_4, %c0_5] : memref<128x128xbf16, #tpu.memory_space<vmem>>, vector<128x128xbf16>
    %cst = arith.constant dense<0.000000e+00> : vector<128x128xf32>
    %6 = tpu.matmul %4, %5, %cst {dimension_numbers = #tpu.dot_dimension_numbers<[1], [0], [0], [1], [0, 0, 1, 1], [], []>} : vector<128x128xbf16>, vector<128x128xbf16>, vector<128x128xf32> -> vector<128x128xf32>
    %7 = arith.addf %3, %6 : vector<128x128xf32>
    %c0_6 = arith.constant 0 : index
    %c0_7 = arith.constant 0 : index
    %8 = vector.load %arg7[%c0_6, %c0_7] : memref<128x128xf32, #tpu.memory_space<vmem>>, vector<128x128xf32>
    tpu.vector_store %arg7[%c0_6, %c0_7], %7 {strides = array<i32>} : memref<128x128xf32, #tpu.memory_space<vmem>>, vector<128x128xf32>,
    %c0_i32_8 = arith.constant 0 : i32
    %9 = arith.cmpi eq, %arg2, %c0_i32_8 : i32
    %10 = arith.extui %9 : i1 to i32
    %c0_i32_9 = arith.constant 0 : i32
    %11 = arith.cmpi ne, %10, %c0_i32_9 : i32
    scf.if %11 {
      %c0_10 = arith.constant 0 : index
      %c0_11 = arith.constant 0 : index
      %12 = vector.load %arg7[%c0_10, %c0_11] : memref<128x128xf32, #tpu.memory_space<vmem>>, vector<128x128xf32>
      %c0_12 = arith.constant 0 : index
      %c0_13 = arith.constant 0 : index
      %13 = vector.load %arg5[%c0_12, %c0_13] : memref<1x128xf32, #tpu.memory_space<vmem>>, vector<1x128xf32>
      %14 = vector.broadcast %13 : vector<1x128xf32> to vector<128x128xf32>
      %15 = arith.addf %12, %14 : vector<128x128xf32>
      %c0_14 = arith.constant 0 : index
      %c0_15 = arith.constant 0 : index
      %16 = vector.load %arg6[%c0_14, %c0_15] : memref<128x128xf32, #tpu.memory_space<vmem>>, vector<128x128xf32>
      tpu.vector_store %arg6[%c0_14, %c0_15], %15 {strides = array<i32>} : memref<128x128xf32, #tpu.memory_space<vmem>>, vector<128x128xf32>,
    } else {
    }
    return
  }
  func.func @transform_0(%arg0: i32, %arg1: i32, %arg2: i32) -> (i32, i32) {
    %c0_i32 = arith.constant 0 : i32
    return %arg0, %arg2 : i32, i32
  }
  func.func @transform_1(%arg0: i32, %arg1: i32, %arg2: i32) -> (i32, i32) {
    %c0_i32 = arith.constant 0 : i32
    return %arg2, %arg1 : i32, i32
  }
  func.func @transform_2(%arg0: i32, %arg1: i32, %arg2: i32) -> (i32, i32) {
    %c0_i32 = arith.constant 0 : i32
    %c0_i32_0 = arith.constant 0 : i32
    return %c0_i32, %arg1 : i32, i32
  }
  func.func @transform_3(%arg0: i32, %arg1: i32, %arg2: i32) -> (i32, i32) {
    %c0_i32 = arith.constant 0 : i32
    return %arg0, %arg1 : i32, i32
  }
}

module attributes {stable_mosaic.version = 11 : i64} {
  func.func @_conv_kernel(%arg0: i32, %arg1: i32, %arg2: i32, %arg3: memref<128x128xbf16, #tpu.memory_space<vmem>>, %arg4: memref<128x128xbf16, #tpu.memory_space<vmem>>, %arg5: memref<1x128xf32, #tpu.memory_space<vmem>>, %arg6: memref<128x128xf32, #tpu.memory_space<vmem>>, %arg7: memref<128x128xf32, #tpu.memory_space<vmem>>) attributes {dimension_semantics = [#tpu.dimension_semantics<parallel>, #tpu.dimension_semantics<parallel>, #tpu.dimension_semantics<arbitrary>], iteration_bounds = array<i64: 1, 1, 1>, scalar_prefetch = 0 : i64, scratch_operands = 1 : i64, tpu.core_type = #tpu.core_type<tc>, window_params = [{transform_indices = @transform_0, window_bounds = array<i64: 128, 128>}, {transform_indices = @transform_1, window_bounds = array<i64: 128, 128>}, {transform_indices = @transform_2, window_bounds = array<i64: 1, 128>}, {transform_indices = @transform_3, window_bounds = array<i64: 128, 128>}]} {
    %c0_i32 = arith.constant 0 : i32
    %0 = arith.cmpi eq, %arg2, %c0_i32 : i32
    %1 = arith.extui %0 : i1 to i32
    %c0_i32_0 = arith.constant 0 : i32
    %2 = arith.cmpi ne, %1, %c0_i32_0 : i32
    scf.if %2 {
      %cst_10 = arith.constant 0.000000e+00 : f32
      %12 = vector.broadcast %cst_10 : f32 to vector<128x128xf32>
      %c0_11 = arith.constant 0 : index
      %c0_12 = arith.constant 0 : index
      %13 = vector.load %arg7[%c0_11, %c0_12] : memref<128x128xf32, #tpu.memory_space<vmem>>, vector<128x128xf32>
      tpu.vector_store %arg7[%c0_11, %c0_12], %12 {strides = array<i32>} : memref<128x128xf32, #tpu.memory_space<vmem>>, vector<128x128xf32>,
    } else {
    }
    %c0 = arith.constant 0 : index
    %c0_1 = arith.constant 0 : index
    %3 = vector.load %arg7[%c0, %c0_1] : memref<128x128xf32, #tpu.memory_space<vmem>>, vector<128x128xf32>
    %c0_2 = arith.constant 0 : index
    %c0_3 = arith.constant 0 : index
    %4 = vector.load %arg3[%c0_2, %c0_3] : memref<128x128xbf16, #tpu.memory_space<vmem>>, vector<128x128xbf16>
    %c0_4 = arith.constant 0 : index
    %c0_5 = arith.constant 0 : index
    %5 = vector.load %arg4[%c0_4, %c0_5] : memref<128x128xbf16, #tpu.memory_space<vmem>>, vector<128x128xbf16>
    %cst = arith.constant dense<0.000000e+00> : vector<128x128xf32>
    %6 = tpu.matmul %4, %5, %cst {dimension_numbers = #tpu.dot_dimension_numbers<[1], [0], [0], [1], [0, 0, 1, 1], [], []>} : vector<128x128xbf16>, vector<128x128xbf16>, vector<128x128xf32> -> vector<128x128xf32>
    %7 = arith.addf %3, %6 : vector<128x128xf32>
    %c0_6 = arith.constant 0 : index
    %c0_7 = arith.constant 0 : index
    %8 = vector.load %arg7[%c0_6, %c0_7] : memref<128x128xf32, #tpu.memory_space<vmem>>, vector<128x128xf32>
    tpu.vector_store %arg7[%c0_6, %c0_7], %7 {strides = array<i32>} : memref<128x128xf32, #tpu.memory_space<vmem>>, vector<128x128xf32>,
    %c0_i32_8 = arith.constant 0 : i32
    %9 = arith.cmpi eq, %arg2, %c0_i32_8 : i32
    %10 = arith.extui %9 : i1 to i32
    %c0_i32_9 = arith.constant 0 : i32
    %11 = arith.cmpi ne, %10, %c0_i32_9 : i32
    scf.if %11 {
      %c0_10 = arith.constant 0 : index
      %c0_11 = arith.constant 0 : index
      %12 = vector.load %arg7[%c0_10, %c0_11] : memref<128x128xf32, #tpu.memory_space<vmem>>, vector<128x128xf32>
      %c0_12 = arith.constant 0 : index
      %c0_13 = arith.constant 0 : index
      %13 = vector.load %arg5[%c0_12, %c0_13] : memref<1x128xf32, #tpu.memory_space<vmem>>, vector<1x128xf32>
      %14 = vector.broadcast %13 : vector<1x128xf32> to vector<128x128xf32>
      %15 = arith.addf %12, %14 : vector<128x128xf32>
      %cst_14 = arith.constant 0.000000e+00 : f32
      %16 = vector.broadcast %cst_14 : f32 to vector<128x128xf32>
      %17 = arith.cmpf oge, %15, %16 : vector<128x128xf32>
      %cst_15 = arith.constant 2.000000e-01 : f32
      %18 = vector.broadcast %cst_15 : f32 to vector<128x128xf32>
      %19 = arith.mulf %18, %15 : vector<128x128xf32>
      %20 = arith.select %17, %15, %19 : vector<128x128xi1>, vector<128x128xf32>
      %c0_16 = arith.constant 0 : index
      %c0_17 = arith.constant 0 : index
      %21 = vector.load %arg6[%c0_16, %c0_17] : memref<128x128xf32, #tpu.memory_space<vmem>>, vector<128x128xf32>
      tpu.vector_store %arg6[%c0_16, %c0_17], %20 {strides = array<i32>} : memref<128x128xf32, #tpu.memory_space<vmem>>, vector<128x128xf32>,
    } else {
    }
    return
  }
  func.func @transform_0(%arg0: i32, %arg1: i32, %arg2: i32) -> (i32, i32) {
    %c0_i32 = arith.constant 0 : i32
    return %arg0, %arg2 : i32, i32
  }
  func.func @transform_1(%arg0: i32, %arg1: i32, %arg2: i32) -> (i32, i32) {
    %c0_i32 = arith.constant 0 : i32
    return %arg2, %arg1 : i32, i32
  }
  func.func @transform_2(%arg0: i32, %arg1: i32, %arg2: i32) -> (i32, i32) {
    %c0_i32 = arith.constant 0 : i32
    %c0_i32_0 = arith.constant 0 : i32
    return %c0_i32, %arg1 : i32, i32
  }
  func.func @transform_3(%arg0: i32, %arg1: i32, %arg2: i32) -> (i32, i32) {
    %c0_i32 = arith.constant 0 : i32
    return %arg0, %arg1 : i32, i32
  }
}

module attributes {stable_mosaic.version = 11 : i64} {
  func.func @_conv_res_kernel(%arg0: i32, %arg1: i32, %arg2: i32, %arg3: memref<128x128xbf16, #tpu.memory_space<vmem>>, %arg4: memref<128x128xbf16, #tpu.memory_space<vmem>>, %arg5: memref<1x128xf32, #tpu.memory_space<vmem>>, %arg6: memref<128x128xf32, #tpu.memory_space<vmem>>, %arg7: memref<128x128xf32, #tpu.memory_space<vmem>>, %arg8: memref<128x128xf32, #tpu.memory_space<vmem>>) attributes {dimension_semantics = [#tpu.dimension_semantics<parallel>, #tpu.dimension_semantics<parallel>, #tpu.dimension_semantics<arbitrary>], iteration_bounds = array<i64: 1, 1, 1>, scalar_prefetch = 0 : i64, scratch_operands = 1 : i64, tpu.core_type = #tpu.core_type<tc>, window_params = [{transform_indices = @transform_0, window_bounds = array<i64: 128, 128>}, {transform_indices = @transform_1, window_bounds = array<i64: 128, 128>}, {transform_indices = @transform_2, window_bounds = array<i64: 1, 128>}, {transform_indices = @transform_3, window_bounds = array<i64: 128, 128>}, {transform_indices = @transform_4, window_bounds = array<i64: 128, 128>}]} {
    %c0_i32 = arith.constant 0 : i32
    %0 = arith.cmpi eq, %arg2, %c0_i32 : i32
    %1 = arith.extui %0 : i1 to i32
    %c0_i32_0 = arith.constant 0 : i32
    %2 = arith.cmpi ne, %1, %c0_i32_0 : i32
    scf.if %2 {
      %cst_10 = arith.constant 0.000000e+00 : f32
      %12 = vector.broadcast %cst_10 : f32 to vector<128x128xf32>
      %c0_11 = arith.constant 0 : index
      %c0_12 = arith.constant 0 : index
      %13 = vector.load %arg8[%c0_11, %c0_12] : memref<128x128xf32, #tpu.memory_space<vmem>>, vector<128x128xf32>
      tpu.vector_store %arg8[%c0_11, %c0_12], %12 {strides = array<i32>} : memref<128x128xf32, #tpu.memory_space<vmem>>, vector<128x128xf32>,
    } else {
    }
    %c0 = arith.constant 0 : index
    %c0_1 = arith.constant 0 : index
    %3 = vector.load %arg8[%c0, %c0_1] : memref<128x128xf32, #tpu.memory_space<vmem>>, vector<128x128xf32>
    %c0_2 = arith.constant 0 : index
    %c0_3 = arith.constant 0 : index
    %4 = vector.load %arg3[%c0_2, %c0_3] : memref<128x128xbf16, #tpu.memory_space<vmem>>, vector<128x128xbf16>
    %c0_4 = arith.constant 0 : index
    %c0_5 = arith.constant 0 : index
    %5 = vector.load %arg4[%c0_4, %c0_5] : memref<128x128xbf16, #tpu.memory_space<vmem>>, vector<128x128xbf16>
    %cst = arith.constant dense<0.000000e+00> : vector<128x128xf32>
    %6 = tpu.matmul %4, %5, %cst {dimension_numbers = #tpu.dot_dimension_numbers<[1], [0], [0], [1], [0, 0, 1, 1], [], []>} : vector<128x128xbf16>, vector<128x128xbf16>, vector<128x128xf32> -> vector<128x128xf32>
    %7 = arith.addf %3, %6 : vector<128x128xf32>
    %c0_6 = arith.constant 0 : index
    %c0_7 = arith.constant 0 : index
    %8 = vector.load %arg8[%c0_6, %c0_7] : memref<128x128xf32, #tpu.memory_space<vmem>>, vector<128x128xf32>
    tpu.vector_store %arg8[%c0_6, %c0_7], %7 {strides = array<i32>} : memref<128x128xf32, #tpu.memory_space<vmem>>, vector<128x128xf32>,
    %c0_i32_8 = arith.constant 0 : i32
    %9 = arith.cmpi eq, %arg2, %c0_i32_8 : i32
    %10 = arith.extui %9 : i1 to i32
    %c0_i32_9 = arith.constant 0 : i32
    %11 = arith.cmpi ne, %10, %c0_i32_9 : i32
    scf.if %11 {
      %c0_10 = arith.constant 0 : index
      %c0_11 = arith.constant 0 : index
      %12 = vector.load %arg8[%c0_10, %c0_11] : memref<128x128xf32, #tpu.memory_space<vmem>>, vector<128x128xf32>
      %c0_12 = arith.constant 0 : index
      %c0_13 = arith.constant 0 : index
      %13 = vector.load %arg5[%c0_12, %c0_13] : memref<1x128xf32, #tpu.memory_space<vmem>>, vector<1x128xf32>
      %14 = vector.broadcast %13 : vector<1x128xf32> to vector<128x128xf32>
      %15 = arith.addf %12, %14 : vector<128x128xf32>
      %c0_14 = arith.constant 0 : index
      %c0_15 = arith.constant 0 : index
      %16 = vector.load %arg6[%c0_14, %c0_15] : memref<128x128xf32, #tpu.memory_space<vmem>>, vector<128x128xf32>
      %17 = arith.addf %15, %16 : vector<128x128xf32>
      %cst_16 = arith.constant 0.000000e+00 : f32
      %18 = vector.broadcast %cst_16 : f32 to vector<128x128xf32>
      %19 = arith.cmpf oge, %17, %18 : vector<128x128xf32>
      %cst_17 = arith.constant 0.00999999977 : f32
      %20 = vector.broadcast %cst_17 : f32 to vector<128x128xf32>
      %21 = arith.mulf %20, %17 : vector<128x128xf32>
      %22 = arith.select %19, %17, %21 : vector<128x128xi1>, vector<128x128xf32>
      %c0_18 = arith.constant 0 : index
      %c0_19 = arith.constant 0 : index
      %23 = vector.load %arg7[%c0_18, %c0_19] : memref<128x128xf32, #tpu.memory_space<vmem>>, vector<128x128xf32>
      tpu.vector_store %arg7[%c0_18, %c0_19], %22 {strides = array<i32>} : memref<128x128xf32, #tpu.memory_space<vmem>>, vector<128x128xf32>,
    } else {
    }
    return
  }
  func.func @transform_0(%arg0: i32, %arg1: i32, %arg2: i32) -> (i32, i32) {
    %c0_i32 = arith.constant 0 : i32
    return %arg0, %arg2 : i32, i32
  }
  func.func @transform_1(%arg0: i32, %arg1: i32, %arg2: i32) -> (i32, i32) {
    %c0_i32 = arith.constant 0 : i32
    return %arg2, %arg1 : i32, i32
  }
  func.func @transform_2(%arg0: i32, %arg1: i32, %arg2: i32) -> (i32, i32) {
    %c0_i32 = arith.constant 0 : i32
    %c0_i32_0 = arith.constant 0 : i32
    return %c0_i32, %arg1 : i32, i32
  }
  func.func @transform_3(%arg0: i32, %arg1: i32, %arg2: i32) -> (i32, i32) {
    %c0_i32 = arith.constant 0 : i32
    return %arg0, %arg1 : i32, i32
  }
  func.func @transform_4(%arg0: i32, %arg1: i32, %arg2: i32) -> (i32, i32) {
    %c0_i32 = arith.constant 0 : i32
    return %arg0, %arg1 : i32, i32
  }
}

module attributes {stable_mosaic.version = 11 : i64} {
  func.func @_conv_kernel(%arg0: i32, %arg1: i32, %arg2: i32, %arg3: memref<32x128xbf16, #tpu.memory_space<vmem>>, %arg4: memref<128x128xbf16, #tpu.memory_space<vmem>>, %arg5: memref<1x128xf32, #tpu.memory_space<vmem>>, %arg6: memref<32x128xf32, #tpu.memory_space<vmem>>, %arg7: memref<32x128xf32, #tpu.memory_space<vmem>>) attributes {dimension_semantics = [#tpu.dimension_semantics<parallel>, #tpu.dimension_semantics<parallel>, #tpu.dimension_semantics<arbitrary>], iteration_bounds = array<i64: 1, 1, 1>, scalar_prefetch = 0 : i64, scratch_operands = 1 : i64, tpu.core_type = #tpu.core_type<tc>, window_params = [{transform_indices = @transform_0, window_bounds = array<i64: 32, 128>}, {transform_indices = @transform_1, window_bounds = array<i64: 128, 128>}, {transform_indices = @transform_2, window_bounds = array<i64: 1, 128>}, {transform_indices = @transform_3, window_bounds = array<i64: 32, 128>}]} {
    %c0_i32 = arith.constant 0 : i32
    %0 = arith.cmpi eq, %arg2, %c0_i32 : i32
    %1 = arith.extui %0 : i1 to i32
    %c0_i32_0 = arith.constant 0 : i32
    %2 = arith.cmpi ne, %1, %c0_i32_0 : i32
    scf.if %2 {
      %cst_10 = arith.constant 0.000000e+00 : f32
      %12 = vector.broadcast %cst_10 : f32 to vector<32x128xf32>
      %c0_11 = arith.constant 0 : index
      %c0_12 = arith.constant 0 : index
      %13 = vector.load %arg7[%c0_11, %c0_12] : memref<32x128xf32, #tpu.memory_space<vmem>>, vector<32x128xf32>
      tpu.vector_store %arg7[%c0_11, %c0_12], %12 {strides = array<i32>} : memref<32x128xf32, #tpu.memory_space<vmem>>, vector<32x128xf32>,
    } else {
    }
    %c0 = arith.constant 0 : index
    %c0_1 = arith.constant 0 : index
    %3 = vector.load %arg7[%c0, %c0_1] : memref<32x128xf32, #tpu.memory_space<vmem>>, vector<32x128xf32>
    %c0_2 = arith.constant 0 : index
    %c0_3 = arith.constant 0 : index
    %4 = vector.load %arg3[%c0_2, %c0_3] : memref<32x128xbf16, #tpu.memory_space<vmem>>, vector<32x128xbf16>
    %c0_4 = arith.constant 0 : index
    %c0_5 = arith.constant 0 : index
    %5 = vector.load %arg4[%c0_4, %c0_5] : memref<128x128xbf16, #tpu.memory_space<vmem>>, vector<128x128xbf16>
    %cst = arith.constant dense<0.000000e+00> : vector<32x128xf32>
    %6 = tpu.matmul %4, %5, %cst {dimension_numbers = #tpu.dot_dimension_numbers<[1], [0], [0], [1], [0, 0, 1, 1], [], []>} : vector<32x128xbf16>, vector<128x128xbf16>, vector<32x128xf32> -> vector<32x128xf32>
    %7 = arith.addf %3, %6 : vector<32x128xf32>
    %c0_6 = arith.constant 0 : index
    %c0_7 = arith.constant 0 : index
    %8 = vector.load %arg7[%c0_6, %c0_7] : memref<32x128xf32, #tpu.memory_space<vmem>>, vector<32x128xf32>
    tpu.vector_store %arg7[%c0_6, %c0_7], %7 {strides = array<i32>} : memref<32x128xf32, #tpu.memory_space<vmem>>, vector<32x128xf32>,
    %c0_i32_8 = arith.constant 0 : i32
    %9 = arith.cmpi eq, %arg2, %c0_i32_8 : i32
    %10 = arith.extui %9 : i1 to i32
    %c0_i32_9 = arith.constant 0 : i32
    %11 = arith.cmpi ne, %10, %c0_i32_9 : i32
    scf.if %11 {
      %c0_10 = arith.constant 0 : index
      %c0_11 = arith.constant 0 : index
      %12 = vector.load %arg7[%c0_10, %c0_11] : memref<32x128xf32, #tpu.memory_space<vmem>>, vector<32x128xf32>
      %c0_12 = arith.constant 0 : index
      %c0_13 = arith.constant 0 : index
      %13 = vector.load %arg5[%c0_12, %c0_13] : memref<1x128xf32, #tpu.memory_space<vmem>>, vector<1x128xf32>
      %14 = vector.broadcast %13 : vector<1x128xf32> to vector<32x128xf32>
      %15 = arith.addf %12, %14 : vector<32x128xf32>
      %c0_14 = arith.constant 0 : index
      %c0_15 = arith.constant 0 : index
      %16 = vector.load %arg6[%c0_14, %c0_15] : memref<32x128xf32, #tpu.memory_space<vmem>>, vector<32x128xf32>
      tpu.vector_store %arg6[%c0_14, %c0_15], %15 {strides = array<i32>} : memref<32x128xf32, #tpu.memory_space<vmem>>, vector<32x128xf32>,
    } else {
    }
    return
  }
  func.func @transform_0(%arg0: i32, %arg1: i32, %arg2: i32) -> (i32, i32) {
    %c0_i32 = arith.constant 0 : i32
    return %arg0, %arg2 : i32, i32
  }
  func.func @transform_1(%arg0: i32, %arg1: i32, %arg2: i32) -> (i32, i32) {
    %c0_i32 = arith.constant 0 : i32
    return %arg2, %arg1 : i32, i32
  }
  func.func @transform_2(%arg0: i32, %arg1: i32, %arg2: i32) -> (i32, i32) {
    %c0_i32 = arith.constant 0 : i32
    %c0_i32_0 = arith.constant 0 : i32
    return %c0_i32, %arg1 : i32, i32
  }
  func.func @transform_3(%arg0: i32, %arg1: i32, %arg2: i32) -> (i32, i32) {
    %c0_i32 = arith.constant 0 : i32
    return %arg0, %arg1 : i32, i32
  }
}

module attributes {stable_mosaic.version = 11 : i64} {
  func.func @_conv_kernel(%arg0: i32, %arg1: i32, %arg2: i32, %arg3: memref<32x128xbf16, #tpu.memory_space<vmem>>, %arg4: memref<128x128xbf16, #tpu.memory_space<vmem>>, %arg5: memref<1x128xf32, #tpu.memory_space<vmem>>, %arg6: memref<32x128xf32, #tpu.memory_space<vmem>>, %arg7: memref<32x128xf32, #tpu.memory_space<vmem>>) attributes {dimension_semantics = [#tpu.dimension_semantics<parallel>, #tpu.dimension_semantics<parallel>, #tpu.dimension_semantics<arbitrary>], iteration_bounds = array<i64: 1, 1, 1>, scalar_prefetch = 0 : i64, scratch_operands = 1 : i64, tpu.core_type = #tpu.core_type<tc>, window_params = [{transform_indices = @transform_0, window_bounds = array<i64: 32, 128>}, {transform_indices = @transform_1, window_bounds = array<i64: 128, 128>}, {transform_indices = @transform_2, window_bounds = array<i64: 1, 128>}, {transform_indices = @transform_3, window_bounds = array<i64: 32, 128>}]} {
    %c0_i32 = arith.constant 0 : i32
    %0 = arith.cmpi eq, %arg2, %c0_i32 : i32
    %1 = arith.extui %0 : i1 to i32
    %c0_i32_0 = arith.constant 0 : i32
    %2 = arith.cmpi ne, %1, %c0_i32_0 : i32
    scf.if %2 {
      %cst_10 = arith.constant 0.000000e+00 : f32
      %12 = vector.broadcast %cst_10 : f32 to vector<32x128xf32>
      %c0_11 = arith.constant 0 : index
      %c0_12 = arith.constant 0 : index
      %13 = vector.load %arg7[%c0_11, %c0_12] : memref<32x128xf32, #tpu.memory_space<vmem>>, vector<32x128xf32>
      tpu.vector_store %arg7[%c0_11, %c0_12], %12 {strides = array<i32>} : memref<32x128xf32, #tpu.memory_space<vmem>>, vector<32x128xf32>,
    } else {
    }
    %c0 = arith.constant 0 : index
    %c0_1 = arith.constant 0 : index
    %3 = vector.load %arg7[%c0, %c0_1] : memref<32x128xf32, #tpu.memory_space<vmem>>, vector<32x128xf32>
    %c0_2 = arith.constant 0 : index
    %c0_3 = arith.constant 0 : index
    %4 = vector.load %arg3[%c0_2, %c0_3] : memref<32x128xbf16, #tpu.memory_space<vmem>>, vector<32x128xbf16>
    %c0_4 = arith.constant 0 : index
    %c0_5 = arith.constant 0 : index
    %5 = vector.load %arg4[%c0_4, %c0_5] : memref<128x128xbf16, #tpu.memory_space<vmem>>, vector<128x128xbf16>
    %cst = arith.constant dense<0.000000e+00> : vector<32x128xf32>
    %6 = tpu.matmul %4, %5, %cst {dimension_numbers = #tpu.dot_dimension_numbers<[1], [0], [0], [1], [0, 0, 1, 1], [], []>} : vector<32x128xbf16>, vector<128x128xbf16>, vector<32x128xf32> -> vector<32x128xf32>
    %7 = arith.addf %3, %6 : vector<32x128xf32>
    %c0_6 = arith.constant 0 : index
    %c0_7 = arith.constant 0 : index
    %8 = vector.load %arg7[%c0_6, %c0_7] : memref<32x128xf32, #tpu.memory_space<vmem>>, vector<32x128xf32>
    tpu.vector_store %arg7[%c0_6, %c0_7], %7 {strides = array<i32>} : memref<32x128xf32, #tpu.memory_space<vmem>>, vector<32x128xf32>,
    %c0_i32_8 = arith.constant 0 : i32
    %9 = arith.cmpi eq, %arg2, %c0_i32_8 : i32
    %10 = arith.extui %9 : i1 to i32
    %c0_i32_9 = arith.constant 0 : i32
    %11 = arith.cmpi ne, %10, %c0_i32_9 : i32
    scf.if %11 {
      %c0_10 = arith.constant 0 : index
      %c0_11 = arith.constant 0 : index
      %12 = vector.load %arg7[%c0_10, %c0_11] : memref<32x128xf32, #tpu.memory_space<vmem>>, vector<32x128xf32>
      %c0_12 = arith.constant 0 : index
      %c0_13 = arith.constant 0 : index
      %13 = vector.load %arg5[%c0_12, %c0_13] : memref<1x128xf32, #tpu.memory_space<vmem>>, vector<1x128xf32>
      %14 = vector.broadcast %13 : vector<1x128xf32> to vector<32x128xf32>
      %15 = arith.addf %12, %14 : vector<32x128xf32>
      %cst_14 = arith.constant 0.000000e+00 : f32
      %16 = vector.broadcast %cst_14 : f32 to vector<32x128xf32>
      %17 = arith.cmpf oge, %15, %16 : vector<32x128xf32>
      %cst_15 = arith.constant 2.000000e-01 : f32
      %18 = vector.broadcast %cst_15 : f32 to vector<32x128xf32>
      %19 = arith.mulf %18, %15 : vector<32x128xf32>
      %20 = arith.select %17, %15, %19 : vector<32x128xi1>, vector<32x128xf32>
      %c0_16 = arith.constant 0 : index
      %c0_17 = arith.constant 0 : index
      %21 = vector.load %arg6[%c0_16, %c0_17] : memref<32x128xf32, #tpu.memory_space<vmem>>, vector<32x128xf32>
      tpu.vector_store %arg6[%c0_16, %c0_17], %20 {strides = array<i32>} : memref<32x128xf32, #tpu.memory_space<vmem>>, vector<32x128xf32>,
    } else {
    }
    return
  }
  func.func @transform_0(%arg0: i32, %arg1: i32, %arg2: i32) -> (i32, i32) {
    %c0_i32 = arith.constant 0 : i32
    return %arg0, %arg2 : i32, i32
  }
  func.func @transform_1(%arg0: i32, %arg1: i32, %arg2: i32) -> (i32, i32) {
    %c0_i32 = arith.constant 0 : i32
    return %arg2, %arg1 : i32, i32
  }
  func.func @transform_2(%arg0: i32, %arg1: i32, %arg2: i32) -> (i32, i32) {
    %c0_i32 = arith.constant 0 : i32
    %c0_i32_0 = arith.constant 0 : i32
    return %c0_i32, %arg1 : i32, i32
  }
  func.func @transform_3(%arg0: i32, %arg1: i32, %arg2: i32) -> (i32, i32) {
    %c0_i32 = arith.constant 0 : i32
    return %arg0, %arg1 : i32, i32
  }
}

module attributes {stable_mosaic.version = 11 : i64} {
  func.func @_conv_kernel(%arg0: i32, %arg1: i32, %arg2: i32, %arg3: memref<32x256xbf16, #tpu.memory_space<vmem>>, %arg4: memref<256x128xbf16, #tpu.memory_space<vmem>>, %arg5: memref<1x128xf32, #tpu.memory_space<vmem>>, %arg6: memref<32x128xf32, #tpu.memory_space<vmem>>, %arg7: memref<32x128xf32, #tpu.memory_space<vmem>>) attributes {dimension_semantics = [#tpu.dimension_semantics<parallel>, #tpu.dimension_semantics<parallel>, #tpu.dimension_semantics<arbitrary>], iteration_bounds = array<i64: 1, 1, 1>, scalar_prefetch = 0 : i64, scratch_operands = 1 : i64, tpu.core_type = #tpu.core_type<tc>, window_params = [{transform_indices = @transform_0, window_bounds = array<i64: 32, 256>}, {transform_indices = @transform_1, window_bounds = array<i64: 256, 128>}, {transform_indices = @transform_2, window_bounds = array<i64: 1, 128>}, {transform_indices = @transform_3, window_bounds = array<i64: 32, 128>}]} {
    %c0_i32 = arith.constant 0 : i32
    %0 = arith.cmpi eq, %arg2, %c0_i32 : i32
    %1 = arith.extui %0 : i1 to i32
    %c0_i32_0 = arith.constant 0 : i32
    %2 = arith.cmpi ne, %1, %c0_i32_0 : i32
    scf.if %2 {
      %cst_10 = arith.constant 0.000000e+00 : f32
      %12 = vector.broadcast %cst_10 : f32 to vector<32x128xf32>
      %c0_11 = arith.constant 0 : index
      %c0_12 = arith.constant 0 : index
      %13 = vector.load %arg7[%c0_11, %c0_12] : memref<32x128xf32, #tpu.memory_space<vmem>>, vector<32x128xf32>
      tpu.vector_store %arg7[%c0_11, %c0_12], %12 {strides = array<i32>} : memref<32x128xf32, #tpu.memory_space<vmem>>, vector<32x128xf32>,
    } else {
    }
    %c0 = arith.constant 0 : index
    %c0_1 = arith.constant 0 : index
    %3 = vector.load %arg7[%c0, %c0_1] : memref<32x128xf32, #tpu.memory_space<vmem>>, vector<32x128xf32>
    %c0_2 = arith.constant 0 : index
    %c0_3 = arith.constant 0 : index
    %4 = vector.load %arg3[%c0_2, %c0_3] : memref<32x256xbf16, #tpu.memory_space<vmem>>, vector<32x256xbf16>
    %c0_4 = arith.constant 0 : index
    %c0_5 = arith.constant 0 : index
    %5 = vector.load %arg4[%c0_4, %c0_5] : memref<256x128xbf16, #tpu.memory_space<vmem>>, vector<256x128xbf16>
    %cst = arith.constant dense<0.000000e+00> : vector<32x128xf32>
    %6 = tpu.matmul %4, %5, %cst {dimension_numbers = #tpu.dot_dimension_numbers<[1], [0], [0], [1], [0, 0, 1, 1], [], []>} : vector<32x256xbf16>, vector<256x128xbf16>, vector<32x128xf32> -> vector<32x128xf32>
    %7 = arith.addf %3, %6 : vector<32x128xf32>
    %c0_6 = arith.constant 0 : index
    %c0_7 = arith.constant 0 : index
    %8 = vector.load %arg7[%c0_6, %c0_7] : memref<32x128xf32, #tpu.memory_space<vmem>>, vector<32x128xf32>
    tpu.vector_store %arg7[%c0_6, %c0_7], %7 {strides = array<i32>} : memref<32x128xf32, #tpu.memory_space<vmem>>, vector<32x128xf32>,
    %c0_i32_8 = arith.constant 0 : i32
    %9 = arith.cmpi eq, %arg2, %c0_i32_8 : i32
    %10 = arith.extui %9 : i1 to i32
    %c0_i32_9 = arith.constant 0 : i32
    %11 = arith.cmpi ne, %10, %c0_i32_9 : i32
    scf.if %11 {
      %c0_10 = arith.constant 0 : index
      %c0_11 = arith.constant 0 : index
      %12 = vector.load %arg7[%c0_10, %c0_11] : memref<32x128xf32, #tpu.memory_space<vmem>>, vector<32x128xf32>
      %c0_12 = arith.constant 0 : index
      %c0_13 = arith.constant 0 : index
      %13 = vector.load %arg5[%c0_12, %c0_13] : memref<1x128xf32, #tpu.memory_space<vmem>>, vector<1x128xf32>
      %14 = vector.broadcast %13 : vector<1x128xf32> to vector<32x128xf32>
      %15 = arith.addf %12, %14 : vector<32x128xf32>
      %cst_14 = arith.constant 0.000000e+00 : f32
      %16 = vector.broadcast %cst_14 : f32 to vector<32x128xf32>
      %17 = arith.cmpf oge, %15, %16 : vector<32x128xf32>
      %cst_15 = arith.constant 2.000000e-01 : f32
      %18 = vector.broadcast %cst_15 : f32 to vector<32x128xf32>
      %19 = arith.mulf %18, %15 : vector<32x128xf32>
      %20 = arith.select %17, %15, %19 : vector<32x128xi1>, vector<32x128xf32>
      %c0_16 = arith.constant 0 : index
      %c0_17 = arith.constant 0 : index
      %21 = vector.load %arg6[%c0_16, %c0_17] : memref<32x128xf32, #tpu.memory_space<vmem>>, vector<32x128xf32>
      tpu.vector_store %arg6[%c0_16, %c0_17], %20 {strides = array<i32>} : memref<32x128xf32, #tpu.memory_space<vmem>>, vector<32x128xf32>,
    } else {
    }
    return
  }
  func.func @transform_0(%arg0: i32, %arg1: i32, %arg2: i32) -> (i32, i32) {
    %c0_i32 = arith.constant 0 : i32
    return %arg0, %arg2 : i32, i32
  }
  func.func @transform_1(%arg0: i32, %arg1: i32, %arg2: i32) -> (i32, i32) {
    %c0_i32 = arith.constant 0 : i32
    return %arg2, %arg1 : i32, i32
  }
  func.func @transform_2(%arg0: i32, %arg1: i32, %arg2: i32) -> (i32, i32) {
    %c0_i32 = arith.constant 0 : i32
    %c0_i32_0 = arith.constant 0 : i32
    return %c0_i32, %arg1 : i32, i32
  }
  func.func @transform_3(%arg0: i32, %arg1: i32, %arg2: i32) -> (i32, i32) {
    %c0_i32 = arith.constant 0 : i32
    return %arg0, %arg1 : i32, i32
  }
}

module attributes {stable_mosaic.version = 11 : i64} {
  func.func @_conv_res_kernel(%arg0: i32, %arg1: i32, %arg2: i32, %arg3: memref<32x128xbf16, #tpu.memory_space<vmem>>, %arg4: memref<128x128xbf16, #tpu.memory_space<vmem>>, %arg5: memref<1x128xf32, #tpu.memory_space<vmem>>, %arg6: memref<32x128xf32, #tpu.memory_space<vmem>>, %arg7: memref<32x128xf32, #tpu.memory_space<vmem>>, %arg8: memref<32x128xf32, #tpu.memory_space<vmem>>) attributes {dimension_semantics = [#tpu.dimension_semantics<parallel>, #tpu.dimension_semantics<parallel>, #tpu.dimension_semantics<arbitrary>], iteration_bounds = array<i64: 1, 1, 1>, scalar_prefetch = 0 : i64, scratch_operands = 1 : i64, tpu.core_type = #tpu.core_type<tc>, window_params = [{transform_indices = @transform_0, window_bounds = array<i64: 32, 128>}, {transform_indices = @transform_1, window_bounds = array<i64: 128, 128>}, {transform_indices = @transform_2, window_bounds = array<i64: 1, 128>}, {transform_indices = @transform_3, window_bounds = array<i64: 32, 128>}, {transform_indices = @transform_4, window_bounds = array<i64: 32, 128>}]} {
    %c0_i32 = arith.constant 0 : i32
    %0 = arith.cmpi eq, %arg2, %c0_i32 : i32
    %1 = arith.extui %0 : i1 to i32
    %c0_i32_0 = arith.constant 0 : i32
    %2 = arith.cmpi ne, %1, %c0_i32_0 : i32
    scf.if %2 {
      %cst_10 = arith.constant 0.000000e+00 : f32
      %12 = vector.broadcast %cst_10 : f32 to vector<32x128xf32>
      %c0_11 = arith.constant 0 : index
      %c0_12 = arith.constant 0 : index
      %13 = vector.load %arg8[%c0_11, %c0_12] : memref<32x128xf32, #tpu.memory_space<vmem>>, vector<32x128xf32>
      tpu.vector_store %arg8[%c0_11, %c0_12], %12 {strides = array<i32>} : memref<32x128xf32, #tpu.memory_space<vmem>>, vector<32x128xf32>,
    } else {
    }
    %c0 = arith.constant 0 : index
    %c0_1 = arith.constant 0 : index
    %3 = vector.load %arg8[%c0, %c0_1] : memref<32x128xf32, #tpu.memory_space<vmem>>, vector<32x128xf32>
    %c0_2 = arith.constant 0 : index
    %c0_3 = arith.constant 0 : index
    %4 = vector.load %arg3[%c0_2, %c0_3] : memref<32x128xbf16, #tpu.memory_space<vmem>>, vector<32x128xbf16>
    %c0_4 = arith.constant 0 : index
    %c0_5 = arith.constant 0 : index
    %5 = vector.load %arg4[%c0_4, %c0_5] : memref<128x128xbf16, #tpu.memory_space<vmem>>, vector<128x128xbf16>
    %cst = arith.constant dense<0.000000e+00> : vector<32x128xf32>
    %6 = tpu.matmul %4, %5, %cst {dimension_numbers = #tpu.dot_dimension_numbers<[1], [0], [0], [1], [0, 0, 1, 1], [], []>} : vector<32x128xbf16>, vector<128x128xbf16>, vector<32x128xf32> -> vector<32x128xf32>
    %7 = arith.addf %3, %6 : vector<32x128xf32>
    %c0_6 = arith.constant 0 : index
    %c0_7 = arith.constant 0 : index
    %8 = vector.load %arg8[%c0_6, %c0_7] : memref<32x128xf32, #tpu.memory_space<vmem>>, vector<32x128xf32>
    tpu.vector_store %arg8[%c0_6, %c0_7], %7 {strides = array<i32>} : memref<32x128xf32, #tpu.memory_space<vmem>>, vector<32x128xf32>,
    %c0_i32_8 = arith.constant 0 : i32
    %9 = arith.cmpi eq, %arg2, %c0_i32_8 : i32
    %10 = arith.extui %9 : i1 to i32
    %c0_i32_9 = arith.constant 0 : i32
    %11 = arith.cmpi ne, %10, %c0_i32_9 : i32
    scf.if %11 {
      %c0_10 = arith.constant 0 : index
      %c0_11 = arith.constant 0 : index
      %12 = vector.load %arg8[%c0_10, %c0_11] : memref<32x128xf32, #tpu.memory_space<vmem>>, vector<32x128xf32>
      %c0_12 = arith.constant 0 : index
      %c0_13 = arith.constant 0 : index
      %13 = vector.load %arg5[%c0_12, %c0_13] : memref<1x128xf32, #tpu.memory_space<vmem>>, vector<1x128xf32>
      %14 = vector.broadcast %13 : vector<1x128xf32> to vector<32x128xf32>
      %15 = arith.addf %12, %14 : vector<32x128xf32>
      %c0_14 = arith.constant 0 : index
      %c0_15 = arith.constant 0 : index
      %16 = vector.load %arg6[%c0_14, %c0_15] : memref<32x128xf32, #tpu.memory_space<vmem>>, vector<32x128xf32>
      %17 = arith.addf %15, %16 : vector<32x128xf32>
      %cst_16 = arith.constant 0.000000e+00 : f32
      %18 = vector.broadcast %cst_16 : f32 to vector<32x128xf32>
      %19 = arith.cmpf oge, %17, %18 : vector<32x128xf32>
      %cst_17 = arith.constant 0.00999999977 : f32
      %20 = vector.broadcast %cst_17 : f32 to vector<32x128xf32>
      %21 = arith.mulf %20, %17 : vector<32x128xf32>
      %22 = arith.select %19, %17, %21 : vector<32x128xi1>, vector<32x128xf32>
      %c0_18 = arith.constant 0 : index
      %c0_19 = arith.constant 0 : index
      %23 = vector.load %arg7[%c0_18, %c0_19] : memref<32x128xf32, #tpu.memory_space<vmem>>, vector<32x128xf32>
      tpu.vector_store %arg7[%c0_18, %c0_19], %22 {strides = array<i32>} : memref<32x128xf32, #tpu.memory_space<vmem>>, vector<32x128xf32>,
    } else {
    }
    return
  }
  func.func @transform_0(%arg0: i32, %arg1: i32, %arg2: i32) -> (i32, i32) {
    %c0_i32 = arith.constant 0 : i32
    return %arg0, %arg2 : i32, i32
  }
  func.func @transform_1(%arg0: i32, %arg1: i32, %arg2: i32) -> (i32, i32) {
    %c0_i32 = arith.constant 0 : i32
    return %arg2, %arg1 : i32, i32
  }
  func.func @transform_2(%arg0: i32, %arg1: i32, %arg2: i32) -> (i32, i32) {
    %c0_i32 = arith.constant 0 : i32
    %c0_i32_0 = arith.constant 0 : i32
    return %c0_i32, %arg1 : i32, i32
  }
  func.func @transform_3(%arg0: i32, %arg1: i32, %arg2: i32) -> (i32, i32) {
    %c0_i32 = arith.constant 0 : i32
    return %arg0, %arg1 : i32, i32
  }
  func.func @transform_4(%arg0: i32, %arg1: i32, %arg2: i32) -> (i32, i32) {
    %c0_i32 = arith.constant 0 : i32
    return %arg0, %arg1 : i32, i32
  }
}

module attributes {stable_mosaic.version = 11 : i64} {
  func.func @_vae_head_kernel(%arg0: i32, %arg1: memref<32x128xbf16, #tpu.memory_space<vmem>>, %arg2: memref<128x128xbf16, #tpu.memory_space<vmem>>, %arg3: memref<1x128xf32, #tpu.memory_space<vmem>>, %arg4: memref<128x128xbf16, #tpu.memory_space<vmem>>, %arg5: memref<1x128xf32, #tpu.memory_space<vmem>>, %arg6: memref<32x128xf32, #tpu.memory_space<vmem>>, %arg7: memref<128x128xbf16, #tpu.memory_space<vmem>>, %arg8: memref<1x128xf32, #tpu.memory_space<vmem>>, %arg9: memref<32x128xf32, #tpu.memory_space<vmem>>, %arg10: memref<32x128xf32, #tpu.memory_space<vmem>>, %arg11: memref<32x128xf32, #tpu.memory_space<vmem>>) attributes {dimension_semantics = [#tpu.dimension_semantics<parallel>], iteration_bounds = array<i64: 1>, scalar_prefetch = 0 : i64, scratch_operands = 0 : i64, tpu.core_type = #tpu.core_type<tc>, window_params = [{transform_indices = @transform_0, window_bounds = array<i64: 32, 128>}, {pipeline_mode = #tpu.pipeline_mode<synchronous>, transform_indices = @transform_1, window_bounds = array<i64: 128, 128>}, {pipeline_mode = #tpu.pipeline_mode<synchronous>, transform_indices = @transform_2, window_bounds = array<i64: 1, 128>}, {pipeline_mode = #tpu.pipeline_mode<synchronous>, transform_indices = @transform_3, window_bounds = array<i64: 128, 128>}, {pipeline_mode = #tpu.pipeline_mode<synchronous>, transform_indices = @transform_4, window_bounds = array<i64: 1, 128>}, {transform_indices = @transform_5, window_bounds = array<i64: 32, 128>}, {pipeline_mode = #tpu.pipeline_mode<synchronous>, transform_indices = @transform_6, window_bounds = array<i64: 128, 128>}, {pipeline_mode = #tpu.pipeline_mode<synchronous>, transform_indices = @transform_7, window_bounds = array<i64: 1, 128>}, {transform_indices = @transform_8, window_bounds = array<i64: 32, 128>}, {transform_indices = @transform_9, window_bounds = array<i64: 32, 128>}, {transform_indices = @transform_10, window_bounds = array<i64: 32, 128>}]} {
    %c0 = arith.constant 0 : index
    %c0_0 = arith.constant 0 : index
    %0 = vector.load %arg1[%c0, %c0_0] : memref<32x128xbf16, #tpu.memory_space<vmem>>, vector<32x128xbf16>
    %c0_1 = arith.constant 0 : index
    %c0_2 = arith.constant 0 : index
    %1 = vector.load %arg2[%c0_1, %c0_2] : memref<128x128xbf16, #tpu.memory_space<vmem>>, vector<128x128xbf16>
    %cst = arith.constant dense<0.000000e+00> : vector<32x128xf32>
    %2 = tpu.matmul %0, %1, %cst {dimension_numbers = #tpu.dot_dimension_numbers<[1], [0], [0], [1], [0, 0, 1, 1], [], []>} : vector<32x128xbf16>, vector<128x128xbf16>, vector<32x128xf32> -> vector<32x128xf32>
    %c0_3 = arith.constant 0 : index
    %c0_4 = arith.constant 0 : index
    %3 = vector.load %arg3[%c0_3, %c0_4] : memref<1x128xf32, #tpu.memory_space<vmem>>, vector<1x128xf32>
    %4 = vector.broadcast %3 : vector<1x128xf32> to vector<32x128xf32>
    %5 = arith.addf %2, %4 : vector<32x128xf32>
    %c0_5 = arith.constant 0 : index
    %c0_6 = arith.constant 0 : index
    %6 = vector.load %arg4[%c0_5, %c0_6] : memref<128x128xbf16, #tpu.memory_space<vmem>>, vector<128x128xbf16>
    %cst_7 = arith.constant dense<0.000000e+00> : vector<32x128xf32>
    %7 = tpu.matmul %0, %6, %cst_7 {dimension_numbers = #tpu.dot_dimension_numbers<[1], [0], [0], [1], [0, 0, 1, 1], [], []>} : vector<32x128xbf16>, vector<128x128xbf16>, vector<32x128xf32> -> vector<32x128xf32>
    %c0_8 = arith.constant 0 : index
    %c0_9 = arith.constant 0 : index
    %8 = vector.load %arg5[%c0_8, %c0_9] : memref<1x128xf32, #tpu.memory_space<vmem>>, vector<1x128xf32>
    %9 = vector.broadcast %8 : vector<1x128xf32> to vector<32x128xf32>
    %10 = arith.addf %7, %9 : vector<32x128xf32>
    %c0_10 = arith.constant 0 : index
    %c0_11 = arith.constant 0 : index
    %11 = vector.load %arg10[%c0_10, %c0_11] : memref<32x128xf32, #tpu.memory_space<vmem>>, vector<32x128xf32>
    tpu.vector_store %arg10[%c0_10, %c0_11], %5 {strides = array<i32>} : memref<32x128xf32, #tpu.memory_space<vmem>>, vector<32x128xf32>,
    %c0_12 = arith.constant 0 : index
    %c0_13 = arith.constant 0 : index
    %12 = vector.load %arg11[%c0_12, %c0_13] : memref<32x128xf32, #tpu.memory_space<vmem>>, vector<32x128xf32>
    tpu.vector_store %arg11[%c0_12, %c0_13], %10 {strides = array<i32>} : memref<32x128xf32, #tpu.memory_space<vmem>>, vector<32x128xf32>,
    %c0_14 = arith.constant 0 : index
    %c0_15 = arith.constant 0 : index
    %13 = vector.load %arg6[%c0_14, %c0_15] : memref<32x128xf32, #tpu.memory_space<vmem>>, vector<32x128xf32>
    %cst_16 = arith.constant 5.000000e-01 : f32
    %14 = vector.broadcast %cst_16 : f32 to vector<32x128xf32>
    %15 = arith.mulf %14, %10 : vector<32x128xf32>
    %16 = math.exp %15 : vector<32x128xf32>
    %17 = arith.mulf %13, %16 : vector<32x128xf32>
    %18 = arith.addf %5, %17 : vector<32x128xf32>
    %19 = arith.truncf %18 : vector<32x128xf32> to vector<32x128xbf16>
    %c0_17 = arith.constant 0 : index
    %c0_18 = arith.constant 0 : index
    %20 = vector.load %arg7[%c0_17, %c0_18] : memref<128x128xbf16, #tpu.memory_space<vmem>>, vector<128x128xbf16>
    %cst_19 = arith.constant dense<0.000000e+00> : vector<32x128xf32>
    %21 = tpu.matmul %19, %20, %cst_19 {dimension_numbers = #tpu.dot_dimension_numbers<[1], [0], [0], [1], [0, 0, 1, 1], [], []>} : vector<32x128xbf16>, vector<128x128xbf16>, vector<32x128xf32> -> vector<32x128xf32>
    %c0_20 = arith.constant 0 : index
    %c0_21 = arith.constant 0 : index
    %22 = vector.load %arg8[%c0_20, %c0_21] : memref<1x128xf32, #tpu.memory_space<vmem>>, vector<1x128xf32>
    %23 = vector.broadcast %22 : vector<1x128xf32> to vector<32x128xf32>
    %24 = arith.addf %21, %23 : vector<32x128xf32>
    %c0_22 = arith.constant 0 : index
    %c0_23 = arith.constant 0 : index
    %25 = vector.load %arg9[%c0_22, %c0_23] : memref<32x128xf32, #tpu.memory_space<vmem>>, vector<32x128xf32>
    tpu.vector_store %arg9[%c0_22, %c0_23], %24 {strides = array<i32>} : memref<32x128xf32, #tpu.memory_space<vmem>>, vector<32x128xf32>,
    return
  }
  func.func @transform_0(%arg0: i32) -> (i32, i32) {
    %c0_i32 = arith.constant 0 : i32
    %c0_i32_0 = arith.constant 0 : i32
    return %arg0, %c0_i32 : i32, i32
  }
  func.func @transform_1(%arg0: i32) -> (i32, i32) {
    %c0_i32 = arith.constant 0 : i32
    %c0_i32_0 = arith.constant 0 : i32
    %c0_i32_1 = arith.constant 0 : i32
    return %c0_i32, %c0_i32_0 : i32, i32
  }
  func.func @transform_2(%arg0: i32) -> (i32, i32) {
    %c0_i32 = arith.constant 0 : i32
    %c0_i32_0 = arith.constant 0 : i32
    %c0_i32_1 = arith.constant 0 : i32
    return %c0_i32, %c0_i32_0 : i32, i32
  }
  func.func @transform_3(%arg0: i32) -> (i32, i32) {
    %c0_i32 = arith.constant 0 : i32
    %c0_i32_0 = arith.constant 0 : i32
    %c0_i32_1 = arith.constant 0 : i32
    return %c0_i32, %c0_i32_0 : i32, i32
  }
  func.func @transform_4(%arg0: i32) -> (i32, i32) {
    %c0_i32 = arith.constant 0 : i32
    %c0_i32_0 = arith.constant 0 : i32
    %c0_i32_1 = arith.constant 0 : i32
    return %c0_i32, %c0_i32_0 : i32, i32
  }
  func.func @transform_5(%arg0: i32) -> (i32, i32) {
    %c0_i32 = arith.constant 0 : i32
    %c0_i32_0 = arith.constant 0 : i32
    return %arg0, %c0_i32 : i32, i32
  }
  func.func @transform_6(%arg0: i32) -> (i32, i32) {
    %c0_i32 = arith.constant 0 : i32
    %c0_i32_0 = arith.constant 0 : i32
    %c0_i32_1 = arith.constant 0 : i32
    return %c0_i32, %c0_i32_0 : i32, i32
  }
  func.func @transform_7(%arg0: i32) -> (i32, i32) {
    %c0_i32 = arith.constant 0 : i32
    %c0_i32_0 = arith.constant 0 : i32
    %c0_i32_1 = arith.constant 0 : i32
    return %c0_i32, %c0_i32_0 : i32, i32
  }
  func.func @transform_8(%arg0: i32) -> (i32, i32) {
    %c0_i32 = arith.constant 0 : i32
    %c0_i32_0 = arith.constant 0 : i32
    return %arg0, %c0_i32 : i32, i32
  }
  func.func @transform_9(%arg0: i32) -> (i32, i32) {
    %c0_i32 = arith.constant 0 : i32
    %c0_i32_0 = arith.constant 0 : i32
    return %arg0, %c0_i32 : i32, i32
  }
  func.func @transform_10(%arg0: i32) -> (i32, i32) {
    %c0_i32 = arith.constant 0 : i32
    %c0_i32_0 = arith.constant 0 : i32
    return %arg0, %c0_i32 : i32, i32
  }
}

module attributes {stable_mosaic.version = 11 : i64} {
  func.func @_conv_kernel(%arg0: i32, %arg1: i32, %arg2: i32, %arg3: memref<32x384xbf16, #tpu.memory_space<vmem>>, %arg4: memref<384x128xbf16, #tpu.memory_space<vmem>>, %arg5: memref<1x128xf32, #tpu.memory_space<vmem>>, %arg6: memref<32x128xf32, #tpu.memory_space<vmem>>, %arg7: memref<32x128xf32, #tpu.memory_space<vmem>>) attributes {dimension_semantics = [#tpu.dimension_semantics<parallel>, #tpu.dimension_semantics<parallel>, #tpu.dimension_semantics<arbitrary>], iteration_bounds = array<i64: 1, 1, 1>, scalar_prefetch = 0 : i64, scratch_operands = 1 : i64, tpu.core_type = #tpu.core_type<tc>, window_params = [{transform_indices = @transform_0, window_bounds = array<i64: 32, 384>}, {transform_indices = @transform_1, window_bounds = array<i64: 384, 128>}, {transform_indices = @transform_2, window_bounds = array<i64: 1, 128>}, {transform_indices = @transform_3, window_bounds = array<i64: 32, 128>}]} {
    %c0_i32 = arith.constant 0 : i32
    %0 = arith.cmpi eq, %arg2, %c0_i32 : i32
    %1 = arith.extui %0 : i1 to i32
    %c0_i32_0 = arith.constant 0 : i32
    %2 = arith.cmpi ne, %1, %c0_i32_0 : i32
    scf.if %2 {
      %cst_10 = arith.constant 0.000000e+00 : f32
      %12 = vector.broadcast %cst_10 : f32 to vector<32x128xf32>
      %c0_11 = arith.constant 0 : index
      %c0_12 = arith.constant 0 : index
      %13 = vector.load %arg7[%c0_11, %c0_12] : memref<32x128xf32, #tpu.memory_space<vmem>>, vector<32x128xf32>
      tpu.vector_store %arg7[%c0_11, %c0_12], %12 {strides = array<i32>} : memref<32x128xf32, #tpu.memory_space<vmem>>, vector<32x128xf32>,
    } else {
    }
    %c0 = arith.constant 0 : index
    %c0_1 = arith.constant 0 : index
    %3 = vector.load %arg7[%c0, %c0_1] : memref<32x128xf32, #tpu.memory_space<vmem>>, vector<32x128xf32>
    %c0_2 = arith.constant 0 : index
    %c0_3 = arith.constant 0 : index
    %4 = vector.load %arg3[%c0_2, %c0_3] : memref<32x384xbf16, #tpu.memory_space<vmem>>, vector<32x384xbf16>
    %c0_4 = arith.constant 0 : index
    %c0_5 = arith.constant 0 : index
    %5 = vector.load %arg4[%c0_4, %c0_5] : memref<384x128xbf16, #tpu.memory_space<vmem>>, vector<384x128xbf16>
    %cst = arith.constant dense<0.000000e+00> : vector<32x128xf32>
    %6 = tpu.matmul %4, %5, %cst {dimension_numbers = #tpu.dot_dimension_numbers<[1], [0], [0], [1], [0, 0, 1, 1], [], []>} : vector<32x384xbf16>, vector<384x128xbf16>, vector<32x128xf32> -> vector<32x128xf32>
    %7 = arith.addf %3, %6 : vector<32x128xf32>
    %c0_6 = arith.constant 0 : index
    %c0_7 = arith.constant 0 : index
    %8 = vector.load %arg7[%c0_6, %c0_7] : memref<32x128xf32, #tpu.memory_space<vmem>>, vector<32x128xf32>
    tpu.vector_store %arg7[%c0_6, %c0_7], %7 {strides = array<i32>} : memref<32x128xf32, #tpu.memory_space<vmem>>, vector<32x128xf32>,
    %c0_i32_8 = arith.constant 0 : i32
    %9 = arith.cmpi eq, %arg2, %c0_i32_8 : i32
    %10 = arith.extui %9 : i1 to i32
    %c0_i32_9 = arith.constant 0 : i32
    %11 = arith.cmpi ne, %10, %c0_i32_9 : i32
    scf.if %11 {
      %c0_10 = arith.constant 0 : index
      %c0_11 = arith.constant 0 : index
      %12 = vector.load %arg7[%c0_10, %c0_11] : memref<32x128xf32, #tpu.memory_space<vmem>>, vector<32x128xf32>
      %c0_12 = arith.constant 0 : index
      %c0_13 = arith.constant 0 : index
      %13 = vector.load %arg5[%c0_12, %c0_13] : memref<1x128xf32, #tpu.memory_space<vmem>>, vector<1x128xf32>
      %14 = vector.broadcast %13 : vector<1x128xf32> to vector<32x128xf32>
      %15 = arith.addf %12, %14 : vector<32x128xf32>
      %c0_14 = arith.constant 0 : index
      %c0_15 = arith.constant 0 : index
      %16 = vector.load %arg6[%c0_14, %c0_15] : memref<32x128xf32, #tpu.memory_space<vmem>>, vector<32x128xf32>
      tpu.vector_store %arg6[%c0_14, %c0_15], %15 {strides = array<i32>} : memref<32x128xf32, #tpu.memory_space<vmem>>, vector<32x128xf32>,
    } else {
    }
    return
  }
  func.func @transform_0(%arg0: i32, %arg1: i32, %arg2: i32) -> (i32, i32) {
    %c0_i32 = arith.constant 0 : i32
    return %arg0, %arg2 : i32, i32
  }
  func.func @transform_1(%arg0: i32, %arg1: i32, %arg2: i32) -> (i32, i32) {
    %c0_i32 = arith.constant 0 : i32
    return %arg2, %arg1 : i32, i32
  }
  func.func @transform_2(%arg0: i32, %arg1: i32, %arg2: i32) -> (i32, i32) {
    %c0_i32 = arith.constant 0 : i32
    %c0_i32_0 = arith.constant 0 : i32
    return %c0_i32, %arg1 : i32, i32
  }
  func.func @transform_3(%arg0: i32, %arg1: i32, %arg2: i32) -> (i32, i32) {
    %c0_i32 = arith.constant 0 : i32
    return %arg0, %arg1 : i32, i32
  }
}

module attributes {stable_mosaic.version = 11 : i64} {
  func.func @_conv_kernel(%arg0: i32, %arg1: i32, %arg2: i32, %arg3: memref<128x384xbf16, #tpu.memory_space<vmem>>, %arg4: memref<384x128xbf16, #tpu.memory_space<vmem>>, %arg5: memref<1x128xf32, #tpu.memory_space<vmem>>, %arg6: memref<128x128xf32, #tpu.memory_space<vmem>>, %arg7: memref<128x128xf32, #tpu.memory_space<vmem>>) attributes {dimension_semantics = [#tpu.dimension_semantics<parallel>, #tpu.dimension_semantics<parallel>, #tpu.dimension_semantics<arbitrary>], iteration_bounds = array<i64: 1, 1, 1>, scalar_prefetch = 0 : i64, scratch_operands = 1 : i64, tpu.core_type = #tpu.core_type<tc>, window_params = [{transform_indices = @transform_0, window_bounds = array<i64: 128, 384>}, {transform_indices = @transform_1, window_bounds = array<i64: 384, 128>}, {transform_indices = @transform_2, window_bounds = array<i64: 1, 128>}, {transform_indices = @transform_3, window_bounds = array<i64: 128, 128>}]} {
    %c0_i32 = arith.constant 0 : i32
    %0 = arith.cmpi eq, %arg2, %c0_i32 : i32
    %1 = arith.extui %0 : i1 to i32
    %c0_i32_0 = arith.constant 0 : i32
    %2 = arith.cmpi ne, %1, %c0_i32_0 : i32
    scf.if %2 {
      %cst_10 = arith.constant 0.000000e+00 : f32
      %12 = vector.broadcast %cst_10 : f32 to vector<128x128xf32>
      %c0_11 = arith.constant 0 : index
      %c0_12 = arith.constant 0 : index
      %13 = vector.load %arg7[%c0_11, %c0_12] : memref<128x128xf32, #tpu.memory_space<vmem>>, vector<128x128xf32>
      tpu.vector_store %arg7[%c0_11, %c0_12], %12 {strides = array<i32>} : memref<128x128xf32, #tpu.memory_space<vmem>>, vector<128x128xf32>,
    } else {
    }
    %c0 = arith.constant 0 : index
    %c0_1 = arith.constant 0 : index
    %3 = vector.load %arg7[%c0, %c0_1] : memref<128x128xf32, #tpu.memory_space<vmem>>, vector<128x128xf32>
    %c0_2 = arith.constant 0 : index
    %c0_3 = arith.constant 0 : index
    %4 = vector.load %arg3[%c0_2, %c0_3] : memref<128x384xbf16, #tpu.memory_space<vmem>>, vector<128x384xbf16>
    %c0_4 = arith.constant 0 : index
    %c0_5 = arith.constant 0 : index
    %5 = vector.load %arg4[%c0_4, %c0_5] : memref<384x128xbf16, #tpu.memory_space<vmem>>, vector<384x128xbf16>
    %cst = arith.constant dense<0.000000e+00> : vector<128x128xf32>
    %6 = tpu.matmul %4, %5, %cst {dimension_numbers = #tpu.dot_dimension_numbers<[1], [0], [0], [1], [0, 0, 1, 1], [], []>} : vector<128x384xbf16>, vector<384x128xbf16>, vector<128x128xf32> -> vector<128x128xf32>
    %7 = arith.addf %3, %6 : vector<128x128xf32>
    %c0_6 = arith.constant 0 : index
    %c0_7 = arith.constant 0 : index
    %8 = vector.load %arg7[%c0_6, %c0_7] : memref<128x128xf32, #tpu.memory_space<vmem>>, vector<128x128xf32>
    tpu.vector_store %arg7[%c0_6, %c0_7], %7 {strides = array<i32>} : memref<128x128xf32, #tpu.memory_space<vmem>>, vector<128x128xf32>,
    %c0_i32_8 = arith.constant 0 : i32
    %9 = arith.cmpi eq, %arg2, %c0_i32_8 : i32
    %10 = arith.extui %9 : i1 to i32
    %c0_i32_9 = arith.constant 0 : i32
    %11 = arith.cmpi ne, %10, %c0_i32_9 : i32
    scf.if %11 {
      %c0_10 = arith.constant 0 : index
      %c0_11 = arith.constant 0 : index
      %12 = vector.load %arg7[%c0_10, %c0_11] : memref<128x128xf32, #tpu.memory_space<vmem>>, vector<128x128xf32>
      %c0_12 = arith.constant 0 : index
      %c0_13 = arith.constant 0 : index
      %13 = vector.load %arg5[%c0_12, %c0_13] : memref<1x128xf32, #tpu.memory_space<vmem>>, vector<1x128xf32>
      %14 = vector.broadcast %13 : vector<1x128xf32> to vector<128x128xf32>
      %15 = arith.addf %12, %14 : vector<128x128xf32>
      %c0_14 = arith.constant 0 : index
      %c0_15 = arith.constant 0 : index
      %16 = vector.load %arg6[%c0_14, %c0_15] : memref<128x128xf32, #tpu.memory_space<vmem>>, vector<128x128xf32>
      tpu.vector_store %arg6[%c0_14, %c0_15], %15 {strides = array<i32>} : memref<128x128xf32, #tpu.memory_space<vmem>>, vector<128x128xf32>,
    } else {
    }
    return
  }
  func.func @transform_0(%arg0: i32, %arg1: i32, %arg2: i32) -> (i32, i32) {
    %c0_i32 = arith.constant 0 : i32
    return %arg0, %arg2 : i32, i32
  }
  func.func @transform_1(%arg0: i32, %arg1: i32, %arg2: i32) -> (i32, i32) {
    %c0_i32 = arith.constant 0 : i32
    return %arg2, %arg1 : i32, i32
  }
  func.func @transform_2(%arg0: i32, %arg1: i32, %arg2: i32) -> (i32, i32) {
    %c0_i32 = arith.constant 0 : i32
    %c0_i32_0 = arith.constant 0 : i32
    return %c0_i32, %arg1 : i32, i32
  }
  func.func @transform_3(%arg0: i32, %arg1: i32, %arg2: i32) -> (i32, i32) {
    %c0_i32 = arith.constant 0 : i32
    return %arg0, %arg1 : i32, i32
  }
}

module attributes {stable_mosaic.version = 11 : i64} {
  func.func @_conv_kernel(%arg0: i32, %arg1: i32, %arg2: i32, %arg3: memref<256x384xbf16, #tpu.memory_space<vmem>>, %arg4: memref<384x128xbf16, #tpu.memory_space<vmem>>, %arg5: memref<1x128xf32, #tpu.memory_space<vmem>>, %arg6: memref<256x128xf32, #tpu.memory_space<vmem>>, %arg7: memref<256x128xf32, #tpu.memory_space<vmem>>) attributes {dimension_semantics = [#tpu.dimension_semantics<parallel>, #tpu.dimension_semantics<parallel>, #tpu.dimension_semantics<arbitrary>], iteration_bounds = array<i64: 2, 1, 1>, scalar_prefetch = 0 : i64, scratch_operands = 1 : i64, tpu.core_type = #tpu.core_type<tc>, window_params = [{transform_indices = @transform_0, window_bounds = array<i64: 256, 384>}, {transform_indices = @transform_1, window_bounds = array<i64: 384, 128>}, {transform_indices = @transform_2, window_bounds = array<i64: 1, 128>}, {transform_indices = @transform_3, window_bounds = array<i64: 256, 128>}]} {
    %c0_i32 = arith.constant 0 : i32
    %0 = arith.cmpi eq, %arg2, %c0_i32 : i32
    %1 = arith.extui %0 : i1 to i32
    %c0_i32_0 = arith.constant 0 : i32
    %2 = arith.cmpi ne, %1, %c0_i32_0 : i32
    scf.if %2 {
      %cst_10 = arith.constant 0.000000e+00 : f32
      %12 = vector.broadcast %cst_10 : f32 to vector<256x128xf32>
      %c0_11 = arith.constant 0 : index
      %c0_12 = arith.constant 0 : index
      %13 = vector.load %arg7[%c0_11, %c0_12] : memref<256x128xf32, #tpu.memory_space<vmem>>, vector<256x128xf32>
      tpu.vector_store %arg7[%c0_11, %c0_12], %12 {strides = array<i32>} : memref<256x128xf32, #tpu.memory_space<vmem>>, vector<256x128xf32>,
    } else {
    }
    %c0 = arith.constant 0 : index
    %c0_1 = arith.constant 0 : index
    %3 = vector.load %arg7[%c0, %c0_1] : memref<256x128xf32, #tpu.memory_space<vmem>>, vector<256x128xf32>
    %c0_2 = arith.constant 0 : index
    %c0_3 = arith.constant 0 : index
    %4 = vector.load %arg3[%c0_2, %c0_3] : memref<256x384xbf16, #tpu.memory_space<vmem>>, vector<256x384xbf16>
    %c0_4 = arith.constant 0 : index
    %c0_5 = arith.constant 0 : index
    %5 = vector.load %arg4[%c0_4, %c0_5] : memref<384x128xbf16, #tpu.memory_space<vmem>>, vector<384x128xbf16>
    %cst = arith.constant dense<0.000000e+00> : vector<256x128xf32>
    %6 = tpu.matmul %4, %5, %cst {dimension_numbers = #tpu.dot_dimension_numbers<[1], [0], [0], [1], [0, 0, 1, 1], [], []>} : vector<256x384xbf16>, vector<384x128xbf16>, vector<256x128xf32> -> vector<256x128xf32>
    %7 = arith.addf %3, %6 : vector<256x128xf32>
    %c0_6 = arith.constant 0 : index
    %c0_7 = arith.constant 0 : index
    %8 = vector.load %arg7[%c0_6, %c0_7] : memref<256x128xf32, #tpu.memory_space<vmem>>, vector<256x128xf32>
    tpu.vector_store %arg7[%c0_6, %c0_7], %7 {strides = array<i32>} : memref<256x128xf32, #tpu.memory_space<vmem>>, vector<256x128xf32>,
    %c0_i32_8 = arith.constant 0 : i32
    %9 = arith.cmpi eq, %arg2, %c0_i32_8 : i32
    %10 = arith.extui %9 : i1 to i32
    %c0_i32_9 = arith.constant 0 : i32
    %11 = arith.cmpi ne, %10, %c0_i32_9 : i32
    scf.if %11 {
      %c0_10 = arith.constant 0 : index
      %c0_11 = arith.constant 0 : index
      %12 = vector.load %arg7[%c0_10, %c0_11] : memref<256x128xf32, #tpu.memory_space<vmem>>, vector<256x128xf32>
      %c0_12 = arith.constant 0 : index
      %c0_13 = arith.constant 0 : index
      %13 = vector.load %arg5[%c0_12, %c0_13] : memref<1x128xf32, #tpu.memory_space<vmem>>, vector<1x128xf32>
      %14 = vector.broadcast %13 : vector<1x128xf32> to vector<256x128xf32>
      %15 = arith.addf %12, %14 : vector<256x128xf32>
      %cst_14 = arith.constant 0.000000e+00 : f32
      %16 = vector.broadcast %cst_14 : f32 to vector<256x128xf32>
      %17 = arith.cmpf oge, %15, %16 : vector<256x128xf32>
      %cst_15 = arith.constant 2.000000e-01 : f32
      %18 = vector.broadcast %cst_15 : f32 to vector<256x128xf32>
      %19 = arith.mulf %18, %15 : vector<256x128xf32>
      %20 = arith.select %17, %15, %19 : vector<256x128xi1>, vector<256x128xf32>
      %c0_16 = arith.constant 0 : index
      %c0_17 = arith.constant 0 : index
      %21 = vector.load %arg6[%c0_16, %c0_17] : memref<256x128xf32, #tpu.memory_space<vmem>>, vector<256x128xf32>
      tpu.vector_store %arg6[%c0_16, %c0_17], %20 {strides = array<i32>} : memref<256x128xf32, #tpu.memory_space<vmem>>, vector<256x128xf32>,
    } else {
    }
    return
  }
  func.func @transform_0(%arg0: i32, %arg1: i32, %arg2: i32) -> (i32, i32) {
    %c0_i32 = arith.constant 0 : i32
    return %arg0, %arg2 : i32, i32
  }
  func.func @transform_1(%arg0: i32, %arg1: i32, %arg2: i32) -> (i32, i32) {
    %c0_i32 = arith.constant 0 : i32
    return %arg2, %arg1 : i32, i32
  }
  func.func @transform_2(%arg0: i32, %arg1: i32, %arg2: i32) -> (i32, i32) {
    %c0_i32 = arith.constant 0 : i32
    %c0_i32_0 = arith.constant 0 : i32
    return %c0_i32, %arg1 : i32, i32
  }
  func.func @transform_3(%arg0: i32, %arg1: i32, %arg2: i32) -> (i32, i32) {
    %c0_i32 = arith.constant 0 : i32
    return %arg0, %arg1 : i32, i32
  }
}

</mosaic_0001>

<llo_original>
// kernel: _lambda_.37
$region0: #{_lambda_.37}
  #allocation0 [shape = 'u32[]', space=smem, size = 0x4, offset = 0x4, fixed_abs, tag = 'smem constant byte address 0x4 - core index']
  #allocation1 [shape = 'u32[144,128]{1,0:T(1,128)}', space=vmem, size = 0x12000, scoped, tag = 'internal scratch']
  #allocation2 [shape = 'f32[128,128]{1,0:T(8,128)}', space=vmem, size = 0x10000, scoped, tag = 'scratch operand']
  %s0 = inlined_call_operand.vmem [shape: bf16[128,128], index: 0, kind: input, shape index: {}]
  %s1 = inlined_call_operand.vmem [shape: bf16[128,128], index: 1, kind: input, shape index: {}]
  %s2 = inlined_call_operand.vmem [shape: f32[1,128], index: 2, kind: input, shape index: {}]
  %s3 = inlined_call_operand.vmem [shape: f32[128,128], index: 3, kind: output, shape index: {}]
  %s4 = sld [smem:[#allocation0]]
  $region30: #{_lambda_.37} parent=0
    _
  %s6 = ssub.s32 1, %s4
  %s7 = scalar_select 0, %s6, %s4
  // Predicated region
  $region2: #{_lambda_.37} parent=0 // pred_check
    _
  $region3: #{_lambda_.37} parent=0 // pred_check_branch
    %9 = sbr.rel (0) target = $region5
  $region4: #{_lambda_.37} parent=0 // pred_region
    _
  $region5: #{_lambda_.37} parent=0 // pred_fallthru
    _
  // Predicated region
  $region6: #{_lambda_.37} parent=0 // pred_check
    _
  $region7: #{_lambda_.37} parent=0 // pred_check_branch
    %11 = sbr.rel (0) target = $region9
  $region8: #{_lambda_.37} parent=0 // pred_region
    _
  $region9: #{_lambda_.37} parent=0 // pred_fallthru
    _
  // Predicated region
  $region10: #{_lambda_.37} parent=0 // pred_check
    _
  $region11: #{_lambda_.37} parent=0 // pred_check_branch
    %13 = sbr.rel (0) target = $region13
  $region12: #{_lambda_.37} parent=0 // pred_region
    _
  $region13: #{_lambda_.37} parent=0 // pred_fallthru
    _
  %p15 = scmp.eq.s32.totalorder 0, 0
  // Predicated region
  $region14: #{_lambda_.37} parent=0 // pred_check
    %p16 = pneg %p15
  $region15: #{_lambda_.37} parent=0 // pred_check_branch
    %18 = sbr.rel (%p16) target = $region17
  $region16: #{_lambda_.37} parent=0 // pred_region
    %19 = vst [vmem:[#allocation2] sm:$0xff] 0.0
    %20 = vst [vmem:[#allocation2 + $0x8] sm:$0xff] 0.0
    %21 = vst [vmem:[#allocation2 + $0x10] sm:$0xff] 0.0
    %22 = vst [vmem:[#allocation2 + $0x18] sm:$0xff] 0.0
    %23 = vst [vmem:[#allocation2 + $0x20] sm:$0xff] 0.0
    %24 = vst [vmem:[#allocation2 + $0x28] sm:$0xff] 0.0
    %25 = vst [vmem:[#allocation2 + $0x30] sm:$0xff] 0.0
    %26 = vst [vmem:[#allocation2 + $0x38] sm:$0xff] 0.0
    %27 = vst [vmem:[#allocation2 + $0x40] sm:$0xff] 0.0
    %28 = vst [vmem:[#allocation2 + $0x48] sm:$0xff] 0.0
    %29 = vst [vmem:[#allocation2 + $0x50] sm:$0xff] 0.0
    %30 = vst [vmem:[#allocation2 + $0x58] sm:$0xff] 0.0
    %31 = vst [vmem:[#allocation2 + $0x60] sm:$0xff] 0.0
    %32 = vst [vmem:[#allocation2 + $0x68] sm:$0xff] 0.0
    %33 = vst [vmem:[#allocation2 + $0x70] sm:$0xff] 0.0
    %34 = vst [vmem:[#allocation2 + $0x78] sm:$0xff] 0.0
  $region17: #{_lambda_.37} parent=0 // pred_fallthru
    _
  %v35 = vld [vmem:[#allocation2] sm:$0xff]
  %v36 = vld [vmem:[#allocation2 + $0x8] sm:$0xff]
  %v37 = vld [vmem:[#allocation2 + $0x10] sm:$0xff]
  %v38 = vld [vmem:[#allocation2 + $0x18] sm:$0xff]
  %v39 = vld [vmem:[#allocation2 + $0x20] sm:$0xff]
  %v40 = vld [vmem:[#allocation2 + $0x28] sm:$0xff]
  %v41 = vld [vmem:[#allocation2 + $0x30] sm:$0xff]
  %v42 = vld [vmem:[#allocation2 + $0x38] sm:$0xff]
  %v43 = vld [vmem:[#allocation2 + $0x40] sm:$0xff]
  %v44 = vld [vmem:[#allocation2 + $0x48] sm:$0xff]
  %v45 = vld [vmem:[#allocation2 + $0x50] sm:$0xff]
  %v46 = vld [vmem:[#allocation2 + $0x58] sm:$0xff]
  %v47 = vld [vmem:[#allocation2 + $0x60] sm:$0xff]
  %v48 = vld [vmem:[#allocation2 + $0x68] sm:$0xff]
  %v49 = vld [vmem:[#allocation2 + $0x70] sm:$0xff]
  %v50 = vld [vmem:[#allocation2 + $0x78] sm:$0xff]
  %v51 = vld [vmem:[%s0] sm:$0xf]
  %v52 = vld [vmem:[%s0 + $0x4] sm:$0xf]
  %v53 = vld [vmem:[%s0 + $0x8] sm:$0xf]
  %v54 = vld [vmem:[%s0 + $0xc] sm:$0xf]
  %v55 = vld [vmem:[%s0 + $0x10] sm:$0xf]
  %v56 = vld [vmem:[%s0 + $0x14] sm:$0xf]
  %v57 = vld [vmem:[%s0 + $0x18] sm:$0xf]
  %v58 = vld [vmem:[%s0 + $0x1c] sm:$0xf]
  %v59 = vld [vmem:[%s0 + $0x20] sm:$0xf]
  %v60 = vld [vmem:[%s0 + $0x24] sm:$0xf]
  %v61 = vld [vmem:[%s0 + $0x28] sm:$0xf]
  %v62 = vld [vmem:[%s0 + $0x2c] sm:$0xf]
  %v63 = vld [vmem:[%s0 + $0x30] sm:$0xf]
  %v64 = vld [vmem:[%s0 + $0x34] sm:$0xf]
  %v65 = vld [vmem:[%s0 + $0x38] sm:$0xf]
  %v66 = vld [vmem:[%s0 + $0x3c] sm:$0xf]
  %v67 = vld [vmem:[%s1] sm:$0xf]
  %v68 = vld [vmem:[%s1 + $0x4] sm:$0xf]
  %v69 = vld [vmem:[%s1 + $0x8] sm:$0xf]
  %v70 = vld [vmem:[%s1 + $0xc] sm:$0xf]
  %v71 = vld [vmem:[%s1 + $0x10] sm:$0xf]
  %v72 = vld [vmem:[%s1 + $0x14] sm:$0xf]
  %v73 = vld [vmem:[%s1 + $0x18] sm:$0xf]
  %v74 = vld [vmem:[%s1 + $0x1c] sm:$0xf]
  %v75 = vld [vmem:[%s1 + $0x20] sm:$0xf]
  %v76 = vld [vmem:[%s1 + $0x24] sm:$0xf]
  %v77 = vld [vmem:[%s1 + $0x28] sm:$0xf]
  %v78 = vld [vmem:[%s1 + $0x2c] sm:$0xf]
  %v79 = vld [vmem:[%s1 + $0x30] sm:$0xf]
  %v80 = vld [vmem:[%s1 + $0x34] sm:$0xf]
  %v81 = vld [vmem:[%s1 + $0x38] sm:$0xf]
  %v82 = vld [vmem:[%s1 + $0x3c] sm:$0xf]
  %v99 = vunpack.c.l.b16 %v51
  %v100 = vunpack.c.l.b16 %v52
  %v101 = vunpack.c.l.b16 %v53
  %v102 = vunpack.c.l.b16 %v54
  %v103 = vunpack.c.l.b16 %v55
  %v104 = vunpack.c.l.b16 %v56
  %v105 = vunpack.c.l.b16 %v57
  %v106 = vunpack.c.l.b16 %v58
  %v107 = vunpack.c.l.b16 %v59
  %v108 = vunpack.c.l.b16 %v60
  %v109 = vunpack.c.l.b16 %v61
  %v110 = vunpack.c.l.b16 %v62
  %v111 = vunpack.c.l.b16 %v63
  %v112 = vunpack.c.l.b16 %v64
  %v113 = vunpack.c.l.b16 %v65
  %v114 = vunpack.c.l.b16 %v66
  %v115 = vpack.c.b16 %v100, %v99
  %v116 = vpack.c.b16 %v102, %v101
  %v117 = vpack.c.b16 %v104, %v103
  %v118 = vpack.c.b16 %v106, %v105
  %v119 = vpack.c.b16 %v108, %v107
  %v120 = vpack.c.b16 %v110, %v109
  %v121 = vpack.c.b16 %v112, %v111
  %v122 = vpack.c.b16 %v114, %v113
  %v147 = vunpack.c.l.b16 %v67
  %v148 = vunpack.c.l.b16 %v68
  %v149 = vunpack.c.l.b16 %v69
  %v150 = vunpack.c.l.b16 %v70
  %v151 = vunpack.c.l.b16 %v71
  %v152 = vunpack.c.l.b16 %v72
  %v153 = vunpack.c.l.b16 %v73
  %v154 = vunpack.c.l.b16 %v74
  %v155 = vunpack.c.l.b16 %v75
  %v156 = vunpack.c.l.b16 %v76
  %v157 = vunpack.c.l.b16 %v77
  %v158 = vunpack.c.l.b16 %v78
  %v159 = vunpack.c.l.b16 %v79
  %v160 = vunpack.c.l.b16 %v80
  %v161 = vunpack.c.l.b16 %v81
  %v162 = vunpack.c.l.b16 %v82
  %v163 = vpack.c.b16 %v148, %v147
  %v164 = vpack.c.b16 %v150, %v149
  %v165 = vpack.c.b16 %v152, %v151
  %v166 = vpack.c.b16 %v154, %v153
  %v167 = vpack.c.b16 %v156, %v155
  %v168 = vpack.c.b16 %v158, %v157
  %v169 = vpack.c.b16 %v160, %v159
  %v170 = vpack.c.b16 %v162, %v161
  %179 = vmatprep.subr.bf16.mxu0 0
  %180 = vmatpush1.bf16.msra.mxu0 %v163
  %181 = vmatprep.subr.bf16.mxu0 0
  %182 = vmatpush1.bf16.msra.mxu0 %v164
  %183 = vmatprep.subr.bf16.mxu0 0
  %184 = vmatpush1.bf16.msra.mxu0 %v165
  %185 = vmatprep.subr.bf16.mxu0 0
  %186 = vmatpush1.bf16.msra.mxu0 %v166
  %187 = vmatprep.subr.bf16.mxu0 0
  %188 = vmatpush1.bf16.msra.mxu0 %v167
  %189 = vmatprep.subr.bf16.mxu0 0
  %190 = vmatpush1.bf16.msra.mxu0 %v168
  %191 = vmatprep.subr.bf16.mxu0 0
  %192 = vmatpush1.bf16.msra.mxu0 %v169
  %193 = vmatprep.subr.bf16.mxu0 0
  %194 = vmatpush1.bf16.msra.mxu0 %v170
  %195 = vmatprep.subr.bf16.mxu0 0
  %196 = vmatpush1.bf16.msra.mxu0 0
  %197 = vmatprep.subr.bf16.mxu0 0
  %198 = vmatpush1.bf16.msra.mxu0 0
  %199 = vmatprep.subr.bf16.mxu0 0
  %200 = vmatpush1.bf16.msra.mxu0 0
  %201 = vmatprep.subr.bf16.mxu0 0
  %202 = vmatpush1.bf16.msra.mxu0 0
  %203 = vmatprep.subr.bf16.mxu0 0
  %204 = vmatpush1.bf16.msra.mxu0 0
  %205 = vmatprep.subr.bf16.mxu0 0
  %206 = vmatpush1.bf16.msra.mxu0 0
  %207 = vmatprep.subr.bf16.mxu0 0
  %208 = vmatpush1.bf16.msra.mxu0 0
  %209 = vmatprep.subr.bf16.mxu0 0
  %210 = vmatpush1.bf16.msra.mxu0 0
  %211 = vmatprep.mubr.bf16.mxu0 0
  %212 = vmatmul.mubr.bf16.gmra.mrb[0].mxu0 %v115
  %v213 = vpop.f32.mrb[0].mxu0
  %v214 = vadd.f32 0.0, %v213
  %v215 = vpop.f32.mrb[0].mxu0
  %v216 = vpop.f32.mrb[0].mxu0
  %v217 = vadd.f32 0.0, %v216
  %v218 = vpop.f32.mrb[0].mxu0
  %219 = vmatprep.mubr.bf16.mxu0 0
  %220 = vmatmul.mubr.bf16.gmra.mrb[0].mxu0 %v116
  %v221 = vpop.f32.mrb[0].mxu0
  %v222 = vadd.f32 0.0, %v221
  %v223 = vpop.f32.mrb[0].mxu0
  %v224 = vpop.f32.mrb[0].mxu0
  %v225 = vadd.f32 0.0, %v224
  %v226 = vpop.f32.mrb[0].mxu0
  %227 = vmatprep.mubr.bf16.mxu0 0
  %228 = vmatmul.mubr.bf16.gmra.mrb[0].mxu0 %v117
  %v229 = vpop.f32.mrb[0].mxu0
  %v230 = vadd.f32 0.0, %v229
  %v231 = vpop.f32.mrb[0].mxu0
  %v232 = vpop.f32.mrb[0].mxu0
  %v233 = vadd.f32 0.0, %v232
  %v234 = vpop.f32.mrb[0].mxu0
  %235 = vmatprep.mubr.bf16.mxu0 0
  %236 = vmatmul.mubr.bf16.gmra.mrb[0].mxu0 %v118
  %v237 = vpop.f32.mrb[0].mxu0
  %v238 = vadd.f32 0.0, %v237
  %v239 = vpop.f32.mrb[0].mxu0
  %v240 = vpop.f32.mrb[0].mxu0
  %v241 = vadd.f32 0.0, %v240
  %v242 = vpop.f32.mrb[0].mxu0
  %243 = vmatprep.mubr.bf16.mxu0 0
  %244 = vmatmul.mubr.bf16.gmra.mrb[0].mxu0 %v119
  %v245 = vpop.f32.mrb[0].mxu0
  %v246 = vadd.f32 0.0, %v245
  %v247 = vpop.f32.mrb[0].mxu0
  %v248 = vpop.f32.mrb[0].mxu0
  %v249 = vadd.f32 0.0, %v248
  %v250 = vpop.f32.mrb[0].mxu0
  %251 = vmatprep.mubr.bf16.mxu0 0
  %252 = vmatmul.mubr.bf16.gmra.mrb[0].mxu0 %v120
  %v253 = vpop.f32.mrb[0].mxu0
  %v254 = vadd.f32 0.0, %v253
  %v255 = vpop.f32.mrb[0].mxu0
  %v256 = vpop.f32.mrb[0].mxu0
  %v257 = vadd.f32 0.0, %v256
  %v258 = vpop.f32.mrb[0].mxu0
  %259 = vmatprep.mubr.bf16.mxu0 0
  %260 = vmatmul.mubr.bf16.gmra.mrb[0].mxu0 %v121
  %v261 = vpop.f32.mrb[0].mxu0
  %v262 = vadd.f32 0.0, %v261
  %v263 = vpop.f32.mrb[0].mxu0
  %v264 = vpop.f32.mrb[0].mxu0
  %v265 = vadd.f32 0.0, %v264
  %v266 = vpop.f32.mrb[0].mxu0
  %267 = vmatprep.mubr.bf16.mxu0 0
  %268 = vmatmul.mubr.bf16.gmra.mrb[0].mxu0 %v122
  %v269 = vpop.f32.mrb[0].mxu0
  %v270 = vadd.f32 0.0, %v269
  %v271 = vpop.f32.mrb[0].mxu0
  %v272 = vpop.f32.mrb[0].mxu0
  %v273 = vadd.f32 0.0, %v272
  %v274 = vpop.f32.mrb[0].mxu0
  %275 = vdwg.mxu0
  %v276 = vadd.f32 %v35, %v214
  %v277 = vadd.f32 %v36, %v217
  %v278 = vadd.f32 %v37, %v222
  %v279 = vadd.f32 %v38, %v225
  %v280 = vadd.f32 %v39, %v230
  %v281 = vadd.f32 %v40, %v233
  %v282 = vadd.f32 %v41, %v238
  %v283 = vadd.f32 %v42, %v241
  %v284 = vadd.f32 %v43, %v246
  %v285 = vadd.f32 %v44, %v249
  %v286 = vadd.f32 %v45, %v254
  %v287 = vadd.f32 %v46, %v257
  %v288 = vadd.f32 %v47, %v262
  %v289 = vadd.f32 %v48, %v265
  %v290 = vadd.f32 %v49, %v270
  %v291 = vadd.f32 %v50, %v273
  %292 = vst [vmem:[#allocation2] sm:$0xff] %v276
  %293 = vst [vmem:[#allocation2 + $0x8] sm:$0xff] %v277
  %294 = vst [vmem:[#allocation2 + $0x10] sm:$0xff] %v278
  %295 = vst [vmem:[#allocation2 + $0x18] sm:$0xff] %v279
  %296 = vst [vmem:[#allocation2 + $0x20] sm:$0xff] %v280
  %297 = vst [vmem:[#allocation2 + $0x28] sm:$0xff] %v281
  %298 = vst [vmem:[#allocation2 + $0x30] sm:$0xff] %v282
  %299 = vst [vmem:[#allocation2 + $0x38] sm:$0xff] %v283
  %300 = vst [vmem:[#allocation2 + $0x40] sm:$0xff] %v284
  %301 = vst [vmem:[#allocation2 + $0x48] sm:$0xff] %v285
  %302 = vst [vmem:[#allocation2 + $0x50] sm:$0xff] %v286
  %303 = vst [vmem:[#allocation2 + $0x58] sm:$0xff] %v287
  %304 = vst [vmem:[#allocation2 + $0x60] sm:$0xff] %v288
  %305 = vst [vmem:[#allocation2 + $0x68] sm:$0xff] %v289
  %306 = vst [vmem:[#allocation2 + $0x70] sm:$0xff] %v290
  %307 = vst [vmem:[#allocation2 + $0x78] sm:$0xff] %v291
  // Predicated region
  $region18: #{_lambda_.37} parent=0 // pred_check
    %p308 = pneg %p15
  $region19: #{_lambda_.37} parent=0 // pred_check_branch
    %310 = sbr.rel (%p308) target = $region21
  $region20: #{_lambda_.37} parent=0 // pred_region
    %v311 = vld [vmem:[#allocation2] sm:$0xff]
    %v312 = vld [vmem:[#allocation2 + $0x8] sm:$0xff]
    %v313 = vld [vmem:[#allocation2 + $0x10] sm:$0xff]
    %v314 = vld [vmem:[#allocation2 + $0x18] sm:$0xff]
    %v315 = vld [vmem:[#allocation2 + $0x20] sm:$0xff]
    %v316 = vld [vmem:[#allocation2 + $0x28] sm:$0xff]
    %v317 = vld [vmem:[#allocation2 + $0x30] sm:$0xff]
    %v318 = vld [vmem:[#allocation2 + $0x38] sm:$0xff]
    %v319 = vld [vmem:[#allocation2 + $0x40] sm:$0xff]
    %v320 = vld [vmem:[#allocation2 + $0x48] sm:$0xff]
    %v321 = vld [vmem:[#allocation2 + $0x50] sm:$0xff]
    %v322 = vld [vmem:[#allocation2 + $0x58] sm:$0xff]
    %v323 = vld [vmem:[#allocation2 + $0x60] sm:$0xff]
    %v324 = vld [vmem:[#allocation2 + $0x68] sm:$0xff]
    %v325 = vld [vmem:[#allocation2 + $0x70] sm:$0xff]
    %v326 = vld [vmem:[#allocation2 + $0x78] sm:$0xff]
    %v327 = vld [vmem:[%s2] sm:$0x1]
    %v329 = vlaneseq
    %v330 = vshrl.u32 %v329, 7
    %v331 = vsub.s32 0, %v330
    %v332 = vrot.slane %v327, %v331
    %v334 = vadd.f32 %v311, %v332
    %v335 = vadd.f32 %v312, %v332
    %v336 = vadd.f32 %v313, %v332
    %v337 = vadd.f32 %v314, %v332
    %v338 = vadd.f32 %v315, %v332
    %v339 = vadd.f32 %v316, %v332
    %v340 = vadd.f32 %v317, %v332
    %v341 = vadd.f32 %v318, %v332
    %v342 = vadd.f32 %v319, %v332
    %v343 = vadd.f32 %v320, %v332
    %v344 = vadd.f32 %v321, %v332
    %v345 = vadd.f32 %v322, %v332
    %v346 = vadd.f32 %v323, %v332
    %v347 = vadd.f32 %v324, %v332
    %v348 = vadd.f32 %v325, %v332
    %v349 = vadd.f32 %v326, %v332
    %350 = vst [vmem:[%s3] sm:$0xff] %v334
    %351 = vst [vmem:[%s3 + $0x8] sm:$0xff] %v335
    %352 = vst [vmem:[%s3 + $0x10] sm:$0xff] %v336
    %353 = vst [vmem:[%s3 + $0x18] sm:$0xff] %v337
    %354 = vst [vmem:[%s3 + $0x20] sm:$0xff] %v338
    %355 = vst [vmem:[%s3 + $0x28] sm:$0xff] %v339
    %356 = vst [vmem:[%s3 + $0x30] sm:$0xff] %v340
    %357 = vst [vmem:[%s3 + $0x38] sm:$0xff] %v341
    %358 = vst [vmem:[%s3 + $0x40] sm:$0xff] %v342
    %359 = vst [vmem:[%s3 + $0x48] sm:$0xff] %v343
    %360 = vst [vmem:[%s3 + $0x50] sm:$0xff] %v344
    %361 = vst [vmem:[%s3 + $0x58] sm:$0xff] %v345
    %362 = vst [vmem:[%s3 + $0x60] sm:$0xff] %v346
    %363 = vst [vmem:[%s3 + $0x68] sm:$0xff] %v347
    %364 = vst [vmem:[%s3 + $0x70] sm:$0xff] %v348
    %365 = vst [vmem:[%s3 + $0x78] sm:$0xff] %v349
  $region21: #{_lambda_.37} parent=0 // pred_fallthru
    _
  // Predicated region
  $region22: #{_lambda_.37} parent=0 // pred_check
    _
  $region23: #{_lambda_.37} parent=0 // pred_check_branch
    %367 = sbr.rel (0) target = $region25
  $region24: #{_lambda_.37} parent=0 // pred_region
    _
  $region25: #{_lambda_.37} parent=0 // pred_fallthru
    _
  // Predicated region
  $region26: #{_lambda_.37} parent=0 // pred_check
    _
  $region27: #{_lambda_.37} parent=0 // pred_check_branch
    %369 = sbr.rel (0) target = $region29
  $region28: #{_lambda_.37} parent=0 // pred_region
    _
  $region29: #{_lambda_.37} parent=0 // pred_fallthru
    _

// kernel: _lambda_.34
$region0: #{_lambda_.34}
  #allocation0 [shape = 'u32[]', space=smem, size = 0x4, offset = 0x4, fixed_abs, tag = 'smem constant byte address 0x4 - core index']
  #allocation1 [shape = 'u32[144,128]{1,0:T(1,128)}', space=vmem, size = 0x12000, scoped, tag = 'internal scratch']
  #allocation2 [shape = 'f32[256,128]{1,0:T(8,128)}', space=vmem, size = 0x20000, scoped, tag = 'scratch operand']
  %s0 = inlined_call_operand.vmem [shape: bf16[512,128], index: 0, kind: input, shape index: {}]
  %s1 = inlined_call_operand.vmem [shape: bf16[128,128], index: 1, kind: input, shape index: {}]
  %s2 = inlined_call_operand.vmem [shape: f32[1,128], index: 2, kind: input, shape index: {}]
  %s3 = inlined_call_operand.vmem [shape: f32[512,128], index: 3, kind: output, shape index: {}]
  %s4 = sld [smem:[#allocation0]]
  $region53: #{_lambda_.34} parent=0
    _
  %s6 = ssub.s32 1, %s4
  %s7 = scalar_select 0, %s6, %s4
  loop: start=0, step=1, limit=4
  $region2: #{_lambda_.34} parent=0 // loop_pre_header
    _
  $region3: #{_lambda_.34} parent=0 // loop_header
    %s9 = sphi 0, %s13
    %p10 = scmp.ge.s32.totalorder %s9, 4
    %s16 = sphi 0, %s35
    %s17 = sphi 0, %s31
    %s18 = sphi 0, %s27
    %s19 = sphi 0, %s16
    %s20 = sphi 0, %s17
    %s21 = sphi 0, %s18
    %s22 = sphi 0, %s19
    %s23 = sphi 0, %s20
    %s24 = sphi 0, %s21
    %s40 = sphi 0, %s42
    %s43 = sphi 0, %s40
    %s44 = sphi 0, %s43
    %s60 = sphi 0, %s44
    %s68 = sphi 0, %s70
    %s71 = sphi 0, %s68
    %s72 = sphi 0, %s71
    %s88 = sphi 0, %s72
    %s94 = sphi 0, %s96
    %s97 = sphi 0, %s94
    %s98 = sphi 0, %s97
    %s114 = sphi 0, %s98
    %s122 = sphi 0, %s124
    %s125 = sphi 0, %s122
    %s126 = sphi 0, %s125
    %s142 = sphi 0, %s126
  $region4: #{_lambda_.34} parent=0 // loop_header_branch
    %12 = sbr.rel (%p10) target = $region8
  $region5: #{_lambda_.34} parent=0 // loop_body
    %s14 = ssub.s32 %s9, 1
    %s15 = ssub.s32 %s9, 2
    %s25 = sadd.s32 1, %s18
    %p26 = scmp.ge.s32.totalorder %s25, 1
    %s27 = scalar_select %p26, 0, %s25
    %s28 = sadd.s32 1, %s17
    %s29 = scalar_select %p26, %s28, %s17
    %p30 = scmp.ge.s32.totalorder %s29, 1
    %s31 = scalar_select %p30, 0, %s29
    %s32 = sadd.s32 1, %s16
    %s33 = scalar_select %p30, %s32, %s16
    %p34 = scmp.ge.s32.totalorder %s33, 2
    %s35 = scalar_select %p34, 0, %s33
    %s36 = ssub.s32 %s16, %s35
    %s37 = ssub.s32 %s18, %s27
    %s38 = sor.u32 %s36, %s37
    %p39 = scmp.eq.s32.totalorder %s38, 0
    %s41 = sadd.s32 %s40, 1
    %s42 = scalar_select %p39, %s40, %s41
    %p45 = pneg %p39
    %p46 = scmp.eq.s32.totalorder %s9, 1
    %p47 = por %p45, %p46
    %p48 = scmp.ne.s32.totalorder %s40, %s43
    %p49 = scmp.eq.s32.totalorder %s9, 0
    %p50 = por %p48, %p49
    %p51 = scmp.ne.s32.totalorder %s40, %s43
    %p52 = scmp.eq.s32.totalorder %s14, 1
    %p53 = por %p51, %p52
    %p54 = scmp.ne.s32.totalorder %s43, %s44
    %p55 = scmp.eq.s32.totalorder %s14, 0
    %p56 = por %p54, %p55
    %p57 = scmp.ne.s32.totalorder %s43, %s44
    %p58 = scmp.eq.s32.totalorder %s15, 1
    %p59 = por %p57, %p58
    %p61 = scmp.ne.s32.totalorder %s44, %s60
    %p62 = scmp.eq.s32.totalorder %s15, 0
    %p63 = por %p61, %p62
    %s64 = ssub.s32 %s18, %s27
    %s65 = ssub.s32 %s17, %s31
    %s66 = sor.u32 %s64, %s65
    %p67 = scmp.eq.s32.totalorder %s66, 0
    %s69 = sadd.s32 %s68, 1
    %s70 = scalar_select %p67, %s68, %s69
    %p73 = pneg %p67
    %p74 = scmp.eq.s32.totalorder %s9, 1
    %p75 = por %p73, %p74
    %p76 = scmp.ne.s32.totalorder %s68, %s71
    %p77 = scmp.eq.s32.totalorder %s9, 0
    %p78 = por %p76, %p77
    %p79 = scmp.ne.s32.totalorder %s68, %s71
    %p80 = scmp.eq.s32.totalorder %s14, 1
    %p81 = por %p79, %p80
    %p82 = scmp.ne.s32.totalorder %s71, %s72
    %p83 = scmp.eq.s32.totalorder %s14, 0
    %p84 = por %p82, %p83
    %p85 = scmp.ne.s32.totalorder %s71, %s72
    %p86 = scmp.eq.s32.totalorder %s15, 1
    %p87 = por %p85, %p86
    %p89 = scmp.ne.s32.totalorder %s72, %s88
    %p90 = scmp.eq.s32.totalorder %s15, 0
    %p91 = por %p89, %p90
    %s92 = ssub.s32 %s17, %s31
    %p93 = scmp.eq.s32.totalorder %s92, 0
    %s95 = sadd.s32 %s94, 1
    %s96 = scalar_select %p93, %s94, %s95
    %p99 = pneg %p93
    %p100 = scmp.eq.s32.totalorder %s9, 1
    %p101 = por %p99, %p100
    %p102 = scmp.ne.s32.totalorder %s94, %s97
    %p103 = scmp.eq.s32.totalorder %s9, 0
    %p104 = por %p102, %p103
    %p105 = scmp.ne.s32.totalorder %s94, %s97
    %p106 = scmp.eq.s32.totalorder %s14, 1
    %p107 = por %p105, %p106
    %p108 = scmp.ne.s32.totalorder %s97, %s98
    %p109 = scmp.eq.s32.totalorder %s14, 0
    %p110 = por %p108, %p109
    %p111 = scmp.ne.s32.totalorder %s97, %s98
    %p112 = scmp.eq.s32.totalorder %s15, 1
    %p113 = por %p111, %p112
    %p115 = scmp.ne.s32.totalorder %s98, %s114
    %p116 = scmp.eq.s32.totalorder %s15, 0
    %p117 = por %p115, %p116
    %s118 = ssub.s32 %s16, %s35
    %s119 = ssub.s32 %s17, %s31
    %s120 = sor.u32 %s118, %s119
    %p121 = scmp.eq.s32.totalorder %s120, 0
    %s123 = sadd.s32 %s122, 1
    %s124 = scalar_select %p121, %s122, %s123
    %p127 = pneg %p121
    %p128 = scmp.eq.s32.totalorder %s9, 1
    %p129 = por %p127, %p128
    %p130 = scmp.ne.s32.totalorder %s122, %s125
    %p131 = scmp.eq.s32.totalorder %s9, 0
    %p132 = por %p130, %p131
    %p133 = scmp.ne.s32.totalorder %s122, %s125
    %p134 = scmp.eq.s32.totalorder %s14, 1
    %p135 = por %p133, %p134
    %p136 = scmp.ne.s32.totalorder %s125, %s126
    %p137 = scmp.eq.s32.totalorder %s14, 0
    %p138 = por %p136, %p137
    %p139 = scmp.ne.s32.totalorder %s125, %s126
    %p140 = scmp.eq.s32.totalorder %s15, 1
    %p141 = por %p139, %p140
    %p143 = scmp.ne.s32.totalorder %s126, %s142
    %p144 = scmp.eq.s32.totalorder %s15, 0
    %p145 = por %p143, %p144
    %p146 = scmp.le.s32.totalorder 1, %s9
    %p147 = scmp.lt.s32.totalorder %s9, 3
    %p148 = pnand %p146, %p147
    %p149 = pneg %p148
    // Predicated region
    $region9: #{_lambda_.34} parent=5 // pred_check
      _
    $region10: #{_lambda_.34} parent=5 // pred_check_branch
      %151 = sbr.rel (%p148) target = $region12
    $region11: #{_lambda_.34} parent=5 // pred_region
      %s152 = ssub.s32 %s9, 1
      // Predicated region
      $region13: #{_lambda_.34} parent=11 // pred_check
        %p153 = pneg %p84
      $region14: #{_lambda_.34} parent=11 // pred_check_branch
        %155 = sbr.rel (%p153) target = $region16
      $region15: #{_lambda_.34} parent=11 // pred_region
        %s156 = smul.u32 16, %s21
        %p157 = scmp.lt.s32.totalorder %s156, 15
        %s158 = scalar_select %p157, %s156, 15
        %p159 = scmp.lt.s32.totalorder %s20, 0
        %s160 = scalar_select %p159, %s20, 0
        %s161 = sadd.s32 %s160, %s158
        %s162 = smul.addr %s161, 4
        %s163 = scalar_lea.vmem %s1, %s162
        %s164 = smul.u32 16, %s21
      $region16: #{_lambda_.34} parent=11 // pred_fallthru
        _
      // Predicated region
      $region17: #{_lambda_.34} parent=11 // pred_check
        %p165 = pneg %p110
      $region18: #{_lambda_.34} parent=11 // pred_check_branch
        %167 = sbr.rel (%p165) target = $region20
      $region19: #{_lambda_.34} parent=11 // pred_region
        %p168 = scmp.lt.s32.totalorder %s20, 0
        %s169 = scalar_select %p168, %s20, 0
        %s170 = scalar_lea.vmem %s2, %s169
      $region20: #{_lambda_.34} parent=11 // pred_fallthru
        _
    $region12: #{_lambda_.34} parent=5 // pred_fallthru
      _
    %p171 = scmp.lt.s32.totalorder %s9, 2
    // Predicated region
    $region21: #{_lambda_.34} parent=5 // pred_check
      %p172 = pneg %p171
    $region22: #{_lambda_.34} parent=5 // pred_check_branch
      %174 = sbr.rel (%p172) target = $region24
    $region23: #{_lambda_.34} parent=5 // pred_region
      // Predicated region
      $region25: #{_lambda_.34} parent=23 // pred_check
        %p175 = pneg %p50
      $region26: #{_lambda_.34} parent=23 // pred_check_branch
        %177 = sbr.rel (%p175) target = $region28
      $region27: #{_lambda_.34} parent=23 // pred_region
        %s178 = smul.u32 32, %s16
        %p179 = scmp.lt.s32.totalorder %s178, 63
        %s180 = scalar_select %p179, %s178, 63
        %p181 = scmp.lt.s32.totalorder %s18, 0
        %s182 = scalar_select %p181, %s18, 0
        %s183 = sadd.s32 %s182, %s180
        %s184 = smul.addr %s183, 4
        %s185 = scalar_lea.vmem %s0, %s184
        %s186 = smul.u32 32, %s16
      $region28: #{_lambda_.34} parent=23 // pred_fallthru
        _
    $region24: #{_lambda_.34} parent=5 // pred_fallthru
      _
    %p187 = scmp.le.s32.totalorder 1, %s9
    %p188 = scmp.lt.s32.totalorder %s9, 3
    %p189 = pnand %p187, %p188
    %p190 = pneg %p189
    // Predicated region
    $region29: #{_lambda_.34} parent=5 // pred_check
      _
    $region30: #{_lambda_.34} parent=5 // pred_check_branch
      %192 = sbr.rel (%p189) target = $region32
    $region31: #{_lambda_.34} parent=5 // pred_region
      %s193 = ssub.s32 %s9, 1
      %s194 = smul.u32 32, %s19
      %p195 = scmp.lt.s32.totalorder %s194, 63
      %s196 = scalar_select %p195, %s194, 63
      %p197 = scmp.lt.s32.totalorder %s21, 0
      %s198 = scalar_select %p197, %s21, 0
      %s199 = sadd.s32 %s198, %s196
      %s200 = smul.addr %s199, 4
      %s201 = scalar_lea.vmem %s0, %s200
      %p202 = pneg %p56
      %p203 = pneg %p53
      %s204 = smul.u32 16, %s21
      %p205 = scmp.lt.s32.totalorder %s204, 15
      %s206 = scalar_select %p205, %s204, 15
      %p207 = scmp.lt.s32.totalorder %s20, 0
      %s208 = scalar_select %p207, %s20, 0
      %s209 = sadd.s32 %s208, %s206
      %s210 = smul.addr %s209, 4
      %s211 = scalar_lea.vmem %s1, %s210
      %p212 = pneg %p84
      %p213 = pneg %p81
      %p214 = scmp.lt.s32.totalorder %s20, 0
      %s215 = scalar_select %p214, %s20, 0
      %s216 = scalar_lea.vmem %s2, %s215
      %p217 = pneg %p110
      %p218 = pneg %p107
      %p219 = pneg %p138
      %p220 = pneg %p135
      %s221 = smul.u32 32, %s19
      %p222 = scmp.lt.s32.totalorder %s221, 63
      %s223 = scalar_select %p222, %s221, 63
      %p224 = scmp.lt.s32.totalorder %s20, 0
      %s225 = scalar_select %p224, %s20, 0
      %s226 = sadd.s32 %s225, %s223
      %s227 = smul.addr %s226, 8
      %s228 = scalar_lea.vmem %s3, %s227
      %s229 = smul.u32 32, %s19
      %p230 = scmp.lt.s32.totalorder %s229, 63
      %s231 = scalar_select %p230, %s229, 63
      %p232 = scmp.lt.s32.totalorder %s21, 0
      %s233 = scalar_select %p232, %s21, 0
      %s234 = sadd.s32 %s233, %s231
      %s235 = smul.addr %s234, 4
      %s236 = scalar_lea.vmem %s0, %s235
      %s237 = smul.u32 32, %s19
      %s238 = smul.u32 16, %s21
      %p239 = scmp.lt.s32.totalorder %s238, 15
      %s240 = scalar_select %p239, %s238, 15
      %p241 = scmp.lt.s32.totalorder %s20, 0
      %s242 = scalar_select %p241, %s20, 0
      %s243 = sadd.s32 %s242, %s240
      %s244 = smul.addr %s243, 4
      %s245 = scalar_lea.vmem %s1, %s244
      %s246 = smul.u32 16, %s21
      %p247 = scmp.lt.s32.totalorder %s20, 0
      %s248 = scalar_select %p247, %s20, 0
      %s249 = scalar_lea.vmem %s2, %s248
      %s250 = smul.u32 32, %s19
      %p251 = scmp.lt.s32.totalorder %s250, 63
      %s252 = scalar_select %p251, %s250, 63
      %p253 = scmp.lt.s32.totalorder %s20, 0
      %s254 = scalar_select %p253, %s20, 0
      %s255 = sadd.s32 %s254, %s252
      %s256 = smul.addr %s255, 8
      %s257 = scalar_lea.vmem %s3, %s256
      %s258 = smul.u32 32, %s19
      %p260 = scmp.eq.s32.totalorder %s21, 0
      // Predicated region
      $region33: #{_lambda_.34} parent=31 // pred_check
        %p261 = pneg %p260
      $region34: #{_lambda_.34} parent=31 // pred_check_branch
        %263 = sbr.rel (%p261) target = $region36
      $region35: #{_lambda_.34} parent=31 // pred_region
        %264 = vst [vmem:[#allocation2] sm:$0xff] 0.0
        %265 = vst [vmem:[#allocation2 + $0x8] sm:$0xff] 0.0
        %266 = vst [vmem:[#allocation2 + $0x10] sm:$0xff] 0.0
        %267 = vst [vmem:[#allocation2 + $0x18] sm:$0xff] 0.0
        %268 = vst [vmem:[#allocation2 + $0x20] sm:$0xff] 0.0
        %269 = vst [vmem:[#allocation2 + $0x28] sm:$0xff] 0.0
        %270 = vst [vmem:[#allocation2 + $0x30] sm:$0xff] 0.0
        %271 = vst [vmem:[#allocation2 + $0x38] sm:$0xff] 0.0
        %272 = vst [vmem:[#allocation2 + $0x40] sm:$0xff] 0.0
        %273 = vst [vmem:[#allocation2 + $0x48] sm:$0xff] 0.0
        %274 = vst [vmem:[#allocation2 + $0x50] sm:$0xff] 0.0
        %275 = vst [vmem:[#allocation2 + $0x58] sm:$0xff] 0.0
        %276 = vst [vmem:[#allocation2 + $0x60] sm:$0xff] 0.0
        %277 = vst [vmem:[#allocation2 + $0x68] sm:$0xff] 0.0
        %278 = vst [vmem:[#allocation2 + $0x70] sm:$0xff] 0.0
        %279 = vst [vmem:[#allocation2 + $0x78] sm:$0xff] 0.0
        %280 = vst [vmem:[#allocation2 + $0x80] sm:$0xff] 0.0
        %281 = vst [vmem:[#allocation2 + $0x88] sm:$0xff] 0.0
        %282 = vst [vmem:[#allocation2 + $0x90] sm:$0xff] 0.0
        %283 = vst [vmem:[#allocation2 + $0x98] sm:$0xff] 0.0
        %284 = vst [vmem:[#allocation2 + $0xa0] sm:$0xff] 0.0
        %285 = vst [vmem:[#allocation2 + $0xa8] sm:$0xff] 0.0
        %286 = vst [vmem:[#allocation2 + $0xb0] sm:$0xff] 0.0
        %287 = vst [vmem:[#allocation2 + $0xb8] sm:$0xff] 0.0
        %288 = vst [vmem:[#allocation2 + $0xc0] sm:$0xff] 0.0
        %289 = vst [vmem:[#allocation2 + $0xc8] sm:$0xff] 0.0
        %290 = vst [vmem:[#allocation2 + $0xd0] sm:$0xff] 0.0
        %291 = vst [vmem:[#allocation2 + $0xd8] sm:$0xff] 0.0
        %292 = vst [vmem:[#allocation2 + $0xe0] sm:$0xff] 0.0
        %293 = vst [vmem:[#allocation2 + $0xe8] sm:$0xff] 0.0
        %294 = vst [vmem:[#allocation2 + $0xf0] sm:$0xff] 0.0
        %295 = vst [vmem:[#allocation2 + $0xf8] sm:$0xff] 0.0
      $region36: #{_lambda_.34} parent=31 // pred_fallthru
        _
      %v296 = vld [vmem:[#allocation2] sm:$0xff]
      %v297 = vld [vmem:[#allocation2 + $0x8] sm:$0xff]
      %v298 = vld [vmem:[#allocation2 + $0x10] sm:$0xff]
      %v299 = vld [vmem:[#allocation2 + $0x18] sm:$0xff]
      %v300 = vld [vmem:[#allocation2 + $0x20] sm:$0xff]
      %v301 = vld [vmem:[#allocation2 + $0x28] sm:$0xff]
      %v302 = vld [vmem:[#allocation2 + $0x30] sm:$0xff]
      %v303 = vld [vmem:[#allocation2 + $0x38] sm:$0xff]
      %v304 = vld [vmem:[#allocation2 + $0x40] sm:$0xff]
      %v305 = vld [vmem:[#allocation2 + $0x48] sm:$0xff]
      %v306 = vld [vmem:[#allocation2 + $0x50] sm:$0xff]
      %v307 = vld [vmem:[#allocation2 + $0x58] sm:$0xff]
      %v308 = vld [vmem:[#allocation2 + $0x60] sm:$0xff]
      %v309 = vld [vmem:[#allocation2 + $0x68] sm:$0xff]
      %v310 = vld [vmem:[#allocation2 + $0x70] sm:$0xff]
      %v311 = vld [vmem:[#allocation2 + $0x78] sm:$0xff]
      %v312 = vld [vmem:[#allocation2 + $0x80] sm:$0xff]
      %v313 = vld [vmem:[#allocation2 + $0x88] sm:$0xff]
      %v314 = vld [vmem:[#allocation2 + $0x90] sm:$0xff]
      %v315 = vld [vmem:[#allocation2 + $0x98] sm:$0xff]
      %v316 = vld [vmem:[#allocation2 + $0xa0] sm:$0xff]
      %v317 = vld [vmem:[#allocation2 + $0xa8] sm:$0xff]
      %v318 = vld [vmem:[#allocation2 + $0xb0] sm:$0xff]
      %v319 = vld [vmem:[#allocation2 + $0xb8] sm:$0xff]
      %v320 = vld [vmem:[#allocation2 + $0xc0] sm:$0xff]
      %v321 = vld [vmem:[#allocation2 + $0xc8] sm:$0xff]
      %v322 = vld [vmem:[#allocation2 + $0xd0] sm:$0xff]
      %v323 = vld [vmem:[#allocation2 + $0xd8] sm:$0xff]
      %v324 = vld [vmem:[#allocation2 + $0xe0] sm:$0xff]
      %v325 = vld [vmem:[#allocation2 + $0xe8] sm:$0xff]
      %v326 = vld [vmem:[#allocation2 + $0xf0] sm:$0xff]
      %v327 = vld [vmem:[#allocation2 + $0xf8] sm:$0xff]
      %v328 = vld [vmem:[%s236] sm:$0xf]
      %v329 = vld [vmem:[%s236 + $0x4] sm:$0xf]
      %v330 = vld [vmem:[%s236 + $0x8] sm:$0xf]
      %v331 = vld [vmem:[%s236 + $0xc] sm:$0xf]
      %v332 = vld [vmem:[%s236 + $0x10] sm:$0xf]
      %v333 = vld [vmem:[%s236 + $0x14] sm:$0xf]
      %v334 = vld [vmem:[%s236 + $0x18] sm:$0xf]
      %v335 = vld [vmem:[%s236 + $0x1c] sm:$0xf]
      %v336 = vld [vmem:[%s236 + $0x20] sm:$0xf]
      %v337 = vld [vmem:[%s236 + $0x24] sm:$0xf]
      %v338 = vld [vmem:[%s236 + $0x28] sm:$0xf]
      %v339 = vld [vmem:[%s236 + $0x2c] sm:$0xf]
      %v340 = vld [vmem:[%s236 + $0x30] sm:$0xf]
      %v341 = vld [vmem:[%s236 + $0x34] sm:$0xf]
      %v342 = vld [vmem:[%s236 + $0x38] sm:$0xf]
      %v343 = vld [vmem:[%s236 + $0x3c] sm:$0xf]
      %v344 = vld [vmem:[%s236 + $0x40] sm:$0xf]
      %v345 = vld [vmem:[%s236 + $0x44] sm:$0xf]
      %v346 = vld [vmem:[%s236 + $0x48] sm:$0xf]
      %v347 = vld [vmem:[%s236 + $0x4c] sm:$0xf]
      %v348 = vld [vmem:[%s236 + $0x50] sm:$0xf]
      %v349 = vld [vmem:[%s236 + $0x54] sm:$0xf]
      %v350 = vld [vmem:[%s236 + $0x58] sm:$0xf]
      %v351 = vld [vmem:[%s236 + $0x5c] sm:$0xf]
      %v352 = vld [vmem:[%s236 + $0x60] sm:$0xf]
      %v353 = vld [vmem:[%s236 + $0x64] sm:$0xf]
      %v354 = vld [vmem:[%s236 + $0x68] sm:$0xf]
      %v355 = vld [vmem:[%s236 + $0x6c] sm:$0xf]
      %v356 = vld [vmem:[%s236 + $0x70] sm:$0xf]
      %v357 = vld [vmem:[%s236 + $0x74] sm:$0xf]
      %v358 = vld [vmem:[%s236 + $0x78] sm:$0xf]
      %v359 = vld [vmem:[%s236 + $0x7c] sm:$0xf]
      %v360 = vld [vmem:[%s245] sm:$0xf]
      %v361 = vld [vmem:[%s245 + $0x4] sm:$0xf]
      %v362 = vld [vmem:[%s245 + $0x8] sm:$0xf]
      %v363 = vld [vmem:[%s245 + $0xc] sm:$0xf]
      %v364 = vld [vmem:[%s245 + $0x10] sm:$0xf]
      %v365 = vld [vmem:[%s245 + $0x14] sm:$0xf]
      %v366 = vld [vmem:[%s245 + $0x18] sm:$0xf]
      %v367 = vld [vmem:[%s245 + $0x1c] sm:$0xf]
      %v368 = vld [vmem:[%s245 + $0x20] sm:$0xf]
      %v369 = vld [vmem:[%s245 + $0x24] sm:$0xf]
      %v370 = vld [vmem:[%s245 + $0x28] sm:$0xf]
      %v371 = vld [vmem:[%s245 + $0x2c] sm:$0xf]
      %v372 = vld [vmem:[%s245 + $0x30] sm:$0xf]
      %v373 = vld [vmem:[%s245 + $0x34] sm:$0xf]
      %v374 = vld [vmem:[%s245 + $0x38] sm:$0xf]
      %v375 = vld [vmem:[%s245 + $0x3c] sm:$0xf]
      %v408 = vunpack.c.l.b16 %v328
      %v409 = vunpack.c.l.b16 %v329
      %v410 = vunpack.c.l.b16 %v330
      %v411 = vunpack.c.l.b16 %v331
      %v412 = vunpack.c.l.b16 %v332
      %v413 = vunpack.c.l.b16 %v333
      %v414 = vunpack.c.l.b16 %v334
      %v415 = vunpack.c.l.b16 %v335
      %v416 = vunpack.c.l.b16 %v336
      %v417 = vunpack.c.l.b16 %v337
      %v418 = vunpack.c.l.b16 %v338
      %v419 = vunpack.c.l.b16 %v339
      %v420 = vunpack.c.l.b16 %v340
      %v421 = vunpack.c.l.b16 %v341
      %v422 = vunpack.c.l.b16 %v342
      %v423 = vunpack.c.l.b16 %v343
      %v424 = vunpack.c.l.b16 %v344
      %v425 = vunpack.c.l.b16 %v345
      %v426 = vunpack.c.l.b16 %v346
      %v427 = vunpack.c.l.b16 %v347
      %v428 = vunpack.c.l.b16 %v348
      %v429 = vunpack.c.l.b16 %v349
      %v430 = vunpack.c.l.b16 %v350
      %v431 = vunpack.c.l.b16 %v351
      %v432 = vunpack.c.l.b16 %v352
      %v433 = vunpack.c.l.b16 %v353
      %v434 = vunpack.c.l.b16 %v354
      %v435 = vunpack.c.l.b16 %v355
      %v436 = vunpack.c.l.b16 %v356
      %v437 = vunpack.c.l.b16 %v357
      %v438 = vunpack.c.l.b16 %v358
      %v439 = vunpack.c.l.b16 %v359
      %v440 = vpack.c.b16 %v409, %v408
      %v441 = vpack.c.b16 %v411, %v410
      %v442 = vpack.c.b16 %v413, %v412
      %v443 = vpack.c.b16 %v415, %v414
      %v444 = vpack.c.b16 %v417, %v416
      %v445 = vpack.c.b16 %v419, %v418
      %v446 = vpack.c.b16 %v421, %v420
      %v447 = vpack.c.b16 %v423, %v422
      %v448 = vpack.c.b16 %v425, %v424
      %v449 = vpack.c.b16 %v427, %v426
      %v450 = vpack.c.b16 %v429, %v428
      %v451 = vpack.c.b16 %v431, %v430
      %v452 = vpack.c.b16 %v433, %v432
      %v453 = vpack.c.b16 %v435, %v434
      %v454 = vpack.c.b16 %v437, %v436
      %v455 = vpack.c.b16 %v439, %v438
      %v488 = vunpack.c.l.b16 %v360
      %v489 = vunpack.c.l.b16 %v361
      %v490 = vunpack.c.l.b16 %v362
      %v491 = vunpack.c.l.b16 %v363
      %v492 = vunpack.c.l.b16 %v364
      %v493 = vunpack.c.l.b16 %v365
      %v494 = vunpack.c.l.b16 %v366
      %v495 = vunpack.c.l.b16 %v367
      %v496 = vunpack.c.l.b16 %v368
      %v497 = vunpack.c.l.b16 %v369
      %v498 = vunpack.c.l.b16 %v370
      %v499 = vunpack.c.l.b16 %v371
      %v500 = vunpack.c.l.b16 %v372
      %v501 = vunpack.c.l.b16 %v373
      %v502 = vunpack.c.l.b16 %v374
      %v503 = vunpack.c.l.b16 %v375
      %v504 = vpack.c.b16 %v489, %v488
      %v505 = vpack.c.b16 %v491, %v490
      %v506 = vpack.c.b16 %v493, %v492
      %v507 = vpack.c.b16 %v495, %v494
      %v508 = vpack.c.b16 %v497, %v496
      %v509 = vpack.c.b16 %v499, %v498
      %v510 = vpack.c.b16 %v501, %v500
      %v511 = vpack.c.b16 %v503, %v502
      %520 = vmatprep.subr.bf16.mxu0 0
      %521 = vmatpush1.bf16.msra.mxu0 %v504
      %522 = vmatprep.subr.bf16.mxu0 0
      %523 = vmatpush1.bf16.msra.mxu0 %v505
      %524 = vmatprep.subr.bf16.mxu0 0
      %525 = vmatpush1.bf16.msra.mxu0 %v506
      %526 = vmatprep.subr.bf16.mxu0 0
      %527 = vmatpush1.bf16.msra.mxu0 %v507
      %528 = vmatprep.subr.bf16.mxu0 0
      %529 = vmatpush1.bf16.msra.mxu0 %v508
      %530 = vmatprep.subr.bf16.mxu0 0
      %531 = vmatpush1.bf16.msra.mxu0 %v509
      %532 = vmatprep.subr.bf16.mxu0 0
      %533 = vmatpush1.bf16.msra.mxu0 %v510
      %534 = vmatprep.subr.bf16.mxu0 0
      %535 = vmatpush1.bf16.msra.mxu0 %v511
      %536 = vmatprep.subr.bf16.mxu0 0
      %537 = vmatpush1.bf16.msra.mxu0 0
      %538 = vmatprep.subr.bf16.mxu0 0
      %539 = vmatpush1.bf16.msra.mxu0 0
      %540 = vmatprep.subr.bf16.mxu0 0
      %541 = vmatpush1.bf16.msra.mxu0 0
      %542 = vmatprep.subr.bf16.mxu0 0
      %543 = vmatpush1.bf16.msra.mxu0 0
      %544 = vmatprep.subr.bf16.mxu0 0
      %545 = vmatpush1.bf16.msra.mxu0 0
      %546 = vmatprep.subr.bf16.mxu0 0
      %547 = vmatpush1.bf16.msra.mxu0 0
      %548 = vmatprep.subr.bf16.mxu0 0
      %549 = vmatpush1.bf16.msra.mxu0 0
      %550 = vmatprep.subr.bf16.mxu0 0
      %551 = vmatpush1.bf16.msra.mxu0 0
      %552 = vmatprep.mubr.bf16.mxu0 0
      %553 = vmatmul.mubr.bf16.gmra.mrb[0].mxu0 %v440
      %v554 = vpop.f32.mrb[0].mxu0
      %v555 = vadd.f32 0.0, %v554
      %v556 = vpop.f32.mrb[0].mxu0
      %v557 = vpop.f32.mrb[0].mxu0
      %v558 = vadd.f32 0.0, %v557
      %v559 = vpop.f32.mrb[0].mxu0
      %560 = vmatprep.mubr.bf16.mxu0 0
      %561 = vmatmul.mubr.bf16.gmra.mrb[0].mxu0 %v441
      %v562 = vpop.f32.mrb[0].mxu0
      %v563 = vadd.f32 0.0, %v562
      %v564 = vpop.f32.mrb[0].mxu0
      %v565 = vpop.f32.mrb[0].mxu0
      %v566 = vadd.f32 0.0, %v565
      %v567 = vpop.f32.mrb[0].mxu0
      %568 = vmatprep.mubr.bf16.mxu0 0
      %569 = vmatmul.mubr.bf16.gmra.mrb[0].mxu0 %v442
      %v570 = vpop.f32.mrb[0].mxu0
      %v571 = vadd.f32 0.0, %v570
      %v572 = vpop.f32.mrb[0].mxu0
      %v573 = vpop.f32.mrb[0].mxu0
      %v574 = vadd.f32 0.0, %v573
      %v575 = vpop.f32.mrb[0].mxu0
      %576 = vmatprep.mubr.bf16.mxu0 0
      %577 = vmatmul.mubr.bf16.gmra.mrb[0].mxu0 %v443
      %v578 = vpop.f32.mrb[0].mxu0
      %v579 = vadd.f32 0.0, %v578
      %v580 = vpop.f32.mrb[0].mxu0
      %v581 = vpop.f32.mrb[0].mxu0
      %v582 = vadd.f32 0.0, %v581
      %v583 = vpop.f32.mrb[0].mxu0
      %584 = vmatprep.mubr.bf16.mxu0 0
      %585 = vmatmul.mubr.bf16.gmra.mrb[0].mxu0 %v444
      %v586 = vpop.f32.mrb[0].mxu0
      %v587 = vadd.f32 0.0, %v586
      %v588 = vpop.f32.mrb[0].mxu0
      %v589 = vpop.f32.mrb[0].mxu0
      %v590 = vadd.f32 0.0, %v589
      %v591 = vpop.f32.mrb[0].mxu0
      %592 = vmatprep.mubr.bf16.mxu0 0
      %593 = vmatmul.mubr.bf16.gmra.mrb[0].mxu0 %v445
      %v594 = vpop.f32.mrb[0].mxu0
      %v595 = vadd.f32 0.0, %v594
      %v596 = vpop.f32.mrb[0].mxu0
      %v597 = vpop.f32.mrb[0].mxu0
      %v598 = vadd.f32 0.0, %v597
      %v599 = vpop.f32.mrb[0].mxu0
      %600 = vmatprep.mubr.bf16.mxu0 0
      %601 = vmatmul.mubr.bf16.gmra.mrb[0].mxu0 %v446
      %v602 = vpop.f32.mrb[0].mxu0
      %v603 = vadd.f32 0.0, %v602
      %v604 = vpop.f32.mrb[0].mxu0
      %v605 = vpop.f32.mrb[0].mxu0
      %v606 = vadd.f32 0.0, %v605
      %v607 = vpop.f32.mrb[0].mxu0
      %608 = vmatprep.mubr.bf16.mxu0 0
      %609 = vmatmul.mubr.bf16.gmra.mrb[0].mxu0 %v447
      %v610 = vpop.f32.mrb[0].mxu0
      %v611 = vadd.f32 0.0, %v610
      %v612 = vpop.f32.mrb[0].mxu0
      %v613 = vpop.f32.mrb[0].mxu0
      %v614 = vadd.f32 0.0, %v613
      %v615 = vpop.f32.mrb[0].mxu0
      %616 = vmatprep.mubr.bf16.mxu0 0
      %617 = vmatmul.mubr.bf16.gmra.mrb[0].mxu0 %v448
      %v618 = vpop.f32.mrb[0].mxu0
      %v619 = vadd.f32 0.0, %v618
      %v620 = vpop.f32.mrb[0].mxu0
      %v621 = vpop.f32.mrb[0].mxu0
      %v622 = vadd.f32 0.0, %v621
      %v623 = vpop.f32.mrb[0].mxu0
      %624 = vmatprep.mubr.bf16.mxu0 0
      %625 = vmatmul.mubr.bf16.gmra.mrb[0].mxu0 %v449
      %v626 = vpop.f32.mrb[0].mxu0
      %v627 = vadd.f32 0.0, %v626
      %v628 = vpop.f32.mrb[0].mxu0
      %v629 = vpop.f32.mrb[0].mxu0
      %v630 = vadd.f32 0.0, %v629
      %v631 = vpop.f32.mrb[0].mxu0
      %632 = vmatprep.mubr.bf16.mxu0 0
      %633 = vmatmul.mubr.bf16.gmra.mrb[0].mxu0 %v450
      %v634 = vpop.f32.mrb[0].mxu0
      %v635 = vadd.f32 0.0, %v634
      %v636 = vpop.f32.mrb[0].mxu0
      %v637 = vpop.f32.mrb[0].mxu0
      %v638 = vadd.f32 0.0, %v637
      %v639 = vpop.f32.mrb[0].mxu0
      %640 = vmatprep.mubr.bf16.mxu0 0
      %641 = vmatmul.mubr.bf16.gmra.mrb[0].mxu0 %v451
      %v642 = vpop.f32.mrb[0].mxu0
      %v643 = vadd.f32 0.0, %v642
      %v644 = vpop.f32.mrb[0].mxu0
      %v645 = vpop.f32.mrb[0].mxu0
      %v646 = vadd.f32 0.0, %v645
      %v647 = vpop.f32.mrb[0].mxu0
      %648 = vmatprep.mubr.bf16.mxu0 0
      %649 = vmatmul.mubr.bf16.gmra.mrb[0].mxu0 %v452
      %v650 = vpop.f32.mrb[0].mxu0
      %v651 = vadd.f32 0.0, %v650
      %v652 = vpop.f32.mrb[0].mxu0
      %v653 = vpop.f32.mrb[0].mxu0
      %v654 = vadd.f32 0.0, %v653
      %v655 = vpop.f32.mrb[0].mxu0
      %656 = vmatprep.mubr.bf16.mxu0 0
      %657 = vmatmul.mubr.bf16.gmra.mrb[0].mxu0 %v453
      %v658 = vpop.f32.mrb[0].mxu0
      %v659 = vadd.f32 0.0, %v658
      %v660 = vpop.f32.mrb[0].mxu0
      %v661 = vpop.f32.mrb[0].mxu0
      %v662 = vadd.f32 0.0, %v661
      %v663 = vpop.f32.mrb[0].mxu0
      %664 = vmatprep.mubr.bf16.mxu0 0
      %665 = vmatmul.mubr.bf16.gmra.mrb[0].mxu0 %v454
      %v666 = vpop.f32.mrb[0].mxu0
      %v667 = vadd.f32 0.0, %v666
      %v668 = vpop.f32.mrb[0].mxu0
      %v669 = vpop.f32.mrb[0].mxu0
      %v670 = vadd.f32 0.0, %v669
      %v671 = vpop.f32.mrb[0].mxu0
      %672 = vmatprep.mubr.bf16.mxu0 0
      %673 = vmatmul.mubr.bf16.gmra.mrb[0].mxu0 %v455
      %v674 = vpop.f32.mrb[0].mxu0
      %v675 = vadd.f32 0.0, %v674
      %v676 = vpop.f32.mrb[0].mxu0
      %v677 = vpop.f32.mrb[0].mxu0
      %v678 = vadd.f32 0.0, %v677
      %v679 = vpop.f32.mrb[0].mxu0
      %680 = vdwg.mxu0
      %v681 = vadd.f32 %v296, %v555
      %v682 = vadd.f32 %v297, %v558
      %v683 = vadd.f32 %v298, %v563
      %v684 = vadd.f32 %v299, %v566
      %v685 = vadd.f32 %v300, %v571
      %v686 = vadd.f32 %v301, %v574
      %v687 = vadd.f32 %v302, %v579
      %v688 = vadd.f32 %v303, %v582
      %v689 = vadd.f32 %v304, %v587
      %v690 = vadd.f32 %v305, %v590
      %v691 = vadd.f32 %v306, %v595
      %v692 = vadd.f32 %v307, %v598
      %v693 = vadd.f32 %v308, %v603
      %v694 = vadd.f32 %v309, %v606
      %v695 = vadd.f32 %v310, %v611
      %v696 = vadd.f32 %v311, %v614
      %v697 = vadd.f32 %v312, %v619
      %v698 = vadd.f32 %v313, %v622
      %v699 = vadd.f32 %v314, %v627
      %v700 = vadd.f32 %v315, %v630
      %v701 = vadd.f32 %v316, %v635
      %v702 = vadd.f32 %v317, %v638
      %v703 = vadd.f32 %v318, %v643
      %v704 = vadd.f32 %v319, %v646
      %v705 = vadd.f32 %v320, %v651
      %v706 = vadd.f32 %v321, %v654
      %v707 = vadd.f32 %v322, %v659
      %v708 = vadd.f32 %v323, %v662
      %v709 = vadd.f32 %v324, %v667
      %v710 = vadd.f32 %v325, %v670
      %v711 = vadd.f32 %v326, %v675
      %v712 = vadd.f32 %v327, %v678
      %713 = vst [vmem:[#allocation2] sm:$0xff] %v681
      %714 = vst [vmem:[#allocation2 + $0x8] sm:$0xff] %v682
      %715 = vst [vmem:[#allocation2 + $0x10] sm:$0xff] %v683
      %716 = vst [vmem:[#allocation2 + $0x18] sm:$0xff] %v684
      %717 = vst [vmem:[#allocation2 + $0x20] sm:$0xff] %v685
      %718 = vst [vmem:[#allocation2 + $0x28] sm:$0xff] %v686
      %719 = vst [vmem:[#allocation2 + $0x30] sm:$0xff] %v687
      %720 = vst [vmem:[#allocation2 + $0x38] sm:$0xff] %v688
      %721 = vst [vmem:[#allocation2 + $0x40] sm:$0xff] %v689
      %722 = vst [vmem:[#allocation2 + $0x48] sm:$0xff] %v690
      %723 = vst [vmem:[#allocation2 + $0x50] sm:$0xff] %v691
      %724 = vst [vmem:[#allocation2 + $0x58] sm:$0xff] %v692
      %725 = vst [vmem:[#allocation2 + $0x60] sm:$0xff] %v693
      %726 = vst [vmem:[#allocation2 + $0x68] sm:$0xff] %v694
      %727 = vst [vmem:[#allocation2 + $0x70] sm:$0xff] %v695
      %728 = vst [vmem:[#allocation2 + $0x78] sm:$0xff] %v696
      %729 = vst [vmem:[#allocation2 + $0x80] sm:$0xff] %v697
      %730 = vst [vmem:[#allocation2 + $0x88] sm:$0xff] %v698
      %731 = vst [vmem:[#allocation2 + $0x90] sm:$0xff] %v699
      %732 = vst [vmem:[#allocation2 + $0x98] sm:$0xff] %v700
      %733 = vst [vmem:[#allocation2 + $0xa0] sm:$0xff] %v701
      %734 = vst [vmem:[#allocation2 + $0xa8] sm:$0xff] %v702
      %735 = vst [vmem:[#allocation2 + $0xb0] sm:$0xff] %v703
      %736 = vst [vmem:[#allocation2 + $0xb8] sm:$0xff] %v704
      %737 = vst [vmem:[#allocation2 + $0xc0] sm:$0xff] %v705
      %738 = vst [vmem:[#allocation2 + $0xc8] sm:$0xff] %v706
      %739 = vst [vmem:[#allocation2 + $0xd0] sm:$0xff] %v707
      %740 = vst [vmem:[#allocation2 + $0xd8] sm:$0xff] %v708
      %741 = vst [vmem:[#allocation2 + $0xe0] sm:$0xff] %v709
      %742 = vst [vmem:[#allocation2 + $0xe8] sm:$0xff] %v710
      %743 = vst [vmem:[#allocation2 + $0xf0] sm:$0xff] %v711
      %744 = vst [vmem:[#allocation2 + $0xf8] sm:$0xff] %v712
      // Predicated region
      $region37: #{_lambda_.34} parent=31 // pred_check
        %p745 = pneg %p260
      $region38: #{_lambda_.34} parent=31 // pred_check_branch
        %747 = sbr.rel (%p745) target = $region40
      $region39: #{_lambda_.34} parent=31 // pred_region
        %v748 = vld [vmem:[#allocation2] sm:$0xff]
        %v749 = vld [vmem:[#allocation2 + $0x8] sm:$0xff]
        %v750 = vld [vmem:[#allocation2 + $0x10] sm:$0xff]
        %v751 = vld [vmem:[#allocation2 + $0x18] sm:$0xff]
        %v752 = vld [vmem:[#allocation2 + $0x20] sm:$0xff]
        %v753 = vld [vmem:[#allocation2 + $0x28] sm:$0xff]
        %v754 = vld [vmem:[#allocation2 + $0x30] sm:$0xff]
        %v755 = vld [vmem:[#allocation2 + $0x38] sm:$0xff]
        %v756 = vld [vmem:[#allocation2 + $0x40] sm:$0xff]
        %v757 = vld [vmem:[#allocation2 + $0x48] sm:$0xff]
        %v758 = vld [vmem:[#allocation2 + $0x50] sm:$0xff]
        %v759 = vld [vmem:[#allocation2 + $0x58] sm:$0xff]
        %v760 = vld [vmem:[#allocation2 + $0x60] sm:$0xff]
        %v761 = vld [vmem:[#allocation2 + $0x68] sm:$0xff]
        %v762 = vld [vmem:[#allocation2 + $0x70] sm:$0xff]
        %v763 = vld [vmem:[#allocation2 + $0x78] sm:$0xff]
        %v764 = vld [vmem:[#allocation2 + $0x80] sm:$0xff]
        %v765 = vld [vmem:[#allocation2 + $0x88] sm:$0xff]
        %v766 = vld [vmem:[#allocation2 + $0x90] sm:$0xff]
        %v767 = vld [vmem:[#allocation2 + $0x98] sm:$0xff]
        %v768 = vld [vmem:[#allocation2 + $0xa0] sm:$0xff]
        %v769 = vld [vmem:[#allocation2 + $0xa8] sm:$0xff]
        %v770 = vld [vmem:[#allocation2 + $0xb0] sm:$0xff]
        %v771 = vld [vmem:[#allocation2 + $0xb8] sm:$0xff]
        %v772 = vld [vmem:[#allocation2 + $0xc0] sm:$0xff]
        %v773 = vld [vmem:[#allocation2 + $0xc8] sm:$0xff]
        %v774 = vld [vmem:[#allocation2 + $0xd0] sm:$0xff]
        %v775 = vld [vmem:[#allocation2 + $0xd8] sm:$0xff]
        %v776 = vld [vmem:[#allocation2 + $0xe0] sm:$0xff]
        %v777 = vld [vmem:[#allocation2 + $0xe8] sm:$0xff]
        %v778 = vld [vmem:[#allocation2 + $0xf0] sm:$0xff]
        %v779 = vld [vmem:[#allocation2 + $0xf8] sm:$0xff]
        %v780 = vld [vmem:[%s249] sm:$0x1]
        %v782 = vlaneseq
        %v783 = vshrl.u32 %v782, 7
        %v784 = vsub.s32 0, %v783
        %v785 = vrot.slane %v780, %v784
        %v787 = vadd.f32 %v748, %v785
        %v788 = vadd.f32 %v749, %v785
        %v789 = vadd.f32 %v750, %v785
        %v790 = vadd.f32 %v751, %v785
        %v791 = vadd.f32 %v752, %v785
        %v792 = vadd.f32 %v753, %v785
        %v793 = vadd.f32 %v754, %v785
        %v794 = vadd.f32 %v755, %v785
        %v795 = vadd.f32 %v756, %v785
        %v796 = vadd.f32 %v757, %v785
        %v797 = vadd.f32 %v758, %v785
        %v798 = vadd.f32 %v759, %v785
        %v799 = vadd.f32 %v760, %v785
        %v800 = vadd.f32 %v761, %v785
        %v801 = vadd.f32 %v762, %v785
        %v802 = vadd.f32 %v763, %v785
        %v803 = vadd.f32 %v764, %v785
        %v804 = vadd.f32 %v765, %v785
        %v805 = vadd.f32 %v766, %v785
        %v806 = vadd.f32 %v767, %v785
        %v807 = vadd.f32 %v768, %v785
        %v808 = vadd.f32 %v769, %v785
        %v809 = vadd.f32 %v770, %v785
        %v810 = vadd.f32 %v771, %v785
        %v811 = vadd.f32 %v772, %v785
        %v812 = vadd.f32 %v773, %v785
        %v813 = vadd.f32 %v774, %v785
        %v814 = vadd.f32 %v775, %v785
        %v815 = vadd.f32 %v776, %v785
        %v816 = vadd.f32 %v777, %v785
        %v817 = vadd.f32 %v778, %v785
        %v818 = vadd.f32 %v779, %v785
        %vm819 = vcmp.ge.f32.partialorder %v787, 0.0
        %vm820 = vcmp.ge.f32.partialorder %v788, 0.0
        %vm821 = vcmp.ge.f32.partialorder %v789, 0.0
        %vm822 = vcmp.ge.f32.partialorder %v790, 0.0
        %vm823 = vcmp.ge.f32.partialorder %v791, 0.0
        %vm824 = vcmp.ge.f32.partialorder %v792, 0.0
        %vm825 = vcmp.ge.f32.partialorder %v793, 0.0
        %vm826 = vcmp.ge.f32.partialorder %v794, 0.0
        %vm827 = vcmp.ge.f32.partialorder %v795, 0.0
        %vm828 = vcmp.ge.f32.partialorder %v796, 0.0
        %vm829 = vcmp.ge.f32.partialorder %v797, 0.0
        %vm830 = vcmp.ge.f32.partialorder %v798, 0.0
        %vm831 = vcmp.ge.f32.partialorder %v799, 0.0
        %vm832 = vcmp.ge.f32.partialorder %v800, 0.0
        %vm833 = vcmp.ge.f32.partialorder %v801, 0.0
        %vm834 = vcmp.ge.f32.partialorder %v802, 0.0
        %vm835 = vcmp.ge.f32.partialorder %v803, 0.0
        %vm836 = vcmp.ge.f32.partialorder %v804, 0.0
        %vm837 = vcmp.ge.f32.partialorder %v805, 0.0
        %vm838 = vcmp.ge.f32.partialorder %v806, 0.0
        %vm839 = vcmp.ge.f32.partialorder %v807, 0.0
        %vm840 = vcmp.ge.f32.partialorder %v808, 0.0
        %vm841 = vcmp.ge.f32.partialorder %v809, 0.0
        %vm842 = vcmp.ge.f32.partialorder %v810, 0.0
        %vm843 = vcmp.ge.f32.partialorder %v811, 0.0
        %vm844 = vcmp.ge.f32.partialorder %v812, 0.0
        %vm845 = vcmp.ge.f32.partialorder %v813, 0.0
        %vm846 = vcmp.ge.f32.partialorder %v814, 0.0
        %vm847 = vcmp.ge.f32.partialorder %v815, 0.0
        %vm848 = vcmp.ge.f32.partialorder %v816, 0.0
        %vm849 = vcmp.ge.f32.partialorder %v817, 0.0
        %vm850 = vcmp.ge.f32.partialorder %v818, 0.0
        %v851 = vmul.f32 %v787, 0.2
        %v852 = vmul.f32 %v788, 0.2
        %v853 = vmul.f32 %v789, 0.2
        %v854 = vmul.f32 %v790, 0.2
        %v855 = vmul.f32 %v791, 0.2
        %v856 = vmul.f32 %v792, 0.2
        %v857 = vmul.f32 %v793, 0.2
        %v858 = vmul.f32 %v794, 0.2
        %v859 = vmul.f32 %v795, 0.2
        %v860 = vmul.f32 %v796, 0.2
        %v861 = vmul.f32 %v797, 0.2
        %v862 = vmul.f32 %v798, 0.2
        %v863 = vmul.f32 %v799, 0.2
        %v864 = vmul.f32 %v800, 0.2
        %v865 = vmul.f32 %v801, 0.2
        %v866 = vmul.f32 %v802, 0.2
        %v867 = vmul.f32 %v803, 0.2
        %v868 = vmul.f32 %v804, 0.2
        %v869 = vmul.f32 %v805, 0.2
        %v870 = vmul.f32 %v806, 0.2
        %v871 = vmul.f32 %v807, 0.2
        %v872 = vmul.f32 %v808, 0.2
        %v873 = vmul.f32 %v809, 0.2
        %v874 = vmul.f32 %v810, 0.2
        %v875 = vmul.f32 %v811, 0.2
        %v876 = vmul.f32 %v812, 0.2
        %v877 = vmul.f32 %v813, 0.2
        %v878 = vmul.f32 %v814, 0.2
        %v879 = vmul.f32 %v815, 0.2
        %v880 = vmul.f32 %v816, 0.2
        %v881 = vmul.f32 %v817, 0.2
        %v882 = vmul.f32 %v818, 0.2
        %v883 = vsel %vm819, %v787, %v851
        %v884 = vsel %vm820, %v788, %v852
        %v885 = vsel %vm821, %v789, %v853
        %v886 = vsel %vm822, %v790, %v854
        %v887 = vsel %vm823, %v791, %v855
        %v888 = vsel %vm824, %v792, %v856
        %v889 = vsel %vm825, %v793, %v857
        %v890 = vsel %vm826, %v794, %v858
        %v891 = vsel %vm827, %v795, %v859
        %v892 = vsel %vm828, %v796, %v860
        %v893 = vsel %vm829, %v797, %v861
        %v894 = vsel %vm830, %v798, %v862
        %v895 = vsel %vm831, %v799, %v863
        %v896 = vsel %vm832, %v800, %v864
        %v897 = vsel %vm833, %v801, %v865
        %v898 = vsel %vm834, %v802, %v866
        %v899 = vsel %vm835, %v803, %v867
        %v900 = vsel %vm836, %v804, %v868
        %v901 = vsel %vm837, %v805, %v869
        %v902 = vsel %vm838, %v806, %v870
        %v903 = vsel %vm839, %v807, %v871
        %v904 = vsel %vm840, %v808, %v872
        %v905 = vsel %vm841, %v809, %v873
        %v906 = vsel %vm842, %v810, %v874
        %v907 = vsel %vm843, %v811, %v875
        %v908 = vsel %vm844, %v812, %v876
        %v909 = vsel %vm845, %v813, %v877
        %v910 = vsel %vm846, %v814, %v878
        %v911 = vsel %vm847, %v815, %v879
        %v912 = vsel %vm848, %v816, %v880
        %v913 = vsel %vm849, %v817, %v881
        %v914 = vsel %vm850, %v818, %v882
        %915 = vst [vmem:[%s257] sm:$0xff] %v883
        %916 = vst [vmem:[%s257 + $0x8] sm:$0xff] %v884
        %917 = vst [vmem:[%s257 + $0x10] sm:$0xff] %v885
        %918 = vst [vmem:[%s257 + $0x18] sm:$0xff] %v886
        %919 = vst [vmem:[%s257 + $0x20] sm:$0xff] %v887
        %920 = vst [vmem:[%s257 + $0x28] sm:$0xff] %v888
        %921 = vst [vmem:[%s257 + $0x30] sm:$0xff] %v889
        %922 = vst [vmem:[%s257 + $0x38] sm:$0xff] %v890
        %923 = vst [vmem:[%s257 + $0x40] sm:$0xff] %v891
        %924 = vst [vmem:[%s257 + $0x48] sm:$0xff] %v892
        %925 = vst [vmem:[%s257 + $0x50] sm:$0xff] %v893
        %926 = vst [vmem:[%s257 + $0x58] sm:$0xff] %v894
        %927 = vst [vmem:[%s257 + $0x60] sm:$0xff] %v895
        %928 = vst [vmem:[%s257 + $0x68] sm:$0xff] %v896
        %929 = vst [vmem:[%s257 + $0x70] sm:$0xff] %v897
        %930 = vst [vmem:[%s257 + $0x78] sm:$0xff] %v898
        %931 = vst [vmem:[%s257 + $0x80] sm:$0xff] %v899
        %932 = vst [vmem:[%s257 + $0x88] sm:$0xff] %v900
        %933 = vst [vmem:[%s257 + $0x90] sm:$0xff] %v901
        %934 = vst [vmem:[%s257 + $0x98] sm:$0xff] %v902
        %935 = vst [vmem:[%s257 + $0xa0] sm:$0xff] %v903
        %936 = vst [vmem:[%s257 + $0xa8] sm:$0xff] %v904
        %937 = vst [vmem:[%s257 + $0xb0] sm:$0xff] %v905
        %938 = vst [vmem:[%s257 + $0xb8] sm:$0xff] %v906
        %939 = vst [vmem:[%s257 + $0xc0] sm:$0xff] %v907
        %940 = vst [vmem:[%s257 + $0xc8] sm:$0xff] %v908
        %941 = vst [vmem:[%s257 + $0xd0] sm:$0xff] %v909
        %942 = vst [vmem:[%s257 + $0xd8] sm:$0xff] %v910
        %943 = vst [vmem:[%s257 + $0xe0] sm:$0xff] %v911
        %944 = vst [vmem:[%s257 + $0xe8] sm:$0xff] %v912
        %945 = vst [vmem:[%s257 + $0xf0] sm:$0xff] %v913
        %946 = vst [vmem:[%s257 + $0xf8] sm:$0xff] %v914
      $region40: #{_lambda_.34} parent=31 // pred_fallthru
        _
      %s947 = smul.u32 32, %s19
      %p948 = scmp.lt.s32.totalorder %s947, 63
      %s949 = scalar_select %p948, %s947, 63
      %p950 = scmp.lt.s32.totalorder %s20, 0
      %s951 = scalar_select %p950, %s20, 0
      %s952 = sadd.s32 %s951, %s949
      %s953 = smul.addr %s952, 8
      %s954 = scalar_lea.vmem %s3, %s953
      // Predicated region
      $region41: #{_lambda_.34} parent=31 // pred_check
        %p955 = pneg %p135
      $region42: #{_lambda_.34} parent=31 // pred_check_branch
        %957 = sbr.rel (%p955) target = $region44
      $region43: #{_lambda_.34} parent=31 // pred_region
        %s958 = smul.u32 32, %s19
      $region44: #{_lambda_.34} parent=31 // pred_fallthru
        _
    $region32: #{_lambda_.34} parent=5 // pred_fallthru
      _
    %p959 = scmp.le.s32.totalorder 2, %s9
    // Predicated region
    $region45: #{_lambda_.34} parent=5 // pred_check
      %p960 = pneg %p959
    $region46: #{_lambda_.34} parent=5 // pred_check_branch
      %962 = sbr.rel (%p960) target = $region48
    $region47: #{_lambda_.34} parent=5 // pred_region
      %s963 = ssub.s32 %s9, 2
      // Predicated region
      $region49: #{_lambda_.34} parent=47 // pred_check
        %p964 = pneg %p141
      $region50: #{_lambda_.34} parent=47 // pred_check_branch
        %966 = sbr.rel (%p964) target = $region52
      $region51: #{_lambda_.34} parent=47 // pred_region
        %s967 = smul.u32 32, %s22
        %p968 = scmp.lt.s32.totalorder %s967, 63
        %s969 = scalar_select %p968, %s967, 63
        %p970 = scmp.lt.s32.totalorder %s23, 0
        %s971 = scalar_select %p970, %s23, 0
        %s972 = sadd.s32 %s971, %s969
        %s973 = smul.addr %s972, 8
        %s974 = scalar_lea.vmem %s3, %s973
      $region52: #{_lambda_.34} parent=47 // pred_fallthru
        _
    $region48: #{_lambda_.34} parent=5 // pred_fallthru
      _
  $region6: #{_lambda_.34} parent=0 // loop_footer
    %s13 = sadd.s32 1, %s9
  $region7: #{_lambda_.34} parent=0 // loop_footer_branch
    %8 = sbr.rel target = $region3
  $region8: #{_lambda_.34} parent=0 // loop_exit
    _

// kernel: _lambda_.36
$region0: #{_lambda_.36}
  #allocation0 [shape = 'u32[]', space=smem, size = 0x4, offset = 0x4, fixed_abs, tag = 'smem constant byte address 0x4 - core index']
  #allocation1 [shape = 'u32[144,128]{1,0:T(1,128)}', space=vmem, size = 0x12000, scoped, tag = 'internal scratch']
  #allocation2 [shape = 'f32[128,128]{1,0:T(8,128)}', space=vmem, size = 0x10000, scoped, tag = 'scratch operand']
  %s0 = inlined_call_operand.vmem [shape: bf16[128,128], index: 0, kind: input, shape index: {}]
  %s1 = inlined_call_operand.vmem [shape: bf16[128,128], index: 1, kind: input, shape index: {}]
  %s2 = inlined_call_operand.vmem [shape: f32[1,128], index: 2, kind: input, shape index: {}]
  %s3 = inlined_call_operand.vmem [shape: f32[128,128], index: 3, kind: output, shape index: {}]
  %s4 = sld [smem:[#allocation0]]
  $region30: #{_lambda_.36} parent=0
    _
  %s6 = ssub.s32 1, %s4
  %s7 = scalar_select 0, %s6, %s4
  // Predicated region
  $region2: #{_lambda_.36} parent=0 // pred_check
    _
  $region3: #{_lambda_.36} parent=0 // pred_check_branch
    %9 = sbr.rel (0) target = $region5
  $region4: #{_lambda_.36} parent=0 // pred_region
    _
  $region5: #{_lambda_.36} parent=0 // pred_fallthru
    _
  // Predicated region
  $region6: #{_lambda_.36} parent=0 // pred_check
    _
  $region7: #{_lambda_.36} parent=0 // pred_check_branch
    %11 = sbr.rel (0) target = $region9
  $region8: #{_lambda_.36} parent=0 // pred_region
    _
  $region9: #{_lambda_.36} parent=0 // pred_fallthru
    _
  // Predicated region
  $region10: #{_lambda_.36} parent=0 // pred_check
    _
  $region11: #{_lambda_.36} parent=0 // pred_check_branch
    %13 = sbr.rel (0) target = $region13
  $region12: #{_lambda_.36} parent=0 // pred_region
    _
  $region13: #{_lambda_.36} parent=0 // pred_fallthru
    _
  %p15 = scmp.eq.s32.totalorder 0, 0
  // Predicated region
  $region14: #{_lambda_.36} parent=0 // pred_check
    %p16 = pneg %p15
  $region15: #{_lambda_.36} parent=0 // pred_check_branch
    %18 = sbr.rel (%p16) target = $region17
  $region16: #{_lambda_.36} parent=0 // pred_region
    %19 = vst [vmem:[#allocation2] sm:$0xff] 0.0
    %20 = vst [vmem:[#allocation2 + $0x8] sm:$0xff] 0.0
    %21 = vst [vmem:[#allocation2 + $0x10] sm:$0xff] 0.0
    %22 = vst [vmem:[#allocation2 + $0x18] sm:$0xff] 0.0
    %23 = vst [vmem:[#allocation2 + $0x20] sm:$0xff] 0.0
    %24 = vst [vmem:[#allocation2 + $0x28] sm:$0xff] 0.0
    %25 = vst [vmem:[#allocation2 + $0x30] sm:$0xff] 0.0
    %26 = vst [vmem:[#allocation2 + $0x38] sm:$0xff] 0.0
    %27 = vst [vmem:[#allocation2 + $0x40] sm:$0xff] 0.0
    %28 = vst [vmem:[#allocation2 + $0x48] sm:$0xff] 0.0
    %29 = vst [vmem:[#allocation2 + $0x50] sm:$0xff] 0.0
    %30 = vst [vmem:[#allocation2 + $0x58] sm:$0xff] 0.0
    %31 = vst [vmem:[#allocation2 + $0x60] sm:$0xff] 0.0
    %32 = vst [vmem:[#allocation2 + $0x68] sm:$0xff] 0.0
    %33 = vst [vmem:[#allocation2 + $0x70] sm:$0xff] 0.0
    %34 = vst [vmem:[#allocation2 + $0x78] sm:$0xff] 0.0
  $region17: #{_lambda_.36} parent=0 // pred_fallthru
    _
  %v35 = vld [vmem:[#allocation2] sm:$0xff]
  %v36 = vld [vmem:[#allocation2 + $0x8] sm:$0xff]
  %v37 = vld [vmem:[#allocation2 + $0x10] sm:$0xff]
  %v38 = vld [vmem:[#allocation2 + $0x18] sm:$0xff]
  %v39 = vld [vmem:[#allocation2 + $0x20] sm:$0xff]
  %v40 = vld [vmem:[#allocation2 + $0x28] sm:$0xff]
  %v41 = vld [vmem:[#allocation2 + $0x30] sm:$0xff]
  %v42 = vld [vmem:[#allocation2 + $0x38] sm:$0xff]
  %v43 = vld [vmem:[#allocation2 + $0x40] sm:$0xff]
  %v44 = vld [vmem:[#allocation2 + $0x48] sm:$0xff]
  %v45 = vld [vmem:[#allocation2 + $0x50] sm:$0xff]
  %v46 = vld [vmem:[#allocation2 + $0x58] sm:$0xff]
  %v47 = vld [vmem:[#allocation2 + $0x60] sm:$0xff]
  %v48 = vld [vmem:[#allocation2 + $0x68] sm:$0xff]
  %v49 = vld [vmem:[#allocation2 + $0x70] sm:$0xff]
  %v50 = vld [vmem:[#allocation2 + $0x78] sm:$0xff]
  %v51 = vld [vmem:[%s0] sm:$0xf]
  %v52 = vld [vmem:[%s0 + $0x4] sm:$0xf]
  %v53 = vld [vmem:[%s0 + $0x8] sm:$0xf]
  %v54 = vld [vmem:[%s0 + $0xc] sm:$0xf]
  %v55 = vld [vmem:[%s0 + $0x10] sm:$0xf]
  %v56 = vld [vmem:[%s0 + $0x14] sm:$0xf]
  %v57 = vld [vmem:[%s0 + $0x18] sm:$0xf]
  %v58 = vld [vmem:[%s0 + $0x1c] sm:$0xf]
  %v59 = vld [vmem:[%s0 + $0x20] sm:$0xf]
  %v60 = vld [vmem:[%s0 + $0x24] sm:$0xf]
  %v61 = vld [vmem:[%s0 + $0x28] sm:$0xf]
  %v62 = vld [vmem:[%s0 + $0x2c] sm:$0xf]
  %v63 = vld [vmem:[%s0 + $0x30] sm:$0xf]
  %v64 = vld [vmem:[%s0 + $0x34] sm:$0xf]
  %v65 = vld [vmem:[%s0 + $0x38] sm:$0xf]
  %v66 = vld [vmem:[%s0 + $0x3c] sm:$0xf]
  %v67 = vld [vmem:[%s1] sm:$0xf]
  %v68 = vld [vmem:[%s1 + $0x4] sm:$0xf]
  %v69 = vld [vmem:[%s1 + $0x8] sm:$0xf]
  %v70 = vld [vmem:[%s1 + $0xc] sm:$0xf]
  %v71 = vld [vmem:[%s1 + $0x10] sm:$0xf]
  %v72 = vld [vmem:[%s1 + $0x14] sm:$0xf]
  %v73 = vld [vmem:[%s1 + $0x18] sm:$0xf]
  %v74 = vld [vmem:[%s1 + $0x1c] sm:$0xf]
  %v75 = vld [vmem:[%s1 + $0x20] sm:$0xf]
  %v76 = vld [vmem:[%s1 + $0x24] sm:$0xf]
  %v77 = vld [vmem:[%s1 + $0x28] sm:$0xf]
  %v78 = vld [vmem:[%s1 + $0x2c] sm:$0xf]
  %v79 = vld [vmem:[%s1 + $0x30] sm:$0xf]
  %v80 = vld [vmem:[%s1 + $0x34] sm:$0xf]
  %v81 = vld [vmem:[%s1 + $0x38] sm:$0xf]
  %v82 = vld [vmem:[%s1 + $0x3c] sm:$0xf]
  %v99 = vunpack.c.l.b16 %v51
  %v100 = vunpack.c.l.b16 %v52
  %v101 = vunpack.c.l.b16 %v53
  %v102 = vunpack.c.l.b16 %v54
  %v103 = vunpack.c.l.b16 %v55
  %v104 = vunpack.c.l.b16 %v56
  %v105 = vunpack.c.l.b16 %v57
  %v106 = vunpack.c.l.b16 %v58
  %v107 = vunpack.c.l.b16 %v59
  %v108 = vunpack.c.l.b16 %v60
  %v109 = vunpack.c.l.b16 %v61
  %v110 = vunpack.c.l.b16 %v62
  %v111 = vunpack.c.l.b16 %v63
  %v112 = vunpack.c.l.b16 %v64
  %v113 = vunpack.c.l.b16 %v65
  %v114 = vunpack.c.l.b16 %v66
  %v115 = vpack.c.b16 %v100, %v99
  %v116 = vpack.c.b16 %v102, %v101
  %v117 = vpack.c.b16 %v104, %v103
  %v118 = vpack.c.b16 %v106, %v105
  %v119 = vpack.c.b16 %v108, %v107
  %v120 = vpack.c.b16 %v110, %v109
  %v121 = vpack.c.b16 %v112, %v111
  %v122 = vpack.c.b16 %v114, %v113
  %v147 = vunpack.c.l.b16 %v67
  %v148 = vunpack.c.l.b16 %v68
  %v149 = vunpack.c.l.b16 %v69
  %v150 = vunpack.c.l.b16 %v70
  %v151 = vunpack.c.l.b16 %v71
  %v152 = vunpack.c.l.b16 %v72
  %v153 = vunpack.c.l.b16 %v73
  %v154 = vunpack.c.l.b16 %v74
  %v155 = vunpack.c.l.b16 %v75
  %v156 = vunpack.c.l.b16 %v76
  %v157 = vunpack.c.l.b16 %v77
  %v158 = vunpack.c.l.b16 %v78
  %v159 = vunpack.c.l.b16 %v79
  %v160 = vunpack.c.l.b16 %v80
  %v161 = vunpack.c.l.b16 %v81
  %v162 = vunpack.c.l.b16 %v82
  %v163 = vpack.c.b16 %v148, %v147
  %v164 = vpack.c.b16 %v150, %v149
  %v165 = vpack.c.b16 %v152, %v151
  %v166 = vpack.c.b16 %v154, %v153
  %v167 = vpack.c.b16 %v156, %v155
  %v168 = vpack.c.b16 %v158, %v157
  %v169 = vpack.c.b16 %v160, %v159
  %v170 = vpack.c.b16 %v162, %v161
  %179 = vmatprep.subr.bf16.mxu0 0
  %180 = vmatpush1.bf16.msra.mxu0 %v163
  %181 = vmatprep.subr.bf16.mxu0 0
  %182 = vmatpush1.bf16.msra.mxu0 %v164
  %183 = vmatprep.subr.bf16.mxu0 0
  %184 = vmatpush1.bf16.msra.mxu0 %v165
  %185 = vmatprep.subr.bf16.mxu0 0
  %186 = vmatpush1.bf16.msra.mxu0 %v166
  %187 = vmatprep.subr.bf16.mxu0 0
  %188 = vmatpush1.bf16.msra.mxu0 %v167
  %189 = vmatprep.subr.bf16.mxu0 0
  %190 = vmatpush1.bf16.msra.mxu0 %v168
  %191 = vmatprep.subr.bf16.mxu0 0
  %192 = vmatpush1.bf16.msra.mxu0 %v169
  %193 = vmatprep.subr.bf16.mxu0 0
  %194 = vmatpush1.bf16.msra.mxu0 %v170
  %195 = vmatprep.subr.bf16.mxu0 0
  %196 = vmatpush1.bf16.msra.mxu0 0
  %197 = vmatprep.subr.bf16.mxu0 0
  %198 = vmatpush1.bf16.msra.mxu0 0
  %199 = vmatprep.subr.bf16.mxu0 0
  %200 = vmatpush1.bf16.msra.mxu0 0
  %201 = vmatprep.subr.bf16.mxu0 0
  %202 = vmatpush1.bf16.msra.mxu0 0
  %203 = vmatprep.subr.bf16.mxu0 0
  %204 = vmatpush1.bf16.msra.mxu0 0
  %205 = vmatprep.subr.bf16.mxu0 0
  %206 = vmatpush1.bf16.msra.mxu0 0
  %207 = vmatprep.subr.bf16.mxu0 0
  %208 = vmatpush1.bf16.msra.mxu0 0
  %209 = vmatprep.subr.bf16.mxu0 0
  %210 = vmatpush1.bf16.msra.mxu0 0
  %211 = vmatprep.mubr.bf16.mxu0 0
  %212 = vmatmul.mubr.bf16.gmra.mrb[0].mxu0 %v115
  %v213 = vpop.f32.mrb[0].mxu0
  %v214 = vadd.f32 0.0, %v213
  %v215 = vpop.f32.mrb[0].mxu0
  %v216 = vpop.f32.mrb[0].mxu0
  %v217 = vadd.f32 0.0, %v216
  %v218 = vpop.f32.mrb[0].mxu0
  %219 = vmatprep.mubr.bf16.mxu0 0
  %220 = vmatmul.mubr.bf16.gmra.mrb[0].mxu0 %v116
  %v221 = vpop.f32.mrb[0].mxu0
  %v222 = vadd.f32 0.0, %v221
  %v223 = vpop.f32.mrb[0].mxu0
  %v224 = vpop.f32.mrb[0].mxu0
  %v225 = vadd.f32 0.0, %v224
  %v226 = vpop.f32.mrb[0].mxu0
  %227 = vmatprep.mubr.bf16.mxu0 0
  %228 = vmatmul.mubr.bf16.gmra.mrb[0].mxu0 %v117
  %v229 = vpop.f32.mrb[0].mxu0
  %v230 = vadd.f32 0.0, %v229
  %v231 = vpop.f32.mrb[0].mxu0
  %v232 = vpop.f32.mrb[0].mxu0
  %v233 = vadd.f32 0.0, %v232
  %v234 = vpop.f32.mrb[0].mxu0
  %235 = vmatprep.mubr.bf16.mxu0 0
  %236 = vmatmul.mubr.bf16.gmra.mrb[0].mxu0 %v118
  %v237 = vpop.f32.mrb[0].mxu0
  %v238 = vadd.f32 0.0, %v237
  %v239 = vpop.f32.mrb[0].mxu0
  %v240 = vpop.f32.mrb[0].mxu0
  %v241 = vadd.f32 0.0, %v240
  %v242 = vpop.f32.mrb[0].mxu0
  %243 = vmatprep.mubr.bf16.mxu0 0
  %244 = vmatmul.mubr.bf16.gmra.mrb[0].mxu0 %v119
  %v245 = vpop.f32.mrb[0].mxu0
  %v246 = vadd.f32 0.0, %v245
  %v247 = vpop.f32.mrb[0].mxu0
  %v248 = vpop.f32.mrb[0].mxu0
  %v249 = vadd.f32 0.0, %v248
  %v250 = vpop.f32.mrb[0].mxu0
  %251 = vmatprep.mubr.bf16.mxu0 0
  %252 = vmatmul.mubr.bf16.gmra.mrb[0].mxu0 %v120
  %v253 = vpop.f32.mrb[0].mxu0
  %v254 = vadd.f32 0.0, %v253
  %v255 = vpop.f32.mrb[0].mxu0
  %v256 = vpop.f32.mrb[0].mxu0
  %v257 = vadd.f32 0.0, %v256
  %v258 = vpop.f32.mrb[0].mxu0
  %259 = vmatprep.mubr.bf16.mxu0 0
  %260 = vmatmul.mubr.bf16.gmra.mrb[0].mxu0 %v121
  %v261 = vpop.f32.mrb[0].mxu0
  %v262 = vadd.f32 0.0, %v261
  %v263 = vpop.f32.mrb[0].mxu0
  %v264 = vpop.f32.mrb[0].mxu0
  %v265 = vadd.f32 0.0, %v264
  %v266 = vpop.f32.mrb[0].mxu0
  %267 = vmatprep.mubr.bf16.mxu0 0
  %268 = vmatmul.mubr.bf16.gmra.mrb[0].mxu0 %v122
  %v269 = vpop.f32.mrb[0].mxu0
  %v270 = vadd.f32 0.0, %v269
  %v271 = vpop.f32.mrb[0].mxu0
  %v272 = vpop.f32.mrb[0].mxu0
  %v273 = vadd.f32 0.0, %v272
  %v274 = vpop.f32.mrb[0].mxu0
  %275 = vdwg.mxu0
  %v276 = vadd.f32 %v35, %v214
  %v277 = vadd.f32 %v36, %v217
  %v278 = vadd.f32 %v37, %v222
  %v279 = vadd.f32 %v38, %v225
  %v280 = vadd.f32 %v39, %v230
  %v281 = vadd.f32 %v40, %v233
  %v282 = vadd.f32 %v41, %v238
  %v283 = vadd.f32 %v42, %v241
  %v284 = vadd.f32 %v43, %v246
  %v285 = vadd.f32 %v44, %v249
  %v286 = vadd.f32 %v45, %v254
  %v287 = vadd.f32 %v46, %v257
  %v288 = vadd.f32 %v47, %v262
  %v289 = vadd.f32 %v48, %v265
  %v290 = vadd.f32 %v49, %v270
  %v291 = vadd.f32 %v50, %v273
  %292 = vst [vmem:[#allocation2] sm:$0xff] %v276
  %293 = vst [vmem:[#allocation2 + $0x8] sm:$0xff] %v277
  %294 = vst [vmem:[#allocation2 + $0x10] sm:$0xff] %v278
  %295 = vst [vmem:[#allocation2 + $0x18] sm:$0xff] %v279
  %296 = vst [vmem:[#allocation2 + $0x20] sm:$0xff] %v280
  %297 = vst [vmem:[#allocation2 + $0x28] sm:$0xff] %v281
  %298 = vst [vmem:[#allocation2 + $0x30] sm:$0xff] %v282
  %299 = vst [vmem:[#allocation2 + $0x38] sm:$0xff] %v283
  %300 = vst [vmem:[#allocation2 + $0x40] sm:$0xff] %v284
  %301 = vst [vmem:[#allocation2 + $0x48] sm:$0xff] %v285
  %302 = vst [vmem:[#allocation2 + $0x50] sm:$0xff] %v286
  %303 = vst [vmem:[#allocation2 + $0x58] sm:$0xff] %v287
  %304 = vst [vmem:[#allocation2 + $0x60] sm:$0xff] %v288
  %305 = vst [vmem:[#allocation2 + $0x68] sm:$0xff] %v289
  %306 = vst [vmem:[#allocation2 + $0x70] sm:$0xff] %v290
  %307 = vst [vmem:[#allocation2 + $0x78] sm:$0xff] %v291
  // Predicated region
  $region18: #{_lambda_.36} parent=0 // pred_check
    %p308 = pneg %p15
  $region19: #{_lambda_.36} parent=0 // pred_check_branch
    %310 = sbr.rel (%p308) target = $region21
  $region20: #{_lambda_.36} parent=0 // pred_region
    %v311 = vld [vmem:[#allocation2] sm:$0xff]
    %v312 = vld [vmem:[#allocation2 + $0x8] sm:$0xff]
    %v313 = vld [vmem:[#allocation2 + $0x10] sm:$0xff]
    %v314 = vld [vmem:[#allocation2 + $0x18] sm:$0xff]
    %v315 = vld [vmem:[#allocation2 + $0x20] sm:$0xff]
    %v316 = vld [vmem:[#allocation2 + $0x28] sm:$0xff]
    %v317 = vld [vmem:[#allocation2 + $0x30] sm:$0xff]
    %v318 = vld [vmem:[#allocation2 + $0x38] sm:$0xff]
    %v319 = vld [vmem:[#allocation2 + $0x40] sm:$0xff]
    %v320 = vld [vmem:[#allocation2 + $0x48] sm:$0xff]
    %v321 = vld [vmem:[#allocation2 + $0x50] sm:$0xff]
    %v322 = vld [vmem:[#allocation2 + $0x58] sm:$0xff]
    %v323 = vld [vmem:[#allocation2 + $0x60] sm:$0xff]
    %v324 = vld [vmem:[#allocation2 + $0x68] sm:$0xff]
    %v325 = vld [vmem:[#allocation2 + $0x70] sm:$0xff]
    %v326 = vld [vmem:[#allocation2 + $0x78] sm:$0xff]
    %v327 = vld [vmem:[%s2] sm:$0x1]
    %v329 = vlaneseq
    %v330 = vshrl.u32 %v329, 7
    %v331 = vsub.s32 0, %v330
    %v332 = vrot.slane %v327, %v331
    %v334 = vadd.f32 %v311, %v332
    %v335 = vadd.f32 %v312, %v332
    %v336 = vadd.f32 %v313, %v332
    %v337 = vadd.f32 %v314, %v332
    %v338 = vadd.f32 %v315, %v332
    %v339 = vadd.f32 %v316, %v332
    %v340 = vadd.f32 %v317, %v332
    %v341 = vadd.f32 %v318, %v332
    %v342 = vadd.f32 %v319, %v332
    %v343 = vadd.f32 %v320, %v332
    %v344 = vadd.f32 %v321, %v332
    %v345 = vadd.f32 %v322, %v332
    %v346 = vadd.f32 %v323, %v332
    %v347 = vadd.f32 %v324, %v332
    %v348 = vadd.f32 %v325, %v332
    %v349 = vadd.f32 %v326, %v332
    %vm350 = vcmp.ge.f32.partialorder %v334, 0.0
    %vm351 = vcmp.ge.f32.partialorder %v335, 0.0
    %vm352 = vcmp.ge.f32.partialorder %v336, 0.0
    %vm353 = vcmp.ge.f32.partialorder %v337, 0.0
    %vm354 = vcmp.ge.f32.partialorder %v338, 0.0
    %vm355 = vcmp.ge.f32.partialorder %v339, 0.0
    %vm356 = vcmp.ge.f32.partialorder %v340, 0.0
    %vm357 = vcmp.ge.f32.partialorder %v341, 0.0
    %vm358 = vcmp.ge.f32.partialorder %v342, 0.0
    %vm359 = vcmp.ge.f32.partialorder %v343, 0.0
    %vm360 = vcmp.ge.f32.partialorder %v344, 0.0
    %vm361 = vcmp.ge.f32.partialorder %v345, 0.0
    %vm362 = vcmp.ge.f32.partialorder %v346, 0.0
    %vm363 = vcmp.ge.f32.partialorder %v347, 0.0
    %vm364 = vcmp.ge.f32.partialorder %v348, 0.0
    %vm365 = vcmp.ge.f32.partialorder %v349, 0.0
    %v366 = vmul.f32 %v334, 0.2
    %v367 = vmul.f32 %v335, 0.2
    %v368 = vmul.f32 %v336, 0.2
    %v369 = vmul.f32 %v337, 0.2
    %v370 = vmul.f32 %v338, 0.2
    %v371 = vmul.f32 %v339, 0.2
    %v372 = vmul.f32 %v340, 0.2
    %v373 = vmul.f32 %v341, 0.2
    %v374 = vmul.f32 %v342, 0.2
    %v375 = vmul.f32 %v343, 0.2
    %v376 = vmul.f32 %v344, 0.2
    %v377 = vmul.f32 %v345, 0.2
    %v378 = vmul.f32 %v346, 0.2
    %v379 = vmul.f32 %v347, 0.2
    %v380 = vmul.f32 %v348, 0.2
    %v381 = vmul.f32 %v349, 0.2
    %v382 = vsel %vm350, %v334, %v366
    %v383 = vsel %vm351, %v335, %v367
    %v384 = vsel %vm352, %v336, %v368
    %v385 = vsel %vm353, %v337, %v369
    %v386 = vsel %vm354, %v338, %v370
    %v387 = vsel %vm355, %v339, %v371
    %v388 = vsel %vm356, %v340, %v372
    %v389 = vsel %vm357, %v341, %v373
    %v390 = vsel %vm358, %v342, %v374
    %v391 = vsel %vm359, %v343, %v375
    %v392 = vsel %vm360, %v344, %v376
    %v393 = vsel %vm361, %v345, %v377
    %v394 = vsel %vm362, %v346, %v378
    %v395 = vsel %vm363, %v347, %v379
    %v396 = vsel %vm364, %v348, %v380
    %v397 = vsel %vm365, %v349, %v381
    %398 = vst [vmem:[%s3] sm:$0xff] %v382
    %399 = vst [vmem:[%s3 + $0x8] sm:$0xff] %v383
    %400 = vst [vmem:[%s3 + $0x10] sm:$0xff] %v384
    %401 = vst [vmem:[%s3 + $0x18] sm:$0xff] %v385
    %402 = vst [vmem:[%s3 + $0x20] sm:$0xff] %v386
    %403 = vst [vmem:[%s3 + $0x28] sm:$0xff] %v387
    %404 = vst [vmem:[%s3 + $0x30] sm:$0xff] %v388
    %405 = vst [vmem:[%s3 + $0x38] sm:$0xff] %v389
    %406 = vst [vmem:[%s3 + $0x40] sm:$0xff] %v390
    %407 = vst [vmem:[%s3 + $0x48] sm:$0xff] %v391
    %408 = vst [vmem:[%s3 + $0x50] sm:$0xff] %v392
    %409 = vst [vmem:[%s3 + $0x58] sm:$0xff] %v393
    %410 = vst [vmem:[%s3 + $0x60] sm:$0xff] %v394
    %411 = vst [vmem:[%s3 + $0x68] sm:$0xff] %v395
    %412 = vst [vmem:[%s3 + $0x70] sm:$0xff] %v396
    %413 = vst [vmem:[%s3 + $0x78] sm:$0xff] %v397
  $region21: #{_lambda_.36} parent=0 // pred_fallthru
    _
  // Predicated region
  $region22: #{_lambda_.36} parent=0 // pred_check
    _
  $region23: #{_lambda_.36} parent=0 // pred_check_branch
    %415 = sbr.rel (0) target = $region25
  $region24: #{_lambda_.36} parent=0 // pred_region
    _
  $region25: #{_lambda_.36} parent=0 // pred_fallthru
    _
  // Predicated region
  $region26: #{_lambda_.36} parent=0 // pred_check
    _
  $region27: #{_lambda_.36} parent=0 // pred_check_branch
    %417 = sbr.rel (0) target = $region29
  $region28: #{_lambda_.36} parent=0 // pred_region
    _
  $region29: #{_lambda_.36} parent=0 // pred_fallthru
    _

// kernel: _lambda_.38
$region0: #{_lambda_.38}
  #allocation0 [shape = 'u32[]', space=smem, size = 0x4, offset = 0x4, fixed_abs, tag = 'smem constant byte address 0x4 - core index']
  #allocation1 [shape = 'u32[144,128]{1,0:T(1,128)}', space=vmem, size = 0x12000, scoped, tag = 'internal scratch']
  #allocation2 [shape = 'f32[128,128]{1,0:T(8,128)}', space=vmem, size = 0x10000, scoped, tag = 'scratch operand']
  %s0 = inlined_call_operand.vmem [shape: bf16[128,128], index: 0, kind: input, shape index: {}]
  %s1 = inlined_call_operand.vmem [shape: bf16[128,128], index: 1, kind: input, shape index: {}]
  %s2 = inlined_call_operand.vmem [shape: f32[1,128], index: 2, kind: input, shape index: {}]
  %s3 = inlined_call_operand.vmem [shape: f32[128,128], index: 3, kind: input, shape index: {}]
  %s4 = inlined_call_operand.vmem [shape: f32[128,128], index: 4, kind: output, shape index: {}]
  %s5 = sld [smem:[#allocation0]]
  $region34: #{_lambda_.38} parent=0
    _
  %s7 = ssub.s32 1, %s5
  %s8 = scalar_select 0, %s7, %s5
  // Predicated region
  $region2: #{_lambda_.38} parent=0 // pred_check
    _
  $region3: #{_lambda_.38} parent=0 // pred_check_branch
    %10 = sbr.rel (0) target = $region5
  $region4: #{_lambda_.38} parent=0 // pred_region
    _
  $region5: #{_lambda_.38} parent=0 // pred_fallthru
    _
  // Predicated region
  $region6: #{_lambda_.38} parent=0 // pred_check
    _
  $region7: #{_lambda_.38} parent=0 // pred_check_branch
    %12 = sbr.rel (0) target = $region9
  $region8: #{_lambda_.38} parent=0 // pred_region
    _
  $region9: #{_lambda_.38} parent=0 // pred_fallthru
    _
  // Predicated region
  $region10: #{_lambda_.38} parent=0 // pred_check
    _
  $region11: #{_lambda_.38} parent=0 // pred_check_branch
    %14 = sbr.rel (0) target = $region13
  $region12: #{_lambda_.38} parent=0 // pred_region
    _
  $region13: #{_lambda_.38} parent=0 // pred_fallthru
    _
  // Predicated region
  $region14: #{_lambda_.38} parent=0 // pred_check
    _
  $region15: #{_lambda_.38} parent=0 // pred_check_branch
    %16 = sbr.rel (0) target = $region17
  $region16: #{_lambda_.38} parent=0 // pred_region
    _
  $region17: #{_lambda_.38} parent=0 // pred_fallthru
    _
  %p18 = scmp.eq.s32.totalorder 0, 0
  // Predicated region
  $region18: #{_lambda_.38} parent=0 // pred_check
    %p19 = pneg %p18
  $region19: #{_lambda_.38} parent=0 // pred_check_branch
    %21 = sbr.rel (%p19) target = $region21
  $region20: #{_lambda_.38} parent=0 // pred_region
    %22 = vst [vmem:[#allocation2] sm:$0xff] 0.0
    %23 = vst [vmem:[#allocation2 + $0x8] sm:$0xff] 0.0
    %24 = vst [vmem:[#allocation2 + $0x10] sm:$0xff] 0.0
    %25 = vst [vmem:[#allocation2 + $0x18] sm:$0xff] 0.0
    %26 = vst [vmem:[#allocation2 + $0x20] sm:$0xff] 0.0
    %27 = vst [vmem:[#allocation2 + $0x28] sm:$0xff] 0.0
    %28 = vst [vmem:[#allocation2 + $0x30] sm:$0xff] 0.0
    %29 = vst [vmem:[#allocation2 + $0x38] sm:$0xff] 0.0
    %30 = vst [vmem:[#allocation2 + $0x40] sm:$0xff] 0.0
    %31 = vst [vmem:[#allocation2 + $0x48] sm:$0xff] 0.0
    %32 = vst [vmem:[#allocation2 + $0x50] sm:$0xff] 0.0
    %33 = vst [vmem:[#allocation2 + $0x58] sm:$0xff] 0.0
    %34 = vst [vmem:[#allocation2 + $0x60] sm:$0xff] 0.0
    %35 = vst [vmem:[#allocation2 + $0x68] sm:$0xff] 0.0
    %36 = vst [vmem:[#allocation2 + $0x70] sm:$0xff] 0.0
    %37 = vst [vmem:[#allocation2 + $0x78] sm:$0xff] 0.0
  $region21: #{_lambda_.38} parent=0 // pred_fallthru
    _
  %v38 = vld [vmem:[#allocation2] sm:$0xff]
  %v39 = vld [vmem:[#allocation2 + $0x8] sm:$0xff]
  %v40 = vld [vmem:[#allocation2 + $0x10] sm:$0xff]
  %v41 = vld [vmem:[#allocation2 + $0x18] sm:$0xff]
  %v42 = vld [vmem:[#allocation2 + $0x20] sm:$0xff]
  %v43 = vld [vmem:[#allocation2 + $0x28] sm:$0xff]
  %v44 = vld [vmem:[#allocation2 + $0x30] sm:$0xff]
  %v45 = vld [vmem:[#allocation2 + $0x38] sm:$0xff]
  %v46 = vld [vmem:[#allocation2 + $0x40] sm:$0xff]
  %v47 = vld [vmem:[#allocation2 + $0x48] sm:$0xff]
  %v48 = vld [vmem:[#allocation2 + $0x50] sm:$0xff]
  %v49 = vld [vmem:[#allocation2 + $0x58] sm:$0xff]
  %v50 = vld [vmem:[#allocation2 + $0x60] sm:$0xff]
  %v51 = vld [vmem:[#allocation2 + $0x68] sm:$0xff]
  %v52 = vld [vmem:[#allocation2 + $0x70] sm:$0xff]
  %v53 = vld [vmem:[#allocation2 + $0x78] sm:$0xff]
  %v54 = vld [vmem:[%s0] sm:$0xf]
  %v55 = vld [vmem:[%s0 + $0x4] sm:$0xf]
  %v56 = vld [vmem:[%s0 + $0x8] sm:$0xf]
  %v57 = vld [vmem:[%s0 + $0xc] sm:$0xf]
  %v58 = vld [vmem:[%s0 + $0x10] sm:$0xf]
  %v59 = vld [vmem:[%s0 + $0x14] sm:$0xf]
  %v60 = vld [vmem:[%s0 + $0x18] sm:$0xf]
  %v61 = vld [vmem:[%s0 + $0x1c] sm:$0xf]
  %v62 = vld [vmem:[%s0 + $0x20] sm:$0xf]
  %v63 = vld [vmem:[%s0 + $0x24] sm:$0xf]
  %v64 = vld [vmem:[%s0 + $0x28] sm:$0xf]
  %v65 = vld [vmem:[%s0 + $0x2c] sm:$0xf]
  %v66 = vld [vmem:[%s0 + $0x30] sm:$0xf]
  %v67 = vld [vmem:[%s0 + $0x34] sm:$0xf]
  %v68 = vld [vmem:[%s0 + $0x38] sm:$0xf]
  %v69 = vld [vmem:[%s0 + $0x3c] sm:$0xf]
  %v70 = vld [vmem:[%s1] sm:$0xf]
  %v71 = vld [vmem:[%s1 + $0x4] sm:$0xf]
  %v72 = vld [vmem:[%s1 + $0x8] sm:$0xf]
  %v73 = vld [vmem:[%s1 + $0xc] sm:$0xf]
  %v74 = vld [vmem:[%s1 + $0x10] sm:$0xf]
  %v75 = vld [vmem:[%s1 + $0x14] sm:$0xf]
  %v76 = vld [vmem:[%s1 + $0x18] sm:$0xf]
  %v77 = vld [vmem:[%s1 + $0x1c] sm:$0xf]
  %v78 = vld [vmem:[%s1 + $0x20] sm:$0xf]
  %v79 = vld [vmem:[%s1 + $0x24] sm:$0xf]
  %v80 = vld [vmem:[%s1 + $0x28] sm:$0xf]
  %v81 = vld [vmem:[%s1 + $0x2c] sm:$0xf]
  %v82 = vld [vmem:[%s1 + $0x30] sm:$0xf]
  %v83 = vld [vmem:[%s1 + $0x34] sm:$0xf]
  %v84 = vld [vmem:[%s1 + $0x38] sm:$0xf]
  %v85 = vld [vmem:[%s1 + $0x3c] sm:$0xf]
  %v102 = vunpack.c.l.b16 %v54
  %v103 = vunpack.c.l.b16 %v55
  %v104 = vunpack.c.l.b16 %v56
  %v105 = vunpack.c.l.b16 %v57
  %v106 = vunpack.c.l.b16 %v58
  %v107 = vunpack.c.l.b16 %v59
  %v108 = vunpack.c.l.b16 %v60
  %v109 = vunpack.c.l.b16 %v61
  %v110 = vunpack.c.l.b16 %v62
  %v111 = vunpack.c.l.b16 %v63
  %v112 = vunpack.c.l.b16 %v64
  %v113 = vunpack.c.l.b16 %v65
  %v114 = vunpack.c.l.b16 %v66
  %v115 = vunpack.c.l.b16 %v67
  %v116 = vunpack.c.l.b16 %v68
  %v117 = vunpack.c.l.b16 %v69
  %v118 = vpack.c.b16 %v103, %v102
  %v119 = vpack.c.b16 %v105, %v104
  %v120 = vpack.c.b16 %v107, %v106
  %v121 = vpack.c.b16 %v109, %v108
  %v122 = vpack.c.b16 %v111, %v110
  %v123 = vpack.c.b16 %v113, %v112
  %v124 = vpack.c.b16 %v115, %v114
  %v125 = vpack.c.b16 %v117, %v116
  %v150 = vunpack.c.l.b16 %v70
  %v151 = vunpack.c.l.b16 %v71
  %v152 = vunpack.c.l.b16 %v72
  %v153 = vunpack.c.l.b16 %v73
  %v154 = vunpack.c.l.b16 %v74
  %v155 = vunpack.c.l.b16 %v75
  %v156 = vunpack.c.l.b16 %v76
  %v157 = vunpack.c.l.b16 %v77
  %v158 = vunpack.c.l.b16 %v78
  %v159 = vunpack.c.l.b16 %v79
  %v160 = vunpack.c.l.b16 %v80
  %v161 = vunpack.c.l.b16 %v81
  %v162 = vunpack.c.l.b16 %v82
  %v163 = vunpack.c.l.b16 %v83
  %v164 = vunpack.c.l.b16 %v84
  %v165 = vunpack.c.l.b16 %v85
  %v166 = vpack.c.b16 %v151, %v150
  %v167 = vpack.c.b16 %v153, %v152
  %v168 = vpack.c.b16 %v155, %v154
  %v169 = vpack.c.b16 %v157, %v156
  %v170 = vpack.c.b16 %v159, %v158
  %v171 = vpack.c.b16 %v161, %v160
  %v172 = vpack.c.b16 %v163, %v162
  %v173 = vpack.c.b16 %v165, %v164
  %182 = vmatprep.subr.bf16.mxu0 0
  %183 = vmatpush1.bf16.msra.mxu0 %v166
  %184 = vmatprep.subr.bf16.mxu0 0
  %185 = vmatpush1.bf16.msra.mxu0 %v167
  %186 = vmatprep.subr.bf16.mxu0 0
  %187 = vmatpush1.bf16.msra.mxu0 %v168
  %188 = vmatprep.subr.bf16.mxu0 0
  %189 = vmatpush1.bf16.msra.mxu0 %v169
  %190 = vmatprep.subr.bf16.mxu0 0
  %191 = vmatpush1.bf16.msra.mxu0 %v170
  %192 = vmatprep.subr.bf16.mxu0 0
  %193 = vmatpush1.bf16.msra.mxu0 %v171
  %194 = vmatprep.subr.bf16.mxu0 0
  %195 = vmatpush1.bf16.msra.mxu0 %v172
  %196 = vmatprep.subr.bf16.mxu0 0
  %197 = vmatpush1.bf16.msra.mxu0 %v173
  %198 = vmatprep.subr.bf16.mxu0 0
  %199 = vmatpush1.bf16.msra.mxu0 0
  %200 = vmatprep.subr.bf16.mxu0 0
  %201 = vmatpush1.bf16.msra.mxu0 0
  %202 = vmatprep.subr.bf16.mxu0 0
  %203 = vmatpush1.bf16.msra.mxu0 0
  %204 = vmatprep.subr.bf16.mxu0 0
  %205 = vmatpush1.bf16.msra.mxu0 0
  %206 = vmatprep.subr.bf16.mxu0 0
  %207 = vmatpush1.bf16.msra.mxu0 0
  %208 = vmatprep.subr.bf16.mxu0 0
  %209 = vmatpush1.bf16.msra.mxu0 0
  %210 = vmatprep.subr.bf16.mxu0 0
  %211 = vmatpush1.bf16.msra.mxu0 0
  %212 = vmatprep.subr.bf16.mxu0 0
  %213 = vmatpush1.bf16.msra.mxu0 0
  %214 = vmatprep.mubr.bf16.mxu0 0
  %215 = vmatmul.mubr.bf16.gmra.mrb[0].mxu0 %v118
  %v216 = vpop.f32.mrb[0].mxu0
  %v217 = vadd.f32 0.0, %v216
  %v218 = vpop.f32.mrb[0].mxu0
  %v219 = vpop.f32.mrb[0].mxu0
  %v220 = vadd.f32 0.0, %v219
  %v221 = vpop.f32.mrb[0].mxu0
  %222 = vmatprep.mubr.bf16.mxu0 0
  %223 = vmatmul.mubr.bf16.gmra.mrb[0].mxu0 %v119
  %v224 = vpop.f32.mrb[0].mxu0
  %v225 = vadd.f32 0.0, %v224
  %v226 = vpop.f32.mrb[0].mxu0
  %v227 = vpop.f32.mrb[0].mxu0
  %v228 = vadd.f32 0.0, %v227
  %v229 = vpop.f32.mrb[0].mxu0
  %230 = vmatprep.mubr.bf16.mxu0 0
  %231 = vmatmul.mubr.bf16.gmra.mrb[0].mxu0 %v120
  %v232 = vpop.f32.mrb[0].mxu0
  %v233 = vadd.f32 0.0, %v232
  %v234 = vpop.f32.mrb[0].mxu0
  %v235 = vpop.f32.mrb[0].mxu0
  %v236 = vadd.f32 0.0, %v235
  %v237 = vpop.f32.mrb[0].mxu0
  %238 = vmatprep.mubr.bf16.mxu0 0
  %239 = vmatmul.mubr.bf16.gmra.mrb[0].mxu0 %v121
  %v240 = vpop.f32.mrb[0].mxu0
  %v241 = vadd.f32 0.0, %v240
  %v242 = vpop.f32.mrb[0].mxu0
  %v243 = vpop.f32.mrb[0].mxu0
  %v244 = vadd.f32 0.0, %v243
  %v245 = vpop.f32.mrb[0].mxu0
  %246 = vmatprep.mubr.bf16.mxu0 0
  %247 = vmatmul.mubr.bf16.gmra.mrb[0].mxu0 %v122
  %v248 = vpop.f32.mrb[0].mxu0
  %v249 = vadd.f32 0.0, %v248
  %v250 = vpop.f32.mrb[0].mxu0
  %v251 = vpop.f32.mrb[0].mxu0
  %v252 = vadd.f32 0.0, %v251
  %v253 = vpop.f32.mrb[0].mxu0
  %254 = vmatprep.mubr.bf16.mxu0 0
  %255 = vmatmul.mubr.bf16.gmra.mrb[0].mxu0 %v123
  %v256 = vpop.f32.mrb[0].mxu0
  %v257 = vadd.f32 0.0, %v256
  %v258 = vpop.f32.mrb[0].mxu0
  %v259 = vpop.f32.mrb[0].mxu0
  %v260 = vadd.f32 0.0, %v259
  %v261 = vpop.f32.mrb[0].mxu0
  %262 = vmatprep.mubr.bf16.mxu0 0
  %263 = vmatmul.mubr.bf16.gmra.mrb[0].mxu0 %v124
  %v264 = vpop.f32.mrb[0].mxu0
  %v265 = vadd.f32 0.0, %v264
  %v266 = vpop.f32.mrb[0].mxu0
  %v267 = vpop.f32.mrb[0].mxu0
  %v268 = vadd.f32 0.0, %v267
  %v269 = vpop.f32.mrb[0].mxu0
  %270 = vmatprep.mubr.bf16.mxu0 0
  %271 = vmatmul.mubr.bf16.gmra.mrb[0].mxu0 %v125
  %v272 = vpop.f32.mrb[0].mxu0
  %v273 = vadd.f32 0.0, %v272
  %v274 = vpop.f32.mrb[0].mxu0
  %v275 = vpop.f32.mrb[0].mxu0
  %v276 = vadd.f32 0.0, %v275
  %v277 = vpop.f32.mrb[0].mxu0
  %278 = vdwg.mxu0
  %v279 = vadd.f32 %v38, %v217
  %v280 = vadd.f32 %v39, %v220
  %v281 = vadd.f32 %v40, %v225
  %v282 = vadd.f32 %v41, %v228
  %v283 = vadd.f32 %v42, %v233
  %v284 = vadd.f32 %v43, %v236
  %v285 = vadd.f32 %v44, %v241
  %v286 = vadd.f32 %v45, %v244
  %v287 = vadd.f32 %v46, %v249
  %v288 = vadd.f32 %v47, %v252
  %v289 = vadd.f32 %v48, %v257
  %v290 = vadd.f32 %v49, %v260
  %v291 = vadd.f32 %v50, %v265
  %v292 = vadd.f32 %v51, %v268
  %v293 = vadd.f32 %v52, %v273
  %v294 = vadd.f32 %v53, %v276
  %295 = vst [vmem:[#allocation2] sm:$0xff] %v279
  %296 = vst [vmem:[#allocation2 + $0x8] sm:$0xff] %v280
  %297 = vst [vmem:[#allocation2 + $0x10] sm:$0xff] %v281
  %298 = vst [vmem:[#allocation2 + $0x18] sm:$0xff] %v282
  %299 = vst [vmem:[#allocation2 + $0x20] sm:$0xff] %v283
  %300 = vst [vmem:[#allocation2 + $0x28] sm:$0xff] %v284
  %301 = vst [vmem:[#allocation2 + $0x30] sm:$0xff] %v285
  %302 = vst [vmem:[#allocation2 + $0x38] sm:$0xff] %v286
  %303 = vst [vmem:[#allocation2 + $0x40] sm:$0xff] %v287
  %304 = vst [vmem:[#allocation2 + $0x48] sm:$0xff] %v288
  %305 = vst [vmem:[#allocation2 + $0x50] sm:$0xff] %v289
  %306 = vst [vmem:[#allocation2 + $0x58] sm:$0xff] %v290
  %307 = vst [vmem:[#allocation2 + $0x60] sm:$0xff] %v291
  %308 = vst [vmem:[#allocation2 + $0x68] sm:$0xff] %v292
  %309 = vst [vmem:[#allocation2 + $0x70] sm:$0xff] %v293
  %310 = vst [vmem:[#allocation2 + $0x78] sm:$0xff] %v294
  // Predicated region
  $region22: #{_lambda_.38} parent=0 // pred_check
    %p311 = pneg %p18
  $region23: #{_lambda_.38} parent=0 // pred_check_branch
    %313 = sbr.rel (%p311) target = $region25
  $region24: #{_lambda_.38} parent=0 // pred_region
    %v314 = vld [vmem:[#allocation2] sm:$0xff]
    %v315 = vld [vmem:[#allocation2 + $0x8] sm:$0xff]
    %v316 = vld [vmem:[#allocation2 + $0x10] sm:$0xff]
    %v317 = vld [vmem:[#allocation2 + $0x18] sm:$0xff]
    %v318 = vld [vmem:[#allocation2 + $0x20] sm:$0xff]
    %v319 = vld [vmem:[#allocation2 + $0x28] sm:$0xff]
    %v320 = vld [vmem:[#allocation2 + $0x30] sm:$0xff]
    %v321 = vld [vmem:[#allocation2 + $0x38] sm:$0xff]
    %v322 = vld [vmem:[#allocation2 + $0x40] sm:$0xff]
    %v323 = vld [vmem:[#allocation2 + $0x48] sm:$0xff]
    %v324 = vld [vmem:[#allocation2 + $0x50] sm:$0xff]
    %v325 = vld [vmem:[#allocation2 + $0x58] sm:$0xff]
    %v326 = vld [vmem:[#allocation2 + $0x60] sm:$0xff]
    %v327 = vld [vmem:[#allocation2 + $0x68] sm:$0xff]
    %v328 = vld [vmem:[#allocation2 + $0x70] sm:$0xff]
    %v329 = vld [vmem:[#allocation2 + $0x78] sm:$0xff]
    %v330 = vld [vmem:[%s2] sm:$0x1]
    %v332 = vlaneseq
    %v333 = vshrl.u32 %v332, 7
    %v334 = vsub.s32 0, %v333
    %v335 = vrot.slane %v330, %v334
    %v337 = vadd.f32 %v314, %v335
    %v338 = vadd.f32 %v315, %v335
    %v339 = vadd.f32 %v316, %v335
    %v340 = vadd.f32 %v317, %v335
    %v341 = vadd.f32 %v318, %v335
    %v342 = vadd.f32 %v319, %v335
    %v343 = vadd.f32 %v320, %v335
    %v344 = vadd.f32 %v321, %v335
    %v345 = vadd.f32 %v322, %v335
    %v346 = vadd.f32 %v323, %v335
    %v347 = vadd.f32 %v324, %v335
    %v348 = vadd.f32 %v325, %v335
    %v349 = vadd.f32 %v326, %v335
    %v350 = vadd.f32 %v327, %v335
    %v351 = vadd.f32 %v328, %v335
    %v352 = vadd.f32 %v329, %v335
    %v353 = vld [vmem:[%s3] sm:$0xff]
    %v354 = vld [vmem:[%s3 + $0x8] sm:$0xff]
    %v355 = vld [vmem:[%s3 + $0x10] sm:$0xff]
    %v356 = vld [vmem:[%s3 + $0x18] sm:$0xff]
    %v357 = vld [vmem:[%s3 + $0x20] sm:$0xff]
    %v358 = vld [vmem:[%s3 + $0x28] sm:$0xff]
    %v359 = vld [vmem:[%s3 + $0x30] sm:$0xff]
    %v360 = vld [vmem:[%s3 + $0x38] sm:$0xff]
    %v361 = vld [vmem:[%s3 + $0x40] sm:$0xff]
    %v362 = vld [vmem:[%s3 + $0x48] sm:$0xff]
    %v363 = vld [vmem:[%s3 + $0x50] sm:$0xff]
    %v364 = vld [vmem:[%s3 + $0x58] sm:$0xff]
    %v365 = vld [vmem:[%s3 + $0x60] sm:$0xff]
    %v366 = vld [vmem:[%s3 + $0x68] sm:$0xff]
    %v367 = vld [vmem:[%s3 + $0x70] sm:$0xff]
    %v368 = vld [vmem:[%s3 + $0x78] sm:$0xff]
    %v369 = vadd.f32 %v337, %v353
    %v370 = vadd.f32 %v338, %v354
    %v371 = vadd.f32 %v339, %v355
    %v372 = vadd.f32 %v340, %v356
    %v373 = vadd.f32 %v341, %v357
    %v374 = vadd.f32 %v342, %v358
    %v375 = vadd.f32 %v343, %v359
    %v376 = vadd.f32 %v344, %v360
    %v377 = vadd.f32 %v345, %v361
    %v378 = vadd.f32 %v346, %v362
    %v379 = vadd.f32 %v347, %v363
    %v380 = vadd.f32 %v348, %v364
    %v381 = vadd.f32 %v349, %v365
    %v382 = vadd.f32 %v350, %v366
    %v383 = vadd.f32 %v351, %v367
    %v384 = vadd.f32 %v352, %v368
    %vm385 = vcmp.ge.f32.partialorder %v369, 0.0
    %vm386 = vcmp.ge.f32.partialorder %v370, 0.0
    %vm387 = vcmp.ge.f32.partialorder %v371, 0.0
    %vm388 = vcmp.ge.f32.partialorder %v372, 0.0
    %vm389 = vcmp.ge.f32.partialorder %v373, 0.0
    %vm390 = vcmp.ge.f32.partialorder %v374, 0.0
    %vm391 = vcmp.ge.f32.partialorder %v375, 0.0
    %vm392 = vcmp.ge.f32.partialorder %v376, 0.0
    %vm393 = vcmp.ge.f32.partialorder %v377, 0.0
    %vm394 = vcmp.ge.f32.partialorder %v378, 0.0
    %vm395 = vcmp.ge.f32.partialorder %v379, 0.0
    %vm396 = vcmp.ge.f32.partialorder %v380, 0.0
    %vm397 = vcmp.ge.f32.partialorder %v381, 0.0
    %vm398 = vcmp.ge.f32.partialorder %v382, 0.0
    %vm399 = vcmp.ge.f32.partialorder %v383, 0.0
    %vm400 = vcmp.ge.f32.partialorder %v384, 0.0
    %v401 = vmul.f32 %v369, 0.01
    %v402 = vmul.f32 %v370, 0.01
    %v403 = vmul.f32 %v371, 0.01
    %v404 = vmul.f32 %v372, 0.01
    %v405 = vmul.f32 %v373, 0.01
    %v406 = vmul.f32 %v374, 0.01
    %v407 = vmul.f32 %v375, 0.01
    %v408 = vmul.f32 %v376, 0.01
    %v409 = vmul.f32 %v377, 0.01
    %v410 = vmul.f32 %v378, 0.01
    %v411 = vmul.f32 %v379, 0.01
    %v412 = vmul.f32 %v380, 0.01
    %v413 = vmul.f32 %v381, 0.01
    %v414 = vmul.f32 %v382, 0.01
    %v415 = vmul.f32 %v383, 0.01
    %v416 = vmul.f32 %v384, 0.01
    %v417 = vsel %vm385, %v369, %v401
    %v418 = vsel %vm386, %v370, %v402
    %v419 = vsel %vm387, %v371, %v403
    %v420 = vsel %vm388, %v372, %v404
    %v421 = vsel %vm389, %v373, %v405
    %v422 = vsel %vm390, %v374, %v406
    %v423 = vsel %vm391, %v375, %v407
    %v424 = vsel %vm392, %v376, %v408
    %v425 = vsel %vm393, %v377, %v409
    %v426 = vsel %vm394, %v378, %v410
    %v427 = vsel %vm395, %v379, %v411
    %v428 = vsel %vm396, %v380, %v412
    %v429 = vsel %vm397, %v381, %v413
    %v430 = vsel %vm398, %v382, %v414
    %v431 = vsel %vm399, %v383, %v415
    %v432 = vsel %vm400, %v384, %v416
    %433 = vst [vmem:[%s4] sm:$0xff] %v417
    %434 = vst [vmem:[%s4 + $0x8] sm:$0xff] %v418
    %435 = vst [vmem:[%s4 + $0x10] sm:$0xff] %v419
    %436 = vst [vmem:[%s4 + $0x18] sm:$0xff] %v420
    %437 = vst [vmem:[%s4 + $0x20] sm:$0xff] %v421
    %438 = vst [vmem:[%s4 + $0x28] sm:$0xff] %v422
    %439 = vst [vmem:[%s4 + $0x30] sm:$0xff] %v423
    %440 = vst [vmem:[%s4 + $0x38] sm:$0xff] %v424
    %441 = vst [vmem:[%s4 + $0x40] sm:$0xff] %v425
    %442 = vst [vmem:[%s4 + $0x48] sm:$0xff] %v426
    %443 = vst [vmem:[%s4 + $0x50] sm:$0xff] %v427
    %444 = vst [vmem:[%s4 + $0x58] sm:$0xff] %v428
    %445 = vst [vmem:[%s4 + $0x60] sm:$0xff] %v429
    %446 = vst [vmem:[%s4 + $0x68] sm:$0xff] %v430
    %447 = vst [vmem:[%s4 + $0x70] sm:$0xff] %v431
    %448 = vst [vmem:[%s4 + $0x78] sm:$0xff] %v432
  $region25: #{_lambda_.38} parent=0 // pred_fallthru
    _
  // Predicated region
  $region26: #{_lambda_.38} parent=0 // pred_check
    _
  $region27: #{_lambda_.38} parent=0 // pred_check_branch
    %450 = sbr.rel (0) target = $region29
  $region28: #{_lambda_.38} parent=0 // pred_region
    _
  $region29: #{_lambda_.38} parent=0 // pred_fallthru
    _
  // Predicated region
  $region30: #{_lambda_.38} parent=0 // pred_check
    _
  $region31: #{_lambda_.38} parent=0 // pred_check_branch
    %452 = sbr.rel (0) target = $region33
  $region32: #{_lambda_.38} parent=0 // pred_region
    _
  $region33: #{_lambda_.38} parent=0 // pred_fallthru
    _

// kernel: _lambda_.44
$region0: #{_lambda_.44}
  #allocation0 [shape = 'u32[]', space=smem, size = 0x4, offset = 0x4, fixed_abs, tag = 'smem constant byte address 0x4 - core index']
  #allocation1 [shape = 'u32[144,128]{1,0:T(1,128)}', space=vmem, size = 0x12000, scoped, tag = 'internal scratch']
  #allocation2 [shape = 'f32[32,128]{1,0:T(8,128)}', space=vmem, size = 0x4000, scoped, tag = 'scratch operand']
  %s0 = inlined_call_operand.vmem [shape: bf16[32,128], index: 0, kind: input, shape index: {}]
  %s1 = inlined_call_operand.vmem [shape: bf16[128,128], index: 1, kind: input, shape index: {}]
  %s2 = inlined_call_operand.vmem [shape: f32[1,128], index: 2, kind: input, shape index: {}]
  %s3 = inlined_call_operand.vmem [shape: f32[32,128], index: 3, kind: output, shape index: {}]
  %s4 = sld [smem:[#allocation0]]
  $region30: #{_lambda_.44} parent=0
    _
  %s6 = ssub.s32 1, %s4
  %s7 = scalar_select 0, %s6, %s4
  // Predicated region
  $region2: #{_lambda_.44} parent=0 // pred_check
    _
  $region3: #{_lambda_.44} parent=0 // pred_check_branch
    %9 = sbr.rel (0) target = $region5
  $region4: #{_lambda_.44} parent=0 // pred_region
    _
  $region5: #{_lambda_.44} parent=0 // pred_fallthru
    _
  // Predicated region
  $region6: #{_lambda_.44} parent=0 // pred_check
    _
  $region7: #{_lambda_.44} parent=0 // pred_check_branch
    %11 = sbr.rel (0) target = $region9
  $region8: #{_lambda_.44} parent=0 // pred_region
    _
  $region9: #{_lambda_.44} parent=0 // pred_fallthru
    _
  // Predicated region
  $region10: #{_lambda_.44} parent=0 // pred_check
    _
  $region11: #{_lambda_.44} parent=0 // pred_check_branch
    %13 = sbr.rel (0) target = $region13
  $region12: #{_lambda_.44} parent=0 // pred_region
    _
  $region13: #{_lambda_.44} parent=0 // pred_fallthru
    _
  %p15 = scmp.eq.s32.totalorder 0, 0
  // Predicated region
  $region14: #{_lambda_.44} parent=0 // pred_check
    %p16 = pneg %p15
  $region15: #{_lambda_.44} parent=0 // pred_check_branch
    %18 = sbr.rel (%p16) target = $region17
  $region16: #{_lambda_.44} parent=0 // pred_region
    %19 = vst [vmem:[#allocation2] sm:$0xff] 0.0
    %20 = vst [vmem:[#allocation2 + $0x8] sm:$0xff] 0.0
    %21 = vst [vmem:[#allocation2 + $0x10] sm:$0xff] 0.0
    %22 = vst [vmem:[#allocation2 + $0x18] sm:$0xff] 0.0
  $region17: #{_lambda_.44} parent=0 // pred_fallthru
    _
  %v23 = vld [vmem:[#allocation2] sm:$0xff]
  %v24 = vld [vmem:[#allocation2 + $0x8] sm:$0xff]
  %v25 = vld [vmem:[#allocation2 + $0x10] sm:$0xff]
  %v26 = vld [vmem:[#allocation2 + $0x18] sm:$0xff]
  %v27 = vld [vmem:[%s0] sm:$0xf]
  %v28 = vld [vmem:[%s0 + $0x4] sm:$0xf]
  %v29 = vld [vmem:[%s0 + $0x8] sm:$0xf]
  %v30 = vld [vmem:[%s0 + $0xc] sm:$0xf]
  %v31 = vld [vmem:[%s1] sm:$0xf]
  %v32 = vld [vmem:[%s1 + $0x4] sm:$0xf]
  %v33 = vld [vmem:[%s1 + $0x8] sm:$0xf]
  %v34 = vld [vmem:[%s1 + $0xc] sm:$0xf]
  %v35 = vld [vmem:[%s1 + $0x10] sm:$0xf]
  %v36 = vld [vmem:[%s1 + $0x14] sm:$0xf]
  %v37 = vld [vmem:[%s1 + $0x18] sm:$0xf]
  %v38 = vld [vmem:[%s1 + $0x1c] sm:$0xf]
  %v39 = vld [vmem:[%s1 + $0x20] sm:$0xf]
  %v40 = vld [vmem:[%s1 + $0x24] sm:$0xf]
  %v41 = vld [vmem:[%s1 + $0x28] sm:$0xf]
  %v42 = vld [vmem:[%s1 + $0x2c] sm:$0xf]
  %v43 = vld [vmem:[%s1 + $0x30] sm:$0xf]
  %v44 = vld [vmem:[%s1 + $0x34] sm:$0xf]
  %v45 = vld [vmem:[%s1 + $0x38] sm:$0xf]
  %v46 = vld [vmem:[%s1 + $0x3c] sm:$0xf]
  %v51 = vunpack.c.l.b16 %v27
  %v52 = vunpack.c.l.b16 %v28
  %v53 = vunpack.c.l.b16 %v29
  %v54 = vunpack.c.l.b16 %v30
  %v55 = vpack.c.b16 %v52, %v51
  %v56 = vpack.c.b16 %v54, %v53
  %v75 = vunpack.c.l.b16 %v31
  %v76 = vunpack.c.l.b16 %v32
  %v77 = vunpack.c.l.b16 %v33
  %v78 = vunpack.c.l.b16 %v34
  %v79 = vunpack.c.l.b16 %v35
  %v80 = vunpack.c.l.b16 %v36
  %v81 = vunpack.c.l.b16 %v37
  %v82 = vunpack.c.l.b16 %v38
  %v83 = vunpack.c.l.b16 %v39
  %v84 = vunpack.c.l.b16 %v40
  %v85 = vunpack.c.l.b16 %v41
  %v86 = vunpack.c.l.b16 %v42
  %v87 = vunpack.c.l.b16 %v43
  %v88 = vunpack.c.l.b16 %v44
  %v89 = vunpack.c.l.b16 %v45
  %v90 = vunpack.c.l.b16 %v46
  %v91 = vpack.c.b16 %v76, %v75
  %v92 = vpack.c.b16 %v78, %v77
  %v93 = vpack.c.b16 %v80, %v79
  %v94 = vpack.c.b16 %v82, %v81
  %v95 = vpack.c.b16 %v84, %v83
  %v96 = vpack.c.b16 %v86, %v85
  %v97 = vpack.c.b16 %v88, %v87
  %v98 = vpack.c.b16 %v90, %v89
  %107 = vmatprep.subr.bf16.mxu0 0
  %108 = vmatpush1.bf16.msra.mxu0 %v91
  %109 = vmatprep.subr.bf16.mxu0 0
  %110 = vmatpush1.bf16.msra.mxu0 %v92
  %111 = vmatprep.subr.bf16.mxu0 0
  %112 = vmatpush1.bf16.msra.mxu0 %v93
  %113 = vmatprep.subr.bf16.mxu0 0
  %114 = vmatpush1.bf16.msra.mxu0 %v94
  %115 = vmatprep.subr.bf16.mxu0 0
  %116 = vmatpush1.bf16.msra.mxu0 %v95
  %117 = vmatprep.subr.bf16.mxu0 0
  %118 = vmatpush1.bf16.msra.mxu0 %v96
  %119 = vmatprep.subr.bf16.mxu0 0
  %120 = vmatpush1.bf16.msra.mxu0 %v97
  %121 = vmatprep.subr.bf16.mxu0 0
  %122 = vmatpush1.bf16.msra.mxu0 %v98
  %123 = vmatprep.subr.bf16.mxu0 0
  %124 = vmatpush1.bf16.msra.mxu0 0
  %125 = vmatprep.subr.bf16.mxu0 0
  %126 = vmatpush1.bf16.msra.mxu0 0
  %127 = vmatprep.subr.bf16.mxu0 0
  %128 = vmatpush1.bf16.msra.mxu0 0
  %129 = vmatprep.subr.bf16.mxu0 0
  %130 = vmatpush1.bf16.msra.mxu0 0
  %131 = vmatprep.subr.bf16.mxu0 0
  %132 = vmatpush1.bf16.msra.mxu0 0
  %133 = vmatprep.subr.bf16.mxu0 0
  %134 = vmatpush1.bf16.msra.mxu0 0
  %135 = vmatprep.subr.bf16.mxu0 0
  %136 = vmatpush1.bf16.msra.mxu0 0
  %137 = vmatprep.subr.bf16.mxu0 0
  %138 = vmatpush1.bf16.msra.mxu0 0
  %139 = vmatprep.mubr.bf16.mxu0 0
  %140 = vmatmul.mubr.bf16.gmra.mrb[0].mxu0 %v55
  %v141 = vpop.f32.mrb[0].mxu0
  %v142 = vadd.f32 0.0, %v141
  %v143 = vpop.f32.mrb[0].mxu0
  %v144 = vpop.f32.mrb[0].mxu0
  %v145 = vadd.f32 0.0, %v144
  %v146 = vpop.f32.mrb[0].mxu0
  %147 = vmatprep.mubr.bf16.mxu0 0
  %148 = vmatmul.mubr.bf16.gmra.mrb[0].mxu0 %v56
  %v149 = vpop.f32.mrb[0].mxu0
  %v150 = vadd.f32 0.0, %v149
  %v151 = vpop.f32.mrb[0].mxu0
  %v152 = vpop.f32.mrb[0].mxu0
  %v153 = vadd.f32 0.0, %v152
  %v154 = vpop.f32.mrb[0].mxu0
  %155 = vdwg.mxu0
  %v156 = vadd.f32 %v23, %v142
  %v157 = vadd.f32 %v24, %v145
  %v158 = vadd.f32 %v25, %v150
  %v159 = vadd.f32 %v26, %v153
  %160 = vst [vmem:[#allocation2] sm:$0xff] %v156
  %161 = vst [vmem:[#allocation2 + $0x8] sm:$0xff] %v157
  %162 = vst [vmem:[#allocation2 + $0x10] sm:$0xff] %v158
  %163 = vst [vmem:[#allocation2 + $0x18] sm:$0xff] %v159
  // Predicated region
  $region18: #{_lambda_.44} parent=0 // pred_check
    %p164 = pneg %p15
  $region19: #{_lambda_.44} parent=0 // pred_check_branch
    %166 = sbr.rel (%p164) target = $region21
  $region20: #{_lambda_.44} parent=0 // pred_region
    %v167 = vld [vmem:[#allocation2] sm:$0xff]
    %v168 = vld [vmem:[#allocation2 + $0x8] sm:$0xff]
    %v169 = vld [vmem:[#allocation2 + $0x10] sm:$0xff]
    %v170 = vld [vmem:[#allocation2 + $0x18] sm:$0xff]
    %v171 = vld [vmem:[%s2] sm:$0x1]
    %v173 = vlaneseq
    %v174 = vshrl.u32 %v173, 7
    %v175 = vsub.s32 0, %v174
    %v176 = vrot.slane %v171, %v175
    %v178 = vadd.f32 %v167, %v176
    %v179 = vadd.f32 %v168, %v176
    %v180 = vadd.f32 %v169, %v176
    %v181 = vadd.f32 %v170, %v176
    %182 = vst [vmem:[%s3] sm:$0xff] %v178
    %183 = vst [vmem:[%s3 + $0x8] sm:$0xff] %v179
    %184 = vst [vmem:[%s3 + $0x10] sm:$0xff] %v180
    %185 = vst [vmem:[%s3 + $0x18] sm:$0xff] %v181
  $region21: #{_lambda_.44} parent=0 // pred_fallthru
    _
  // Predicated region
  $region22: #{_lambda_.44} parent=0 // pred_check
    _
  $region23: #{_lambda_.44} parent=0 // pred_check_branch
    %187 = sbr.rel (0) target = $region25
  $region24: #{_lambda_.44} parent=0 // pred_region
    _
  $region25: #{_lambda_.44} parent=0 // pred_fallthru
    _
  // Predicated region
  $region26: #{_lambda_.44} parent=0 // pred_check
    _
  $region27: #{_lambda_.44} parent=0 // pred_check_branch
    %189 = sbr.rel (0) target = $region29
  $region28: #{_lambda_.44} parent=0 // pred_region
    _
  $region29: #{_lambda_.44} parent=0 // pred_fallthru
    _

// kernel: _lambda_.46
$region0: #{_lambda_.46}
  #allocation0 [shape = 'u32[]', space=smem, size = 0x4, offset = 0x4, fixed_abs, tag = 'smem constant byte address 0x4 - core index']
  #allocation1 [shape = 'u32[144,128]{1,0:T(1,128)}', space=vmem, size = 0x12000, scoped, tag = 'internal scratch']
  #allocation2 [shape = 'f32[32,128]{1,0:T(8,128)}', space=vmem, size = 0x4000, scoped, tag = 'scratch operand']
  %s0 = inlined_call_operand.vmem [shape: bf16[32,128], index: 0, kind: input, shape index: {}]
  %s1 = inlined_call_operand.vmem [shape: bf16[128,128], index: 1, kind: input, shape index: {}]
  %s2 = inlined_call_operand.vmem [shape: f32[1,128], index: 2, kind: input, shape index: {}]
  %s3 = inlined_call_operand.vmem [shape: f32[32,128], index: 3, kind: output, shape index: {}]
  %s4 = sld [smem:[#allocation0]]
  $region30: #{_lambda_.46} parent=0
    _
  %s6 = ssub.s32 1, %s4
  %s7 = scalar_select 0, %s6, %s4
  // Predicated region
  $region2: #{_lambda_.46} parent=0 // pred_check
    _
  $region3: #{_lambda_.46} parent=0 // pred_check_branch
    %9 = sbr.rel (0) target = $region5
  $region4: #{_lambda_.46} parent=0 // pred_region
    _
  $region5: #{_lambda_.46} parent=0 // pred_fallthru
    _
  // Predicated region
  $region6: #{_lambda_.46} parent=0 // pred_check
    _
  $region7: #{_lambda_.46} parent=0 // pred_check_branch
    %11 = sbr.rel (0) target = $region9
  $region8: #{_lambda_.46} parent=0 // pred_region
    _
  $region9: #{_lambda_.46} parent=0 // pred_fallthru
    _
  // Predicated region
  $region10: #{_lambda_.46} parent=0 // pred_check
    _
  $region11: #{_lambda_.46} parent=0 // pred_check_branch
    %13 = sbr.rel (0) target = $region13
  $region12: #{_lambda_.46} parent=0 // pred_region
    _
  $region13: #{_lambda_.46} parent=0 // pred_fallthru
    _
  %p15 = scmp.eq.s32.totalorder 0, 0
  // Predicated region
  $region14: #{_lambda_.46} parent=0 // pred_check
    %p16 = pneg %p15
  $region15: #{_lambda_.46} parent=0 // pred_check_branch
    %18 = sbr.rel (%p16) target = $region17
  $region16: #{_lambda_.46} parent=0 // pred_region
    %19 = vst [vmem:[#allocation2] sm:$0xff] 0.0
    %20 = vst [vmem:[#allocation2 + $0x8] sm:$0xff] 0.0
    %21 = vst [vmem:[#allocation2 + $0x10] sm:$0xff] 0.0
    %22 = vst [vmem:[#allocation2 + $0x18] sm:$0xff] 0.0
  $region17: #{_lambda_.46} parent=0 // pred_fallthru
    _
  %v23 = vld [vmem:[#allocation2] sm:$0xff]
  %v24 = vld [vmem:[#allocation2 + $0x8] sm:$0xff]
  %v25 = vld [vmem:[#allocation2 + $0x10] sm:$0xff]
  %v26 = vld [vmem:[#allocation2 + $0x18] sm:$0xff]
  %v27 = vld [vmem:[%s0] sm:$0xf]
  %v28 = vld [vmem:[%s0 + $0x4] sm:$0xf]
  %v29 = vld [vmem:[%s0 + $0x8] sm:$0xf]
  %v30 = vld [vmem:[%s0 + $0xc] sm:$0xf]
  %v31 = vld [vmem:[%s1] sm:$0xf]
  %v32 = vld [vmem:[%s1 + $0x4] sm:$0xf]
  %v33 = vld [vmem:[%s1 + $0x8] sm:$0xf]
  %v34 = vld [vmem:[%s1 + $0xc] sm:$0xf]
  %v35 = vld [vmem:[%s1 + $0x10] sm:$0xf]
  %v36 = vld [vmem:[%s1 + $0x14] sm:$0xf]
  %v37 = vld [vmem:[%s1 + $0x18] sm:$0xf]
  %v38 = vld [vmem:[%s1 + $0x1c] sm:$0xf]
  %v39 = vld [vmem:[%s1 + $0x20] sm:$0xf]
  %v40 = vld [vmem:[%s1 + $0x24] sm:$0xf]
  %v41 = vld [vmem:[%s1 + $0x28] sm:$0xf]
  %v42 = vld [vmem:[%s1 + $0x2c] sm:$0xf]
  %v43 = vld [vmem:[%s1 + $0x30] sm:$0xf]
  %v44 = vld [vmem:[%s1 + $0x34] sm:$0xf]
  %v45 = vld [vmem:[%s1 + $0x38] sm:$0xf]
  %v46 = vld [vmem:[%s1 + $0x3c] sm:$0xf]
  %v51 = vunpack.c.l.b16 %v27
  %v52 = vunpack.c.l.b16 %v28
  %v53 = vunpack.c.l.b16 %v29
  %v54 = vunpack.c.l.b16 %v30
  %v55 = vpack.c.b16 %v52, %v51
  %v56 = vpack.c.b16 %v54, %v53
  %v75 = vunpack.c.l.b16 %v31
  %v76 = vunpack.c.l.b16 %v32
  %v77 = vunpack.c.l.b16 %v33
  %v78 = vunpack.c.l.b16 %v34
  %v79 = vunpack.c.l.b16 %v35
  %v80 = vunpack.c.l.b16 %v36
  %v81 = vunpack.c.l.b16 %v37
  %v82 = vunpack.c.l.b16 %v38
  %v83 = vunpack.c.l.b16 %v39
  %v84 = vunpack.c.l.b16 %v40
  %v85 = vunpack.c.l.b16 %v41
  %v86 = vunpack.c.l.b16 %v42
  %v87 = vunpack.c.l.b16 %v43
  %v88 = vunpack.c.l.b16 %v44
  %v89 = vunpack.c.l.b16 %v45
  %v90 = vunpack.c.l.b16 %v46
  %v91 = vpack.c.b16 %v76, %v75
  %v92 = vpack.c.b16 %v78, %v77
  %v93 = vpack.c.b16 %v80, %v79
  %v94 = vpack.c.b16 %v82, %v81
  %v95 = vpack.c.b16 %v84, %v83
  %v96 = vpack.c.b16 %v86, %v85
  %v97 = vpack.c.b16 %v88, %v87
  %v98 = vpack.c.b16 %v90, %v89
  %107 = vmatprep.subr.bf16.mxu0 0
  %108 = vmatpush1.bf16.msra.mxu0 %v91
  %109 = vmatprep.subr.bf16.mxu0 0
  %110 = vmatpush1.bf16.msra.mxu0 %v92
  %111 = vmatprep.subr.bf16.mxu0 0
  %112 = vmatpush1.bf16.msra.mxu0 %v93
  %113 = vmatprep.subr.bf16.mxu0 0
  %114 = vmatpush1.bf16.msra.mxu0 %v94
  %115 = vmatprep.subr.bf16.mxu0 0
  %116 = vmatpush1.bf16.msra.mxu0 %v95
  %117 = vmatprep.subr.bf16.mxu0 0
  %118 = vmatpush1.bf16.msra.mxu0 %v96
  %119 = vmatprep.subr.bf16.mxu0 0
  %120 = vmatpush1.bf16.msra.mxu0 %v97
  %121 = vmatprep.subr.bf16.mxu0 0
  %122 = vmatpush1.bf16.msra.mxu0 %v98
  %123 = vmatprep.subr.bf16.mxu0 0
  %124 = vmatpush1.bf16.msra.mxu0 0
  %125 = vmatprep.subr.bf16.mxu0 0
  %126 = vmatpush1.bf16.msra.mxu0 0
  %127 = vmatprep.subr.bf16.mxu0 0
  %128 = vmatpush1.bf16.msra.mxu0 0
  %129 = vmatprep.subr.bf16.mxu0 0
  %130 = vmatpush1.bf16.msra.mxu0 0
  %131 = vmatprep.subr.bf16.mxu0 0
  %132 = vmatpush1.bf16.msra.mxu0 0
  %133 = vmatprep.subr.bf16.mxu0 0
  %134 = vmatpush1.bf16.msra.mxu0 0
  %135 = vmatprep.subr.bf16.mxu0 0
  %136 = vmatpush1.bf16.msra.mxu0 0
  %137 = vmatprep.subr.bf16.mxu0 0
  %138 = vmatpush1.bf16.msra.mxu0 0
  %139 = vmatprep.mubr.bf16.mxu0 0
  %140 = vmatmul.mubr.bf16.gmra.mrb[0].mxu0 %v55
  %v141 = vpop.f32.mrb[0].mxu0
  %v142 = vadd.f32 0.0, %v141
  %v143 = vpop.f32.mrb[0].mxu0
  %v144 = vpop.f32.mrb[0].mxu0
  %v145 = vadd.f32 0.0, %v144
  %v146 = vpop.f32.mrb[0].mxu0
  %147 = vmatprep.mubr.bf16.mxu0 0
  %148 = vmatmul.mubr.bf16.gmra.mrb[0].mxu0 %v56
  %v149 = vpop.f32.mrb[0].mxu0
  %v150 = vadd.f32 0.0, %v149
  %v151 = vpop.f32.mrb[0].mxu0
  %v152 = vpop.f32.mrb[0].mxu0
  %v153 = vadd.f32 0.0, %v152
  %v154 = vpop.f32.mrb[0].mxu0
  %155 = vdwg.mxu0
  %v156 = vadd.f32 %v23, %v142
  %v157 = vadd.f32 %v24, %v145
  %v158 = vadd.f32 %v25, %v150
  %v159 = vadd.f32 %v26, %v153
  %160 = vst [vmem:[#allocation2] sm:$0xff] %v156
  %161 = vst [vmem:[#allocation2 + $0x8] sm:$0xff] %v157
  %162 = vst [vmem:[#allocation2 + $0x10] sm:$0xff] %v158
  %163 = vst [vmem:[#allocation2 + $0x18] sm:$0xff] %v159
  // Predicated region
  $region18: #{_lambda_.46} parent=0 // pred_check
    %p164 = pneg %p15
  $region19: #{_lambda_.46} parent=0 // pred_check_branch
    %166 = sbr.rel (%p164) target = $region21
  $region20: #{_lambda_.46} parent=0 // pred_region
    %v167 = vld [vmem:[#allocation2] sm:$0xff]
    %v168 = vld [vmem:[#allocation2 + $0x8] sm:$0xff]
    %v169 = vld [vmem:[#allocation2 + $0x10] sm:$0xff]
    %v170 = vld [vmem:[#allocation2 + $0x18] sm:$0xff]
    %v171 = vld [vmem:[%s2] sm:$0x1]
    %v173 = vlaneseq
    %v174 = vshrl.u32 %v173, 7
    %v175 = vsub.s32 0, %v174
    %v176 = vrot.slane %v171, %v175
    %v178 = vadd.f32 %v167, %v176
    %v179 = vadd.f32 %v168, %v176
    %v180 = vadd.f32 %v169, %v176
    %v181 = vadd.f32 %v170, %v176
    %vm182 = vcmp.ge.f32.partialorder %v178, 0.0
    %vm183 = vcmp.ge.f32.partialorder %v179, 0.0
    %vm184 = vcmp.ge.f32.partialorder %v180, 0.0
    %vm185 = vcmp.ge.f32.partialorder %v181, 0.0
    %v186 = vmul.f32 %v178, 0.2
    %v187 = vmul.f32 %v179, 0.2
    %v188 = vmul.f32 %v180, 0.2
    %v189 = vmul.f32 %v181, 0.2
    %v190 = vsel %vm182, %v178, %v186
    %v191 = vsel %vm183, %v179, %v187
    %v192 = vsel %vm184, %v180, %v188
    %v193 = vsel %vm185, %v181, %v189
    %194 = vst [vmem:[%s3] sm:$0xff] %v190
    %195 = vst [vmem:[%s3 + $0x8] sm:$0xff] %v191
    %196 = vst [vmem:[%s3 + $0x10] sm:$0xff] %v192
    %197 = vst [vmem:[%s3 + $0x18] sm:$0xff] %v193
  $region21: #{_lambda_.46} parent=0 // pred_fallthru
    _
  // Predicated region
  $region22: #{_lambda_.46} parent=0 // pred_check
    _
  $region23: #{_lambda_.46} parent=0 // pred_check_branch
    %199 = sbr.rel (0) target = $region25
  $region24: #{_lambda_.46} parent=0 // pred_region
    _
  $region25: #{_lambda_.46} parent=0 // pred_fallthru
    _
  // Predicated region
  $region26: #{_lambda_.46} parent=0 // pred_check
    _
  $region27: #{_lambda_.46} parent=0 // pred_check_branch
    %201 = sbr.rel (0) target = $region29
  $region28: #{_lambda_.46} parent=0 // pred_region
    _
  $region29: #{_lambda_.46} parent=0 // pred_fallthru
    _

// kernel: _lambda_.43
$region0: #{_lambda_.43}
  #allocation0 [shape = 'u32[]', space=smem, size = 0x4, offset = 0x4, fixed_abs, tag = 'smem constant byte address 0x4 - core index']
  #allocation1 [shape = 'u32[144,128]{1,0:T(1,128)}', space=vmem, size = 0x12000, scoped, tag = 'internal scratch']
  #allocation2 [shape = 'f32[32,128]{1,0:T(8,128)}', space=vmem, size = 0x4000, scoped, tag = 'scratch operand']
  %s0 = inlined_call_operand.vmem [shape: bf16[32,256], index: 0, kind: input, shape index: {}]
  %s1 = inlined_call_operand.vmem [shape: bf16[256,128], index: 1, kind: input, shape index: {}]
  %s2 = inlined_call_operand.vmem [shape: f32[1,128], index: 2, kind: input, shape index: {}]
  %s3 = inlined_call_operand.vmem [shape: f32[32,128], index: 3, kind: output, shape index: {}]
  %s4 = sld [smem:[#allocation0]]
  $region30: #{_lambda_.43} parent=0
    _
  %s6 = ssub.s32 1, %s4
  %s7 = scalar_select 0, %s6, %s4
  // Predicated region
  $region2: #{_lambda_.43} parent=0 // pred_check
    _
  $region3: #{_lambda_.43} parent=0 // pred_check_branch
    %9 = sbr.rel (0) target = $region5
  $region4: #{_lambda_.43} parent=0 // pred_region
    _
  $region5: #{_lambda_.43} parent=0 // pred_fallthru
    _
  // Predicated region
  $region6: #{_lambda_.43} parent=0 // pred_check
    _
  $region7: #{_lambda_.43} parent=0 // pred_check_branch
    %11 = sbr.rel (0) target = $region9
  $region8: #{_lambda_.43} parent=0 // pred_region
    _
  $region9: #{_lambda_.43} parent=0 // pred_fallthru
    _
  // Predicated region
  $region10: #{_lambda_.43} parent=0 // pred_check
    _
  $region11: #{_lambda_.43} parent=0 // pred_check_branch
    %13 = sbr.rel (0) target = $region13
  $region12: #{_lambda_.43} parent=0 // pred_region
    _
  $region13: #{_lambda_.43} parent=0 // pred_fallthru
    _
  %p15 = scmp.eq.s32.totalorder 0, 0
  // Predicated region
  $region14: #{_lambda_.43} parent=0 // pred_check
    %p16 = pneg %p15
  $region15: #{_lambda_.43} parent=0 // pred_check_branch
    %18 = sbr.rel (%p16) target = $region17
  $region16: #{_lambda_.43} parent=0 // pred_region
    %19 = vst [vmem:[#allocation2] sm:$0xff] 0.0
    %20 = vst [vmem:[#allocation2 + $0x8] sm:$0xff] 0.0
    %21 = vst [vmem:[#allocation2 + $0x10] sm:$0xff] 0.0
    %22 = vst [vmem:[#allocation2 + $0x18] sm:$0xff] 0.0
  $region17: #{_lambda_.43} parent=0 // pred_fallthru
    _
  %v23 = vld [vmem:[#allocation2] sm:$0xff]
  %v24 = vld [vmem:[#allocation2 + $0x8] sm:$0xff]
  %v25 = vld [vmem:[#allocation2 + $0x10] sm:$0xff]
  %v26 = vld [vmem:[#allocation2 + $0x18] sm:$0xff]
  %v27 = vld [vmem:[%s0] sm:$0xff]
  %v28 = vld [vmem:[%s0 + $0x8] sm:$0xff]
  %v29 = vld [vmem:[%s0 + $0x10] sm:$0xff]
  %v30 = vld [vmem:[%s0 + $0x18] sm:$0xff]
  %v31 = vld [vmem:[%s1] sm:$0xf]
  %v32 = vld [vmem:[%s1 + $0x4] sm:$0xf]
  %v33 = vld [vmem:[%s1 + $0x8] sm:$0xf]
  %v34 = vld [vmem:[%s1 + $0xc] sm:$0xf]
  %v35 = vld [vmem:[%s1 + $0x10] sm:$0xf]
  %v36 = vld [vmem:[%s1 + $0x14] sm:$0xf]
  %v37 = vld [vmem:[%s1 + $0x18] sm:$0xf]
  %v38 = vld [vmem:[%s1 + $0x1c] sm:$0xf]
  %v39 = vld [vmem:[%s1 + $0x20] sm:$0xf]
  %v40 = vld [vmem:[%s1 + $0x24] sm:$0xf]
  %v41 = vld [vmem:[%s1 + $0x28] sm:$0xf]
  %v42 = vld [vmem:[%s1 + $0x2c] sm:$0xf]
  %v43 = vld [vmem:[%s1 + $0x30] sm:$0xf]
  %v44 = vld [vmem:[%s1 + $0x34] sm:$0xf]
  %v45 = vld [vmem:[%s1 + $0x38] sm:$0xf]
  %v46 = vld [vmem:[%s1 + $0x3c] sm:$0xf]
  %v47 = vld [vmem:[%s1 + $0x40] sm:$0xf]
  %v48 = vld [vmem:[%s1 + $0x44] sm:$0xf]
  %v49 = vld [vmem:[%s1 + $0x48] sm:$0xf]
  %v50 = vld [vmem:[%s1 + $0x4c] sm:$0xf]
  %v51 = vld [vmem:[%s1 + $0x50] sm:$0xf]
  %v52 = vld [vmem:[%s1 + $0x54] sm:$0xf]
  %v53 = vld [vmem:[%s1 + $0x58] sm:$0xf]
  %v54 = vld [vmem:[%s1 + $0x5c] sm:$0xf]
  %v55 = vld [vmem:[%s1 + $0x60] sm:$0xf]
  %v56 = vld [vmem:[%s1 + $0x64] sm:$0xf]
  %v57 = vld [vmem:[%s1 + $0x68] sm:$0xf]
  %v58 = vld [vmem:[%s1 + $0x6c] sm:$0xf]
  %v59 = vld [vmem:[%s1 + $0x70] sm:$0xf]
  %v60 = vld [vmem:[%s1 + $0x74] sm:$0xf]
  %v61 = vld [vmem:[%s1 + $0x78] sm:$0xf]
  %v62 = vld [vmem:[%s1 + $0x7c] sm:$0xf]
  %v67 = vunpack.c.l.b16 %v27
  %v68 = vunpack.c.h.b16 %v27
  %v69 = vunpack.c.l.b16 %v28
  %v70 = vunpack.c.h.b16 %v28
  %v71 = vunpack.c.l.b16 %v29
  %v72 = vunpack.c.h.b16 %v29
  %v73 = vunpack.c.l.b16 %v30
  %v74 = vunpack.c.h.b16 %v30
  %v75 = vpack.c.b16 %v69, %v67
  %v76 = vpack.c.b16 %v70, %v68
  %v77 = vpack.c.b16 %v73, %v71
  %v78 = vpack.c.b16 %v74, %v72
  %v115 = vunpack.c.l.b16 %v31
  %v116 = vunpack.c.l.b16 %v32
  %v117 = vunpack.c.l.b16 %v33
  %v118 = vunpack.c.l.b16 %v34
  %v119 = vunpack.c.l.b16 %v35
  %v120 = vunpack.c.l.b16 %v36
  %v121 = vunpack.c.l.b16 %v37
  %v122 = vunpack.c.l.b16 %v38
  %v123 = vunpack.c.l.b16 %v39
  %v124 = vunpack.c.l.b16 %v40
  %v125 = vunpack.c.l.b16 %v41
  %v126 = vunpack.c.l.b16 %v42
  %v127 = vunpack.c.l.b16 %v43
  %v128 = vunpack.c.l.b16 %v44
  %v129 = vunpack.c.l.b16 %v45
  %v130 = vunpack.c.l.b16 %v46
  %v131 = vunpack.c.l.b16 %v47
  %v132 = vunpack.c.l.b16 %v48
  %v133 = vunpack.c.l.b16 %v49
  %v134 = vunpack.c.l.b16 %v50
  %v135 = vunpack.c.l.b16 %v51
  %v136 = vunpack.c.l.b16 %v52
  %v137 = vunpack.c.l.b16 %v53
  %v138 = vunpack.c.l.b16 %v54
  %v139 = vunpack.c.l.b16 %v55
  %v140 = vunpack.c.l.b16 %v56
  %v141 = vunpack.c.l.b16 %v57
  %v142 = vunpack.c.l.b16 %v58
  %v143 = vunpack.c.l.b16 %v59
  %v144 = vunpack.c.l.b16 %v60
  %v145 = vunpack.c.l.b16 %v61
  %v146 = vunpack.c.l.b16 %v62
  %v147 = vpack.c.b16 %v116, %v115
  %v148 = vpack.c.b16 %v118, %v117
  %v149 = vpack.c.b16 %v120, %v119
  %v150 = vpack.c.b16 %v122, %v121
  %v151 = vpack.c.b16 %v124, %v123
  %v152 = vpack.c.b16 %v126, %v125
  %v153 = vpack.c.b16 %v128, %v127
  %v154 = vpack.c.b16 %v130, %v129
  %v155 = vpack.c.b16 %v132, %v131
  %v156 = vpack.c.b16 %v134, %v133
  %v157 = vpack.c.b16 %v136, %v135
  %v158 = vpack.c.b16 %v138, %v137
  %v159 = vpack.c.b16 %v140, %v139
  %v160 = vpack.c.b16 %v142, %v141
  %v161 = vpack.c.b16 %v144, %v143
  %v162 = vpack.c.b16 %v146, %v145
  %179 = vmatprep.subr.bf16.mxu0 0
  %180 = vmatpush1.bf16.msra.mxu0 %v147
  %181 = vmatprep.subr.bf16.mxu0 0
  %182 = vmatpush1.bf16.msra.mxu0 %v148
  %183 = vmatprep.subr.bf16.mxu0 0
  %184 = vmatpush1.bf16.msra.mxu0 %v149
  %185 = vmatprep.subr.bf16.mxu0 0
  %186 = vmatpush1.bf16.msra.mxu0 %v150
  %187 = vmatprep.subr.bf16.mxu0 0
  %188 = vmatpush1.bf16.msra.mxu0 %v151
  %189 = vmatprep.subr.bf16.mxu0 0
  %190 = vmatpush1.bf16.msra.mxu0 %v152
  %191 = vmatprep.subr.bf16.mxu0 0
  %192 = vmatpush1.bf16.msra.mxu0 %v153
  %193 = vmatprep.subr.bf16.mxu0 0
  %194 = vmatpush1.bf16.msra.mxu0 %v154
  %195 = vmatprep.subr.bf16.mxu0 0
  %196 = vmatpush1.bf16.msra.mxu0 %v155
  %197 = vmatprep.subr.bf16.mxu0 0
  %198 = vmatpush1.bf16.msra.mxu0 %v156
  %199 = vmatprep.subr.bf16.mxu0 0
  %200 = vmatpush1.bf16.msra.mxu0 %v157
  %201 = vmatprep.subr.bf16.mxu0 0
  %202 = vmatpush1.bf16.msra.mxu0 %v158
  %203 = vmatprep.subr.bf16.mxu0 0
  %204 = vmatpush1.bf16.msra.mxu0 %v159
  %205 = vmatprep.subr.bf16.mxu0 0
  %206 = vmatpush1.bf16.msra.mxu0 %v160
  %207 = vmatprep.subr.bf16.mxu0 0
  %208 = vmatpush1.bf16.msra.mxu0 %v161
  %209 = vmatprep.subr.bf16.mxu0 0
  %210 = vmatpush1.bf16.msra.mxu0 %v162
  %211 = vmatprep.mubr.bf16.mxu0 %v76
  %212 = vmatmul.mubr.bf16.gmra.mrb[0].mxu0 %v75
  %v213 = vpop.f32.mrb[0].mxu0
  %v214 = vadd.f32 0.0, %v213
  %v215 = vpop.f32.mrb[0].mxu0
  %v216 = vpop.f32.mrb[0].mxu0
  %v217 = vadd.f32 0.0, %v216
  %v218 = vpop.f32.mrb[0].mxu0
  %219 = vmatprep.mubr.bf16.mxu0 %v78
  %220 = vmatmul.mubr.bf16.gmra.mrb[0].mxu0 %v77
  %v221 = vpop.f32.mrb[0].mxu0
  %v222 = vadd.f32 0.0, %v221
  %v223 = vpop.f32.mrb[0].mxu0
  %v224 = vpop.f32.mrb[0].mxu0
  %v225 = vadd.f32 0.0, %v224
  %v226 = vpop.f32.mrb[0].mxu0
  %227 = vdwg.mxu0
  %v228 = vadd.f32 %v23, %v214
  %v229 = vadd.f32 %v24, %v217
  %v230 = vadd.f32 %v25, %v222
  %v231 = vadd.f32 %v26, %v225
  %232 = vst [vmem:[#allocation2] sm:$0xff] %v228
  %233 = vst [vmem:[#allocation2 + $0x8] sm:$0xff] %v229
  %234 = vst [vmem:[#allocation2 + $0x10] sm:$0xff] %v230
  %235 = vst [vmem:[#allocation2 + $0x18] sm:$0xff] %v231
  // Predicated region
  $region18: #{_lambda_.43} parent=0 // pred_check
    %p236 = pneg %p15
  $region19: #{_lambda_.43} parent=0 // pred_check_branch
    %238 = sbr.rel (%p236) target = $region21
  $region20: #{_lambda_.43} parent=0 // pred_region
    %v239 = vld [vmem:[#allocation2] sm:$0xff]
    %v240 = vld [vmem:[#allocation2 + $0x8] sm:$0xff]
    %v241 = vld [vmem:[#allocation2 + $0x10] sm:$0xff]
    %v242 = vld [vmem:[#allocation2 + $0x18] sm:$0xff]
    %v243 = vld [vmem:[%s2] sm:$0x1]
    %v245 = vlaneseq
    %v246 = vshrl.u32 %v245, 7
    %v247 = vsub.s32 0, %v246
    %v248 = vrot.slane %v243, %v247
    %v250 = vadd.f32 %v239, %v248
    %v251 = vadd.f32 %v240, %v248
    %v252 = vadd.f32 %v241, %v248
    %v253 = vadd.f32 %v242, %v248
    %vm254 = vcmp.ge.f32.partialorder %v250, 0.0
    %vm255 = vcmp.ge.f32.partialorder %v251, 0.0
    %vm256 = vcmp.ge.f32.partialorder %v252, 0.0
    %vm257 = vcmp.ge.f32.partialorder %v253, 0.0
    %v258 = vmul.f32 %v250, 0.2
    %v259 = vmul.f32 %v251, 0.2
    %v260 = vmul.f32 %v252, 0.2
    %v261 = vmul.f32 %v253, 0.2
    %v262 = vsel %vm254, %v250, %v258
    %v263 = vsel %vm255, %v251, %v259
    %v264 = vsel %vm256, %v252, %v260
    %v265 = vsel %vm257, %v253, %v261
    %266 = vst [vmem:[%s3] sm:$0xff] %v262
    %267 = vst [vmem:[%s3 + $0x8] sm:$0xff] %v263
    %268 = vst [vmem:[%s3 + $0x10] sm:$0xff] %v264
    %269 = vst [vmem:[%s3 + $0x18] sm:$0xff] %v265
  $region21: #{_lambda_.43} parent=0 // pred_fallthru
    _
  // Predicated region
  $region22: #{_lambda_.43} parent=0 // pred_check
    _
  $region23: #{_lambda_.43} parent=0 // pred_check_branch
    %271 = sbr.rel (0) target = $region25
  $region24: #{_lambda_.43} parent=0 // pred_region
    _
  $region25: #{_lambda_.43} parent=0 // pred_fallthru
    _
  // Predicated region
  $region26: #{_lambda_.43} parent=0 // pred_check
    _
  $region27: #{_lambda_.43} parent=0 // pred_check_branch
    %273 = sbr.rel (0) target = $region29
  $region28: #{_lambda_.43} parent=0 // pred_region
    _
  $region29: #{_lambda_.43} parent=0 // pred_fallthru
    _

// kernel: _lambda_.45
$region0: #{_lambda_.45}
  #allocation0 [shape = 'u32[]', space=smem, size = 0x4, offset = 0x4, fixed_abs, tag = 'smem constant byte address 0x4 - core index']
  #allocation1 [shape = 'u32[144,128]{1,0:T(1,128)}', space=vmem, size = 0x12000, scoped, tag = 'internal scratch']
  #allocation2 [shape = 'f32[32,128]{1,0:T(8,128)}', space=vmem, size = 0x4000, scoped, tag = 'scratch operand']
  %s0 = inlined_call_operand.vmem [shape: bf16[32,128], index: 0, kind: input, shape index: {}]
  %s1 = inlined_call_operand.vmem [shape: bf16[128,128], index: 1, kind: input, shape index: {}]
  %s2 = inlined_call_operand.vmem [shape: f32[1,128], index: 2, kind: input, shape index: {}]
  %s3 = inlined_call_operand.vmem [shape: f32[32,128], index: 3, kind: input, shape index: {}]
  %s4 = inlined_call_operand.vmem [shape: f32[32,128], index: 4, kind: output, shape index: {}]
  %s5 = sld [smem:[#allocation0]]
  $region34: #{_lambda_.45} parent=0
    _
  %s7 = ssub.s32 1, %s5
  %s8 = scalar_select 0, %s7, %s5
  // Predicated region
  $region2: #{_lambda_.45} parent=0 // pred_check
    _
  $region3: #{_lambda_.45} parent=0 // pred_check_branch
    %10 = sbr.rel (0) target = $region5
  $region4: #{_lambda_.45} parent=0 // pred_region
    _
  $region5: #{_lambda_.45} parent=0 // pred_fallthru
    _
  // Predicated region
  $region6: #{_lambda_.45} parent=0 // pred_check
    _
  $region7: #{_lambda_.45} parent=0 // pred_check_branch
    %12 = sbr.rel (0) target = $region9
  $region8: #{_lambda_.45} parent=0 // pred_region
    _
  $region9: #{_lambda_.45} parent=0 // pred_fallthru
    _
  // Predicated region
  $region10: #{_lambda_.45} parent=0 // pred_check
    _
  $region11: #{_lambda_.45} parent=0 // pred_check_branch
    %14 = sbr.rel (0) target = $region13
  $region12: #{_lambda_.45} parent=0 // pred_region
    _
  $region13: #{_lambda_.45} parent=0 // pred_fallthru
    _
  // Predicated region
  $region14: #{_lambda_.45} parent=0 // pred_check
    _
  $region15: #{_lambda_.45} parent=0 // pred_check_branch
    %16 = sbr.rel (0) target = $region17
  $region16: #{_lambda_.45} parent=0 // pred_region
    _
  $region17: #{_lambda_.45} parent=0 // pred_fallthru
    _
  %p18 = scmp.eq.s32.totalorder 0, 0
  // Predicated region
  $region18: #{_lambda_.45} parent=0 // pred_check
    %p19 = pneg %p18
  $region19: #{_lambda_.45} parent=0 // pred_check_branch
    %21 = sbr.rel (%p19) target = $region21
  $region20: #{_lambda_.45} parent=0 // pred_region
    %22 = vst [vmem:[#allocation2] sm:$0xff] 0.0
    %23 = vst [vmem:[#allocation2 + $0x8] sm:$0xff] 0.0
    %24 = vst [vmem:[#allocation2 + $0x10] sm:$0xff] 0.0
    %25 = vst [vmem:[#allocation2 + $0x18] sm:$0xff] 0.0
  $region21: #{_lambda_.45} parent=0 // pred_fallthru
    _
  %v26 = vld [vmem:[#allocation2] sm:$0xff]
  %v27 = vld [vmem:[#allocation2 + $0x8] sm:$0xff]
  %v28 = vld [vmem:[#allocation2 + $0x10] sm:$0xff]
  %v29 = vld [vmem:[#allocation2 + $0x18] sm:$0xff]
  %v30 = vld [vmem:[%s0] sm:$0xf]
  %v31 = vld [vmem:[%s0 + $0x4] sm:$0xf]
  %v32 = vld [vmem:[%s0 + $0x8] sm:$0xf]
  %v33 = vld [vmem:[%s0 + $0xc] sm:$0xf]
  %v34 = vld [vmem:[%s1] sm:$0xf]
  %v35 = vld [vmem:[%s1 + $0x4] sm:$0xf]
  %v36 = vld [vmem:[%s1 + $0x8] sm:$0xf]
  %v37 = vld [vmem:[%s1 + $0xc] sm:$0xf]
  %v38 = vld [vmem:[%s1 + $0x10] sm:$0xf]
  %v39 = vld [vmem:[%s1 + $0x14] sm:$0xf]
  %v40 = vld [vmem:[%s1 + $0x18] sm:$0xf]
  %v41 = vld [vmem:[%s1 + $0x1c] sm:$0xf]
  %v42 = vld [vmem:[%s1 + $0x20] sm:$0xf]
  %v43 = vld [vmem:[%s1 + $0x24] sm:$0xf]
  %v44 = vld [vmem:[%s1 + $0x28] sm:$0xf]
  %v45 = vld [vmem:[%s1 + $0x2c] sm:$0xf]
  %v46 = vld [vmem:[%s1 + $0x30] sm:$0xf]
  %v47 = vld [vmem:[%s1 + $0x34] sm:$0xf]
  %v48 = vld [vmem:[%s1 + $0x38] sm:$0xf]
  %v49 = vld [vmem:[%s1 + $0x3c] sm:$0xf]
  %v54 = vunpack.c.l.b16 %v30
  %v55 = vunpack.c.l.b16 %v31
  %v56 = vunpack.c.l.b16 %v32
  %v57 = vunpack.c.l.b16 %v33
  %v58 = vpack.c.b16 %v55, %v54
  %v59 = vpack.c.b16 %v57, %v56
  %v78 = vunpack.c.l.b16 %v34
  %v79 = vunpack.c.l.b16 %v35
  %v80 = vunpack.c.l.b16 %v36
  %v81 = vunpack.c.l.b16 %v37
  %v82 = vunpack.c.l.b16 %v38
  %v83 = vunpack.c.l.b16 %v39
  %v84 = vunpack.c.l.b16 %v40
  %v85 = vunpack.c.l.b16 %v41
  %v86 = vunpack.c.l.b16 %v42
  %v87 = vunpack.c.l.b16 %v43
  %v88 = vunpack.c.l.b16 %v44
  %v89 = vunpack.c.l.b16 %v45
  %v90 = vunpack.c.l.b16 %v46
  %v91 = vunpack.c.l.b16 %v47
  %v92 = vunpack.c.l.b16 %v48
  %v93 = vunpack.c.l.b16 %v49
  %v94 = vpack.c.b16 %v79, %v78
  %v95 = vpack.c.b16 %v81, %v80
  %v96 = vpack.c.b16 %v83, %v82
  %v97 = vpack.c.b16 %v85, %v84
  %v98 = vpack.c.b16 %v87, %v86
  %v99 = vpack.c.b16 %v89, %v88
  %v100 = vpack.c.b16 %v91, %v90
  %v101 = vpack.c.b16 %v93, %v92
  %110 = vmatprep.subr.bf16.mxu0 0
  %111 = vmatpush1.bf16.msra.mxu0 %v94
  %112 = vmatprep.subr.bf16.mxu0 0
  %113 = vmatpush1.bf16.msra.mxu0 %v95
  %114 = vmatprep.subr.bf16.mxu0 0
  %115 = vmatpush1.bf16.msra.mxu0 %v96
  %116 = vmatprep.subr.bf16.mxu0 0
  %117 = vmatpush1.bf16.msra.mxu0 %v97
  %118 = vmatprep.subr.bf16.mxu0 0
  %119 = vmatpush1.bf16.msra.mxu0 %v98
  %120 = vmatprep.subr.bf16.mxu0 0
  %121 = vmatpush1.bf16.msra.mxu0 %v99
  %122 = vmatprep.subr.bf16.mxu0 0
  %123 = vmatpush1.bf16.msra.mxu0 %v100
  %124 = vmatprep.subr.bf16.mxu0 0
  %125 = vmatpush1.bf16.msra.mxu0 %v101
  %126 = vmatprep.subr.bf16.mxu0 0
  %127 = vmatpush1.bf16.msra.mxu0 0
  %128 = vmatprep.subr.bf16.mxu0 0
  %129 = vmatpush1.bf16.msra.mxu0 0
  %130 = vmatprep.subr.bf16.mxu0 0
  %131 = vmatpush1.bf16.msra.mxu0 0
  %132 = vmatprep.subr.bf16.mxu0 0
  %133 = vmatpush1.bf16.msra.mxu0 0
  %134 = vmatprep.subr.bf16.mxu0 0
  %135 = vmatpush1.bf16.msra.mxu0 0
  %136 = vmatprep.subr.bf16.mxu0 0
  %137 = vmatpush1.bf16.msra.mxu0 0
  %138 = vmatprep.subr.bf16.mxu0 0
  %139 = vmatpush1.bf16.msra.mxu0 0
  %140 = vmatprep.subr.bf16.mxu0 0
  %141 = vmatpush1.bf16.msra.mxu0 0
  %142 = vmatprep.mubr.bf16.mxu0 0
  %143 = vmatmul.mubr.bf16.gmra.mrb[0].mxu0 %v58
  %v144 = vpop.f32.mrb[0].mxu0
  %v145 = vadd.f32 0.0, %v144
  %v146 = vpop.f32.mrb[0].mxu0
  %v147 = vpop.f32.mrb[0].mxu0
  %v148 = vadd.f32 0.0, %v147
  %v149 = vpop.f32.mrb[0].mxu0
  %150 = vmatprep.mubr.bf16.mxu0 0
  %151 = vmatmul.mubr.bf16.gmra.mrb[0].mxu0 %v59
  %v152 = vpop.f32.mrb[0].mxu0
  %v153 = vadd.f32 0.0, %v152
  %v154 = vpop.f32.mrb[0].mxu0
  %v155 = vpop.f32.mrb[0].mxu0
  %v156 = vadd.f32 0.0, %v155
  %v157 = vpop.f32.mrb[0].mxu0
  %158 = vdwg.mxu0
  %v159 = vadd.f32 %v26, %v145
  %v160 = vadd.f32 %v27, %v148
  %v161 = vadd.f32 %v28, %v153
  %v162 = vadd.f32 %v29, %v156
  %163 = vst [vmem:[#allocation2] sm:$0xff] %v159
  %164 = vst [vmem:[#allocation2 + $0x8] sm:$0xff] %v160
  %165 = vst [vmem:[#allocation2 + $0x10] sm:$0xff] %v161
  %166 = vst [vmem:[#allocation2 + $0x18] sm:$0xff] %v162
  // Predicated region
  $region22: #{_lambda_.45} parent=0 // pred_check
    %p167 = pneg %p18
  $region23: #{_lambda_.45} parent=0 // pred_check_branch
    %169 = sbr.rel (%p167) target = $region25
  $region24: #{_lambda_.45} parent=0 // pred_region
    %v170 = vld [vmem:[#allocation2] sm:$0xff]
    %v171 = vld [vmem:[#allocation2 + $0x8] sm:$0xff]
    %v172 = vld [vmem:[#allocation2 + $0x10] sm:$0xff]
    %v173 = vld [vmem:[#allocation2 + $0x18] sm:$0xff]
    %v174 = vld [vmem:[%s2] sm:$0x1]
    %v176 = vlaneseq
    %v177 = vshrl.u32 %v176, 7
    %v178 = vsub.s32 0, %v177
    %v179 = vrot.slane %v174, %v178
    %v181 = vadd.f32 %v170, %v179
    %v182 = vadd.f32 %v171, %v179
    %v183 = vadd.f32 %v172, %v179
    %v184 = vadd.f32 %v173, %v179
    %v185 = vld [vmem:[%s3] sm:$0xff]
    %v186 = vld [vmem:[%s3 + $0x8] sm:$0xff]
    %v187 = vld [vmem:[%s3 + $0x10] sm:$0xff]
    %v188 = vld [vmem:[%s3 + $0x18] sm:$0xff]
    %v189 = vadd.f32 %v181, %v185
    %v190 = vadd.f32 %v182, %v186
    %v191 = vadd.f32 %v183, %v187
    %v192 = vadd.f32 %v184, %v188
    %vm193 = vcmp.ge.f32.partialorder %v189, 0.0
    %vm194 = vcmp.ge.f32.partialorder %v190, 0.0
    %vm195 = vcmp.ge.f32.partialorder %v191, 0.0
    %vm196 = vcmp.ge.f32.partialorder %v192, 0.0
    %v197 = vmul.f32 %v189, 0.01
    %v198 = vmul.f32 %v190, 0.01
    %v199 = vmul.f32 %v191, 0.01
    %v200 = vmul.f32 %v192, 0.01
    %v201 = vsel %vm193, %v189, %v197
    %v202 = vsel %vm194, %v190, %v198
    %v203 = vsel %vm195, %v191, %v199
    %v204 = vsel %vm196, %v192, %v200
    %205 = vst [vmem:[%s4] sm:$0xff] %v201
    %206 = vst [vmem:[%s4 + $0x8] sm:$0xff] %v202
    %207 = vst [vmem:[%s4 + $0x10] sm:$0xff] %v203
    %208 = vst [vmem:[%s4 + $0x18] sm:$0xff] %v204
  $region25: #{_lambda_.45} parent=0 // pred_fallthru
    _
  // Predicated region
  $region26: #{_lambda_.45} parent=0 // pred_check
    _
  $region27: #{_lambda_.45} parent=0 // pred_check_branch
    %210 = sbr.rel (0) target = $region29
  $region28: #{_lambda_.45} parent=0 // pred_region
    _
  $region29: #{_lambda_.45} parent=0 // pred_fallthru
    _
  // Predicated region
  $region30: #{_lambda_.45} parent=0 // pred_check
    _
  $region31: #{_lambda_.45} parent=0 // pred_check_branch
    %212 = sbr.rel (0) target = $region33
  $region32: #{_lambda_.45} parent=0 // pred_region
    _
  $region33: #{_lambda_.45} parent=0 // pred_fallthru
    _

// kernel: _lambda_.50
$region0: #{_lambda_.50}
  #allocation0 [shape = 'u32[]', space=smem, size = 0x4, offset = 0x4, fixed_abs, tag = 'smem constant byte address 0x4 - core index']
  #allocation1 [shape = 'u32[144,128]{1,0:T(1,128)}', space=vmem, size = 0x12000, scoped, tag = 'internal scratch']
  %s0 = inlined_call_operand.vmem [shape: bf16[32,128], index: 0, kind: input, shape index: {}]
  %s1 = inlined_call_operand.vmem [shape: bf16[128,128], index: 1, kind: input, shape index: {}]
  %s2 = inlined_call_operand.vmem [shape: f32[1,128], index: 2, kind: input, shape index: {}]
  %s3 = inlined_call_operand.vmem [shape: bf16[128,128], index: 3, kind: input, shape index: {}]
  %s4 = inlined_call_operand.vmem [shape: f32[1,128], index: 4, kind: input, shape index: {}]
  %s5 = inlined_call_operand.vmem [shape: f32[32,128], index: 5, kind: input, shape index: {}]
  %s6 = inlined_call_operand.vmem [shape: bf16[128,128], index: 6, kind: input, shape index: {}]
  %s7 = inlined_call_operand.vmem [shape: f32[1,128], index: 7, kind: input, shape index: {}]
  %s8 = inlined_call_operand.vmem [shape: f32[32,128], index: 8, kind: output, shape index: {0}]
  %s9 = inlined_call_operand.vmem [shape: f32[32,128], index: 9, kind: output, shape index: {1}]
  %s10 = inlined_call_operand.vmem [shape: f32[32,128], index: 10, kind: output, shape index: {2}]
  %11 = xla_tuple %s8, %s9, %s10
  %s12 = sld [smem:[#allocation0]]
  $region58: #{_lambda_.50} parent=0
    _
  %s14 = ssub.s32 1, %s12
  %s15 = scalar_select 0, %s14, %s12
  // Predicated region
  $region2: #{_lambda_.50} parent=0 // pred_check
    _
  $region3: #{_lambda_.50} parent=0 // pred_check_branch
    %17 = sbr.rel (0) target = $region5
  $region4: #{_lambda_.50} parent=0 // pred_region
    _
  $region5: #{_lambda_.50} parent=0 // pred_fallthru
    _
  // Predicated region
  $region6: #{_lambda_.50} parent=0 // pred_check
    _
  $region7: #{_lambda_.50} parent=0 // pred_check_branch
    %19 = sbr.rel (0) target = $region9
  $region8: #{_lambda_.50} parent=0 // pred_region
    _
  $region9: #{_lambda_.50} parent=0 // pred_fallthru
    _
  // Predicated region
  $region10: #{_lambda_.50} parent=0 // pred_check
    _
  $region11: #{_lambda_.50} parent=0 // pred_check_branch
    %21 = sbr.rel (0) target = $region13
  $region12: #{_lambda_.50} parent=0 // pred_region
    _
  $region13: #{_lambda_.50} parent=0 // pred_fallthru
    _
  // Predicated region
  $region14: #{_lambda_.50} parent=0 // pred_check
    _
  $region15: #{_lambda_.50} parent=0 // pred_check_branch
    %23 = sbr.rel (0) target = $region17
  $region16: #{_lambda_.50} parent=0 // pred_region
    _
  $region17: #{_lambda_.50} parent=0 // pred_fallthru
    _
  // Predicated region
  $region18: #{_lambda_.50} parent=0 // pred_check
    _
  $region19: #{_lambda_.50} parent=0 // pred_check_branch
    %25 = sbr.rel (0) target = $region21
  $region20: #{_lambda_.50} parent=0 // pred_region
    _
  $region21: #{_lambda_.50} parent=0 // pred_fallthru
    _
  // Predicated region
  $region22: #{_lambda_.50} parent=0 // pred_check
    _
  $region23: #{_lambda_.50} parent=0 // pred_check_branch
    %27 = sbr.rel (0) target = $region25
  $region24: #{_lambda_.50} parent=0 // pred_region
    _
  $region25: #{_lambda_.50} parent=0 // pred_fallthru
    _
  // Predicated region
  $region26: #{_lambda_.50} parent=0 // pred_check
    _
  $region27: #{_lambda_.50} parent=0 // pred_check_branch
    %29 = sbr.rel (0) target = $region29
  $region28: #{_lambda_.50} parent=0 // pred_region
    _
  $region29: #{_lambda_.50} parent=0 // pred_fallthru
    _
  // Predicated region
  $region30: #{_lambda_.50} parent=0 // pred_check
    _
  $region31: #{_lambda_.50} parent=0 // pred_check_branch
    %31 = sbr.rel (0) target = $region33
  $region32: #{_lambda_.50} parent=0 // pred_region
    _
  $region33: #{_lambda_.50} parent=0 // pred_fallthru
    _
  %v33 = vld [vmem:[%s0] sm:$0xf]
  %v34 = vld [vmem:[%s0 + $0x4] sm:$0xf]
  %v35 = vld [vmem:[%s0 + $0x8] sm:$0xf]
  %v36 = vld [vmem:[%s0 + $0xc] sm:$0xf]
  %v37 = vld [vmem:[%s1] sm:$0xf]
  %v38 = vld [vmem:[%s1 + $0x4] sm:$0xf]
  %v39 = vld [vmem:[%s1 + $0x8] sm:$0xf]
  %v40 = vld [vmem:[%s1 + $0xc] sm:$0xf]
  %v41 = vld [vmem:[%s1 + $0x10] sm:$0xf]
  %v42 = vld [vmem:[%s1 + $0x14] sm:$0xf]
  %v43 = vld [vmem:[%s1 + $0x18] sm:$0xf]
  %v44 = vld [vmem:[%s1 + $0x1c] sm:$0xf]
  %v45 = vld [vmem:[%s1 + $0x20] sm:$0xf]
  %v46 = vld [vmem:[%s1 + $0x24] sm:$0xf]
  %v47 = vld [vmem:[%s1 + $0x28] sm:$0xf]
  %v48 = vld [vmem:[%s1 + $0x2c] sm:$0xf]
  %v49 = vld [vmem:[%s1 + $0x30] sm:$0xf]
  %v50 = vld [vmem:[%s1 + $0x34] sm:$0xf]
  %v51 = vld [vmem:[%s1 + $0x38] sm:$0xf]
  %v52 = vld [vmem:[%s1 + $0x3c] sm:$0xf]
  %v53 = vld [vmem:[%s2] sm:$0x1]
  %v55 = vlaneseq
  %v56 = vshrl.u32 %v55, 7
  %v57 = vsub.s32 0, %v56
  %v58 = vrot.slane %v53, %v57
  %v64 = vunpack.c.l.b16 %v33
  %v65 = vunpack.c.l.b16 %v34
  %v66 = vunpack.c.l.b16 %v35
  %v67 = vunpack.c.l.b16 %v36
  %v68 = vpack.c.b16 %v65, %v64
  %v69 = vpack.c.b16 %v67, %v66
  %v88 = vunpack.c.l.b16 %v37
  %v89 = vunpack.c.l.b16 %v38
  %v90 = vunpack.c.l.b16 %v39
  %v91 = vunpack.c.l.b16 %v40
  %v92 = vunpack.c.l.b16 %v41
  %v93 = vunpack.c.l.b16 %v42
  %v94 = vunpack.c.l.b16 %v43
  %v95 = vunpack.c.l.b16 %v44
  %v96 = vunpack.c.l.b16 %v45
  %v97 = vunpack.c.l.b16 %v46
  %v98 = vunpack.c.l.b16 %v47
  %v99 = vunpack.c.l.b16 %v48
  %v100 = vunpack.c.l.b16 %v49
  %v101 = vunpack.c.l.b16 %v50
  %v102 = vunpack.c.l.b16 %v51
  %v103 = vunpack.c.l.b16 %v52
  %v104 = vpack.c.b16 %v89, %v88
  %v105 = vpack.c.b16 %v91, %v90
  %v106 = vpack.c.b16 %v93, %v92
  %v107 = vpack.c.b16 %v95, %v94
  %v108 = vpack.c.b16 %v97, %v96
  %v109 = vpack.c.b16 %v99, %v98
  %v110 = vpack.c.b16 %v101, %v100
  %v111 = vpack.c.b16 %v103, %v102
  %120 = vmatprep.subr.bf16.mxu0 0
  %121 = vmatpush1.bf16.msra.mxu0 %v104
  %122 = vmatprep.subr.bf16.mxu0 0
  %123 = vmatpush1.bf16.msra.mxu0 %v105
  %124 = vmatprep.subr.bf16.mxu0 0
  %125 = vmatpush1.bf16.msra.mxu0 %v106
  %126 = vmatprep.subr.bf16.mxu0 0
  %127 = vmatpush1.bf16.msra.mxu0 %v107
  %128 = vmatprep.subr.bf16.mxu0 0
  %129 = vmatpush1.bf16.msra.mxu0 %v108
  %130 = vmatprep.subr.bf16.mxu0 0
  %131 = vmatpush1.bf16.msra.mxu0 %v109
  %132 = vmatprep.subr.bf16.mxu0 0
  %133 = vmatpush1.bf16.msra.mxu0 %v110
  %134 = vmatprep.subr.bf16.mxu0 0
  %135 = vmatpush1.bf16.msra.mxu0 %v111
  %136 = vmatprep.subr.bf16.mxu0 0
  %137 = vmatpush1.bf16.msra.mxu0 0
  %138 = vmatprep.subr.bf16.mxu0 0
  %139 = vmatpush1.bf16.msra.mxu0 0
  %140 = vmatprep.subr.bf16.mxu0 0
  %141 = vmatpush1.bf16.msra.mxu0 0
  %142 = vmatprep.subr.bf16.mxu0 0
  %143 = vmatpush1.bf16.msra.mxu0 0
  %144 = vmatprep.subr.bf16.mxu0 0
  %145 = vmatpush1.bf16.msra.mxu0 0
  %146 = vmatprep.subr.bf16.mxu0 0
  %147 = vmatpush1.bf16.msra.mxu0 0
  %148 = vmatprep.subr.bf16.mxu0 0
  %149 = vmatpush1.bf16.msra.mxu0 0
  %150 = vmatprep.subr.bf16.mxu0 0
  %151 = vmatpush1.bf16.msra.mxu0 0
  %152 = vmatprep.mubr.bf16.mxu0 0
  %153 = vmatmul.mubr.bf16.gmra.mrb[0].mxu0 %v68
  %v154 = vpop.f32.mrb[0].mxu0
  %v155 = vadd.f32 %v58, %v154
  %v156 = vpop.f32.mrb[0].mxu0
  %v157 = vpop.f32.mrb[0].mxu0
  %v158 = vadd.f32 %v58, %v157
  %v159 = vpop.f32.mrb[0].mxu0
  %160 = vmatprep.mubr.bf16.mxu0 0
  %161 = vmatmul.mubr.bf16.gmra.mrb[0].mxu0 %v69
  %v162 = vpop.f32.mrb[0].mxu0
  %v163 = vadd.f32 %v58, %v162
  %v164 = vpop.f32.mrb[0].mxu0
  %v165 = vpop.f32.mrb[0].mxu0
  %v166 = vadd.f32 %v58, %v165
  %v167 = vpop.f32.mrb[0].mxu0
  %168 = vdwg.mxu0
  %v169 = vld [vmem:[%s3] sm:$0xf]
  %v170 = vld [vmem:[%s3 + $0x4] sm:$0xf]
  %v171 = vld [vmem:[%s3 + $0x8] sm:$0xf]
  %v172 = vld [vmem:[%s3 + $0xc] sm:$0xf]
  %v173 = vld [vmem:[%s3 + $0x10] sm:$0xf]
  %v174 = vld [vmem:[%s3 + $0x14] sm:$0xf]
  %v175 = vld [vmem:[%s3 + $0x18] sm:$0xf]
  %v176 = vld [vmem:[%s3 + $0x1c] sm:$0xf]
  %v177 = vld [vmem:[%s3 + $0x20] sm:$0xf]
  %v178 = vld [vmem:[%s3 + $0x24] sm:$0xf]
  %v179 = vld [vmem:[%s3 + $0x28] sm:$0xf]
  %v180 = vld [vmem:[%s3 + $0x2c] sm:$0xf]
  %v181 = vld [vmem:[%s3 + $0x30] sm:$0xf]
  %v182 = vld [vmem:[%s3 + $0x34] sm:$0xf]
  %v183 = vld [vmem:[%s3 + $0x38] sm:$0xf]
  %v184 = vld [vmem:[%s3 + $0x3c] sm:$0xf]
  %v185 = vld [vmem:[%s4] sm:$0x1]
  %v187 = vlaneseq
  %v188 = vshrl.u32 %v187, 7
  %v189 = vsub.s32 0, %v188
  %v190 = vrot.slane %v185, %v189
  %v208 = vunpack.c.l.b16 %v169
  %v209 = vunpack.c.l.b16 %v170
  %v210 = vunpack.c.l.b16 %v171
  %v211 = vunpack.c.l.b16 %v172
  %v212 = vunpack.c.l.b16 %v173
  %v213 = vunpack.c.l.b16 %v174
  %v214 = vunpack.c.l.b16 %v175
  %v215 = vunpack.c.l.b16 %v176
  %v216 = vunpack.c.l.b16 %v177
  %v217 = vunpack.c.l.b16 %v178
  %v218 = vunpack.c.l.b16 %v179
  %v219 = vunpack.c.l.b16 %v180
  %v220 = vunpack.c.l.b16 %v181
  %v221 = vunpack.c.l.b16 %v182
  %v222 = vunpack.c.l.b16 %v183
  %v223 = vunpack.c.l.b16 %v184
  %v224 = vpack.c.b16 %v209, %v208
  %v225 = vpack.c.b16 %v211, %v210
  %v226 = vpack.c.b16 %v213, %v212
  %v227 = vpack.c.b16 %v215, %v214
  %v228 = vpack.c.b16 %v217, %v216
  %v229 = vpack.c.b16 %v219, %v218
  %v230 = vpack.c.b16 %v221, %v220
  %v231 = vpack.c.b16 %v223, %v222
  %240 = vmatprep.subr.bf16.mxu0 0
  %241 = vmatpush1.bf16.msra.mxu0 %v224
  %242 = vmatprep.subr.bf16.mxu0 0
  %243 = vmatpush1.bf16.msra.mxu0 %v225
  %244 = vmatprep.subr.bf16.mxu0 0
  %245 = vmatpush1.bf16.msra.mxu0 %v226
  %246 = vmatprep.subr.bf16.mxu0 0
  %247 = vmatpush1.bf16.msra.mxu0 %v227
  %248 = vmatprep.subr.bf16.mxu0 0
  %249 = vmatpush1.bf16.msra.mxu0 %v228
  %250 = vmatprep.subr.bf16.mxu0 0
  %251 = vmatpush1.bf16.msra.mxu0 %v229
  %252 = vmatprep.subr.bf16.mxu0 0
  %253 = vmatpush1.bf16.msra.mxu0 %v230
  %254 = vmatprep.subr.bf16.mxu0 0
  %255 = vmatpush1.bf16.msra.mxu0 %v231
  %256 = vmatprep.subr.bf16.mxu0 0
  %257 = vmatpush1.bf16.msra.mxu0 0
  %258 = vmatprep.subr.bf16.mxu0 0
  %259 = vmatpush1.bf16.msra.mxu0 0
  %260 = vmatprep.subr.bf16.mxu0 0
  %261 = vmatpush1.bf16.msra.mxu0 0
  %262 = vmatprep.subr.bf16.mxu0 0
  %263 = vmatpush1.bf16.msra.mxu0 0
  %264 = vmatprep.subr.bf16.mxu0 0
  %265 = vmatpush1.bf16.msra.mxu0 0
  %266 = vmatprep.subr.bf16.mxu0 0
  %267 = vmatpush1.bf16.msra.mxu0 0
  %268 = vmatprep.subr.bf16.mxu0 0
  %269 = vmatpush1.bf16.msra.mxu0 0
  %270 = vmatprep.subr.bf16.mxu0 0
  %271 = vmatpush1.bf16.msra.mxu0 0
  %272 = vmatprep.mubr.bf16.mxu0 0
  %273 = vmatmul.mubr.bf16.gmra.mrb[0].mxu0 %v68
  %v274 = vpop.f32.mrb[0].mxu0
  %v275 = vadd.f32 %v190, %v274
  %v276 = vpop.f32.mrb[0].mxu0
  %v277 = vpop.f32.mrb[0].mxu0
  %v278 = vadd.f32 %v190, %v277
  %v279 = vpop.f32.mrb[0].mxu0
  %280 = vmatprep.mubr.bf16.mxu0 0
  %281 = vmatmul.mubr.bf16.gmra.mrb[0].mxu0 %v69
  %v282 = vpop.f32.mrb[0].mxu0
  %v283 = vadd.f32 %v190, %v282
  %v284 = vpop.f32.mrb[0].mxu0
  %v285 = vpop.f32.mrb[0].mxu0
  %v286 = vadd.f32 %v190, %v285
  %v287 = vpop.f32.mrb[0].mxu0
  %288 = vdwg.mxu0
  %289 = vst [vmem:[%s9] sm:$0xff] %v155
  %290 = vst [vmem:[%s9 + $0x8] sm:$0xff] %v158
  %291 = vst [vmem:[%s9 + $0x10] sm:$0xff] %v163
  %292 = vst [vmem:[%s9 + $0x18] sm:$0xff] %v166
  %293 = vst [vmem:[%s10] sm:$0xff] %v275
  %294 = vst [vmem:[%s10 + $0x8] sm:$0xff] %v278
  %295 = vst [vmem:[%s10 + $0x10] sm:$0xff] %v283
  %296 = vst [vmem:[%s10 + $0x18] sm:$0xff] %v286
  %v297 = vld [vmem:[%s5] sm:$0xff]
  %v298 = vld [vmem:[%s5 + $0x8] sm:$0xff]
  %v299 = vld [vmem:[%s5 + $0x10] sm:$0xff]
  %v300 = vld [vmem:[%s5 + $0x18] sm:$0xff]
  %v301 = vmul.f32 %v275, 0.5
  %v302 = vmul.f32 %v278, 0.5
  %v303 = vmul.f32 %v283, 0.5
  %v304 = vmul.f32 %v286, 0.5
  %v305 = vmul.f32 %v301, 1.442695
  %v306 = vpow.pop %v305
  %v307 = vmul.f32 %v302, 1.442695
  %v308 = vpow.pop %v307
  %v309 = vmul.f32 %v303, 1.442695
  %v310 = vpow.pop %v309
  %v311 = vmul.f32 %v304, 1.442695
  %v312 = vpow.pop %v311
  %v313 = vmul.f32 %v297, %v306
  %v314 = vmul.f32 %v298, %v308
  %v315 = vmul.f32 %v299, %v310
  %v316 = vmul.f32 %v300, %v312
  %v317 = vadd.f32 %v155, %v313
  %v318 = vadd.f32 %v158, %v314
  %v319 = vadd.f32 %v163, %v315
  %v320 = vadd.f32 %v166, %v316
  %v321 = vpack.c.bf16 %v318, %v317
  %v322 = vpack.c.bf16 %v320, %v319
  %v323 = vld [vmem:[%s6] sm:$0xf]
  %v324 = vld [vmem:[%s6 + $0x4] sm:$0xf]
  %v325 = vld [vmem:[%s6 + $0x8] sm:$0xf]
  %v326 = vld [vmem:[%s6 + $0xc] sm:$0xf]
  %v327 = vld [vmem:[%s6 + $0x10] sm:$0xf]
  %v328 = vld [vmem:[%s6 + $0x14] sm:$0xf]
  %v329 = vld [vmem:[%s6 + $0x18] sm:$0xf]
  %v330 = vld [vmem:[%s6 + $0x1c] sm:$0xf]
  %v331 = vld [vmem:[%s6 + $0x20] sm:$0xf]
  %v332 = vld [vmem:[%s6 + $0x24] sm:$0xf]
  %v333 = vld [vmem:[%s6 + $0x28] sm:$0xf]
  %v334 = vld [vmem:[%s6 + $0x2c] sm:$0xf]
  %v335 = vld [vmem:[%s6 + $0x30] sm:$0xf]
  %v336 = vld [vmem:[%s6 + $0x34] sm:$0xf]
  %v337 = vld [vmem:[%s6 + $0x38] sm:$0xf]
  %v338 = vld [vmem:[%s6 + $0x3c] sm:$0xf]
  %v339 = vld [vmem:[%s7] sm:$0x1]
  %v341 = vlaneseq
  %v342 = vshrl.u32 %v341, 7
  %v343 = vsub.s32 0, %v342
  %v344 = vrot.slane %v339, %v343
  %v362 = vunpack.c.l.b16 %v323
  %v363 = vunpack.c.l.b16 %v324
  %v364 = vunpack.c.l.b16 %v325
  %v365 = vunpack.c.l.b16 %v326
  %v366 = vunpack.c.l.b16 %v327
  %v367 = vunpack.c.l.b16 %v328
  %v368 = vunpack.c.l.b16 %v329
  %v369 = vunpack.c.l.b16 %v330
  %v370 = vunpack.c.l.b16 %v331
  %v371 = vunpack.c.l.b16 %v332
  %v372 = vunpack.c.l.b16 %v333
  %v373 = vunpack.c.l.b16 %v334
  %v374 = vunpack.c.l.b16 %v335
  %v375 = vunpack.c.l.b16 %v336
  %v376 = vunpack.c.l.b16 %v337
  %v377 = vunpack.c.l.b16 %v338
  %v378 = vpack.c.b16 %v363, %v362
  %v379 = vpack.c.b16 %v365, %v364
  %v380 = vpack.c.b16 %v367, %v366
  %v381 = vpack.c.b16 %v369, %v368
  %v382 = vpack.c.b16 %v371, %v370
  %v383 = vpack.c.b16 %v373, %v372
  %v384 = vpack.c.b16 %v375, %v374
  %v385 = vpack.c.b16 %v377, %v376
  %394 = vmatprep.subr.bf16.mxu0 0
  %395 = vmatpush1.bf16.msra.mxu0 %v378
  %396 = vmatprep.subr.bf16.mxu0 0
  %397 = vmatpush1.bf16.msra.mxu0 %v379
  %398 = vmatprep.subr.bf16.mxu0 0
  %399 = vmatpush1.bf16.msra.mxu0 %v380
  %400 = vmatprep.subr.bf16.mxu0 0
  %401 = vmatpush1.bf16.msra.mxu0 %v381
  %402 = vmatprep.subr.bf16.mxu0 0
  %403 = vmatpush1.bf16.msra.mxu0 %v382
  %404 = vmatprep.subr.bf16.mxu0 0
  %405 = vmatpush1.bf16.msra.mxu0 %v383
  %406 = vmatprep.subr.bf16.mxu0 0
  %407 = vmatpush1.bf16.msra.mxu0 %v384
  %408 = vmatprep.subr.bf16.mxu0 0
  %409 = vmatpush1.bf16.msra.mxu0 %v385
  %410 = vmatprep.subr.bf16.mxu0 0
  %411 = vmatpush1.bf16.msra.mxu0 0
  %412 = vmatprep.subr.bf16.mxu0 0
  %413 = vmatpush1.bf16.msra.mxu0 0
  %414 = vmatprep.subr.bf16.mxu0 0
  %415 = vmatpush1.bf16.msra.mxu0 0
  %416 = vmatprep.subr.bf16.mxu0 0
  %417 = vmatpush1.bf16.msra.mxu0 0
  %418 = vmatprep.subr.bf16.mxu0 0
  %419 = vmatpush1.bf16.msra.mxu0 0
  %420 = vmatprep.subr.bf16.mxu0 0
  %421 = vmatpush1.bf16.msra.mxu0 0
  %422 = vmatprep.subr.bf16.mxu0 0
  %423 = vmatpush1.bf16.msra.mxu0 0
  %424 = vmatprep.subr.bf16.mxu0 0
  %425 = vmatpush1.bf16.msra.mxu0 0
  %426 = vmatprep.mubr.bf16.mxu0 0
  %427 = vmatmul.mubr.bf16.gmra.mrb[0].mxu0 %v321
  %v428 = vpop.f32.mrb[0].mxu0
  %v429 = vadd.f32 %v344, %v428
  %v430 = vpop.f32.mrb[0].mxu0
  %v431 = vpop.f32.mrb[0].mxu0
  %v432 = vadd.f32 %v344, %v431
  %v433 = vpop.f32.mrb[0].mxu0
  %434 = vmatprep.mubr.bf16.mxu0 0
  %435 = vmatmul.mubr.bf16.gmra.mrb[0].mxu0 %v322
  %v436 = vpop.f32.mrb[0].mxu0
  %v437 = vadd.f32 %v344, %v436
  %v438 = vpop.f32.mrb[0].mxu0
  %v439 = vpop.f32.mrb[0].mxu0
  %v440 = vadd.f32 %v344, %v439
  %v441 = vpop.f32.mrb[0].mxu0
  %442 = vdwg.mxu0
  %443 = vst [vmem:[%s8] sm:$0xff] %v429
  %444 = vst [vmem:[%s8 + $0x8] sm:$0xff] %v432
  %445 = vst [vmem:[%s8 + $0x10] sm:$0xff] %v437
  %446 = vst [vmem:[%s8 + $0x18] sm:$0xff] %v440
  // Predicated region
  $region34: #{_lambda_.50} parent=0 // pred_check
    _
  $region35: #{_lambda_.50} parent=0 // pred_check_branch
    %448 = sbr.rel (0) target = $region37
  $region36: #{_lambda_.50} parent=0 // pred_region
    _
  $region37: #{_lambda_.50} parent=0 // pred_fallthru
    _
  // Predicated region
  $region38: #{_lambda_.50} parent=0 // pred_check
    _
  $region39: #{_lambda_.50} parent=0 // pred_check_branch
    %450 = sbr.rel (0) target = $region41
  $region40: #{_lambda_.50} parent=0 // pred_region
    _
  $region41: #{_lambda_.50} parent=0 // pred_fallthru
    _
  // Predicated region
  $region42: #{_lambda_.50} parent=0 // pred_check
    _
  $region43: #{_lambda_.50} parent=0 // pred_check_branch
    %452 = sbr.rel (0) target = $region45
  $region44: #{_lambda_.50} parent=0 // pred_region
    _
  $region45: #{_lambda_.50} parent=0 // pred_fallthru
    _
  // Predicated region
  $region46: #{_lambda_.50} parent=0 // pred_check
    _
  $region47: #{_lambda_.50} parent=0 // pred_check_branch
    %454 = sbr.rel (0) target = $region49
  $region48: #{_lambda_.50} parent=0 // pred_region
    _
  $region49: #{_lambda_.50} parent=0 // pred_fallthru
    _
  // Predicated region
  $region50: #{_lambda_.50} parent=0 // pred_check
    _
  $region51: #{_lambda_.50} parent=0 // pred_check_branch
    %456 = sbr.rel (0) target = $region53
  $region52: #{_lambda_.50} parent=0 // pred_region
    _
  $region53: #{_lambda_.50} parent=0 // pred_fallthru
    _
  // Predicated region
  $region54: #{_lambda_.50} parent=0 // pred_check
    _
  $region55: #{_lambda_.50} parent=0 // pred_check_branch
    %458 = sbr.rel (0) target = $region57
  $region56: #{_lambda_.50} parent=0 // pred_region
    _
  $region57: #{_lambda_.50} parent=0 // pred_fallthru
    _

// kernel: _lambda_.59
$region0: #{_lambda_.59}
  #allocation0 [shape = 'u32[]', space=smem, size = 0x4, offset = 0x4, fixed_abs, tag = 'smem constant byte address 0x4 - core index']
  #allocation1 [shape = 'u32[144,128]{1,0:T(1,128)}', space=vmem, size = 0x12000, scoped, tag = 'internal scratch']
  #allocation2 [shape = 'f32[32,128]{1,0:T(8,128)}', space=vmem, size = 0x4000, scoped, tag = 'scratch operand']
  %s0 = inlined_call_operand.vmem [shape: bf16[32,384], index: 0, kind: input, shape index: {}]
  %s1 = inlined_call_operand.vmem [shape: bf16[384,128], index: 1, kind: input, shape index: {}]
  %s2 = inlined_call_operand.vmem [shape: f32[1,128], index: 2, kind: input, shape index: {}]
  %s3 = inlined_call_operand.vmem [shape: f32[32,128], index: 3, kind: output, shape index: {}]
  %s4 = sld [smem:[#allocation0]]
  $region30: #{_lambda_.59} parent=0
    _
  %s6 = ssub.s32 1, %s4
  %s7 = scalar_select 0, %s6, %s4
  // Predicated region
  $region2: #{_lambda_.59} parent=0 // pred_check
    _
  $region3: #{_lambda_.59} parent=0 // pred_check_branch
    %9 = sbr.rel (0) target = $region5
  $region4: #{_lambda_.59} parent=0 // pred_region
    _
  $region5: #{_lambda_.59} parent=0 // pred_fallthru
    _
  // Predicated region
  $region6: #{_lambda_.59} parent=0 // pred_check
    _
  $region7: #{_lambda_.59} parent=0 // pred_check_branch
    %11 = sbr.rel (0) target = $region9
  $region8: #{_lambda_.59} parent=0 // pred_region
    _
  $region9: #{_lambda_.59} parent=0 // pred_fallthru
    _
  // Predicated region
  $region10: #{_lambda_.59} parent=0 // pred_check
    _
  $region11: #{_lambda_.59} parent=0 // pred_check_branch
    %13 = sbr.rel (0) target = $region13
  $region12: #{_lambda_.59} parent=0 // pred_region
    _
  $region13: #{_lambda_.59} parent=0 // pred_fallthru
    _
  %p15 = scmp.eq.s32.totalorder 0, 0
  // Predicated region
  $region14: #{_lambda_.59} parent=0 // pred_check
    %p16 = pneg %p15
  $region15: #{_lambda_.59} parent=0 // pred_check_branch
    %18 = sbr.rel (%p16) target = $region17
  $region16: #{_lambda_.59} parent=0 // pred_region
    %19 = vst [vmem:[#allocation2] sm:$0xff] 0.0
    %20 = vst [vmem:[#allocation2 + $0x8] sm:$0xff] 0.0
    %21 = vst [vmem:[#allocation2 + $0x10] sm:$0xff] 0.0
    %22 = vst [vmem:[#allocation2 + $0x18] sm:$0xff] 0.0
  $region17: #{_lambda_.59} parent=0 // pred_fallthru
    _
  %v23 = vld [vmem:[#allocation2] sm:$0xff]
  %v24 = vld [vmem:[#allocation2 + $0x8] sm:$0xff]
  %v25 = vld [vmem:[#allocation2 + $0x10] sm:$0xff]
  %v26 = vld [vmem:[#allocation2 + $0x18] sm:$0xff]
  %v27 = vld [vmem:[%s0] sm:$0xff]
  %v28 = vld [vmem:[%s0 + $0x8] sm:$0xf]
  %v29 = vld [vmem:[%s0 + $0xc] sm:$0xff]
  %v30 = vld [vmem:[%s0 + $0x14] sm:$0xf]
  %v31 = vld [vmem:[%s0 + $0x18] sm:$0xff]
  %v32 = vld [vmem:[%s0 + $0x20] sm:$0xf]
  %v33 = vld [vmem:[%s0 + $0x24] sm:$0xff]
  %v34 = vld [vmem:[%s0 + $0x2c] sm:$0xf]
  %v35 = vld [vmem:[%s1] sm:$0xf]
  %v36 = vld [vmem:[%s1 + $0x4] sm:$0xf]
  %v37 = vld [vmem:[%s1 + $0x8] sm:$0xf]
  %v38 = vld [vmem:[%s1 + $0xc] sm:$0xf]
  %v39 = vld [vmem:[%s1 + $0x10] sm:$0xf]
  %v40 = vld [vmem:[%s1 + $0x14] sm:$0xf]
  %v41 = vld [vmem:[%s1 + $0x18] sm:$0xf]
  %v42 = vld [vmem:[%s1 + $0x1c] sm:$0xf]
  %v43 = vld [vmem:[%s1 + $0x20] sm:$0xf]
  %v44 = vld [vmem:[%s1 + $0x24] sm:$0xf]
  %v45 = vld [vmem:[%s1 + $0x28] sm:$0xf]
  %v46 = vld [vmem:[%s1 + $0x2c] sm:$0xf]
  %v47 = vld [vmem:[%s1 + $0x30] sm:$0xf]
  %v48 = vld [vmem:[%s1 + $0x34] sm:$0xf]
  %v49 = vld [vmem:[%s1 + $0x38] sm:$0xf]
  %v50 = vld [vmem:[%s1 + $0x3c] sm:$0xf]
  %v51 = vld [vmem:[%s1 + $0x40] sm:$0xf]
  %v52 = vld [vmem:[%s1 + $0x44] sm:$0xf]
  %v53 = vld [vmem:[%s1 + $0x48] sm:$0xf]
  %v54 = vld [vmem:[%s1 + $0x4c] sm:$0xf]
  %v55 = vld [vmem:[%s1 + $0x50] sm:$0xf]
  %v56 = vld [vmem:[%s1 + $0x54] sm:$0xf]
  %v57 = vld [vmem:[%s1 + $0x58] sm:$0xf]
  %v58 = vld [vmem:[%s1 + $0x5c] sm:$0xf]
  %v59 = vld [vmem:[%s1 + $0x60] sm:$0xf]
  %v60 = vld [vmem:[%s1 + $0x64] sm:$0xf]
  %v61 = vld [vmem:[%s1 + $0x68] sm:$0xf]
  %v62 = vld [vmem:[%s1 + $0x6c] sm:$0xf]
  %v63 = vld [vmem:[%s1 + $0x70] sm:$0xf]
  %v64 = vld [vmem:[%s1 + $0x74] sm:$0xf]
  %v65 = vld [vmem:[%s1 + $0x78] sm:$0xf]
  %v66 = vld [vmem:[%s1 + $0x7c] sm:$0xf]
  %v67 = vld [vmem:[%s1 + $0x80] sm:$0xf]
  %v68 = vld [vmem:[%s1 + $0x84] sm:$0xf]
  %v69 = vld [vmem:[%s1 + $0x88] sm:$0xf]
  %v70 = vld [vmem:[%s1 + $0x8c] sm:$0xf]
  %v71 = vld [vmem:[%s1 + $0x90] sm:$0xf]
  %v72 = vld [vmem:[%s1 + $0x94] sm:$0xf]
  %v73 = vld [vmem:[%s1 + $0x98] sm:$0xf]
  %v74 = vld [vmem:[%s1 + $0x9c] sm:$0xf]
  %v75 = vld [vmem:[%s1 + $0xa0] sm:$0xf]
  %v76 = vld [vmem:[%s1 + $0xa4] sm:$0xf]
  %v77 = vld [vmem:[%s1 + $0xa8] sm:$0xf]
  %v78 = vld [vmem:[%s1 + $0xac] sm:$0xf]
  %v79 = vld [vmem:[%s1 + $0xb0] sm:$0xf]
  %v80 = vld [vmem:[%s1 + $0xb4] sm:$0xf]
  %v81 = vld [vmem:[%s1 + $0xb8] sm:$0xf]
  %v82 = vld [vmem:[%s1 + $0xbc] sm:$0xf]
  %v91 = vunpack.c.l.b16 %v27
  %v92 = vunpack.c.h.b16 %v27
  %v93 = vunpack.c.l.b16 %v28
  %v94 = vunpack.c.l.b16 %v29
  %v95 = vunpack.c.h.b16 %v29
  %v96 = vunpack.c.l.b16 %v30
  %v97 = vunpack.c.l.b16 %v31
  %v98 = vunpack.c.h.b16 %v31
  %v99 = vunpack.c.l.b16 %v32
  %v100 = vunpack.c.l.b16 %v33
  %v101 = vunpack.c.h.b16 %v33
  %v102 = vunpack.c.l.b16 %v34
  %v103 = vpack.c.b16 %v94, %v91
  %v104 = vpack.c.b16 %v95, %v92
  %v105 = vpack.c.b16 %v96, %v93
  %v106 = vpack.c.b16 %v100, %v97
  %v107 = vpack.c.b16 %v101, %v98
  %v108 = vpack.c.b16 %v102, %v99
  %v163 = vunpack.c.l.b16 %v35
  %v164 = vunpack.c.l.b16 %v36
  %v165 = vunpack.c.l.b16 %v37
  %v166 = vunpack.c.l.b16 %v38
  %v167 = vunpack.c.l.b16 %v39
  %v168 = vunpack.c.l.b16 %v40
  %v169 = vunpack.c.l.b16 %v41
  %v170 = vunpack.c.l.b16 %v42
  %v171 = vunpack.c.l.b16 %v43
  %v172 = vunpack.c.l.b16 %v44
  %v173 = vunpack.c.l.b16 %v45
  %v174 = vunpack.c.l.b16 %v46
  %v175 = vunpack.c.l.b16 %v47
  %v176 = vunpack.c.l.b16 %v48
  %v177 = vunpack.c.l.b16 %v49
  %v178 = vunpack.c.l.b16 %v50
  %v179 = vunpack.c.l.b16 %v51
  %v180 = vunpack.c.l.b16 %v52
  %v181 = vunpack.c.l.b16 %v53
  %v182 = vunpack.c.l.b16 %v54
  %v183 = vunpack.c.l.b16 %v55
  %v184 = vunpack.c.l.b16 %v56
  %v185 = vunpack.c.l.b16 %v57
  %v186 = vunpack.c.l.b16 %v58
  %v187 = vunpack.c.l.b16 %v59
  %v188 = vunpack.c.l.b16 %v60
  %v189 = vunpack.c.l.b16 %v61
  %v190 = vunpack.c.l.b16 %v62
  %v191 = vunpack.c.l.b16 %v63
  %v192 = vunpack.c.l.b16 %v64
  %v193 = vunpack.c.l.b16 %v65
  %v194 = vunpack.c.l.b16 %v66
  %v195 = vunpack.c.l.b16 %v67
  %v196 = vunpack.c.l.b16 %v68
  %v197 = vunpack.c.l.b16 %v69
  %v198 = vunpack.c.l.b16 %v70
  %v199 = vunpack.c.l.b16 %v71
  %v200 = vunpack.c.l.b16 %v72
  %v201 = vunpack.c.l.b16 %v73
  %v202 = vunpack.c.l.b16 %v74
  %v203 = vunpack.c.l.b16 %v75
  %v204 = vunpack.c.l.b16 %v76
  %v205 = vunpack.c.l.b16 %v77
  %v206 = vunpack.c.l.b16 %v78
  %v207 = vunpack.c.l.b16 %v79
  %v208 = vunpack.c.l.b16 %v80
  %v209 = vunpack.c.l.b16 %v81
  %v210 = vunpack.c.l.b16 %v82
  %v211 = vpack.c.b16 %v164, %v163
  %v212 = vpack.c.b16 %v166, %v165
  %v213 = vpack.c.b16 %v168, %v167
  %v214 = vpack.c.b16 %v170, %v169
  %v215 = vpack.c.b16 %v172, %v171
  %v216 = vpack.c.b16 %v174, %v173
  %v217 = vpack.c.b16 %v176, %v175
  %v218 = vpack.c.b16 %v178, %v177
  %v219 = vpack.c.b16 %v180, %v179
  %v220 = vpack.c.b16 %v182, %v181
  %v221 = vpack.c.b16 %v184, %v183
  %v222 = vpack.c.b16 %v186, %v185
  %v223 = vpack.c.b16 %v188, %v187
  %v224 = vpack.c.b16 %v190, %v189
  %v225 = vpack.c.b16 %v192, %v191
  %v226 = vpack.c.b16 %v194, %v193
  %v227 = vpack.c.b16 %v196, %v195
  %v228 = vpack.c.b16 %v198, %v197
  %v229 = vpack.c.b16 %v200, %v199
  %v230 = vpack.c.b16 %v202, %v201
  %v231 = vpack.c.b16 %v204, %v203
  %v232 = vpack.c.b16 %v206, %v205
  %v233 = vpack.c.b16 %v208, %v207
  %v234 = vpack.c.b16 %v210, %v209
  %259 = vmatprep.subr.bf16.mxu0 0
  %260 = vmatpush1.bf16.msra.mxu0 %v211
  %261 = vmatprep.subr.bf16.mxu0 0
  %262 = vmatpush1.bf16.msra.mxu0 %v212
  %263 = vmatprep.subr.bf16.mxu0 0
  %264 = vmatpush1.bf16.msra.mxu0 %v213
  %265 = vmatprep.subr.bf16.mxu0 0
  %266 = vmatpush1.bf16.msra.mxu0 %v214
  %267 = vmatprep.subr.bf16.mxu0 0
  %268 = vmatpush1.bf16.msra.mxu0 %v215
  %269 = vmatprep.subr.bf16.mxu0 0
  %270 = vmatpush1.bf16.msra.mxu0 %v216
  %271 = vmatprep.subr.bf16.mxu0 0
  %272 = vmatpush1.bf16.msra.mxu0 %v217
  %273 = vmatprep.subr.bf16.mxu0 0
  %274 = vmatpush1.bf16.msra.mxu0 %v218
  %275 = vmatprep.subr.bf16.mxu0 0
  %276 = vmatpush1.bf16.msra.mxu0 %v219
  %277 = vmatprep.subr.bf16.mxu0 0
  %278 = vmatpush1.bf16.msra.mxu0 %v220
  %279 = vmatprep.subr.bf16.mxu0 0
  %280 = vmatpush1.bf16.msra.mxu0 %v221
  %281 = vmatprep.subr.bf16.mxu0 0
  %282 = vmatpush1.bf16.msra.mxu0 %v222
  %283 = vmatprep.subr.bf16.mxu0 0
  %284 = vmatpush1.bf16.msra.mxu0 %v223
  %285 = vmatprep.subr.bf16.mxu0 0
  %286 = vmatpush1.bf16.msra.mxu0 %v224
  %287 = vmatprep.subr.bf16.mxu0 0
  %288 = vmatpush1.bf16.msra.mxu0 %v225
  %289 = vmatprep.subr.bf16.mxu0 0
  %290 = vmatpush1.bf16.msra.mxu0 %v226
  %291 = vmatprep.mubr.bf16.mxu0 %v104
  %292 = vmatmul.mubr.bf16.gmra.mrb[0].mxu0 %v103
  %v293 = vpop.f32.mrb[0].mxu0
  %v294 = vadd.f32 0.0, %v293
  %v295 = vpop.f32.mrb[0].mxu0
  %v296 = vpop.f32.mrb[0].mxu0
  %v297 = vadd.f32 0.0, %v296
  %v298 = vpop.f32.mrb[0].mxu0
  %299 = vmatprep.mubr.bf16.mxu0 %v107
  %300 = vmatmul.mubr.bf16.gmra.mrb[0].mxu0 %v106
  %v301 = vpop.f32.mrb[0].mxu0
  %v302 = vadd.f32 0.0, %v301
  %v303 = vpop.f32.mrb[0].mxu0
  %v304 = vpop.f32.mrb[0].mxu0
  %v305 = vadd.f32 0.0, %v304
  %v306 = vpop.f32.mrb[0].mxu0
  %307 = vdwg.mxu0
  %308 = vmatprep.subr.bf16.mxu0 0
  %309 = vmatpush1.bf16.msra.mxu0 %v227
  %310 = vmatprep.subr.bf16.mxu0 0
  %311 = vmatpush1.bf16.msra.mxu0 %v228
  %312 = vmatprep.subr.bf16.mxu0 0
  %313 = vmatpush1.bf16.msra.mxu0 %v229
  %314 = vmatprep.subr.bf16.mxu0 0
  %315 = vmatpush1.bf16.msra.mxu0 %v230
  %316 = vmatprep.subr.bf16.mxu0 0
  %317 = vmatpush1.bf16.msra.mxu0 %v231
  %318 = vmatprep.subr.bf16.mxu0 0
  %319 = vmatpush1.bf16.msra.mxu0 %v232
  %320 = vmatprep.subr.bf16.mxu0 0
  %321 = vmatpush1.bf16.msra.mxu0 %v233
  %322 = vmatprep.subr.bf16.mxu0 0
  %323 = vmatpush1.bf16.msra.mxu0 %v234
  %324 = vmatprep.subr.bf16.mxu0 0
  %325 = vmatpush1.bf16.msra.mxu0 0
  %326 = vmatprep.subr.bf16.mxu0 0
  %327 = vmatpush1.bf16.msra.mxu0 0
  %328 = vmatprep.subr.bf16.mxu0 0
  %329 = vmatpush1.bf16.msra.mxu0 0
  %330 = vmatprep.subr.bf16.mxu0 0
  %331 = vmatpush1.bf16.msra.mxu0 0
  %332 = vmatprep.subr.bf16.mxu0 0
  %333 = vmatpush1.bf16.msra.mxu0 0
  %334 = vmatprep.subr.bf16.mxu0 0
  %335 = vmatpush1.bf16.msra.mxu0 0
  %336 = vmatprep.subr.bf16.mxu0 0
  %337 = vmatpush1.bf16.msra.mxu0 0
  %338 = vmatprep.subr.bf16.mxu0 0
  %339 = vmatpush1.bf16.msra.mxu0 0
  %340 = vmatprep.mubr.bf16.mxu0 0
  %341 = vmatmul.mubr.bf16.gmra.mrb[0].mxu0 %v105
  %v342 = vpop.f32.mrb[0].mxu0
  %v343 = vadd.f32 %v294, %v342
  %v344 = vpop.f32.mrb[0].mxu0
  %v345 = vpop.f32.mrb[0].mxu0
  %v346 = vadd.f32 %v297, %v345
  %v347 = vpop.f32.mrb[0].mxu0
  %348 = vmatprep.mubr.bf16.mxu0 0
  %349 = vmatmul.mubr.bf16.gmra.mrb[0].mxu0 %v108
  %v350 = vpop.f32.mrb[0].mxu0
  %v351 = vadd.f32 %v302, %v350
  %v352 = vpop.f32.mrb[0].mxu0
  %v353 = vpop.f32.mrb[0].mxu0
  %v354 = vadd.f32 %v305, %v353
  %v355 = vpop.f32.mrb[0].mxu0
  %356 = vdwg.mxu0
  %v357 = vadd.f32 %v23, %v343
  %v358 = vadd.f32 %v24, %v346
  %v359 = vadd.f32 %v25, %v351
  %v360 = vadd.f32 %v26, %v354
  %361 = vst [vmem:[#allocation2] sm:$0xff] %v357
  %362 = vst [vmem:[#allocation2 + $0x8] sm:$0xff] %v358
  %363 = vst [vmem:[#allocation2 + $0x10] sm:$0xff] %v359
  %364 = vst [vmem:[#allocation2 + $0x18] sm:$0xff] %v360
  // Predicated region
  $region18: #{_lambda_.59} parent=0 // pred_check
    %p365 = pneg %p15
  $region19: #{_lambda_.59} parent=0 // pred_check_branch
    %367 = sbr.rel (%p365) target = $region21
  $region20: #{_lambda_.59} parent=0 // pred_region
    %v368 = vld [vmem:[#allocation2] sm:$0xff]
    %v369 = vld [vmem:[#allocation2 + $0x8] sm:$0xff]
    %v370 = vld [vmem:[#allocation2 + $0x10] sm:$0xff]
    %v371 = vld [vmem:[#allocation2 + $0x18] sm:$0xff]
    %v372 = vld [vmem:[%s2] sm:$0x1]
    %v374 = vlaneseq
    %v375 = vshrl.u32 %v374, 7
    %v376 = vsub.s32 0, %v375
    %v377 = vrot.slane %v372, %v376
    %v379 = vadd.f32 %v368, %v377
    %v380 = vadd.f32 %v369, %v377
    %v381 = vadd.f32 %v370, %v377
    %v382 = vadd.f32 %v371, %v377
    %383 = vst [vmem:[%s3] sm:$0xff] %v379
    %384 = vst [vmem:[%s3 + $0x8] sm:$0xff] %v380
    %385 = vst [vmem:[%s3 + $0x10] sm:$0xff] %v381
    %386 = vst [vmem:[%s3 + $0x18] sm:$0xff] %v382
  $region21: #{_lambda_.59} parent=0 // pred_fallthru
    _
  // Predicated region
  $region22: #{_lambda_.59} parent=0 // pred_check
    _
  $region23: #{_lambda_.59} parent=0 // pred_check_branch
    %388 = sbr.rel (0) target = $region25
  $region24: #{_lambda_.59} parent=0 // pred_region
    _
  $region25: #{_lambda_.59} parent=0 // pred_fallthru
    _
  // Predicated region
  $region26: #{_lambda_.59} parent=0 // pred_check
    _
  $region27: #{_lambda_.59} parent=0 // pred_check_branch
    %390 = sbr.rel (0) target = $region29
  $region28: #{_lambda_.59} parent=0 // pred_region
    _
  $region29: #{_lambda_.59} parent=0 // pred_fallthru
    _

// kernel: _lambda_.66
$region0: #{_lambda_.66}
  #allocation0 [shape = 'u32[]', space=smem, size = 0x4, offset = 0x4, fixed_abs, tag = 'smem constant byte address 0x4 - core index']
  #allocation1 [shape = 'u32[144,128]{1,0:T(1,128)}', space=vmem, size = 0x12000, scoped, tag = 'internal scratch']
  #allocation2 [shape = 'f32[128,128]{1,0:T(8,128)}', space=vmem, size = 0x10000, scoped, tag = 'scratch operand']
  %s0 = inlined_call_operand.vmem [shape: bf16[128,384], index: 0, kind: input, shape index: {}]
  %s1 = inlined_call_operand.vmem [shape: bf16[384,128], index: 1, kind: input, shape index: {}]
  %s2 = inlined_call_operand.vmem [shape: f32[1,128], index: 2, kind: input, shape index: {}]
  %s3 = inlined_call_operand.vmem [shape: f32[128,128], index: 3, kind: output, shape index: {}]
  %s4 = sld [smem:[#allocation0]]
  $region30: #{_lambda_.66} parent=0
    _
  %s6 = ssub.s32 1, %s4
  %s7 = scalar_select 0, %s6, %s4
  // Predicated region
  $region2: #{_lambda_.66} parent=0 // pred_check
    _
  $region3: #{_lambda_.66} parent=0 // pred_check_branch
    %9 = sbr.rel (0) target = $region5
  $region4: #{_lambda_.66} parent=0 // pred_region
    _
  $region5: #{_lambda_.66} parent=0 // pred_fallthru
    _
  // Predicated region
  $region6: #{_lambda_.66} parent=0 // pred_check
    _
  $region7: #{_lambda_.66} parent=0 // pred_check_branch
    %11 = sbr.rel (0) target = $region9
  $region8: #{_lambda_.66} parent=0 // pred_region
    _
  $region9: #{_lambda_.66} parent=0 // pred_fallthru
    _
  // Predicated region
  $region10: #{_lambda_.66} parent=0 // pred_check
    _
  $region11: #{_lambda_.66} parent=0 // pred_check_branch
    %13 = sbr.rel (0) target = $region13
  $region12: #{_lambda_.66} parent=0 // pred_region
    _
  $region13: #{_lambda_.66} parent=0 // pred_fallthru
    _
  %p15 = scmp.eq.s32.totalorder 0, 0
  // Predicated region
  $region14: #{_lambda_.66} parent=0 // pred_check
    %p16 = pneg %p15
  $region15: #{_lambda_.66} parent=0 // pred_check_branch
    %18 = sbr.rel (%p16) target = $region17
  $region16: #{_lambda_.66} parent=0 // pred_region
    %19 = vst [vmem:[#allocation2] sm:$0xff] 0.0
    %20 = vst [vmem:[#allocation2 + $0x8] sm:$0xff] 0.0
    %21 = vst [vmem:[#allocation2 + $0x10] sm:$0xff] 0.0
    %22 = vst [vmem:[#allocation2 + $0x18] sm:$0xff] 0.0
    %23 = vst [vmem:[#allocation2 + $0x20] sm:$0xff] 0.0
    %24 = vst [vmem:[#allocation2 + $0x28] sm:$0xff] 0.0
    %25 = vst [vmem:[#allocation2 + $0x30] sm:$0xff] 0.0
    %26 = vst [vmem:[#allocation2 + $0x38] sm:$0xff] 0.0
    %27 = vst [vmem:[#allocation2 + $0x40] sm:$0xff] 0.0
    %28 = vst [vmem:[#allocation2 + $0x48] sm:$0xff] 0.0
    %29 = vst [vmem:[#allocation2 + $0x50] sm:$0xff] 0.0
    %30 = vst [vmem:[#allocation2 + $0x58] sm:$0xff] 0.0
    %31 = vst [vmem:[#allocation2 + $0x60] sm:$0xff] 0.0
    %32 = vst [vmem:[#allocation2 + $0x68] sm:$0xff] 0.0
    %33 = vst [vmem:[#allocation2 + $0x70] sm:$0xff] 0.0
    %34 = vst [vmem:[#allocation2 + $0x78] sm:$0xff] 0.0
  $region17: #{_lambda_.66} parent=0 // pred_fallthru
    _
  %v35 = vld [vmem:[#allocation2] sm:$0xff]
  %v36 = vld [vmem:[#allocation2 + $0x8] sm:$0xff]
  %v37 = vld [vmem:[#allocation2 + $0x10] sm:$0xff]
  %v38 = vld [vmem:[#allocation2 + $0x18] sm:$0xff]
  %v39 = vld [vmem:[#allocation2 + $0x20] sm:$0xff]
  %v40 = vld [vmem:[#allocation2 + $0x28] sm:$0xff]
  %v41 = vld [vmem:[#allocation2 + $0x30] sm:$0xff]
  %v42 = vld [vmem:[#allocation2 + $0x38] sm:$0xff]
  %v43 = vld [vmem:[#allocation2 + $0x40] sm:$0xff]
  %v44 = vld [vmem:[#allocation2 + $0x48] sm:$0xff]
  %v45 = vld [vmem:[#allocation2 + $0x50] sm:$0xff]
  %v46 = vld [vmem:[#allocation2 + $0x58] sm:$0xff]
  %v47 = vld [vmem:[#allocation2 + $0x60] sm:$0xff]
  %v48 = vld [vmem:[#allocation2 + $0x68] sm:$0xff]
  %v49 = vld [vmem:[#allocation2 + $0x70] sm:$0xff]
  %v50 = vld [vmem:[#allocation2 + $0x78] sm:$0xff]
  %v51 = vld [vmem:[%s0] sm:$0xff]
  %v52 = vld [vmem:[%s0 + $0x8] sm:$0xf]
  %v53 = vld [vmem:[%s0 + $0xc] sm:$0xff]
  %v54 = vld [vmem:[%s0 + $0x14] sm:$0xf]
  %v55 = vld [vmem:[%s0 + $0x18] sm:$0xff]
  %v56 = vld [vmem:[%s0 + $0x20] sm:$0xf]
  %v57 = vld [vmem:[%s0 + $0x24] sm:$0xff]
  %v58 = vld [vmem:[%s0 + $0x2c] sm:$0xf]
  %v59 = vld [vmem:[%s0 + $0x30] sm:$0xff]
  %v60 = vld [vmem:[%s0 + $0x38] sm:$0xf]
  %v61 = vld [vmem:[%s0 + $0x3c] sm:$0xff]
  %v62 = vld [vmem:[%s0 + $0x44] sm:$0xf]
  %v63 = vld [vmem:[%s0 + $0x48] sm:$0xff]
  %v64 = vld [vmem:[%s0 + $0x50] sm:$0xf]
  %v65 = vld [vmem:[%s0 + $0x54] sm:$0xff]
  %v66 = vld [vmem:[%s0 + $0x5c] sm:$0xf]
  %v67 = vld [vmem:[%s0 + $0x60] sm:$0xff]
  %v68 = vld [vmem:[%s0 + $0x68] sm:$0xf]
  %v69 = vld [vmem:[%s0 + $0x6c] sm:$0xff]
  %v70 = vld [vmem:[%s0 + $0x74] sm:$0xf]
  %v71 = vld [vmem:[%s0 + $0x78] sm:$0xff]
  %v72 = vld [vmem:[%s0 + $0x80] sm:$0xf]
  %v73 = vld [vmem:[%s0 + $0x84] sm:$0xff]
  %v74 = vld [vmem:[%s0 + $0x8c] sm:$0xf]
  %v75 = vld [vmem:[%s0 + $0x90] sm:$0xff]
  %v76 = vld [vmem:[%s0 + $0x98] sm:$0xf]
  %v77 = vld [vmem:[%s0 + $0x9c] sm:$0xff]
  %v78 = vld [vmem:[%s0 + $0xa4] sm:$0xf]
  %v79 = vld [vmem:[%s0 + $0xa8] sm:$0xff]
  %v80 = vld [vmem:[%s0 + $0xb0] sm:$0xf]
  %v81 = vld [vmem:[%s0 + $0xb4] sm:$0xff]
  %v82 = vld [vmem:[%s0 + $0xbc] sm:$0xf]
  %v83 = vld [vmem:[%s1] sm:$0xf]
  %v84 = vld [vmem:[%s1 + $0x4] sm:$0xf]
  %v85 = vld [vmem:[%s1 + $0x8] sm:$0xf]
  %v86 = vld [vmem:[%s1 + $0xc] sm:$0xf]
  %v87 = vld [vmem:[%s1 + $0x10] sm:$0xf]
  %v88 = vld [vmem:[%s1 + $0x14] sm:$0xf]
  %v89 = vld [vmem:[%s1 + $0x18] sm:$0xf]
  %v90 = vld [vmem:[%s1 + $0x1c] sm:$0xf]
  %v91 = vld [vmem:[%s1 + $0x20] sm:$0xf]
  %v92 = vld [vmem:[%s1 + $0x24] sm:$0xf]
  %v93 = vld [vmem:[%s1 + $0x28] sm:$0xf]
  %v94 = vld [vmem:[%s1 + $0x2c] sm:$0xf]
  %v95 = vld [vmem:[%s1 + $0x30] sm:$0xf]
  %v96 = vld [vmem:[%s1 + $0x34] sm:$0xf]
  %v97 = vld [vmem:[%s1 + $0x38] sm:$0xf]
  %v98 = vld [vmem:[%s1 + $0x3c] sm:$0xf]
  %v99 = vld [vmem:[%s1 + $0x40] sm:$0xf]
  %v100 = vld [vmem:[%s1 + $0x44] sm:$0xf]
  %v101 = vld [vmem:[%s1 + $0x48] sm:$0xf]
  %v102 = vld [vmem:[%s1 + $0x4c] sm:$0xf]
  %v103 = vld [vmem:[%s1 + $0x50] sm:$0xf]
  %v104 = vld [vmem:[%s1 + $0x54] sm:$0xf]
  %v105 = vld [vmem:[%s1 + $0x58] sm:$0xf]
  %v106 = vld [vmem:[%s1 + $0x5c] sm:$0xf]
  %v107 = vld [vmem:[%s1 + $0x60] sm:$0xf]
  %v108 = vld [vmem:[%s1 + $0x64] sm:$0xf]
  %v109 = vld [vmem:[%s1 + $0x68] sm:$0xf]
  %v110 = vld [vmem:[%s1 + $0x6c] sm:$0xf]
  %v111 = vld [vmem:[%s1 + $0x70] sm:$0xf]
  %v112 = vld [vmem:[%s1 + $0x74] sm:$0xf]
  %v113 = vld [vmem:[%s1 + $0x78] sm:$0xf]
  %v114 = vld [vmem:[%s1 + $0x7c] sm:$0xf]
  %v115 = vld [vmem:[%s1 + $0x80] sm:$0xf]
  %v116 = vld [vmem:[%s1 + $0x84] sm:$0xf]
  %v117 = vld [vmem:[%s1 + $0x88] sm:$0xf]
  %v118 = vld [vmem:[%s1 + $0x8c] sm:$0xf]
  %v119 = vld [vmem:[%s1 + $0x90] sm:$0xf]
  %v120 = vld [vmem:[%s1 + $0x94] sm:$0xf]
  %v121 = vld [vmem:[%s1 + $0x98] sm:$0xf]
  %v122 = vld [vmem:[%s1 + $0x9c] sm:$0xf]
  %v123 = vld [vmem:[%s1 + $0xa0] sm:$0xf]
  %v124 = vld [vmem:[%s1 + $0xa4] sm:$0xf]
  %v125 = vld [vmem:[%s1 + $0xa8] sm:$0xf]
  %v126 = vld [vmem:[%s1 + $0xac] sm:$0xf]
  %v127 = vld [vmem:[%s1 + $0xb0] sm:$0xf]
  %v128 = vld [vmem:[%s1 + $0xb4] sm:$0xf]
  %v129 = vld [vmem:[%s1 + $0xb8] sm:$0xf]
  %v130 = vld [vmem:[%s1 + $0xbc] sm:$0xf]
  %v163 = vunpack.c.l.b16 %v51
  %v164 = vunpack.c.h.b16 %v51
  %v165 = vunpack.c.l.b16 %v52
  %v166 = vunpack.c.l.b16 %v53
  %v167 = vunpack.c.h.b16 %v53
  %v168 = vunpack.c.l.b16 %v54
  %v169 = vunpack.c.l.b16 %v55
  %v170 = vunpack.c.h.b16 %v55
  %v171 = vunpack.c.l.b16 %v56
  %v172 = vunpack.c.l.b16 %v57
  %v173 = vunpack.c.h.b16 %v57
  %v174 = vunpack.c.l.b16 %v58
  %v175 = vunpack.c.l.b16 %v59
  %v176 = vunpack.c.h.b16 %v59
  %v177 = vunpack.c.l.b16 %v60
  %v178 = vunpack.c.l.b16 %v61
  %v179 = vunpack.c.h.b16 %v61
  %v180 = vunpack.c.l.b16 %v62
  %v181 = vunpack.c.l.b16 %v63
  %v182 = vunpack.c.h.b16 %v63
  %v183 = vunpack.c.l.b16 %v64
  %v184 = vunpack.c.l.b16 %v65
  %v185 = vunpack.c.h.b16 %v65
  %v186 = vunpack.c.l.b16 %v66
  %v187 = vunpack.c.l.b16 %v67
  %v188 = vunpack.c.h.b16 %v67
  %v189 = vunpack.c.l.b16 %v68
  %v190 = vunpack.c.l.b16 %v69
  %v191 = vunpack.c.h.b16 %v69
  %v192 = vunpack.c.l.b16 %v70
  %v193 = vunpack.c.l.b16 %v71
  %v194 = vunpack.c.h.b16 %v71
  %v195 = vunpack.c.l.b16 %v72
  %v196 = vunpack.c.l.b16 %v73
  %v197 = vunpack.c.h.b16 %v73
  %v198 = vunpack.c.l.b16 %v74
  %v199 = vunpack.c.l.b16 %v75
  %v200 = vunpack.c.h.b16 %v75
  %v201 = vunpack.c.l.b16 %v76
  %v202 = vunpack.c.l.b16 %v77
  %v203 = vunpack.c.h.b16 %v77
  %v204 = vunpack.c.l.b16 %v78
  %v205 = vunpack.c.l.b16 %v79
  %v206 = vunpack.c.h.b16 %v79
  %v207 = vunpack.c.l.b16 %v80
  %v208 = vunpack.c.l.b16 %v81
  %v209 = vunpack.c.h.b16 %v81
  %v210 = vunpack.c.l.b16 %v82
  %v211 = vpack.c.b16 %v166, %v163
  %v212 = vpack.c.b16 %v167, %v164
  %v213 = vpack.c.b16 %v168, %v165
  %v214 = vpack.c.b16 %v172, %v169
  %v215 = vpack.c.b16 %v173, %v170
  %v216 = vpack.c.b16 %v174, %v171
  %v217 = vpack.c.b16 %v178, %v175
  %v218 = vpack.c.b16 %v179, %v176
  %v219 = vpack.c.b16 %v180, %v177
  %v220 = vpack.c.b16 %v184, %v181
  %v221 = vpack.c.b16 %v185, %v182
  %v222 = vpack.c.b16 %v186, %v183
  %v223 = vpack.c.b16 %v190, %v187
  %v224 = vpack.c.b16 %v191, %v188
  %v225 = vpack.c.b16 %v192, %v189
  %v226 = vpack.c.b16 %v196, %v193
  %v227 = vpack.c.b16 %v197, %v194
  %v228 = vpack.c.b16 %v198, %v195
  %v229 = vpack.c.b16 %v202, %v199
  %v230 = vpack.c.b16 %v203, %v200
  %v231 = vpack.c.b16 %v204, %v201
  %v232 = vpack.c.b16 %v208, %v205
  %v233 = vpack.c.b16 %v209, %v206
  %v234 = vpack.c.b16 %v210, %v207
  %v307 = vunpack.c.l.b16 %v83
  %v308 = vunpack.c.l.b16 %v84
  %v309 = vunpack.c.l.b16 %v85
  %v310 = vunpack.c.l.b16 %v86
  %v311 = vunpack.c.l.b16 %v87
  %v312 = vunpack.c.l.b16 %v88
  %v313 = vunpack.c.l.b16 %v89
  %v314 = vunpack.c.l.b16 %v90
  %v315 = vunpack.c.l.b16 %v91
  %v316 = vunpack.c.l.b16 %v92
  %v317 = vunpack.c.l.b16 %v93
  %v318 = vunpack.c.l.b16 %v94
  %v319 = vunpack.c.l.b16 %v95
  %v320 = vunpack.c.l.b16 %v96
  %v321 = vunpack.c.l.b16 %v97
  %v322 = vunpack.c.l.b16 %v98
  %v323 = vunpack.c.l.b16 %v99
  %v324 = vunpack.c.l.b16 %v100
  %v325 = vunpack.c.l.b16 %v101
  %v326 = vunpack.c.l.b16 %v102
  %v327 = vunpack.c.l.b16 %v103
  %v328 = vunpack.c.l.b16 %v104
  %v329 = vunpack.c.l.b16 %v105
  %v330 = vunpack.c.l.b16 %v106
  %v331 = vunpack.c.l.b16 %v107
  %v332 = vunpack.c.l.b16 %v108
  %v333 = vunpack.c.l.b16 %v109
  %v334 = vunpack.c.l.b16 %v110
  %v335 = vunpack.c.l.b16 %v111
  %v336 = vunpack.c.l.b16 %v112
  %v337 = vunpack.c.l.b16 %v113
  %v338 = vunpack.c.l.b16 %v114
  %v339 = vunpack.c.l.b16 %v115
  %v340 = vunpack.c.l.b16 %v116
  %v341 = vunpack.c.l.b16 %v117
  %v342 = vunpack.c.l.b16 %v118
  %v343 = vunpack.c.l.b16 %v119
  %v344 = vunpack.c.l.b16 %v120
  %v345 = vunpack.c.l.b16 %v121
  %v346 = vunpack.c.l.b16 %v122
  %v347 = vunpack.c.l.b16 %v123
  %v348 = vunpack.c.l.b16 %v124
  %v349 = vunpack.c.l.b16 %v125
  %v350 = vunpack.c.l.b16 %v126
  %v351 = vunpack.c.l.b16 %v127
  %v352 = vunpack.c.l.b16 %v128
  %v353 = vunpack.c.l.b16 %v129
  %v354 = vunpack.c.l.b16 %v130
  %v355 = vpack.c.b16 %v308, %v307
  %v356 = vpack.c.b16 %v310, %v309
  %v357 = vpack.c.b16 %v312, %v311
  %v358 = vpack.c.b16 %v314, %v313
  %v359 = vpack.c.b16 %v316, %v315
  %v360 = vpack.c.b16 %v318, %v317
  %v361 = vpack.c.b16 %v320, %v319
  %v362 = vpack.c.b16 %v322, %v321
  %v363 = vpack.c.b16 %v324, %v323
  %v364 = vpack.c.b16 %v326, %v325
  %v365 = vpack.c.b16 %v328, %v327
  %v366 = vpack.c.b16 %v330, %v329
  %v367 = vpack.c.b16 %v332, %v331
  %v368 = vpack.c.b16 %v334, %v333
  %v369 = vpack.c.b16 %v336, %v335
  %v370 = vpack.c.b16 %v338, %v337
  %v371 = vpack.c.b16 %v340, %v339
  %v372 = vpack.c.b16 %v342, %v341
  %v373 = vpack.c.b16 %v344, %v343
  %v374 = vpack.c.b16 %v346, %v345
  %v375 = vpack.c.b16 %v348, %v347
  %v376 = vpack.c.b16 %v350, %v349
  %v377 = vpack.c.b16 %v352, %v351
  %v378 = vpack.c.b16 %v354, %v353
  %403 = vmatprep.subr.bf16.mxu0 0
  %404 = vmatpush1.bf16.msra.mxu0 %v355
  %405 = vmatprep.subr.bf16.mxu0 0
  %406 = vmatpush1.bf16.msra.mxu0 %v356
  %407 = vmatprep.subr.bf16.mxu0 0
  %408 = vmatpush1.bf16.msra.mxu0 %v357
  %409 = vmatprep.subr.bf16.mxu0 0
  %410 = vmatpush1.bf16.msra.mxu0 %v358
  %411 = vmatprep.subr.bf16.mxu0 0
  %412 = vmatpush1.bf16.msra.mxu0 %v359
  %413 = vmatprep.subr.bf16.mxu0 0
  %414 = vmatpush1.bf16.msra.mxu0 %v360
  %415 = vmatprep.subr.bf16.mxu0 0
  %416 = vmatpush1.bf16.msra.mxu0 %v361
  %417 = vmatprep.subr.bf16.mxu0 0
  %418 = vmatpush1.bf16.msra.mxu0 %v362
  %419 = vmatprep.subr.bf16.mxu0 0
  %420 = vmatpush1.bf16.msra.mxu0 %v363
  %421 = vmatprep.subr.bf16.mxu0 0
  %422 = vmatpush1.bf16.msra.mxu0 %v364
  %423 = vmatprep.subr.bf16.mxu0 0
  %424 = vmatpush1.bf16.msra.mxu0 %v365
  %425 = vmatprep.subr.bf16.mxu0 0
  %426 = vmatpush1.bf16.msra.mxu0 %v366
  %427 = vmatprep.subr.bf16.mxu0 0
  %428 = vmatpush1.bf16.msra.mxu0 %v367
  %429 = vmatprep.subr.bf16.mxu0 0
  %430 = vmatpush1.bf16.msra.mxu0 %v368
  %431 = vmatprep.subr.bf16.mxu0 0
  %432 = vmatpush1.bf16.msra.mxu0 %v369
  %433 = vmatprep.subr.bf16.mxu0 0
  %434 = vmatpush1.bf16.msra.mxu0 %v370
  %435 = vmatprep.mubr.bf16.mxu0 %v212
  %436 = vmatmul.mubr.bf16.gmra.mrb[0].mxu0 %v211
  %v437 = vpop.f32.mrb[0].mxu0
  %v438 = vadd.f32 0.0, %v437
  %v439 = vpop.f32.mrb[0].mxu0
  %v440 = vpop.f32.mrb[0].mxu0
  %v441 = vadd.f32 0.0, %v440
  %v442 = vpop.f32.mrb[0].mxu0
  %443 = vmatprep.mubr.bf16.mxu0 %v215
  %444 = vmatmul.mubr.bf16.gmra.mrb[0].mxu0 %v214
  %v445 = vpop.f32.mrb[0].mxu0
  %v446 = vadd.f32 0.0, %v445
  %v447 = vpop.f32.mrb[0].mxu0
  %v448 = vpop.f32.mrb[0].mxu0
  %v449 = vadd.f32 0.0, %v448
  %v450 = vpop.f32.mrb[0].mxu0
  %451 = vmatprep.mubr.bf16.mxu0 %v218
  %452 = vmatmul.mubr.bf16.gmra.mrb[0].mxu0 %v217
  %v453 = vpop.f32.mrb[0].mxu0
  %v454 = vadd.f32 0.0, %v453
  %v455 = vpop.f32.mrb[0].mxu0
  %v456 = vpop.f32.mrb[0].mxu0
  %v457 = vadd.f32 0.0, %v456
  %v458 = vpop.f32.mrb[0].mxu0
  %459 = vmatprep.mubr.bf16.mxu0 %v221
  %460 = vmatmul.mubr.bf16.gmra.mrb[0].mxu0 %v220
  %v461 = vpop.f32.mrb[0].mxu0
  %v462 = vadd.f32 0.0, %v461
  %v463 = vpop.f32.mrb[0].mxu0
  %v464 = vpop.f32.mrb[0].mxu0
  %v465 = vadd.f32 0.0, %v464
  %v466 = vpop.f32.mrb[0].mxu0
  %467 = vmatprep.mubr.bf16.mxu0 %v224
  %468 = vmatmul.mubr.bf16.gmra.mrb[0].mxu0 %v223
  %v469 = vpop.f32.mrb[0].mxu0
  %v470 = vadd.f32 0.0, %v469
  %v471 = vpop.f32.mrb[0].mxu0
  %v472 = vpop.f32.mrb[0].mxu0
  %v473 = vadd.f32 0.0, %v472
  %v474 = vpop.f32.mrb[0].mxu0
  %475 = vmatprep.mubr.bf16.mxu0 %v227
  %476 = vmatmul.mubr.bf16.gmra.mrb[0].mxu0 %v226
  %v477 = vpop.f32.mrb[0].mxu0
  %v478 = vadd.f32 0.0, %v477
  %v479 = vpop.f32.mrb[0].mxu0
  %v480 = vpop.f32.mrb[0].mxu0
  %v481 = vadd.f32 0.0, %v480
  %v482 = vpop.f32.mrb[0].mxu0
  %483 = vmatprep.mubr.bf16.mxu0 %v230
  %484 = vmatmul.mubr.bf16.gmra.mrb[0].mxu0 %v229
  %v485 = vpop.f32.mrb[0].mxu0
  %v486 = vadd.f32 0.0, %v485
  %v487 = vpop.f32.mrb[0].mxu0
  %v488 = vpop.f32.mrb[0].mxu0
  %v489 = vadd.f32 0.0, %v488
  %v490 = vpop.f32.mrb[0].mxu0
  %491 = vmatprep.mubr.bf16.mxu0 %v233
  %492 = vmatmul.mubr.bf16.gmra.mrb[0].mxu0 %v232
  %v493 = vpop.f32.mrb[0].mxu0
  %v494 = vadd.f32 0.0, %v493
  %v495 = vpop.f32.mrb[0].mxu0
  %v496 = vpop.f32.mrb[0].mxu0
  %v497 = vadd.f32 0.0, %v496
  %v498 = vpop.f32.mrb[0].mxu0
  %499 = vdwg.mxu0
  %500 = vmatprep.subr.bf16.mxu0 0
  %501 = vmatpush1.bf16.msra.mxu0 %v371
  %502 = vmatprep.subr.bf16.mxu0 0
  %503 = vmatpush1.bf16.msra.mxu0 %v372
  %504 = vmatprep.subr.bf16.mxu0 0
  %505 = vmatpush1.bf16.msra.mxu0 %v373
  %506 = vmatprep.subr.bf16.mxu0 0
  %507 = vmatpush1.bf16.msra.mxu0 %v374
  %508 = vmatprep.subr.bf16.mxu0 0
  %509 = vmatpush1.bf16.msra.mxu0 %v375
  %510 = vmatprep.subr.bf16.mxu0 0
  %511 = vmatpush1.bf16.msra.mxu0 %v376
  %512 = vmatprep.subr.bf16.mxu0 0
  %513 = vmatpush1.bf16.msra.mxu0 %v377
  %514 = vmatprep.subr.bf16.mxu0 0
  %515 = vmatpush1.bf16.msra.mxu0 %v378
  %516 = vmatprep.subr.bf16.mxu0 0
  %517 = vmatpush1.bf16.msra.mxu0 0
  %518 = vmatprep.subr.bf16.mxu0 0
  %519 = vmatpush1.bf16.msra.mxu0 0
  %520 = vmatprep.subr.bf16.mxu0 0
  %521 = vmatpush1.bf16.msra.mxu0 0
  %522 = vmatprep.subr.bf16.mxu0 0
  %523 = vmatpush1.bf16.msra.mxu0 0
  %524 = vmatprep.subr.bf16.mxu0 0
  %525 = vmatpush1.bf16.msra.mxu0 0
  %526 = vmatprep.subr.bf16.mxu0 0
  %527 = vmatpush1.bf16.msra.mxu0 0
  %528 = vmatprep.subr.bf16.mxu0 0
  %529 = vmatpush1.bf16.msra.mxu0 0
  %530 = vmatprep.subr.bf16.mxu0 0
  %531 = vmatpush1.bf16.msra.mxu0 0
  %532 = vmatprep.mubr.bf16.mxu0 0
  %533 = vmatmul.mubr.bf16.gmra.mrb[0].mxu0 %v213
  %v534 = vpop.f32.mrb[0].mxu0
  %v535 = vadd.f32 %v438, %v534
  %v536 = vpop.f32.mrb[0].mxu0
  %v537 = vpop.f32.mrb[0].mxu0
  %v538 = vadd.f32 %v441, %v537
  %v539 = vpop.f32.mrb[0].mxu0
  %540 = vmatprep.mubr.bf16.mxu0 0
  %541 = vmatmul.mubr.bf16.gmra.mrb[0].mxu0 %v216
  %v542 = vpop.f32.mrb[0].mxu0
  %v543 = vadd.f32 %v446, %v542
  %v544 = vpop.f32.mrb[0].mxu0
  %v545 = vpop.f32.mrb[0].mxu0
  %v546 = vadd.f32 %v449, %v545
  %v547 = vpop.f32.mrb[0].mxu0
  %548 = vmatprep.mubr.bf16.mxu0 0
  %549 = vmatmul.mubr.bf16.gmra.mrb[0].mxu0 %v219
  %v550 = vpop.f32.mrb[0].mxu0
  %v551 = vadd.f32 %v454, %v550
  %v552 = vpop.f32.mrb[0].mxu0
  %v553 = vpop.f32.mrb[0].mxu0
  %v554 = vadd.f32 %v457, %v553
  %v555 = vpop.f32.mrb[0].mxu0
  %556 = vmatprep.mubr.bf16.mxu0 0
  %557 = vmatmul.mubr.bf16.gmra.mrb[0].mxu0 %v222
  %v558 = vpop.f32.mrb[0].mxu0
  %v559 = vadd.f32 %v462, %v558
  %v560 = vpop.f32.mrb[0].mxu0
  %v561 = vpop.f32.mrb[0].mxu0
  %v562 = vadd.f32 %v465, %v561
  %v563 = vpop.f32.mrb[0].mxu0
  %564 = vmatprep.mubr.bf16.mxu0 0
  %565 = vmatmul.mubr.bf16.gmra.mrb[0].mxu0 %v225
  %v566 = vpop.f32.mrb[0].mxu0
  %v567 = vadd.f32 %v470, %v566
  %v568 = vpop.f32.mrb[0].mxu0
  %v569 = vpop.f32.mrb[0].mxu0
  %v570 = vadd.f32 %v473, %v569
  %v571 = vpop.f32.mrb[0].mxu0
  %572 = vmatprep.mubr.bf16.mxu0 0
  %573 = vmatmul.mubr.bf16.gmra.mrb[0].mxu0 %v228
  %v574 = vpop.f32.mrb[0].mxu0
  %v575 = vadd.f32 %v478, %v574
  %v576 = vpop.f32.mrb[0].mxu0
  %v577 = vpop.f32.mrb[0].mxu0
  %v578 = vadd.f32 %v481, %v577
  %v579 = vpop.f32.mrb[0].mxu0
  %580 = vmatprep.mubr.bf16.mxu0 0
  %581 = vmatmul.mubr.bf16.gmra.mrb[0].mxu0 %v231
  %v582 = vpop.f32.mrb[0].mxu0
  %v583 = vadd.f32 %v486, %v582
  %v584 = vpop.f32.mrb[0].mxu0
  %v585 = vpop.f32.mrb[0].mxu0
  %v586 = vadd.f32 %v489, %v585
  %v587 = vpop.f32.mrb[0].mxu0
  %588 = vmatprep.mubr.bf16.mxu0 0
  %589 = vmatmul.mubr.bf16.gmra.mrb[0].mxu0 %v234
  %v590 = vpop.f32.mrb[0].mxu0
  %v591 = vadd.f32 %v494, %v590
  %v592 = vpop.f32.mrb[0].mxu0
  %v593 = vpop.f32.mrb[0].mxu0
  %v594 = vadd.f32 %v497, %v593
  %v595 = vpop.f32.mrb[0].mxu0
  %596 = vdwg.mxu0
  %v597 = vadd.f32 %v35, %v535
  %v598 = vadd.f32 %v36, %v538
  %v599 = vadd.f32 %v37, %v543
  %v600 = vadd.f32 %v38, %v546
  %v601 = vadd.f32 %v39, %v551
  %v602 = vadd.f32 %v40, %v554
  %v603 = vadd.f32 %v41, %v559
  %v604 = vadd.f32 %v42, %v562
  %v605 = vadd.f32 %v43, %v567
  %v606 = vadd.f32 %v44, %v570
  %v607 = vadd.f32 %v45, %v575
  %v608 = vadd.f32 %v46, %v578
  %v609 = vadd.f32 %v47, %v583
  %v610 = vadd.f32 %v48, %v586
  %v611 = vadd.f32 %v49, %v591
  %v612 = vadd.f32 %v50, %v594
  %613 = vst [vmem:[#allocation2] sm:$0xff] %v597
  %614 = vst [vmem:[#allocation2 + $0x8] sm:$0xff] %v598
  %615 = vst [vmem:[#allocation2 + $0x10] sm:$0xff] %v599
  %616 = vst [vmem:[#allocation2 + $0x18] sm:$0xff] %v600
  %617 = vst [vmem:[#allocation2 + $0x20] sm:$0xff] %v601
  %618 = vst [vmem:[#allocation2 + $0x28] sm:$0xff] %v602
  %619 = vst [vmem:[#allocation2 + $0x30] sm:$0xff] %v603
  %620 = vst [vmem:[#allocation2 + $0x38] sm:$0xff] %v604
  %621 = vst [vmem:[#allocation2 + $0x40] sm:$0xff] %v605
  %622 = vst [vmem:[#allocation2 + $0x48] sm:$0xff] %v606
  %623 = vst [vmem:[#allocation2 + $0x50] sm:$0xff] %v607
  %624 = vst [vmem:[#allocation2 + $0x58] sm:$0xff] %v608
  %625 = vst [vmem:[#allocation2 + $0x60] sm:$0xff] %v609
  %626 = vst [vmem:[#allocation2 + $0x68] sm:$0xff] %v610
  %627 = vst [vmem:[#allocation2 + $0x70] sm:$0xff] %v611
  %628 = vst [vmem:[#allocation2 + $0x78] sm:$0xff] %v612
  // Predicated region
  $region18: #{_lambda_.66} parent=0 // pred_check
    %p629 = pneg %p15
  $region19: #{_lambda_.66} parent=0 // pred_check_branch
    %631 = sbr.rel (%p629) target = $region21
  $region20: #{_lambda_.66} parent=0 // pred_region
    %v632 = vld [vmem:[#allocation2] sm:$0xff]
    %v633 = vld [vmem:[#allocation2 + $0x8] sm:$0xff]
    %v634 = vld [vmem:[#allocation2 + $0x10] sm:$0xff]
    %v635 = vld [vmem:[#allocation2 + $0x18] sm:$0xff]
    %v636 = vld [vmem:[#allocation2 + $0x20] sm:$0xff]
    %v637 = vld [vmem:[#allocation2 + $0x28] sm:$0xff]
    %v638 = vld [vmem:[#allocation2 + $0x30] sm:$0xff]
    %v639 = vld [vmem:[#allocation2 + $0x38] sm:$0xff]
    %v640 = vld [vmem:[#allocation2 + $0x40] sm:$0xff]
    %v641 = vld [vmem:[#allocation2 + $0x48] sm:$0xff]
    %v642 = vld [vmem:[#allocation2 + $0x50] sm:$0xff]
    %v643 = vld [vmem:[#allocation2 + $0x58] sm:$0xff]
    %v644 = vld [vmem:[#allocation2 + $0x60] sm:$0xff]
    %v645 = vld [vmem:[#allocation2 + $0x68] sm:$0xff]
    %v646 = vld [vmem:[#allocation2 + $0x70] sm:$0xff]
    %v647 = vld [vmem:[#allocation2 + $0x78] sm:$0xff]
    %v648 = vld [vmem:[%s2] sm:$0x1]
    %v650 = vlaneseq
    %v651 = vshrl.u32 %v650, 7
    %v652 = vsub.s32 0, %v651
    %v653 = vrot.slane %v648, %v652
    %v655 = vadd.f32 %v632, %v653
    %v656 = vadd.f32 %v633, %v653
    %v657 = vadd.f32 %v634, %v653
    %v658 = vadd.f32 %v635, %v653
    %v659 = vadd.f32 %v636, %v653
    %v660 = vadd.f32 %v637, %v653
    %v661 = vadd.f32 %v638, %v653
    %v662 = vadd.f32 %v639, %v653
    %v663 = vadd.f32 %v640, %v653
    %v664 = vadd.f32 %v641, %v653
    %v665 = vadd.f32 %v642, %v653
    %v666 = vadd.f32 %v643, %v653
    %v667 = vadd.f32 %v644, %v653
    %v668 = vadd.f32 %v645, %v653
    %v669 = vadd.f32 %v646, %v653
    %v670 = vadd.f32 %v647, %v653
    %671 = vst [vmem:[%s3] sm:$0xff] %v655
    %672 = vst [vmem:[%s3 + $0x8] sm:$0xff] %v656
    %673 = vst [vmem:[%s3 + $0x10] sm:$0xff] %v657
    %674 = vst [vmem:[%s3 + $0x18] sm:$0xff] %v658
    %675 = vst [vmem:[%s3 + $0x20] sm:$0xff] %v659
    %676 = vst [vmem:[%s3 + $0x28] sm:$0xff] %v660
    %677 = vst [vmem:[%s3 + $0x30] sm:$0xff] %v661
    %678 = vst [vmem:[%s3 + $0x38] sm:$0xff] %v662
    %679 = vst [vmem:[%s3 + $0x40] sm:$0xff] %v663
    %680 = vst [vmem:[%s3 + $0x48] sm:$0xff] %v664
    %681 = vst [vmem:[%s3 + $0x50] sm:$0xff] %v665
    %682 = vst [vmem:[%s3 + $0x58] sm:$0xff] %v666
    %683 = vst [vmem:[%s3 + $0x60] sm:$0xff] %v667
    %684 = vst [vmem:[%s3 + $0x68] sm:$0xff] %v668
    %685 = vst [vmem:[%s3 + $0x70] sm:$0xff] %v669
    %686 = vst [vmem:[%s3 + $0x78] sm:$0xff] %v670
  $region21: #{_lambda_.66} parent=0 // pred_fallthru
    _
  // Predicated region
  $region22: #{_lambda_.66} parent=0 // pred_check
    _
  $region23: #{_lambda_.66} parent=0 // pred_check_branch
    %688 = sbr.rel (0) target = $region25
  $region24: #{_lambda_.66} parent=0 // pred_region
    _
  $region25: #{_lambda_.66} parent=0 // pred_fallthru
    _
  // Predicated region
  $region26: #{_lambda_.66} parent=0 // pred_check
    _
  $region27: #{_lambda_.66} parent=0 // pred_check_branch
    %690 = sbr.rel (0) target = $region29
  $region28: #{_lambda_.66} parent=0 // pred_region
    _
  $region29: #{_lambda_.66} parent=0 // pred_fallthru
    _

// kernel: _lambda_.67
$region0: #{_lambda_.67}
  #allocation0 [shape = 'u32[]', space=smem, size = 0x4, offset = 0x4, fixed_abs, tag = 'smem constant byte address 0x4 - core index']
  #allocation1 [shape = 'u32[144,128]{1,0:T(1,128)}', space=vmem, size = 0x12000, scoped, tag = 'internal scratch']
  #allocation2 [shape = 'f32[256,128]{1,0:T(8,128)}', space=vmem, size = 0x20000, scoped, tag = 'scratch operand']
  %s0 = inlined_call_operand.vmem [shape: bf16[512,384], index: 0, kind: input, shape index: {}]
  %s1 = inlined_call_operand.vmem [shape: bf16[384,128], index: 1, kind: input, shape index: {}]
  %s2 = inlined_call_operand.vmem [shape: f32[1,128], index: 2, kind: input, shape index: {}]
  %s3 = inlined_call_operand.vmem [shape: f32[512,128], index: 3, kind: output, shape index: {}]
  %s4 = sld [smem:[#allocation0]]
  $region53: #{_lambda_.67} parent=0
    _
  %s6 = ssub.s32 1, %s4
  %s7 = scalar_select 0, %s6, %s4
  loop: start=0, step=1, limit=4
  $region2: #{_lambda_.67} parent=0 // loop_pre_header
    _
  $region3: #{_lambda_.67} parent=0 // loop_header
    %s9 = sphi 0, %s13
    %p10 = scmp.ge.s32.totalorder %s9, 4
    %s16 = sphi 0, %s35
    %s17 = sphi 0, %s31
    %s18 = sphi 0, %s27
    %s19 = sphi 0, %s16
    %s20 = sphi 0, %s17
    %s21 = sphi 0, %s18
    %s22 = sphi 0, %s19
    %s23 = sphi 0, %s20
    %s24 = sphi 0, %s21
    %s40 = sphi 0, %s42
    %s43 = sphi 0, %s40
    %s44 = sphi 0, %s43
    %s60 = sphi 0, %s44
    %s68 = sphi 0, %s70
    %s71 = sphi 0, %s68
    %s72 = sphi 0, %s71
    %s88 = sphi 0, %s72
    %s94 = sphi 0, %s96
    %s97 = sphi 0, %s94
    %s98 = sphi 0, %s97
    %s114 = sphi 0, %s98
    %s122 = sphi 0, %s124
    %s125 = sphi 0, %s122
    %s126 = sphi 0, %s125
    %s142 = sphi 0, %s126
  $region4: #{_lambda_.67} parent=0 // loop_header_branch
    %12 = sbr.rel (%p10) target = $region8
  $region5: #{_lambda_.67} parent=0 // loop_body
    %s14 = ssub.s32 %s9, 1
    %s15 = ssub.s32 %s9, 2
    %s25 = sadd.s32 1, %s18
    %p26 = scmp.ge.s32.totalorder %s25, 1
    %s27 = scalar_select %p26, 0, %s25
    %s28 = sadd.s32 1, %s17
    %s29 = scalar_select %p26, %s28, %s17
    %p30 = scmp.ge.s32.totalorder %s29, 1
    %s31 = scalar_select %p30, 0, %s29
    %s32 = sadd.s32 1, %s16
    %s33 = scalar_select %p30, %s32, %s16
    %p34 = scmp.ge.s32.totalorder %s33, 2
    %s35 = scalar_select %p34, 0, %s33
    %s36 = ssub.s32 %s16, %s35
    %s37 = ssub.s32 %s18, %s27
    %s38 = sor.u32 %s36, %s37
    %p39 = scmp.eq.s32.totalorder %s38, 0
    %s41 = sadd.s32 %s40, 1
    %s42 = scalar_select %p39, %s40, %s41
    %p45 = pneg %p39
    %p46 = scmp.eq.s32.totalorder %s9, 1
    %p47 = por %p45, %p46
    %p48 = scmp.ne.s32.totalorder %s40, %s43
    %p49 = scmp.eq.s32.totalorder %s9, 0
    %p50 = por %p48, %p49
    %p51 = scmp.ne.s32.totalorder %s40, %s43
    %p52 = scmp.eq.s32.totalorder %s14, 1
    %p53 = por %p51, %p52
    %p54 = scmp.ne.s32.totalorder %s43, %s44
    %p55 = scmp.eq.s32.totalorder %s14, 0
    %p56 = por %p54, %p55
    %p57 = scmp.ne.s32.totalorder %s43, %s44
    %p58 = scmp.eq.s32.totalorder %s15, 1
    %p59 = por %p57, %p58
    %p61 = scmp.ne.s32.totalorder %s44, %s60
    %p62 = scmp.eq.s32.totalorder %s15, 0
    %p63 = por %p61, %p62
    %s64 = ssub.s32 %s18, %s27
    %s65 = ssub.s32 %s17, %s31
    %s66 = sor.u32 %s64, %s65
    %p67 = scmp.eq.s32.totalorder %s66, 0
    %s69 = sadd.s32 %s68, 1
    %s70 = scalar_select %p67, %s68, %s69
    %p73 = pneg %p67
    %p74 = scmp.eq.s32.totalorder %s9, 1
    %p75 = por %p73, %p74
    %p76 = scmp.ne.s32.totalorder %s68, %s71
    %p77 = scmp.eq.s32.totalorder %s9, 0
    %p78 = por %p76, %p77
    %p79 = scmp.ne.s32.totalorder %s68, %s71
    %p80 = scmp.eq.s32.totalorder %s14, 1
    %p81 = por %p79, %p80
    %p82 = scmp.ne.s32.totalorder %s71, %s72
    %p83 = scmp.eq.s32.totalorder %s14, 0
    %p84 = por %p82, %p83
    %p85 = scmp.ne.s32.totalorder %s71, %s72
    %p86 = scmp.eq.s32.totalorder %s15, 1
    %p87 = por %p85, %p86
    %p89 = scmp.ne.s32.totalorder %s72, %s88
    %p90 = scmp.eq.s32.totalorder %s15, 0
    %p91 = por %p89, %p90
    %s92 = ssub.s32 %s17, %s31
    %p93 = scmp.eq.s32.totalorder %s92, 0
    %s95 = sadd.s32 %s94, 1
    %s96 = scalar_select %p93, %s94, %s95
    %p99 = pneg %p93
    %p100 = scmp.eq.s32.totalorder %s9, 1
    %p101 = por %p99, %p100
    %p102 = scmp.ne.s32.totalorder %s94, %s97
    %p103 = scmp.eq.s32.totalorder %s9, 0
    %p104 = por %p102, %p103
    %p105 = scmp.ne.s32.totalorder %s94, %s97
    %p106 = scmp.eq.s32.totalorder %s14, 1
    %p107 = por %p105, %p106
    %p108 = scmp.ne.s32.totalorder %s97, %s98
    %p109 = scmp.eq.s32.totalorder %s14, 0
    %p110 = por %p108, %p109
    %p111 = scmp.ne.s32.totalorder %s97, %s98
    %p112 = scmp.eq.s32.totalorder %s15, 1
    %p113 = por %p111, %p112
    %p115 = scmp.ne.s32.totalorder %s98, %s114
    %p116 = scmp.eq.s32.totalorder %s15, 0
    %p117 = por %p115, %p116
    %s118 = ssub.s32 %s16, %s35
    %s119 = ssub.s32 %s17, %s31
    %s120 = sor.u32 %s118, %s119
    %p121 = scmp.eq.s32.totalorder %s120, 0
    %s123 = sadd.s32 %s122, 1
    %s124 = scalar_select %p121, %s122, %s123
    %p127 = pneg %p121
    %p128 = scmp.eq.s32.totalorder %s9, 1
    %p129 = por %p127, %p128
    %p130 = scmp.ne.s32.totalorder %s122, %s125
    %p131 = scmp.eq.s32.totalorder %s9, 0
    %p132 = por %p130, %p131
    %p133 = scmp.ne.s32.totalorder %s122, %s125
    %p134 = scmp.eq.s32.totalorder %s14, 1
    %p135 = por %p133, %p134
    %p136 = scmp.ne.s32.totalorder %s125, %s126
    %p137 = scmp.eq.s32.totalorder %s14, 0
    %p138 = por %p136, %p137
    %p139 = scmp.ne.s32.totalorder %s125, %s126
    %p140 = scmp.eq.s32.totalorder %s15, 1
    %p141 = por %p139, %p140
    %p143 = scmp.ne.s32.totalorder %s126, %s142
    %p144 = scmp.eq.s32.totalorder %s15, 0
    %p145 = por %p143, %p144
    %p146 = scmp.le.s32.totalorder 1, %s9
    %p147 = scmp.lt.s32.totalorder %s9, 3
    %p148 = pnand %p146, %p147
    %p149 = pneg %p148
    // Predicated region
    $region9: #{_lambda_.67} parent=5 // pred_check
      _
    $region10: #{_lambda_.67} parent=5 // pred_check_branch
      %151 = sbr.rel (%p148) target = $region12
    $region11: #{_lambda_.67} parent=5 // pred_region
      %s152 = ssub.s32 %s9, 1
      // Predicated region
      $region13: #{_lambda_.67} parent=11 // pred_check
        %p153 = pneg %p84
      $region14: #{_lambda_.67} parent=11 // pred_check_branch
        %155 = sbr.rel (%p153) target = $region16
      $region15: #{_lambda_.67} parent=11 // pred_region
        %s156 = smul.u32 48, %s21
        %p157 = scmp.lt.s32.totalorder %s156, 47
        %s158 = scalar_select %p157, %s156, 47
        %p159 = scmp.lt.s32.totalorder %s20, 0
        %s160 = scalar_select %p159, %s20, 0
        %s161 = sadd.s32 %s160, %s158
        %s162 = smul.addr %s161, 4
        %s163 = scalar_lea.vmem %s1, %s162
        %s164 = smul.u32 48, %s21
      $region16: #{_lambda_.67} parent=11 // pred_fallthru
        _
      // Predicated region
      $region17: #{_lambda_.67} parent=11 // pred_check
        %p165 = pneg %p110
      $region18: #{_lambda_.67} parent=11 // pred_check_branch
        %167 = sbr.rel (%p165) target = $region20
      $region19: #{_lambda_.67} parent=11 // pred_region
        %p168 = scmp.lt.s32.totalorder %s20, 0
        %s169 = scalar_select %p168, %s20, 0
        %s170 = scalar_lea.vmem %s2, %s169
      $region20: #{_lambda_.67} parent=11 // pred_fallthru
        _
    $region12: #{_lambda_.67} parent=5 // pred_fallthru
      _
    %p171 = scmp.lt.s32.totalorder %s9, 2
    // Predicated region
    $region21: #{_lambda_.67} parent=5 // pred_check
      %p172 = pneg %p171
    $region22: #{_lambda_.67} parent=5 // pred_check_branch
      %174 = sbr.rel (%p172) target = $region24
    $region23: #{_lambda_.67} parent=5 // pred_region
      // Predicated region
      $region25: #{_lambda_.67} parent=23 // pred_check
        %p175 = pneg %p50
      $region26: #{_lambda_.67} parent=23 // pred_check_branch
        %177 = sbr.rel (%p175) target = $region28
      $region27: #{_lambda_.67} parent=23 // pred_region
        %s178 = smul.u32 32, %s16
        %s179 = smul.u32 3, %s18
        %p180 = scmp.lt.s32.totalorder %s178, 63
        %s181 = scalar_select %p180, %s178, 63
        %p182 = scmp.lt.s32.totalorder %s179, 2
        %s183 = scalar_select %p182, %s179, 2
        %s184 = smul.addr %s181, 3
        %s185 = sadd.s32 %s183, %s184
        %s186 = smul.addr %s185, 4
        %s187 = scalar_lea.vmem %s0, %s186
        %s188 = smul.u32 32, %s16
        %s189 = smul.u32 3, %s18
      $region28: #{_lambda_.67} parent=23 // pred_fallthru
        _
    $region24: #{_lambda_.67} parent=5 // pred_fallthru
      _
    %p190 = scmp.le.s32.totalorder 1, %s9
    %p191 = scmp.lt.s32.totalorder %s9, 3
    %p192 = pnand %p190, %p191
    %p193 = pneg %p192
    // Predicated region
    $region29: #{_lambda_.67} parent=5 // pred_check
      _
    $region30: #{_lambda_.67} parent=5 // pred_check_branch
      %195 = sbr.rel (%p192) target = $region32
    $region31: #{_lambda_.67} parent=5 // pred_region
      %s196 = ssub.s32 %s9, 1
      %s197 = smul.u32 32, %s19
      %s198 = smul.u32 3, %s21
      %p199 = scmp.lt.s32.totalorder %s197, 63
      %s200 = scalar_select %p199, %s197, 63
      %p201 = scmp.lt.s32.totalorder %s198, 2
      %s202 = scalar_select %p201, %s198, 2
      %s203 = smul.addr %s200, 3
      %s204 = sadd.s32 %s202, %s203
      %s205 = smul.addr %s204, 4
      %s206 = scalar_lea.vmem %s0, %s205
      %p207 = pneg %p56
      %p208 = pneg %p53
      %s209 = smul.u32 48, %s21
      %p210 = scmp.lt.s32.totalorder %s209, 47
      %s211 = scalar_select %p210, %s209, 47
      %p212 = scmp.lt.s32.totalorder %s20, 0
      %s213 = scalar_select %p212, %s20, 0
      %s214 = sadd.s32 %s213, %s211
      %s215 = smul.addr %s214, 4
      %s216 = scalar_lea.vmem %s1, %s215
      %p217 = pneg %p84
      %p218 = pneg %p81
      %p219 = scmp.lt.s32.totalorder %s20, 0
      %s220 = scalar_select %p219, %s20, 0
      %s221 = scalar_lea.vmem %s2, %s220
      %p222 = pneg %p110
      %p223 = pneg %p107
      %p224 = pneg %p138
      %p225 = pneg %p135
      %s226 = smul.u32 32, %s19
      %p227 = scmp.lt.s32.totalorder %s226, 63
      %s228 = scalar_select %p227, %s226, 63
      %p229 = scmp.lt.s32.totalorder %s20, 0
      %s230 = scalar_select %p229, %s20, 0
      %s231 = sadd.s32 %s230, %s228
      %s232 = smul.addr %s231, 8
      %s233 = scalar_lea.vmem %s3, %s232
      %s234 = smul.u32 32, %s19
      %s235 = smul.u32 3, %s21
      %p236 = scmp.lt.s32.totalorder %s234, 63
      %s237 = scalar_select %p236, %s234, 63
      %p238 = scmp.lt.s32.totalorder %s235, 2
      %s239 = scalar_select %p238, %s235, 2
      %s240 = smul.addr %s237, 3
      %s241 = sadd.s32 %s239, %s240
      %s242 = smul.addr %s241, 4
      %s243 = scalar_lea.vmem %s0, %s242
      %s244 = smul.u32 32, %s19
      %s245 = smul.u32 3, %s21
      %s246 = smul.u32 48, %s21
      %p247 = scmp.lt.s32.totalorder %s246, 47
      %s248 = scalar_select %p247, %s246, 47
      %p249 = scmp.lt.s32.totalorder %s20, 0
      %s250 = scalar_select %p249, %s20, 0
      %s251 = sadd.s32 %s250, %s248
      %s252 = smul.addr %s251, 4
      %s253 = scalar_lea.vmem %s1, %s252
      %s254 = smul.u32 48, %s21
      %p255 = scmp.lt.s32.totalorder %s20, 0
      %s256 = scalar_select %p255, %s20, 0
      %s257 = scalar_lea.vmem %s2, %s256
      %s258 = smul.u32 32, %s19
      %p259 = scmp.lt.s32.totalorder %s258, 63
      %s260 = scalar_select %p259, %s258, 63
      %p261 = scmp.lt.s32.totalorder %s20, 0
      %s262 = scalar_select %p261, %s20, 0
      %s263 = sadd.s32 %s262, %s260
      %s264 = smul.addr %s263, 8
      %s265 = scalar_lea.vmem %s3, %s264
      %s266 = smul.u32 32, %s19
      %p268 = scmp.eq.s32.totalorder %s21, 0
      // Predicated region
      $region33: #{_lambda_.67} parent=31 // pred_check
        %p269 = pneg %p268
      $region34: #{_lambda_.67} parent=31 // pred_check_branch
        %271 = sbr.rel (%p269) target = $region36
      $region35: #{_lambda_.67} parent=31 // pred_region
        %272 = vst [vmem:[#allocation2] sm:$0xff] 0.0
        %273 = vst [vmem:[#allocation2 + $0x8] sm:$0xff] 0.0
        %274 = vst [vmem:[#allocation2 + $0x10] sm:$0xff] 0.0
        %275 = vst [vmem:[#allocation2 + $0x18] sm:$0xff] 0.0
        %276 = vst [vmem:[#allocation2 + $0x20] sm:$0xff] 0.0
        %277 = vst [vmem:[#allocation2 + $0x28] sm:$0xff] 0.0
        %278 = vst [vmem:[#allocation2 + $0x30] sm:$0xff] 0.0
        %279 = vst [vmem:[#allocation2 + $0x38] sm:$0xff] 0.0
        %280 = vst [vmem:[#allocation2 + $0x40] sm:$0xff] 0.0
        %281 = vst [vmem:[#allocation2 + $0x48] sm:$0xff] 0.0
        %282 = vst [vmem:[#allocation2 + $0x50] sm:$0xff] 0.0
        %283 = vst [vmem:[#allocation2 + $0x58] sm:$0xff] 0.0
        %284 = vst [vmem:[#allocation2 + $0x60] sm:$0xff] 0.0
        %285 = vst [vmem:[#allocation2 + $0x68] sm:$0xff] 0.0
        %286 = vst [vmem:[#allocation2 + $0x70] sm:$0xff] 0.0
        %287 = vst [vmem:[#allocation2 + $0x78] sm:$0xff] 0.0
        %288 = vst [vmem:[#allocation2 + $0x80] sm:$0xff] 0.0
        %289 = vst [vmem:[#allocation2 + $0x88] sm:$0xff] 0.0
        %290 = vst [vmem:[#allocation2 + $0x90] sm:$0xff] 0.0
        %291 = vst [vmem:[#allocation2 + $0x98] sm:$0xff] 0.0
        %292 = vst [vmem:[#allocation2 + $0xa0] sm:$0xff] 0.0
        %293 = vst [vmem:[#allocation2 + $0xa8] sm:$0xff] 0.0
        %294 = vst [vmem:[#allocation2 + $0xb0] sm:$0xff] 0.0
        %295 = vst [vmem:[#allocation2 + $0xb8] sm:$0xff] 0.0
        %296 = vst [vmem:[#allocation2 + $0xc0] sm:$0xff] 0.0
        %297 = vst [vmem:[#allocation2 + $0xc8] sm:$0xff] 0.0
        %298 = vst [vmem:[#allocation2 + $0xd0] sm:$0xff] 0.0
        %299 = vst [vmem:[#allocation2 + $0xd8] sm:$0xff] 0.0
        %300 = vst [vmem:[#allocation2 + $0xe0] sm:$0xff] 0.0
        %301 = vst [vmem:[#allocation2 + $0xe8] sm:$0xff] 0.0
        %302 = vst [vmem:[#allocation2 + $0xf0] sm:$0xff] 0.0
        %303 = vst [vmem:[#allocation2 + $0xf8] sm:$0xff] 0.0
      $region36: #{_lambda_.67} parent=31 // pred_fallthru
        _
      %v304 = vld [vmem:[#allocation2] sm:$0xff]
      %v305 = vld [vmem:[#allocation2 + $0x8] sm:$0xff]
      %v306 = vld [vmem:[#allocation2 + $0x10] sm:$0xff]
      %v307 = vld [vmem:[#allocation2 + $0x18] sm:$0xff]
      %v308 = vld [vmem:[#allocation2 + $0x20] sm:$0xff]
      %v309 = vld [vmem:[#allocation2 + $0x28] sm:$0xff]
      %v310 = vld [vmem:[#allocation2 + $0x30] sm:$0xff]
      %v311 = vld [vmem:[#allocation2 + $0x38] sm:$0xff]
      %v312 = vld [vmem:[#allocation2 + $0x40] sm:$0xff]
      %v313 = vld [vmem:[#allocation2 + $0x48] sm:$0xff]
      %v314 = vld [vmem:[#allocation2 + $0x50] sm:$0xff]
      %v315 = vld [vmem:[#allocation2 + $0x58] sm:$0xff]
      %v316 = vld [vmem:[#allocation2 + $0x60] sm:$0xff]
      %v317 = vld [vmem:[#allocation2 + $0x68] sm:$0xff]
      %v318 = vld [vmem:[#allocation2 + $0x70] sm:$0xff]
      %v319 = vld [vmem:[#allocation2 + $0x78] sm:$0xff]
      %v320 = vld [vmem:[#allocation2 + $0x80] sm:$0xff]
      %v321 = vld [vmem:[#allocation2 + $0x88] sm:$0xff]
      %v322 = vld [vmem:[#allocation2 + $0x90] sm:$0xff]
      %v323 = vld [vmem:[#allocation2 + $0x98] sm:$0xff]
      %v324 = vld [vmem:[#allocation2 + $0xa0] sm:$0xff]
      %v325 = vld [vmem:[#allocation2 + $0xa8] sm:$0xff]
      %v326 = vld [vmem:[#allocation2 + $0xb0] sm:$0xff]
      %v327 = vld [vmem:[#allocation2 + $0xb8] sm:$0xff]
      %v328 = vld [vmem:[#allocation2 + $0xc0] sm:$0xff]
      %v329 = vld [vmem:[#allocation2 + $0xc8] sm:$0xff]
      %v330 = vld [vmem:[#allocation2 + $0xd0] sm:$0xff]
      %v331 = vld [vmem:[#allocation2 + $0xd8] sm:$0xff]
      %v332 = vld [vmem:[#allocation2 + $0xe0] sm:$0xff]
      %v333 = vld [vmem:[#allocation2 + $0xe8] sm:$0xff]
      %v334 = vld [vmem:[#allocation2 + $0xf0] sm:$0xff]
      %v335 = vld [vmem:[#allocation2 + $0xf8] sm:$0xff]
      %v336 = vld [vmem:[%s243] sm:$0xff]
      %v337 = vld [vmem:[%s243 + $0x8] sm:$0xf]
      %v338 = vld [vmem:[%s243 + $0xc] sm:$0xff]
      %v339 = vld [vmem:[%s243 + $0x14] sm:$0xf]
      %v340 = vld [vmem:[%s243 + $0x18] sm:$0xff]
      %v341 = vld [vmem:[%s243 + $0x20] sm:$0xf]
      %v342 = vld [vmem:[%s243 + $0x24] sm:$0xff]
      %v343 = vld [vmem:[%s243 + $0x2c] sm:$0xf]
      %v344 = vld [vmem:[%s243 + $0x30] sm:$0xff]
      %v345 = vld [vmem:[%s243 + $0x38] sm:$0xf]
      %v346 = vld [vmem:[%s243 + $0x3c] sm:$0xff]
      %v347 = vld [vmem:[%s243 + $0x44] sm:$0xf]
      %v348 = vld [vmem:[%s243 + $0x48] sm:$0xff]
      %v349 = vld [vmem:[%s243 + $0x50] sm:$0xf]
      %v350 = vld [vmem:[%s243 + $0x54] sm:$0xff]
      %v351 = vld [vmem:[%s243 + $0x5c] sm:$0xf]
      %v352 = vld [vmem:[%s243 + $0x60] sm:$0xff]
      %v353 = vld [vmem:[%s243 + $0x68] sm:$0xf]
      %v354 = vld [vmem:[%s243 + $0x6c] sm:$0xff]
      %v355 = vld [vmem:[%s243 + $0x74] sm:$0xf]
      %v356 = vld [vmem:[%s243 + $0x78] sm:$0xff]
      %v357 = vld [vmem:[%s243 + $0x80] sm:$0xf]
      %v358 = vld [vmem:[%s243 + $0x84] sm:$0xff]
      %v359 = vld [vmem:[%s243 + $0x8c] sm:$0xf]
      %v360 = vld [vmem:[%s243 + $0x90] sm:$0xff]
      %v361 = vld [vmem:[%s243 + $0x98] sm:$0xf]
      %v362 = vld [vmem:[%s243 + $0x9c] sm:$0xff]
      %v363 = vld [vmem:[%s243 + $0xa4] sm:$0xf]
      %v364 = vld [vmem:[%s243 + $0xa8] sm:$0xff]
      %v365 = vld [vmem:[%s243 + $0xb0] sm:$0xf]
      %v366 = vld [vmem:[%s243 + $0xb4] sm:$0xff]
      %v367 = vld [vmem:[%s243 + $0xbc] sm:$0xf]
      %v368 = vld [vmem:[%s243 + $0xc0] sm:$0xff]
      %v369 = vld [vmem:[%s243 + $0xc8] sm:$0xf]
      %v370 = vld [vmem:[%s243 + $0xcc] sm:$0xff]
      %v371 = vld [vmem:[%s243 + $0xd4] sm:$0xf]
      %v372 = vld [vmem:[%s243 + $0xd8] sm:$0xff]
      %v373 = vld [vmem:[%s243 + $0xe0] sm:$0xf]
      %v374 = vld [vmem:[%s243 + $0xe4] sm:$0xff]
      %v375 = vld [vmem:[%s243 + $0xec] sm:$0xf]
      %v376 = vld [vmem:[%s243 + $0xf0] sm:$0xff]
      %v377 = vld [vmem:[%s243 + $0xf8] sm:$0xf]
      %v378 = vld [vmem:[%s243 + $0xfc] sm:$0xff]
      %v379 = vld [vmem:[%s243 + $0x104] sm:$0xf]
      %v380 = vld [vmem:[%s243 + $0x108] sm:$0xff]
      %v381 = vld [vmem:[%s243 + $0x110] sm:$0xf]
      %v382 = vld [vmem:[%s243 + $0x114] sm:$0xff]
      %v383 = vld [vmem:[%s243 + $0x11c] sm:$0xf]
      %v384 = vld [vmem:[%s243 + $0x120] sm:$0xff]
      %v385 = vld [vmem:[%s243 + $0x128] sm:$0xf]
      %v386 = vld [vmem:[%s243 + $0x12c] sm:$0xff]
      %v387 = vld [vmem:[%s243 + $0x134] sm:$0xf]
      %v388 = vld [vmem:[%s243 + $0x138] sm:$0xff]
      %v389 = vld [vmem:[%s243 + $0x140] sm:$0xf]
      %v390 = vld [vmem:[%s243 + $0x144] sm:$0xff]
      %v391 = vld [vmem:[%s243 + $0x14c] sm:$0xf]
      %v392 = vld [vmem:[%s243 + $0x150] sm:$0xff]
      %v393 = vld [vmem:[%s243 + $0x158] sm:$0xf]
      %v394 = vld [vmem:[%s243 + $0x15c] sm:$0xff]
      %v395 = vld [vmem:[%s243 + $0x164] sm:$0xf]
      %v396 = vld [vmem:[%s243 + $0x168] sm:$0xff]
      %v397 = vld [vmem:[%s243 + $0x170] sm:$0xf]
      %v398 = vld [vmem:[%s243 + $0x174] sm:$0xff]
      %v399 = vld [vmem:[%s243 + $0x17c] sm:$0xf]
      %v400 = vld [vmem:[%s253] sm:$0xf]
      %v401 = vld [vmem:[%s253 + $0x4] sm:$0xf]
      %v402 = vld [vmem:[%s253 + $0x8] sm:$0xf]
      %v403 = vld [vmem:[%s253 + $0xc] sm:$0xf]
      %v404 = vld [vmem:[%s253 + $0x10] sm:$0xf]
      %v405 = vld [vmem:[%s253 + $0x14] sm:$0xf]
      %v406 = vld [vmem:[%s253 + $0x18] sm:$0xf]
      %v407 = vld [vmem:[%s253 + $0x1c] sm:$0xf]
      %v408 = vld [vmem:[%s253 + $0x20] sm:$0xf]
      %v409 = vld [vmem:[%s253 + $0x24] sm:$0xf]
      %v410 = vld [vmem:[%s253 + $0x28] sm:$0xf]
      %v411 = vld [vmem:[%s253 + $0x2c] sm:$0xf]
      %v412 = vld [vmem:[%s253 + $0x30] sm:$0xf]
      %v413 = vld [vmem:[%s253 + $0x34] sm:$0xf]
      %v414 = vld [vmem:[%s253 + $0x38] sm:$0xf]
      %v415 = vld [vmem:[%s253 + $0x3c] sm:$0xf]
      %v416 = vld [vmem:[%s253 + $0x40] sm:$0xf]
      %v417 = vld [vmem:[%s253 + $0x44] sm:$0xf]
      %v418 = vld [vmem:[%s253 + $0x48] sm:$0xf]
      %v419 = vld [vmem:[%s253 + $0x4c] sm:$0xf]
      %v420 = vld [vmem:[%s253 + $0x50] sm:$0xf]
      %v421 = vld [vmem:[%s253 + $0x54] sm:$0xf]
      %v422 = vld [vmem:[%s253 + $0x58] sm:$0xf]
      %v423 = vld [vmem:[%s253 + $0x5c] sm:$0xf]
      %v424 = vld [vmem:[%s253 + $0x60] sm:$0xf]
      %v425 = vld [vmem:[%s253 + $0x64] sm:$0xf]
      %v426 = vld [vmem:[%s253 + $0x68] sm:$0xf]
      %v427 = vld [vmem:[%s253 + $0x6c] sm:$0xf]
      %v428 = vld [vmem:[%s253 + $0x70] sm:$0xf]
      %v429 = vld [vmem:[%s253 + $0x74] sm:$0xf]
      %v430 = vld [vmem:[%s253 + $0x78] sm:$0xf]
      %v431 = vld [vmem:[%s253 + $0x7c] sm:$0xf]
      %v432 = vld [vmem:[%s253 + $0x80] sm:$0xf]
      %v433 = vld [vmem:[%s253 + $0x84] sm:$0xf]
      %v434 = vld [vmem:[%s253 + $0x88] sm:$0xf]
      %v435 = vld [vmem:[%s253 + $0x8c] sm:$0xf]
      %v436 = vld [vmem:[%s253 + $0x90] sm:$0xf]
      %v437 = vld [vmem:[%s253 + $0x94] sm:$0xf]
      %v438 = vld [vmem:[%s253 + $0x98] sm:$0xf]
      %v439 = vld [vmem:[%s253 + $0x9c] sm:$0xf]
      %v440 = vld [vmem:[%s253 + $0xa0] sm:$0xf]
      %v441 = vld [vmem:[%s253 + $0xa4] sm:$0xf]
      %v442 = vld [vmem:[%s253 + $0xa8] sm:$0xf]
      %v443 = vld [vmem:[%s253 + $0xac] sm:$0xf]
      %v444 = vld [vmem:[%s253 + $0xb0] sm:$0xf]
      %v445 = vld [vmem:[%s253 + $0xb4] sm:$0xf]
      %v446 = vld [vmem:[%s253 + $0xb8] sm:$0xf]
      %v447 = vld [vmem:[%s253 + $0xbc] sm:$0xf]
      %v512 = vunpack.c.l.b16 %v336
      %v513 = vunpack.c.h.b16 %v336
      %v514 = vunpack.c.l.b16 %v337
      %v515 = vunpack.c.l.b16 %v338
      %v516 = vunpack.c.h.b16 %v338
      %v517 = vunpack.c.l.b16 %v339
      %v518 = vunpack.c.l.b16 %v340
      %v519 = vunpack.c.h.b16 %v340
      %v520 = vunpack.c.l.b16 %v341
      %v521 = vunpack.c.l.b16 %v342
      %v522 = vunpack.c.h.b16 %v342
      %v523 = vunpack.c.l.b16 %v343
      %v524 = vunpack.c.l.b16 %v344
      %v525 = vunpack.c.h.b16 %v344
      %v526 = vunpack.c.l.b16 %v345
      %v527 = vunpack.c.l.b16 %v346
      %v528 = vunpack.c.h.b16 %v346
      %v529 = vunpack.c.l.b16 %v347
      %v530 = vunpack.c.l.b16 %v348
      %v531 = vunpack.c.h.b16 %v348
      %v532 = vunpack.c.l.b16 %v349
      %v533 = vunpack.c.l.b16 %v350
      %v534 = vunpack.c.h.b16 %v350
      %v535 = vunpack.c.l.b16 %v351
      %v536 = vunpack.c.l.b16 %v352
      %v537 = vunpack.c.h.b16 %v352
      %v538 = vunpack.c.l.b16 %v353
      %v539 = vunpack.c.l.b16 %v354
      %v540 = vunpack.c.h.b16 %v354
      %v541 = vunpack.c.l.b16 %v355
      %v542 = vunpack.c.l.b16 %v356
      %v543 = vunpack.c.h.b16 %v356
      %v544 = vunpack.c.l.b16 %v357
      %v545 = vunpack.c.l.b16 %v358
      %v546 = vunpack.c.h.b16 %v358
      %v547 = vunpack.c.l.b16 %v359
      %v548 = vunpack.c.l.b16 %v360
      %v549 = vunpack.c.h.b16 %v360
      %v550 = vunpack.c.l.b16 %v361
      %v551 = vunpack.c.l.b16 %v362
      %v552 = vunpack.c.h.b16 %v362
      %v553 = vunpack.c.l.b16 %v363
      %v554 = vunpack.c.l.b16 %v364
      %v555 = vunpack.c.h.b16 %v364
      %v556 = vunpack.c.l.b16 %v365
      %v557 = vunpack.c.l.b16 %v366
      %v558 = vunpack.c.h.b16 %v366
      %v559 = vunpack.c.l.b16 %v367
      %v560 = vunpack.c.l.b16 %v368
      %v561 = vunpack.c.h.b16 %v368
      %v562 = vunpack.c.l.b16 %v369
      %v563 = vunpack.c.l.b16 %v370
      %v564 = vunpack.c.h.b16 %v370
      %v565 = vunpack.c.l.b16 %v371
      %v566 = vunpack.c.l.b16 %v372
      %v567 = vunpack.c.h.b16 %v372
      %v568 = vunpack.c.l.b16 %v373
      %v569 = vunpack.c.l.b16 %v374
      %v570 = vunpack.c.h.b16 %v374
      %v571 = vunpack.c.l.b16 %v375
      %v572 = vunpack.c.l.b16 %v376
      %v573 = vunpack.c.h.b16 %v376
      %v574 = vunpack.c.l.b16 %v377
      %v575 = vunpack.c.l.b16 %v378
      %v576 = vunpack.c.h.b16 %v378
      %v577 = vunpack.c.l.b16 %v379
      %v578 = vunpack.c.l.b16 %v380
      %v579 = vunpack.c.h.b16 %v380
      %v580 = vunpack.c.l.b16 %v381
      %v581 = vunpack.c.l.b16 %v382
      %v582 = vunpack.c.h.b16 %v382
      %v583 = vunpack.c.l.b16 %v383
      %v584 = vunpack.c.l.b16 %v384
      %v585 = vunpack.c.h.b16 %v384
      %v586 = vunpack.c.l.b16 %v385
      %v587 = vunpack.c.l.b16 %v386
      %v588 = vunpack.c.h.b16 %v386
      %v589 = vunpack.c.l.b16 %v387
      %v590 = vunpack.c.l.b16 %v388
      %v591 = vunpack.c.h.b16 %v388
      %v592 = vunpack.c.l.b16 %v389
      %v593 = vunpack.c.l.b16 %v390
      %v594 = vunpack.c.h.b16 %v390
      %v595 = vunpack.c.l.b16 %v391
      %v596 = vunpack.c.l.b16 %v392
      %v597 = vunpack.c.h.b16 %v392
      %v598 = vunpack.c.l.b16 %v393
      %v599 = vunpack.c.l.b16 %v394
      %v600 = vunpack.c.h.b16 %v394
      %v601 = vunpack.c.l.b16 %v395
      %v602 = vunpack.c.l.b16 %v396
      %v603 = vunpack.c.h.b16 %v396
      %v604 = vunpack.c.l.b16 %v397
      %v605 = vunpack.c.l.b16 %v398
      %v606 = vunpack.c.h.b16 %v398
      %v607 = vunpack.c.l.b16 %v399
      %v608 = vpack.c.b16 %v515, %v512
      %v609 = vpack.c.b16 %v516, %v513
      %v610 = vpack.c.b16 %v517, %v514
      %v611 = vpack.c.b16 %v521, %v518
      %v612 = vpack.c.b16 %v522, %v519
      %v613 = vpack.c.b16 %v523, %v520
      %v614 = vpack.c.b16 %v527, %v524
      %v615 = vpack.c.b16 %v528, %v525
      %v616 = vpack.c.b16 %v529, %v526
      %v617 = vpack.c.b16 %v533, %v530
      %v618 = vpack.c.b16 %v534, %v531
      %v619 = vpack.c.b16 %v535, %v532
      %v620 = vpack.c.b16 %v539, %v536
      %v621 = vpack.c.b16 %v540, %v537
      %v622 = vpack.c.b16 %v541, %v538
      %v623 = vpack.c.b16 %v545, %v542
      %v624 = vpack.c.b16 %v546, %v543
      %v625 = vpack.c.b16 %v547, %v544
      %v626 = vpack.c.b16 %v551, %v548
      %v627 = vpack.c.b16 %v552, %v549
      %v628 = vpack.c.b16 %v553, %v550
      %v629 = vpack.c.b16 %v557, %v554
      %v630 = vpack.c.b16 %v558, %v555
      %v631 = vpack.c.b16 %v559, %v556
      %v632 = vpack.c.b16 %v563, %v560
      %v633 = vpack.c.b16 %v564, %v561
      %v634 = vpack.c.b16 %v565, %v562
      %v635 = vpack.c.b16 %v569, %v566
      %v636 = vpack.c.b16 %v570, %v567
      %v637 = vpack.c.b16 %v571, %v568
      %v638 = vpack.c.b16 %v575, %v572
      %v639 = vpack.c.b16 %v576, %v573
      %v640 = vpack.c.b16 %v577, %v574
      %v641 = vpack.c.b16 %v581, %v578
      %v642 = vpack.c.b16 %v582, %v579
      %v643 = vpack.c.b16 %v583, %v580
      %v644 = vpack.c.b16 %v587, %v584
      %v645 = vpack.c.b16 %v588, %v585
      %v646 = vpack.c.b16 %v589, %v586
      %v647 = vpack.c.b16 %v593, %v590
      %v648 = vpack.c.b16 %v594, %v591
      %v649 = vpack.c.b16 %v595, %v592
      %v650 = vpack.c.b16 %v599, %v596
      %v651 = vpack.c.b16 %v600, %v597
      %v652 = vpack.c.b16 %v601, %v598
      %v653 = vpack.c.b16 %v605, %v602
      %v654 = vpack.c.b16 %v606, %v603
      %v655 = vpack.c.b16 %v607, %v604
      %v752 = vunpack.c.l.b16 %v400
      %v753 = vunpack.c.l.b16 %v401
      %v754 = vunpack.c.l.b16 %v402
      %v755 = vunpack.c.l.b16 %v403
      %v756 = vunpack.c.l.b16 %v404
      %v757 = vunpack.c.l.b16 %v405
      %v758 = vunpack.c.l.b16 %v406
      %v759 = vunpack.c.l.b16 %v407
      %v760 = vunpack.c.l.b16 %v408
      %v761 = vunpack.c.l.b16 %v409
      %v762 = vunpack.c.l.b16 %v410
      %v763 = vunpack.c.l.b16 %v411
      %v764 = vunpack.c.l.b16 %v412
      %v765 = vunpack.c.l.b16 %v413
      %v766 = vunpack.c.l.b16 %v414
      %v767 = vunpack.c.l.b16 %v415
      %v768 = vunpack.c.l.b16 %v416
      %v769 = vunpack.c.l.b16 %v417
      %v770 = vunpack.c.l.b16 %v418
      %v771 = vunpack.c.l.b16 %v419
      %v772 = vunpack.c.l.b16 %v420
      %v773 = vunpack.c.l.b16 %v421
      %v774 = vunpack.c.l.b16 %v422
      %v775 = vunpack.c.l.b16 %v423
      %v776 = vunpack.c.l.b16 %v424
      %v777 = vunpack.c.l.b16 %v425
      %v778 = vunpack.c.l.b16 %v426
      %v779 = vunpack.c.l.b16 %v427
      %v780 = vunpack.c.l.b16 %v428
      %v781 = vunpack.c.l.b16 %v429
      %v782 = vunpack.c.l.b16 %v430
      %v783 = vunpack.c.l.b16 %v431
      %v784 = vunpack.c.l.b16 %v432
      %v785 = vunpack.c.l.b16 %v433
      %v786 = vunpack.c.l.b16 %v434
      %v787 = vunpack.c.l.b16 %v435
      %v788 = vunpack.c.l.b16 %v436
      %v789 = vunpack.c.l.b16 %v437
      %v790 = vunpack.c.l.b16 %v438
      %v791 = vunpack.c.l.b16 %v439
      %v792 = vunpack.c.l.b16 %v440
      %v793 = vunpack.c.l.b16 %v441
      %v794 = vunpack.c.l.b16 %v442
      %v795 = vunpack.c.l.b16 %v443
      %v796 = vunpack.c.l.b16 %v444
      %v797 = vunpack.c.l.b16 %v445
      %v798 = vunpack.c.l.b16 %v446
      %v799 = vunpack.c.l.b16 %v447
      %v800 = vpack.c.b16 %v753, %v752
      %v801 = vpack.c.b16 %v755, %v754
      %v802 = vpack.c.b16 %v757, %v756
      %v803 = vpack.c.b16 %v759, %v758
      %v804 = vpack.c.b16 %v761, %v760
      %v805 = vpack.c.b16 %v763, %v762
      %v806 = vpack.c.b16 %v765, %v764
      %v807 = vpack.c.b16 %v767, %v766
      %v808 = vpack.c.b16 %v769, %v768
      %v809 = vpack.c.b16 %v771, %v770
      %v810 = vpack.c.b16 %v773, %v772
      %v811 = vpack.c.b16 %v775, %v774
      %v812 = vpack.c.b16 %v777, %v776
      %v813 = vpack.c.b16 %v779, %v778
      %v814 = vpack.c.b16 %v781, %v780
      %v815 = vpack.c.b16 %v783, %v782
      %v816 = vpack.c.b16 %v785, %v784
      %v817 = vpack.c.b16 %v787, %v786
      %v818 = vpack.c.b16 %v789, %v788
      %v819 = vpack.c.b16 %v791, %v790
      %v820 = vpack.c.b16 %v793, %v792
      %v821 = vpack.c.b16 %v795, %v794
      %v822 = vpack.c.b16 %v797, %v796
      %v823 = vpack.c.b16 %v799, %v798
      %848 = vmatprep.subr.bf16.mxu0 0
      %849 = vmatpush1.bf16.msra.mxu0 %v800
      %850 = vmatprep.subr.bf16.mxu0 0
      %851 = vmatpush1.bf16.msra.mxu0 %v801
      %852 = vmatprep.subr.bf16.mxu0 0
      %853 = vmatpush1.bf16.msra.mxu0 %v802
      %854 = vmatprep.subr.bf16.mxu0 0
      %855 = vmatpush1.bf16.msra.mxu0 %v803
      %856 = vmatprep.subr.bf16.mxu0 0
      %857 = vmatpush1.bf16.msra.mxu0 %v804
      %858 = vmatprep.subr.bf16.mxu0 0
      %859 = vmatpush1.bf16.msra.mxu0 %v805
      %860 = vmatprep.subr.bf16.mxu0 0
      %861 = vmatpush1.bf16.msra.mxu0 %v806
      %862 = vmatprep.subr.bf16.mxu0 0
      %863 = vmatpush1.bf16.msra.mxu0 %v807
      %864 = vmatprep.subr.bf16.mxu0 0
      %865 = vmatpush1.bf16.msra.mxu0 %v808
      %866 = vmatprep.subr.bf16.mxu0 0
      %867 = vmatpush1.bf16.msra.mxu0 %v809
      %868 = vmatprep.subr.bf16.mxu0 0
      %869 = vmatpush1.bf16.msra.mxu0 %v810
      %870 = vmatprep.subr.bf16.mxu0 0
      %871 = vmatpush1.bf16.msra.mxu0 %v811
      %872 = vmatprep.subr.bf16.mxu0 0
      %873 = vmatpush1.bf16.msra.mxu0 %v812
      %874 = vmatprep.subr.bf16.mxu0 0
      %875 = vmatpush1.bf16.msra.mxu0 %v813
      %876 = vmatprep.subr.bf16.mxu0 0
      %877 = vmatpush1.bf16.msra.mxu0 %v814
      %878 = vmatprep.subr.bf16.mxu0 0
      %879 = vmatpush1.bf16.msra.mxu0 %v815
      %880 = vmatprep.mubr.bf16.mxu0 %v609
      %881 = vmatmul.mubr.bf16.gmra.mrb[0].mxu0 %v608
      %v882 = vpop.f32.mrb[0].mxu0
      %v883 = vadd.f32 0.0, %v882
      %v884 = vpop.f32.mrb[0].mxu0
      %v885 = vpop.f32.mrb[0].mxu0
      %v886 = vadd.f32 0.0, %v885
      %v887 = vpop.f32.mrb[0].mxu0
      %888 = vmatprep.mubr.bf16.mxu0 %v612
      %889 = vmatmul.mubr.bf16.gmra.mrb[0].mxu0 %v611
      %v890 = vpop.f32.mrb[0].mxu0
      %v891 = vadd.f32 0.0, %v890
      %v892 = vpop.f32.mrb[0].mxu0
      %v893 = vpop.f32.mrb[0].mxu0
      %v894 = vadd.f32 0.0, %v893
      %v895 = vpop.f32.mrb[0].mxu0
      %896 = vmatprep.mubr.bf16.mxu0 %v615
      %897 = vmatmul.mubr.bf16.gmra.mrb[0].mxu0 %v614
      %v898 = vpop.f32.mrb[0].mxu0
      %v899 = vadd.f32 0.0, %v898
      %v900 = vpop.f32.mrb[0].mxu0
      %v901 = vpop.f32.mrb[0].mxu0
      %v902 = vadd.f32 0.0, %v901
      %v903 = vpop.f32.mrb[0].mxu0
      %904 = vmatprep.mubr.bf16.mxu0 %v618
      %905 = vmatmul.mubr.bf16.gmra.mrb[0].mxu0 %v617
      %v906 = vpop.f32.mrb[0].mxu0
      %v907 = vadd.f32 0.0, %v906
      %v908 = vpop.f32.mrb[0].mxu0
      %v909 = vpop.f32.mrb[0].mxu0
      %v910 = vadd.f32 0.0, %v909
      %v911 = vpop.f32.mrb[0].mxu0
      %912 = vmatprep.mubr.bf16.mxu0 %v621
      %913 = vmatmul.mubr.bf16.gmra.mrb[0].mxu0 %v620
      %v914 = vpop.f32.mrb[0].mxu0
      %v915 = vadd.f32 0.0, %v914
      %v916 = vpop.f32.mrb[0].mxu0
      %v917 = vpop.f32.mrb[0].mxu0
      %v918 = vadd.f32 0.0, %v917
      %v919 = vpop.f32.mrb[0].mxu0
      %920 = vmatprep.mubr.bf16.mxu0 %v624
      %921 = vmatmul.mubr.bf16.gmra.mrb[0].mxu0 %v623
      %v922 = vpop.f32.mrb[0].mxu0
      %v923 = vadd.f32 0.0, %v922
      %v924 = vpop.f32.mrb[0].mxu0
      %v925 = vpop.f32.mrb[0].mxu0
      %v926 = vadd.f32 0.0, %v925
      %v927 = vpop.f32.mrb[0].mxu0
      %928 = vmatprep.mubr.bf16.mxu0 %v627
      %929 = vmatmul.mubr.bf16.gmra.mrb[0].mxu0 %v626
      %v930 = vpop.f32.mrb[0].mxu0
      %v931 = vadd.f32 0.0, %v930
      %v932 = vpop.f32.mrb[0].mxu0
      %v933 = vpop.f32.mrb[0].mxu0
      %v934 = vadd.f32 0.0, %v933
      %v935 = vpop.f32.mrb[0].mxu0
      %936 = vmatprep.mubr.bf16.mxu0 %v630
      %937 = vmatmul.mubr.bf16.gmra.mrb[0].mxu0 %v629
      %v938 = vpop.f32.mrb[0].mxu0
      %v939 = vadd.f32 0.0, %v938
      %v940 = vpop.f32.mrb[0].mxu0
      %v941 = vpop.f32.mrb[0].mxu0
      %v942 = vadd.f32 0.0, %v941
      %v943 = vpop.f32.mrb[0].mxu0
      %944 = vmatprep.mubr.bf16.mxu0 %v633
      %945 = vmatmul.mubr.bf16.gmra.mrb[0].mxu0 %v632
      %v946 = vpop.f32.mrb[0].mxu0
      %v947 = vadd.f32 0.0, %v946
      %v948 = vpop.f32.mrb[0].mxu0
      %v949 = vpop.f32.mrb[0].mxu0
      %v950 = vadd.f32 0.0, %v949
      %v951 = vpop.f32.mrb[0].mxu0
      %952 = vmatprep.mubr.bf16.mxu0 %v636
      %953 = vmatmul.mubr.bf16.gmra.mrb[0].mxu0 %v635
      %v954 = vpop.f32.mrb[0].mxu0
      %v955 = vadd.f32 0.0, %v954
      %v956 = vpop.f32.mrb[0].mxu0
      %v957 = vpop.f32.mrb[0].mxu0
      %v958 = vadd.f32 0.0, %v957
      %v959 = vpop.f32.mrb[0].mxu0
      %960 = vmatprep.mubr.bf16.mxu0 %v639
      %961 = vmatmul.mubr.bf16.gmra.mrb[0].mxu0 %v638
      %v962 = vpop.f32.mrb[0].mxu0
      %v963 = vadd.f32 0.0, %v962
      %v964 = vpop.f32.mrb[0].mxu0
      %v965 = vpop.f32.mrb[0].mxu0
      %v966 = vadd.f32 0.0, %v965
      %v967 = vpop.f32.mrb[0].mxu0
      %968 = vmatprep.mubr.bf16.mxu0 %v642
      %969 = vmatmul.mubr.bf16.gmra.mrb[0].mxu0 %v641
      %v970 = vpop.f32.mrb[0].mxu0
      %v971 = vadd.f32 0.0, %v970
      %v972 = vpop.f32.mrb[0].mxu0
      %v973 = vpop.f32.mrb[0].mxu0
      %v974 = vadd.f32 0.0, %v973
      %v975 = vpop.f32.mrb[0].mxu0
      %976 = vmatprep.mubr.bf16.mxu0 %v645
      %977 = vmatmul.mubr.bf16.gmra.mrb[0].mxu0 %v644
      %v978 = vpop.f32.mrb[0].mxu0
      %v979 = vadd.f32 0.0, %v978
      %v980 = vpop.f32.mrb[0].mxu0
      %v981 = vpop.f32.mrb[0].mxu0
      %v982 = vadd.f32 0.0, %v981
      %v983 = vpop.f32.mrb[0].mxu0
      %984 = vmatprep.mubr.bf16.mxu0 %v648
      %985 = vmatmul.mubr.bf16.gmra.mrb[0].mxu0 %v647
      %v986 = vpop.f32.mrb[0].mxu0
      %v987 = vadd.f32 0.0, %v986
      %v988 = vpop.f32.mrb[0].mxu0
      %v989 = vpop.f32.mrb[0].mxu0
      %v990 = vadd.f32 0.0, %v989
      %v991 = vpop.f32.mrb[0].mxu0
      %992 = vmatprep.mubr.bf16.mxu0 %v651
      %993 = vmatmul.mubr.bf16.gmra.mrb[0].mxu0 %v650
      %v994 = vpop.f32.mrb[0].mxu0
      %v995 = vadd.f32 0.0, %v994
      %v996 = vpop.f32.mrb[0].mxu0
      %v997 = vpop.f32.mrb[0].mxu0
      %v998 = vadd.f32 0.0, %v997
      %v999 = vpop.f32.mrb[0].mxu0
      %1000 = vmatprep.mubr.bf16.mxu0 %v654
      %1001 = vmatmul.mubr.bf16.gmra.mrb[0].mxu0 %v653
      %v1002 = vpop.f32.mrb[0].mxu0
      %v1003 = vadd.f32 0.0, %v1002
      %v1004 = vpop.f32.mrb[0].mxu0
      %v1005 = vpop.f32.mrb[0].mxu0
      %v1006 = vadd.f32 0.0, %v1005
      %v1007 = vpop.f32.mrb[0].mxu0
      %1008 = vdwg.mxu0
      %1009 = vmatprep.subr.bf16.mxu0 0
      %1010 = vmatpush1.bf16.msra.mxu0 %v816
      %1011 = vmatprep.subr.bf16.mxu0 0
      %1012 = vmatpush1.bf16.msra.mxu0 %v817
      %1013 = vmatprep.subr.bf16.mxu0 0
      %1014 = vmatpush1.bf16.msra.mxu0 %v818
      %1015 = vmatprep.subr.bf16.mxu0 0
      %1016 = vmatpush1.bf16.msra.mxu0 %v819
      %1017 = vmatprep.subr.bf16.mxu0 0
      %1018 = vmatpush1.bf16.msra.mxu0 %v820
      %1019 = vmatprep.subr.bf16.mxu0 0
      %1020 = vmatpush1.bf16.msra.mxu0 %v821
      %1021 = vmatprep.subr.bf16.mxu0 0
      %1022 = vmatpush1.bf16.msra.mxu0 %v822
      %1023 = vmatprep.subr.bf16.mxu0 0
      %1024 = vmatpush1.bf16.msra.mxu0 %v823
      %1025 = vmatprep.subr.bf16.mxu0 0
      %1026 = vmatpush1.bf16.msra.mxu0 0
      %1027 = vmatprep.subr.bf16.mxu0 0
      %1028 = vmatpush1.bf16.msra.mxu0 0
      %1029 = vmatprep.subr.bf16.mxu0 0
      %1030 = vmatpush1.bf16.msra.mxu0 0
      %1031 = vmatprep.subr.bf16.mxu0 0
      %1032 = vmatpush1.bf16.msra.mxu0 0
      %1033 = vmatprep.subr.bf16.mxu0 0
      %1034 = vmatpush1.bf16.msra.mxu0 0
      %1035 = vmatprep.subr.bf16.mxu0 0
      %1036 = vmatpush1.bf16.msra.mxu0 0
      %1037 = vmatprep.subr.bf16.mxu0 0
      %1038 = vmatpush1.bf16.msra.mxu0 0
      %1039 = vmatprep.subr.bf16.mxu0 0
      %1040 = vmatpush1.bf16.msra.mxu0 0
      %1041 = vmatprep.mubr.bf16.mxu0 0
      %1042 = vmatmul.mubr.bf16.gmra.mrb[0].mxu0 %v610
      %v1043 = vpop.f32.mrb[0].mxu0
      %v1044 = vadd.f32 %v883, %v1043
      %v1045 = vpop.f32.mrb[0].mxu0
      %v1046 = vpop.f32.mrb[0].mxu0
      %v1047 = vadd.f32 %v886, %v1046
      %v1048 = vpop.f32.mrb[0].mxu0
      %1049 = vmatprep.mubr.bf16.mxu0 0
      %1050 = vmatmul.mubr.bf16.gmra.mrb[0].mxu0 %v613
      %v1051 = vpop.f32.mrb[0].mxu0
      %v1052 = vadd.f32 %v891, %v1051
      %v1053 = vpop.f32.mrb[0].mxu0
      %v1054 = vpop.f32.mrb[0].mxu0
      %v1055 = vadd.f32 %v894, %v1054
      %v1056 = vpop.f32.mrb[0].mxu0
      %1057 = vmatprep.mubr.bf16.mxu0 0
      %1058 = vmatmul.mubr.bf16.gmra.mrb[0].mxu0 %v616
      %v1059 = vpop.f32.mrb[0].mxu0
      %v1060 = vadd.f32 %v899, %v1059
      %v1061 = vpop.f32.mrb[0].mxu0
      %v1062 = vpop.f32.mrb[0].mxu0
      %v1063 = vadd.f32 %v902, %v1062
      %v1064 = vpop.f32.mrb[0].mxu0
      %1065 = vmatprep.mubr.bf16.mxu0 0
      %1066 = vmatmul.mubr.bf16.gmra.mrb[0].mxu0 %v619
      %v1067 = vpop.f32.mrb[0].mxu0
      %v1068 = vadd.f32 %v907, %v1067
      %v1069 = vpop.f32.mrb[0].mxu0
      %v1070 = vpop.f32.mrb[0].mxu0
      %v1071 = vadd.f32 %v910, %v1070
      %v1072 = vpop.f32.mrb[0].mxu0
      %1073 = vmatprep.mubr.bf16.mxu0 0
      %1074 = vmatmul.mubr.bf16.gmra.mrb[0].mxu0 %v622
      %v1075 = vpop.f32.mrb[0].mxu0
      %v1076 = vadd.f32 %v915, %v1075
      %v1077 = vpop.f32.mrb[0].mxu0
      %v1078 = vpop.f32.mrb[0].mxu0
      %v1079 = vadd.f32 %v918, %v1078
      %v1080 = vpop.f32.mrb[0].mxu0
      %1081 = vmatprep.mubr.bf16.mxu0 0
      %1082 = vmatmul.mubr.bf16.gmra.mrb[0].mxu0 %v625
      %v1083 = vpop.f32.mrb[0].mxu0
      %v1084 = vadd.f32 %v923, %v1083
      %v1085 = vpop.f32.mrb[0].mxu0
      %v1086 = vpop.f32.mrb[0].mxu0
      %v1087 = vadd.f32 %v926, %v1086
      %v1088 = vpop.f32.mrb[0].mxu0
      %1089 = vmatprep.mubr.bf16.mxu0 0
      %1090 = vmatmul.mubr.bf16.gmra.mrb[0].mxu0 %v628
      %v1091 = vpop.f32.mrb[0].mxu0
      %v1092 = vadd.f32 %v931, %v1091
      %v1093 = vpop.f32.mrb[0].mxu0
      %v1094 = vpop.f32.mrb[0].mxu0
      %v1095 = vadd.f32 %v934, %v1094
      %v1096 = vpop.f32.mrb[0].mxu0
      %1097 = vmatprep.mubr.bf16.mxu0 0
      %1098 = vmatmul.mubr.bf16.gmra.mrb[0].mxu0 %v631
      %v1099 = vpop.f32.mrb[0].mxu0
      %v1100 = vadd.f32 %v939, %v1099
      %v1101 = vpop.f32.mrb[0].mxu0
      %v1102 = vpop.f32.mrb[0].mxu0
      %v1103 = vadd.f32 %v942, %v1102
      %v1104 = vpop.f32.mrb[0].mxu0
      %1105 = vmatprep.mubr.bf16.mxu0 0
      %1106 = vmatmul.mubr.bf16.gmra.mrb[0].mxu0 %v634
      %v1107 = vpop.f32.mrb[0].mxu0
      %v1108 = vadd.f32 %v947, %v1107
      %v1109 = vpop.f32.mrb[0].mxu0
      %v1110 = vpop.f32.mrb[0].mxu0
      %v1111 = vadd.f32 %v950, %v1110
      %v1112 = vpop.f32.mrb[0].mxu0
      %1113 = vmatprep.mubr.bf16.mxu0 0
      %1114 = vmatmul.mubr.bf16.gmra.mrb[0].mxu0 %v637
      %v1115 = vpop.f32.mrb[0].mxu0
      %v1116 = vadd.f32 %v955, %v1115
      %v1117 = vpop.f32.mrb[0].mxu0
      %v1118 = vpop.f32.mrb[0].mxu0
      %v1119 = vadd.f32 %v958, %v1118
      %v1120 = vpop.f32.mrb[0].mxu0
      %1121 = vmatprep.mubr.bf16.mxu0 0
      %1122 = vmatmul.mubr.bf16.gmra.mrb[0].mxu0 %v640
      %v1123 = vpop.f32.mrb[0].mxu0
      %v1124 = vadd.f32 %v963, %v1123
      %v1125 = vpop.f32.mrb[0].mxu0
      %v1126 = vpop.f32.mrb[0].mxu0
      %v1127 = vadd.f32 %v966, %v1126
      %v1128 = vpop.f32.mrb[0].mxu0
      %1129 = vmatprep.mubr.bf16.mxu0 0
      %1130 = vmatmul.mubr.bf16.gmra.mrb[0].mxu0 %v643
      %v1131 = vpop.f32.mrb[0].mxu0
      %v1132 = vadd.f32 %v971, %v1131
      %v1133 = vpop.f32.mrb[0].mxu0
      %v1134 = vpop.f32.mrb[0].mxu0
      %v1135 = vadd.f32 %v974, %v1134
      %v1136 = vpop.f32.mrb[0].mxu0
      %1137 = vmatprep.mubr.bf16.mxu0 0
      %1138 = vmatmul.mubr.bf16.gmra.mrb[0].mxu0 %v646
      %v1139 = vpop.f32.mrb[0].mxu0
      %v1140 = vadd.f32 %v979, %v1139
      %v1141 = vpop.f32.mrb[0].mxu0
      %v1142 = vpop.f32.mrb[0].mxu0
      %v1143 = vadd.f32 %v982, %v1142
      %v1144 = vpop.f32.mrb[0].mxu0
      %1145 = vmatprep.mubr.bf16.mxu0 0
      %1146 = vmatmul.mubr.bf16.gmra.mrb[0].mxu0 %v649
      %v1147 = vpop.f32.mrb[0].mxu0
      %v1148 = vadd.f32 %v987, %v1147
      %v1149 = vpop.f32.mrb[0].mxu0
      %v1150 = vpop.f32.mrb[0].mxu0
      %v1151 = vadd.f32 %v990, %v1150
      %v1152 = vpop.f32.mrb[0].mxu0
      %1153 = vmatprep.mubr.bf16.mxu0 0
      %1154 = vmatmul.mubr.bf16.gmra.mrb[0].mxu0 %v652
      %v1155 = vpop.f32.mrb[0].mxu0
      %v1156 = vadd.f32 %v995, %v1155
      %v1157 = vpop.f32.mrb[0].mxu0
      %v1158 = vpop.f32.mrb[0].mxu0
      %v1159 = vadd.f32 %v998, %v1158
      %v1160 = vpop.f32.mrb[0].mxu0
      %1161 = vmatprep.mubr.bf16.mxu0 0
      %1162 = vmatmul.mubr.bf16.gmra.mrb[0].mxu0 %v655
      %v1163 = vpop.f32.mrb[0].mxu0
      %v1164 = vadd.f32 %v1003, %v1163
      %v1165 = vpop.f32.mrb[0].mxu0
      %v1166 = vpop.f32.mrb[0].mxu0
      %v1167 = vadd.f32 %v1006, %v1166
      %v1168 = vpop.f32.mrb[0].mxu0
      %1169 = vdwg.mxu0
      %v1170 = vadd.f32 %v304, %v1044
      %v1171 = vadd.f32 %v305, %v1047
      %v1172 = vadd.f32 %v306, %v1052
      %v1173 = vadd.f32 %v307, %v1055
      %v1174 = vadd.f32 %v308, %v1060
      %v1175 = vadd.f32 %v309, %v1063
      %v1176 = vadd.f32 %v310, %v1068
      %v1177 = vadd.f32 %v311, %v1071
      %v1178 = vadd.f32 %v312, %v1076
      %v1179 = vadd.f32 %v313, %v1079
      %v1180 = vadd.f32 %v314, %v1084
      %v1181 = vadd.f32 %v315, %v1087
      %v1182 = vadd.f32 %v316, %v1092
      %v1183 = vadd.f32 %v317, %v1095
      %v1184 = vadd.f32 %v318, %v1100
      %v1185 = vadd.f32 %v319, %v1103
      %v1186 = vadd.f32 %v320, %v1108
      %v1187 = vadd.f32 %v321, %v1111
      %v1188 = vadd.f32 %v322, %v1116
      %v1189 = vadd.f32 %v323, %v1119
      %v1190 = vadd.f32 %v324, %v1124
      %v1191 = vadd.f32 %v325, %v1127
      %v1192 = vadd.f32 %v326, %v1132
      %v1193 = vadd.f32 %v327, %v1135
      %v1194 = vadd.f32 %v328, %v1140
      %v1195 = vadd.f32 %v329, %v1143
      %v1196 = vadd.f32 %v330, %v1148
      %v1197 = vadd.f32 %v331, %v1151
      %v1198 = vadd.f32 %v332, %v1156
      %v1199 = vadd.f32 %v333, %v1159
      %v1200 = vadd.f32 %v334, %v1164
      %v1201 = vadd.f32 %v335, %v1167
      %1202 = vst [vmem:[#allocation2] sm:$0xff] %v1170
      %1203 = vst [vmem:[#allocation2 + $0x8] sm:$0xff] %v1171
      %1204 = vst [vmem:[#allocation2 + $0x10] sm:$0xff] %v1172
      %1205 = vst [vmem:[#allocation2 + $0x18] sm:$0xff] %v1173
      %1206 = vst [vmem:[#allocation2 + $0x20] sm:$0xff] %v1174
      %1207 = vst [vmem:[#allocation2 + $0x28] sm:$0xff] %v1175
      %1208 = vst [vmem:[#allocation2 + $0x30] sm:$0xff] %v1176
      %1209 = vst [vmem:[#allocation2 + $0x38] sm:$0xff] %v1177
      %1210 = vst [vmem:[#allocation2 + $0x40] sm:$0xff] %v1178
      %1211 = vst [vmem:[#allocation2 + $0x48] sm:$0xff] %v1179
      %1212 = vst [vmem:[#allocation2 + $0x50] sm:$0xff] %v1180
      %1213 = vst [vmem:[#allocation2 + $0x58] sm:$0xff] %v1181
      %1214 = vst [vmem:[#allocation2 + $0x60] sm:$0xff] %v1182
      %1215 = vst [vmem:[#allocation2 + $0x68] sm:$0xff] %v1183
      %1216 = vst [vmem:[#allocation2 + $0x70] sm:$0xff] %v1184
      %1217 = vst [vmem:[#allocation2 + $0x78] sm:$0xff] %v1185
      %1218 = vst [vmem:[#allocation2 + $0x80] sm:$0xff] %v1186
      %1219 = vst [vmem:[#allocation2 + $0x88] sm:$0xff] %v1187
      %1220 = vst [vmem:[#allocation2 + $0x90] sm:$0xff] %v1188
      %1221 = vst [vmem:[#allocation2 + $0x98] sm:$0xff] %v1189
      %1222 = vst [vmem:[#allocation2 + $0xa0] sm:$0xff] %v1190
      %1223 = vst [vmem:[#allocation2 + $0xa8] sm:$0xff] %v1191
      %1224 = vst [vmem:[#allocation2 + $0xb0] sm:$0xff] %v1192
      %1225 = vst [vmem:[#allocation2 + $0xb8] sm:$0xff] %v1193
      %1226 = vst [vmem:[#allocation2 + $0xc0] sm:$0xff] %v1194
      %1227 = vst [vmem:[#allocation2 + $0xc8] sm:$0xff] %v1195
      %1228 = vst [vmem:[#allocation2 + $0xd0] sm:$0xff] %v1196
      %1229 = vst [vmem:[#allocation2 + $0xd8] sm:$0xff] %v1197
      %1230 = vst [vmem:[#allocation2 + $0xe0] sm:$0xff] %v1198
      %1231 = vst [vmem:[#allocation2 + $0xe8] sm:$0xff] %v1199
      %1232 = vst [vmem:[#allocation2 + $0xf0] sm:$0xff] %v1200
      %1233 = vst [vmem:[#allocation2 + $0xf8] sm:$0xff] %v1201
      // Predicated region
      $region37: #{_lambda_.67} parent=31 // pred_check
        %p1234 = pneg %p268
      $region38: #{_lambda_.67} parent=31 // pred_check_branch
        %1236 = sbr.rel (%p1234) target = $region40
      $region39: #{_lambda_.67} parent=31 // pred_region
        %v1237 = vld [vmem:[#allocation2] sm:$0xff]
        %v1238 = vld [vmem:[#allocation2 + $0x8] sm:$0xff]
        %v1239 = vld [vmem:[#allocation2 + $0x10] sm:$0xff]
        %v1240 = vld [vmem:[#allocation2 + $0x18] sm:$0xff]
        %v1241 = vld [vmem:[#allocation2 + $0x20] sm:$0xff]
        %v1242 = vld [vmem:[#allocation2 + $0x28] sm:$0xff]
        %v1243 = vld [vmem:[#allocation2 + $0x30] sm:$0xff]
        %v1244 = vld [vmem:[#allocation2 + $0x38] sm:$0xff]
        %v1245 = vld [vmem:[#allocation2 + $0x40] sm:$0xff]
        %v1246 = vld [vmem:[#allocation2 + $0x48] sm:$0xff]
        %v1247 = vld [vmem:[#allocation2 + $0x50] sm:$0xff]
        %v1248 = vld [vmem:[#allocation2 + $0x58] sm:$0xff]
        %v1249 = vld [vmem:[#allocation2 + $0x60] sm:$0xff]
        %v1250 = vld [vmem:[#allocation2 + $0x68] sm:$0xff]
        %v1251 = vld [vmem:[#allocation2 + $0x70] sm:$0xff]
        %v1252 = vld [vmem:[#allocation2 + $0x78] sm:$0xff]
        %v1253 = vld [vmem:[#allocation2 + $0x80] sm:$0xff]
        %v1254 = vld [vmem:[#allocation2 + $0x88] sm:$0xff]
        %v1255 = vld [vmem:[#allocation2 + $0x90] sm:$0xff]
        %v1256 = vld [vmem:[#allocation2 + $0x98] sm:$0xff]
        %v1257 = vld [vmem:[#allocation2 + $0xa0] sm:$0xff]
        %v1258 = vld [vmem:[#allocation2 + $0xa8] sm:$0xff]
        %v1259 = vld [vmem:[#allocation2 + $0xb0] sm:$0xff]
        %v1260 = vld [vmem:[#allocation2 + $0xb8] sm:$0xff]
        %v1261 = vld [vmem:[#allocation2 + $0xc0] sm:$0xff]
        %v1262 = vld [vmem:[#allocation2 + $0xc8] sm:$0xff]
        %v1263 = vld [vmem:[#allocation2 + $0xd0] sm:$0xff]
        %v1264 = vld [vmem:[#allocation2 + $0xd8] sm:$0xff]
        %v1265 = vld [vmem:[#allocation2 + $0xe0] sm:$0xff]
        %v1266 = vld [vmem:[#allocation2 + $0xe8] sm:$0xff]
        %v1267 = vld [vmem:[#allocation2 + $0xf0] sm:$0xff]
        %v1268 = vld [vmem:[#allocation2 + $0xf8] sm:$0xff]
        %v1269 = vld [vmem:[%s257] sm:$0x1]
        %v1271 = vlaneseq
        %v1272 = vshrl.u32 %v1271, 7
        %v1273 = vsub.s32 0, %v1272
        %v1274 = vrot.slane %v1269, %v1273
        %v1276 = vadd.f32 %v1237, %v1274
        %v1277 = vadd.f32 %v1238, %v1274
        %v1278 = vadd.f32 %v1239, %v1274
        %v1279 = vadd.f32 %v1240, %v1274
        %v1280 = vadd.f32 %v1241, %v1274
        %v1281 = vadd.f32 %v1242, %v1274
        %v1282 = vadd.f32 %v1243, %v1274
        %v1283 = vadd.f32 %v1244, %v1274
        %v1284 = vadd.f32 %v1245, %v1274
        %v1285 = vadd.f32 %v1246, %v1274
        %v1286 = vadd.f32 %v1247, %v1274
        %v1287 = vadd.f32 %v1248, %v1274
        %v1288 = vadd.f32 %v1249, %v1274
        %v1289 = vadd.f32 %v1250, %v1274
        %v1290 = vadd.f32 %v1251, %v1274
        %v1291 = vadd.f32 %v1252, %v1274
        %v1292 = vadd.f32 %v1253, %v1274
        %v1293 = vadd.f32 %v1254, %v1274
        %v1294 = vadd.f32 %v1255, %v1274
        %v1295 = vadd.f32 %v1256, %v1274
        %v1296 = vadd.f32 %v1257, %v1274
        %v1297 = vadd.f32 %v1258, %v1274
        %v1298 = vadd.f32 %v1259, %v1274
        %v1299 = vadd.f32 %v1260, %v1274
        %v1300 = vadd.f32 %v1261, %v1274
        %v1301 = vadd.f32 %v1262, %v1274
        %v1302 = vadd.f32 %v1263, %v1274
        %v1303 = vadd.f32 %v1264, %v1274
        %v1304 = vadd.f32 %v1265, %v1274
        %v1305 = vadd.f32 %v1266, %v1274
        %v1306 = vadd.f32 %v1267, %v1274
        %v1307 = vadd.f32 %v1268, %v1274
        %vm1308 = vcmp.ge.f32.partialorder %v1276, 0.0
        %vm1309 = vcmp.ge.f32.partialorder %v1277, 0.0
        %vm1310 = vcmp.ge.f32.partialorder %v1278, 0.0
        %vm1311 = vcmp.ge.f32.partialorder %v1279, 0.0
        %vm1312 = vcmp.ge.f32.partialorder %v1280, 0.0
        %vm1313 = vcmp.ge.f32.partialorder %v1281, 0.0
        %vm1314 = vcmp.ge.f32.partialorder %v1282, 0.0
        %vm1315 = vcmp.ge.f32.partialorder %v1283, 0.0
        %vm1316 = vcmp.ge.f32.partialorder %v1284, 0.0
        %vm1317 = vcmp.ge.f32.partialorder %v1285, 0.0
        %vm1318 = vcmp.ge.f32.partialorder %v1286, 0.0
        %vm1319 = vcmp.ge.f32.partialorder %v1287, 0.0
        %vm1320 = vcmp.ge.f32.partialorder %v1288, 0.0
        %vm1321 = vcmp.ge.f32.partialorder %v1289, 0.0
        %vm1322 = vcmp.ge.f32.partialorder %v1290, 0.0
        %vm1323 = vcmp.ge.f32.partialorder %v1291, 0.0
        %vm1324 = vcmp.ge.f32.partialorder %v1292, 0.0
        %vm1325 = vcmp.ge.f32.partialorder %v1293, 0.0
        %vm1326 = vcmp.ge.f32.partialorder %v1294, 0.0
        %vm1327 = vcmp.ge.f32.partialorder %v1295, 0.0
        %vm1328 = vcmp.ge.f32.partialorder %v1296, 0.0
        %vm1329 = vcmp.ge.f32.partialorder %v1297, 0.0
        %vm1330 = vcmp.ge.f32.partialorder %v1298, 0.0
        %vm1331 = vcmp.ge.f32.partialorder %v1299, 0.0
        %vm1332 = vcmp.ge.f32.partialorder %v1300, 0.0
        %vm1333 = vcmp.ge.f32.partialorder %v1301, 0.0
        %vm1334 = vcmp.ge.f32.partialorder %v1302, 0.0
        %vm1335 = vcmp.ge.f32.partialorder %v1303, 0.0
        %vm1336 = vcmp.ge.f32.partialorder %v1304, 0.0
        %vm1337 = vcmp.ge.f32.partialorder %v1305, 0.0
        %vm1338 = vcmp.ge.f32.partialorder %v1306, 0.0
        %vm1339 = vcmp.ge.f32.partialorder %v1307, 0.0
        %v1340 = vmul.f32 %v1276, 0.2
        %v1341 = vmul.f32 %v1277, 0.2
        %v1342 = vmul.f32 %v1278, 0.2
        %v1343 = vmul.f32 %v1279, 0.2
        %v1344 = vmul.f32 %v1280, 0.2
        %v1345 = vmul.f32 %v1281, 0.2
        %v1346 = vmul.f32 %v1282, 0.2
        %v1347 = vmul.f32 %v1283, 0.2
        %v1348 = vmul.f32 %v1284, 0.2
        %v1349 = vmul.f32 %v1285, 0.2
        %v1350 = vmul.f32 %v1286, 0.2
        %v1351 = vmul.f32 %v1287, 0.2
        %v1352 = vmul.f32 %v1288, 0.2
        %v1353 = vmul.f32 %v1289, 0.2
        %v1354 = vmul.f32 %v1290, 0.2
        %v1355 = vmul.f32 %v1291, 0.2
        %v1356 = vmul.f32 %v1292, 0.2
        %v1357 = vmul.f32 %v1293, 0.2
        %v1358 = vmul.f32 %v1294, 0.2
        %v1359 = vmul.f32 %v1295, 0.2
        %v1360 = vmul.f32 %v1296, 0.2
        %v1361 = vmul.f32 %v1297, 0.2
        %v1362 = vmul.f32 %v1298, 0.2
        %v1363 = vmul.f32 %v1299, 0.2
        %v1364 = vmul.f32 %v1300, 0.2
        %v1365 = vmul.f32 %v1301, 0.2
        %v1366 = vmul.f32 %v1302, 0.2
        %v1367 = vmul.f32 %v1303, 0.2
        %v1368 = vmul.f32 %v1304, 0.2
        %v1369 = vmul.f32 %v1305, 0.2
        %v1370 = vmul.f32 %v1306, 0.2
        %v1371 = vmul.f32 %v1307, 0.2
        %v1372 = vsel %vm1308, %v1276, %v1340
        %v1373 = vsel %vm1309, %v1277, %v1341
        %v1374 = vsel %vm1310, %v1278, %v1342
        %v1375 = vsel %vm1311, %v1279, %v1343
        %v1376 = vsel %vm1312, %v1280, %v1344
        %v1377 = vsel %vm1313, %v1281, %v1345
        %v1378 = vsel %vm1314, %v1282, %v1346
        %v1379 = vsel %vm1315, %v1283, %v1347
        %v1380 = vsel %vm1316, %v1284, %v1348
        %v1381 = vsel %vm1317, %v1285, %v1349
        %v1382 = vsel %vm1318, %v1286, %v1350
        %v1383 = vsel %vm1319, %v1287, %v1351
        %v1384 = vsel %vm1320, %v1288, %v1352
        %v1385 = vsel %vm1321, %v1289, %v1353
        %v1386 = vsel %vm1322, %v1290, %v1354
        %v1387 = vsel %vm1323, %v1291, %v1355
        %v1388 = vsel %vm1324, %v1292, %v1356
        %v1389 = vsel %vm1325, %v1293, %v1357
        %v1390 = vsel %vm1326, %v1294, %v1358
        %v1391 = vsel %vm1327, %v1295, %v1359
        %v1392 = vsel %vm1328, %v1296, %v1360
        %v1393 = vsel %vm1329, %v1297, %v1361
        %v1394 = vsel %vm1330, %v1298, %v1362
        %v1395 = vsel %vm1331, %v1299, %v1363
        %v1396 = vsel %vm1332, %v1300, %v1364
        %v1397 = vsel %vm1333, %v1301, %v1365
        %v1398 = vsel %vm1334, %v1302, %v1366
        %v1399 = vsel %vm1335, %v1303, %v1367
        %v1400 = vsel %vm1336, %v1304, %v1368
        %v1401 = vsel %vm1337, %v1305, %v1369
        %v1402 = vsel %vm1338, %v1306, %v1370
        %v1403 = vsel %vm1339, %v1307, %v1371
        %1404 = vst [vmem:[%s265] sm:$0xff] %v1372
        %1405 = vst [vmem:[%s265 + $0x8] sm:$0xff] %v1373
        %1406 = vst [vmem:[%s265 + $0x10] sm:$0xff] %v1374
        %1407 = vst [vmem:[%s265 + $0x18] sm:$0xff] %v1375
        %1408 = vst [vmem:[%s265 + $0x20] sm:$0xff] %v1376
        %1409 = vst [vmem:[%s265 + $0x28] sm:$0xff] %v1377
        %1410 = vst [vmem:[%s265 + $0x30] sm:$0xff] %v1378
        %1411 = vst [vmem:[%s265 + $0x38] sm:$0xff] %v1379
        %1412 = vst [vmem:[%s265 + $0x40] sm:$0xff] %v1380
        %1413 = vst [vmem:[%s265 + $0x48] sm:$0xff] %v1381
        %1414 = vst [vmem:[%s265 + $0x50] sm:$0xff] %v1382
        %1415 = vst [vmem:[%s265 + $0x58] sm:$0xff] %v1383
        %1416 = vst [vmem:[%s265 + $0x60] sm:$0xff] %v1384
        %1417 = vst [vmem:[%s265 + $0x68] sm:$0xff] %v1385
        %1418 = vst [vmem:[%s265 + $0x70] sm:$0xff] %v1386
        %1419 = vst [vmem:[%s265 + $0x78] sm:$0xff] %v1387
        %1420 = vst [vmem:[%s265 + $0x80] sm:$0xff] %v1388
        %1421 = vst [vmem:[%s265 + $0x88] sm:$0xff] %v1389
        %1422 = vst [vmem:[%s265 + $0x90] sm:$0xff] %v1390
        %1423 = vst [vmem:[%s265 + $0x98] sm:$0xff] %v1391
        %1424 = vst [vmem:[%s265 + $0xa0] sm:$0xff] %v1392
        %1425 = vst [vmem:[%s265 + $0xa8] sm:$0xff] %v1393
        %1426 = vst [vmem:[%s265 + $0xb0] sm:$0xff] %v1394
        %1427 = vst [vmem:[%s265 + $0xb8] sm:$0xff] %v1395
        %1428 = vst [vmem:[%s265 + $0xc0] sm:$0xff] %v1396
        %1429 = vst [vmem:[%s265 + $0xc8] sm:$0xff] %v1397
        %1430 = vst [vmem:[%s265 + $0xd0] sm:$0xff] %v1398
        %1431 = vst [vmem:[%s265 + $0xd8] sm:$0xff] %v1399
        %1432 = vst [vmem:[%s265 + $0xe0] sm:$0xff] %v1400
        %1433 = vst [vmem:[%s265 + $0xe8] sm:$0xff] %v1401
        %1434 = vst [vmem:[%s265 + $0xf0] sm:$0xff] %v1402
        %1435 = vst [vmem:[%s265 + $0xf8] sm:$0xff] %v1403
      $region40: #{_lambda_.67} parent=31 // pred_fallthru
        _
      %s1436 = smul.u32 32, %s19
      %p1437 = scmp.lt.s32.totalorder %s1436, 63
      %s1438 = scalar_select %p1437, %s1436, 63
      %p1439 = scmp.lt.s32.totalorder %s20, 0
      %s1440 = scalar_select %p1439, %s20, 0
      %s1441 = sadd.s32 %s1440, %s1438
      %s1442 = smul.addr %s1441, 8
      %s1443 = scalar_lea.vmem %s3, %s1442
      // Predicated region
      $region41: #{_lambda_.67} parent=31 // pred_check
        %p1444 = pneg %p135
      $region42: #{_lambda_.67} parent=31 // pred_check_branch
        %1446 = sbr.rel (%p1444) target = $region44
      $region43: #{_lambda_.67} parent=31 // pred_region
        %s1447 = smul.u32 32, %s19
      $region44: #{_lambda_.67} parent=31 // pred_fallthru
        _
    $region32: #{_lambda_.67} parent=5 // pred_fallthru
      _
    %p1448 = scmp.le.s32.totalorder 2, %s9
    // Predicated region
    $region45: #{_lambda_.67} parent=5 // pred_check
      %p1449 = pneg %p1448
    $region46: #{_lambda_.67} parent=5 // pred_check_branch
      %1451 = sbr.rel (%p1449) target = $region48
    $region47: #{_lambda_.67} parent=5 // pred_region
      %s1452 = ssub.s32 %s9, 2
      // Predicated region
      $region49: #{_lambda_.67} parent=47 // pred_check
        %p1453 = pneg %p141
      $region50: #{_lambda_.67} parent=47 // pred_check_branch
        %1455 = sbr.rel (%p1453) target = $region52
      $region51: #{_lambda_.67} parent=47 // pred_region
        %s1456 = smul.u32 32, %s22
        %p1457 = scmp.lt.s32.totalorder %s1456, 63
        %s1458 = scalar_select %p1457, %s1456, 63
        %p1459 = scmp.lt.s32.totalorder %s23, 0
        %s1460 = scalar_select %p1459, %s23, 0
        %s1461 = sadd.s32 %s1460, %s1458
        %s1462 = smul.addr %s1461, 8
        %s1463 = scalar_lea.vmem %s3, %s1462
      $region52: #{_lambda_.67} parent=47 // pred_fallthru
        _
    $region48: #{_lambda_.67} parent=5 // pred_fallthru
      _
  $region6: #{_lambda_.67} parent=0 // loop_footer
    %s13 = sadd.s32 1, %s9
  $region7: #{_lambda_.67} parent=0 // loop_footer_branch
    %8 = sbr.rel target = $region3
  $region8: #{_lambda_.67} parent=0 // loop_exit
    _

</llo_original>
